<compile_context>
chip_gen: v6e
topology: v6e:2x2x1
jax: 0.10.0
libtpu: 0.0.40
codegen_flags: <defaults>
</compile_context>

<pallas_src>
import jax
import jax.numpy as jnp
from jax.experimental import pallas as pl
from jax.experimental.pallas import tpu as pltpu

EPS = 1e-5
LANE = 128


def double_conv_kernel(x_ref, w1_ref, g1_ref, b1_ref, w2_ref, g2_ref, b2_ref,
                       out_ref, col1_ref, mid_ref, col2_ref):
    # x_ref   : (N, H+2, W+2, Cin)   spatially padded input (NHWC), VMEM
    # w1_ref  : (9*Cin, Cp)          conv1 weights, taps folded into K
    # w2_ref  : (9*Cp, Cp)           conv2 weights, taps folded into K
    # g*/b*   : (1, Cp)              BN affine params (zero in the pad lanes)
    # out_ref : (N*H*W, Cp)          lane-dense output slab (Cp % 128 == 0)
    # col1_ref: (N, H, W, 9*Cin)     im2col scratch for conv1
    # mid_ref : (N, H+2, W+2, Cp)    padded intermediate (border-zeroed only)
    # col2_ref: (N, H, W, 9*Cp)      im2col scratch for conv2
    N, Hp2, Wp2, Cin = x_ref.shape
    H, W = Hp2 - 2, Wp2 - 2
    Cp = out_ref.shape[-1]
    M = N * H * W
    inv_m = 1.0 / M

    # ---- conv1: im2col (9 strided copies into scratch) + ONE matmul, K=9*Cin ----
    for t in range(9):
        dy, dx = divmod(t, 3)
        col1_ref[:, :, :, t * Cin:(t + 1) * Cin] = x_ref[:, dy:dy + H, dx:dx + W, :]
    acc1 = jnp.dot(col1_ref[...].reshape(M, 9 * Cin), w1_ref[...],
                   preferred_element_type=jnp.float32)              # (M, Cp)

    # ---- BN1 (training batch stats, single-pass sum/sumsq) + ReLU ----
    s1 = jnp.sum(acc1, axis=0, keepdims=True)
    q1 = jnp.sum(acc1 * acc1, axis=0, keepdims=True)
    mean1 = s1 * inv_m
    var1 = q1 * inv_m - mean1 * mean1
    scale1 = g1_ref[...] * jax.lax.rsqrt(var1 + EPS)
    shift1 = b1_ref[...] - mean1 * scale1
    y = jnp.maximum(acc1 * scale1 + shift1, 0.0)                    # (M, Cp)

    # ---- write y into padded intermediate; zero ONLY the 1-pixel border ----
    zrow = jnp.zeros((N, 1, Wp2, Cp), jnp.float32)
    zcol = jnp.zeros((N, H, 1, Cp), jnp.float32)
    mid_ref[:, 0:1, :, :] = zrow
    mid_ref[:, H + 1:H + 2, :, :] = zrow
    mid_ref[:, 1:H + 1, 0:1, :] = zcol
    mid_ref[:, 1:H + 1, W + 1:W + 2, :] = zcol
    mid_ref[:, 1:H + 1, 1:W + 1, :] = y.reshape(N, H, W, Cp)

    # ---- conv2: im2col + ONE matmul, K = 9*Cp (128-lane aligned tap slots) ----
    for t in range(9):
        dy, dx = divmod(t, 3)
        col2_ref[:, :, :, t * Cp:(t + 1) * Cp] = mid_ref[:, dy:dy + H, dx:dx + W, :]
    acc2 = jnp.dot(col2_ref[...].reshape(M, 9 * Cp), w2_ref[...],
                   preferred_element_type=jnp.float32)              # (M, Cp)

    # ---- BN2 + ReLU; lane-dense, unmasked output store ----
    s2 = jnp.sum(acc2, axis=0, keepdims=True)
    q2 = jnp.sum(acc2 * acc2, axis=0, keepdims=True)
    mean2 = s2 * inv_m
    var2 = q2 * inv_m - mean2 * mean2
    scale2 = g2_ref[...] * jax.lax.rsqrt(var2 + EPS)
    shift2 = b2_ref[...] - mean2 * scale2
    out_ref[...] = jnp.maximum(acc2 * scale2 + shift2, 0.0).astype(out_ref.dtype)


def double_conv(x_nchw, w1, g1, b1, w2, g2, b2):
    """x_nchw: (N, Cin, H, W); w1: (Cout, Cin, 3, 3); w2: (Cout, Cout, 3, 3)."""
    N, Cin, H, W = x_nchw.shape
    Cout = w1.shape[0]
    Cp = ((Cout + LANE - 1) // LANE) * LANE          # lane-dense channel count
    M = N * H * W

    # --- wrapper-side layout plumbing: NHWC, spatial pad, fold taps into K,
    #     zero-pad channels so the kernel works on 128-lane slabs. ---
    x = jnp.transpose(x_nchw, (0, 2, 3, 1))
    xp = jnp.pad(x, ((0, 0), (1, 1), (1, 1), (0, 0)))

    w1k = jnp.transpose(w1, (2, 3, 1, 0)).reshape(9 * Cin, Cout)    # (tap*cin, cout)
    w1k = jnp.pad(w1k, ((0, 0), (0, Cp - Cout)))                    # (9*Cin, Cp)
    w2k = jnp.transpose(w2, (2, 3, 1, 0)).reshape(9, Cout, Cout)
    w2k = jnp.pad(w2k, ((0, 0), (0, Cp - Cout), (0, Cp - Cout)))
    w2k = w2k.reshape(9 * Cp, Cp)                                   # (9*Cp, Cp)

    def pad_vec(v):  # padded lanes get 0 so the pad channels stay exactly 0
        return jnp.pad(v.reshape(1, Cout), ((0, 0), (0, Cp - Cout)))

    vmem = pl.BlockSpec(memory_space=pltpu.MemorySpace.VMEM)

    # Explicit scoped-VMEM budget (default is only 16 MiB on v5e); keep it
    # well under v7x's 64 MiB physical VMEM.
    f32 = 4
    vmem_need = f32 * (xp.size + w1k.size + w2k.size + 4 * Cp + M * Cp
                       + N * H * W * 9 * Cin
                       + N * (H + 2) * (W + 2) * Cp
                       + N * H * W * 9 * Cp)
    vmem_limit = int(min(max(2 * vmem_need, 32 * 1024 * 1024), 48 * 1024 * 1024))

    out = pl.pallas_call(
        double_conv_kernel,
        out_shape=jax.ShapeDtypeStruct((M, Cp), jnp.float32),
        in_specs=[vmem] * 7,
        out_specs=vmem,
        scratch_shapes=[
            pltpu.VMEM((N, H, W, 9 * Cin), jnp.float32),     # im2col for conv1
            pltpu.VMEM((N, H + 2, W + 2, Cp), jnp.float32),  # padded intermediate
            pltpu.VMEM((N, H, W, 9 * Cp), jnp.float32),      # im2col for conv2
        ],
        compiler_params=pltpu.CompilerParams(vmem_limit_bytes=vmem_limit),
    )(xp, w1k, pad_vec(g1), pad_vec(b1), w2k, pad_vec(g2), pad_vec(b2))

    out = out.reshape(N, H, W, Cp)[..., :Cout]               # drop channel pad
    return jnp.transpose(out, (0, 3, 1, 2))                  # back to NCHW


def ref_double_conv(x, w1, g1, b1, w2, g2, b2):
    """Pure-JAX reference matching PyTorch DoubleConv forward (training BN)."""
    def conv(x, w):
        return jax.lax.conv_general_dilated(
            x, w, (1, 1), ((1, 1), (1, 1)),
            dimension_numbers=("NCHW", "OIHW", "NCHW"))

    def bn(x, g, b):
        mean = jnp.mean(x, axis=(0, 2, 3), keepdims=True)
        var = jnp.mean((x - mean) ** 2, axis=(0, 2, 3), keepdims=True)
        return ((x - mean) * jax.lax.rsqrt(var + EPS)
                * g.reshape(1, -1, 1, 1) + b.reshape(1, -1, 1, 1))

    y = jnp.maximum(bn(conv(x, w1), g1, b1), 0.0)
    return jnp.maximum(bn(conv(y, w2), g2, b2), 0.0)


if __name__ == "__main__":
    key = jax.random.PRNGKey(0)
    k_x, k_w1, k_w2, k_g1, k_b1, k_g2, k_b2 = jax.random.split(key, 7)

    N, Cin, Cout, H, W = 2, 4, 8, 16, 16
    x = jax.random.normal(k_x, (N, Cin, H, W), jnp.float32)
    w1 = 0.1 * jax.random.normal(k_w1, (Cout, Cin, 3, 3), jnp.float32)
    w2 = 0.1 * jax.random.normal(k_w2, (Cout, Cout, 3, 3), jnp.float32)
    g1 = 1.0 + 0.1 * jax.random.normal(k_g1, (Cout,), jnp.float32)
    b1 = 0.1 * jax.random.normal(k_b1, (Cout,), jnp.float32)
    g2 = 1.0 + 0.1 * jax.random.normal(k_g2, (Cout,), jnp.float32)
    b2 = 0.1 * jax.random.normal(k_b2, (Cout,), jnp.float32)

    out = double_conv(x, w1, g1, b1, w2, g2, b2)
    out = jax.block_until_ready(out)

    ref = ref_double_conv(x, w1, g1, b1, w2, g2, b2)
    assert out.shape == (N, Cout, H, W)
    err = float(jnp.max(jnp.abs(out - ref)))
    assert jnp.allclose(out, ref, atol=1e-4, rtol=1e-4), err

    print("KERNEL_OK")
</pallas_src>

<mosaic_0001>
module attributes {stable_mosaic.version = 11 : i64} {
  func.func @double_conv_kernel(%arg0: memref<2x18x18x4xf32, #tpu.memory_space<vmem>>, %arg1: memref<36x128xf32, #tpu.memory_space<vmem>>, %arg2: memref<1x128xf32, #tpu.memory_space<vmem>>, %arg3: memref<1x128xf32, #tpu.memory_space<vmem>>, %arg4: memref<1152x128xf32, #tpu.memory_space<vmem>>, %arg5: memref<1x128xf32, #tpu.memory_space<vmem>>, %arg6: memref<1x128xf32, #tpu.memory_space<vmem>>, %arg7: memref<512x128xf32, #tpu.memory_space<vmem>>, %arg8: memref<2x16x16x36xf32, #tpu.memory_space<vmem>>, %arg9: memref<2x18x18x128xf32, #tpu.memory_space<vmem>>, %arg10: memref<2x16x16x1152xf32, #tpu.memory_space<vmem>>) attributes {dimension_semantics = [], scalar_prefetch = 0 : i64, scratch_operands = 3 : i64, tpu.core_type = #tpu.core_type<tc>} {
    %c0 = arith.constant 0 : index
    %c0_0 = arith.constant 0 : index
    %c0_1 = arith.constant 0 : index
    %c0_2 = arith.constant 0 : index
    %0 = vector.load %arg0[%c0, %c0_0, %c0_1, %c0_2] : memref<2x18x18x4xf32, #tpu.memory_space<vmem>>, vector<2x16x16x4xf32>
    %c0_3 = arith.constant 0 : index
    %c0_4 = arith.constant 0 : index
    %c0_5 = arith.constant 0 : index
    %c0_6 = arith.constant 0 : index
    %1 = vector.load %arg8[%c0_3, %c0_4, %c0_5, %c0_6] : memref<2x16x16x36xf32, #tpu.memory_space<vmem>>, vector<2x16x16x4xf32>
    tpu.vector_store %arg8[%c0_3, %c0_4, %c0_5, %c0_6], %0 {strides = array<i32>} : memref<2x16x16x36xf32, #tpu.memory_space<vmem>>, vector<2x16x16x4xf32>,
    %c0_7 = arith.constant 0 : index
    %c0_8 = arith.constant 0 : index
    %c1 = arith.constant 1 : index
    %c0_9 = arith.constant 0 : index
    %2 = vector.load %arg0[%c0_7, %c0_8, %c1, %c0_9] : memref<2x18x18x4xf32, #tpu.memory_space<vmem>>, vector<2x16x16x4xf32>
    %c0_10 = arith.constant 0 : index
    %c0_11 = arith.constant 0 : index
    %c0_12 = arith.constant 0 : index
    %c4 = arith.constant 4 : index
    %3 = vector.load %arg8[%c0_10, %c0_11, %c0_12, %c4] : memref<2x16x16x36xf32, #tpu.memory_space<vmem>>, vector<2x16x16x4xf32>
    tpu.vector_store %arg8[%c0_10, %c0_11, %c0_12, %c4], %2 {strides = array<i32>} : memref<2x16x16x36xf32, #tpu.memory_space<vmem>>, vector<2x16x16x4xf32>,
    %c0_13 = arith.constant 0 : index
    %c0_14 = arith.constant 0 : index
    %c2 = arith.constant 2 : index
    %c0_15 = arith.constant 0 : index
    %4 = vector.load %arg0[%c0_13, %c0_14, %c2, %c0_15] : memref<2x18x18x4xf32, #tpu.memory_space<vmem>>, vector<2x16x16x4xf32>
    %c0_16 = arith.constant 0 : index
    %c0_17 = arith.constant 0 : index
    %c0_18 = arith.constant 0 : index
    %c8 = arith.constant 8 : index
    %5 = vector.load %arg8[%c0_16, %c0_17, %c0_18, %c8] : memref<2x16x16x36xf32, #tpu.memory_space<vmem>>, vector<2x16x16x4xf32>
    tpu.vector_store %arg8[%c0_16, %c0_17, %c0_18, %c8], %4 {strides = array<i32>} : memref<2x16x16x36xf32, #tpu.memory_space<vmem>>, vector<2x16x16x4xf32>,
    %c0_19 = arith.constant 0 : index
    %c1_20 = arith.constant 1 : index
    %c0_21 = arith.constant 0 : index
    %c0_22 = arith.constant 0 : index
    %6 = vector.load %arg0[%c0_19, %c1_20, %c0_21, %c0_22] : memref<2x18x18x4xf32, #tpu.memory_space<vmem>>, vector<2x16x16x4xf32>
    %c0_23 = arith.constant 0 : index
    %c0_24 = arith.constant 0 : index
    %c0_25 = arith.constant 0 : index
    %c12 = arith.constant 12 : index
    %7 = vector.load %arg8[%c0_23, %c0_24, %c0_25, %c12] : memref<2x16x16x36xf32, #tpu.memory_space<vmem>>, vector<2x16x16x4xf32>
    tpu.vector_store %arg8[%c0_23, %c0_24, %c0_25, %c12], %6 {strides = array<i32>} : memref<2x16x16x36xf32, #tpu.memory_space<vmem>>, vector<2x16x16x4xf32>,
    %c0_26 = arith.constant 0 : index
    %c1_27 = arith.constant 1 : index
    %c1_28 = arith.constant 1 : index
    %c0_29 = arith.constant 0 : index
    %8 = vector.load %arg0[%c0_26, %c1_27, %c1_28, %c0_29] : memref<2x18x18x4xf32, #tpu.memory_space<vmem>>, vector<2x16x16x4xf32>
    %c0_30 = arith.constant 0 : index
    %c0_31 = arith.constant 0 : index
    %c0_32 = arith.constant 0 : index
    %c16 = arith.constant 16 : index
    %9 = vector.load %arg8[%c0_30, %c0_31, %c0_32, %c16] : memref<2x16x16x36xf32, #tpu.memory_space<vmem>>, vector<2x16x16x4xf32>
    tpu.vector_store %arg8[%c0_30, %c0_31, %c0_32, %c16], %8 {strides = array<i32>} : memref<2x16x16x36xf32, #tpu.memory_space<vmem>>, vector<2x16x16x4xf32>,
    %c0_33 = arith.constant 0 : index
    %c1_34 = arith.constant 1 : index
    %c2_35 = arith.constant 2 : index
    %c0_36 = arith.constant 0 : index
    %10 = vector.load %arg0[%c0_33, %c1_34, %c2_35, %c0_36] : memref<2x18x18x4xf32, #tpu.memory_space<vmem>>, vector<2x16x16x4xf32>
    %c0_37 = arith.constant 0 : index
    %c0_38 = arith.constant 0 : index
    %c0_39 = arith.constant 0 : index
    %c20 = arith.constant 20 : index
    %11 = vector.load %arg8[%c0_37, %c0_38, %c0_39, %c20] : memref<2x16x16x36xf32, #tpu.memory_space<vmem>>, vector<2x16x16x4xf32>
    tpu.vector_store %arg8[%c0_37, %c0_38, %c0_39, %c20], %10 {strides = array<i32>} : memref<2x16x16x36xf32, #tpu.memory_space<vmem>>, vector<2x16x16x4xf32>,
    %c0_40 = arith.constant 0 : index
    %c2_41 = arith.constant 2 : index
    %c0_42 = arith.constant 0 : index
    %c0_43 = arith.constant 0 : index
    %12 = vector.load %arg0[%c0_40, %c2_41, %c0_42, %c0_43] : memref<2x18x18x4xf32, #tpu.memory_space<vmem>>, vector<2x16x16x4xf32>
    %c0_44 = arith.constant 0 : index
    %c0_45 = arith.constant 0 : index
    %c0_46 = arith.constant 0 : index
    %c24 = arith.constant 24 : index
    %13 = vector.load %arg8[%c0_44, %c0_45, %c0_46, %c24] : memref<2x16x16x36xf32, #tpu.memory_space<vmem>>, vector<2x16x16x4xf32>
    tpu.vector_store %arg8[%c0_44, %c0_45, %c0_46, %c24], %12 {strides = array<i32>} : memref<2x16x16x36xf32, #tpu.memory_space<vmem>>, vector<2x16x16x4xf32>,
    %c0_47 = arith.constant 0 : index
    %c2_48 = arith.constant 2 : index
    %c1_49 = arith.constant 1 : index
    %c0_50 = arith.constant 0 : index
    %14 = vector.load %arg0[%c0_47, %c2_48, %c1_49, %c0_50] : memref<2x18x18x4xf32, #tpu.memory_space<vmem>>, vector<2x16x16x4xf32>
    %c0_51 = arith.constant 0 : index
    %c0_52 = arith.constant 0 : index
    %c0_53 = arith.constant 0 : index
    %c28 = arith.constant 28 : index
    %15 = vector.load %arg8[%c0_51, %c0_52, %c0_53, %c28] : memref<2x16x16x36xf32, #tpu.memory_space<vmem>>, vector<2x16x16x4xf32>
    tpu.vector_store %arg8[%c0_51, %c0_52, %c0_53, %c28], %14 {strides = array<i32>} : memref<2x16x16x36xf32, #tpu.memory_space<vmem>>, vector<2x16x16x4xf32>,
    %c0_54 = arith.constant 0 : index
    %c2_55 = arith.constant 2 : index
    %c2_56 = arith.constant 2 : index
    %c0_57 = arith.constant 0 : index
    %16 = vector.load %arg0[%c0_54, %c2_55, %c2_56, %c0_57] : memref<2x18x18x4xf32, #tpu.memory_space<vmem>>, vector<2x16x16x4xf32>
    %c0_58 = arith.constant 0 : index
    %c0_59 = arith.constant 0 : index
    %c0_60 = arith.constant 0 : index
    %c32 = arith.constant 32 : index
    %17 = vector.load %arg8[%c0_58, %c0_59, %c0_60, %c32] : memref<2x16x16x36xf32, #tpu.memory_space<vmem>>, vector<2x16x16x4xf32>
    tpu.vector_store %arg8[%c0_58, %c0_59, %c0_60, %c32], %16 {strides = array<i32>} : memref<2x16x16x36xf32, #tpu.memory_space<vmem>>, vector<2x16x16x4xf32>,
    %c0_61 = arith.constant 0 : index
    %c0_62 = arith.constant 0 : index
    %c0_63 = arith.constant 0 : index
    %c0_64 = arith.constant 0 : index
    %18 = vector.load %arg8[%c0_61, %c0_62, %c0_63, %c0_64] : memref<2x16x16x36xf32, #tpu.memory_space<vmem>>, vector<2x16x16x36xf32>
    %19 = vector.shape_cast %18 : vector<2x16x16x36xf32> to vector<512x36xf32>
    %c0_65 = arith.constant 0 : index
    %c0_66 = arith.constant 0 : index
    %20 = vector.load %arg1[%c0_65, %c0_66] : memref<36x128xf32, #tpu.memory_space<vmem>>, vector<36x128xf32>
    %cst = arith.constant dense<0.000000e+00> : vector<512x128xf32>
    %21 = tpu.matmul %19, %20, %cst {dimension_numbers = #tpu.dot_dimension_numbers<[1], [0], [0], [1], [0, 0, 1, 1], [], []>} : vector<512x36xf32>, vector<36x128xf32>, vector<512x128xf32> -> vector<512x128xf32>
    %cst_67 = arith.constant dense<0.000000e+00> : vector<128xf32>
    %22 = vector.multi_reduction <add>, %21, %cst_67 [0] : vector<512x128xf32> to vector<128xf32>
    %23 = vector.shape_cast %22 : vector<128xf32> to vector<1x128xf32>
    %24 = arith.mulf %21, %21 : vector<512x128xf32>
    %cst_68 = arith.constant dense<0.000000e+00> : vector<128xf32>
    %25 = vector.multi_reduction <add>, %24, %cst_68 [0] : vector<512x128xf32> to vector<128xf32>
    %26 = vector.shape_cast %25 : vector<128xf32> to vector<1x128xf32>
    %cst_69 = arith.constant 0.001953125 : f32
    %27 = vector.broadcast %cst_69 : f32 to vector<1x128xf32>
    %28 = arith.mulf %23, %27 : vector<1x128xf32>
    %cst_70 = arith.constant 0.001953125 : f32
    %29 = vector.broadcast %cst_70 : f32 to vector<1x128xf32>
    %30 = arith.mulf %26, %29 : vector<1x128xf32>
    %31 = arith.mulf %28, %28 : vector<1x128xf32>
    %32 = arith.subf %30, %31 : vector<1x128xf32>
    %c0_71 = arith.constant 0 : index
    %c0_72 = arith.constant 0 : index
    %33 = vector.load %arg2[%c0_71, %c0_72] : memref<1x128xf32, #tpu.memory_space<vmem>>, vector<1x128xf32>
    %cst_73 = arith.constant 9.99999974E-6 : f32
    %34 = vector.broadcast %cst_73 : f32 to vector<1x128xf32>
    %35 = arith.addf %32, %34 : vector<1x128xf32>
    %36 = math.rsqrt %35 : vector<1x128xf32>
    %37 = arith.mulf %33, %36 : vector<1x128xf32>
    %c0_74 = arith.constant 0 : index
    %c0_75 = arith.constant 0 : index
    %38 = vector.load %arg3[%c0_74, %c0_75] : memref<1x128xf32, #tpu.memory_space<vmem>>, vector<1x128xf32>
    %39 = arith.mulf %28, %37 : vector<1x128xf32>
    %40 = arith.subf %38, %39 : vector<1x128xf32>
    %41 = vector.broadcast %37 : vector<1x128xf32> to vector<512x128xf32>
    %42 = arith.mulf %21, %41 : vector<512x128xf32>
    %43 = vector.broadcast %40 : vector<1x128xf32> to vector<512x128xf32>
    %44 = arith.addf %42, %43 : vector<512x128xf32>
    %cst_76 = arith.constant 0.000000e+00 : f32
    %45 = vector.broadcast %cst_76 : f32 to vector<512x128xf32>
    %46 = arith.maximumf %44, %45 : vector<512x128xf32>
    %cst_77 = arith.constant 0.000000e+00 : f32
    %47 = vector.broadcast %cst_77 : f32 to vector<2x1x18x128xf32>
    %cst_78 = arith.constant 0.000000e+00 : f32
    %48 = vector.broadcast %cst_78 : f32 to vector<2x16x1x128xf32>
    %c0_79 = arith.constant 0 : index
    %c0_80 = arith.constant 0 : index
    %c0_81 = arith.constant 0 : index
    %c0_82 = arith.constant 0 : index
    %49 = vector.load %arg9[%c0_79, %c0_80, %c0_81, %c0_82] : memref<2x18x18x128xf32, #tpu.memory_space<vmem>>, vector<2x1x18x128xf32>
    tpu.vector_store %arg9[%c0_79, %c0_80, %c0_81, %c0_82], %47 {strides = array<i32>} : memref<2x18x18x128xf32, #tpu.memory_space<vmem>>, vector<2x1x18x128xf32>,
    %c0_83 = arith.constant 0 : index
    %c17 = arith.constant 17 : index
    %c0_84 = arith.constant 0 : index
    %c0_85 = arith.constant 0 : index
    %50 = vector.load %arg9[%c0_83, %c17, %c0_84, %c0_85] : memref<2x18x18x128xf32, #tpu.memory_space<vmem>>, vector<2x1x18x128xf32>
    tpu.vector_store %arg9[%c0_83, %c17, %c0_84, %c0_85], %47 {strides = array<i32>} : memref<2x18x18x128xf32, #tpu.memory_space<vmem>>, vector<2x1x18x128xf32>,
    %c0_86 = arith.constant 0 : index
    %c1_87 = arith.constant 1 : index
    %c0_88 = arith.constant 0 : index
    %c0_89 = arith.constant 0 : index
    %51 = vector.load %arg9[%c0_86, %c1_87, %c0_88, %c0_89] : memref<2x18x18x128xf32, #tpu.memory_space<vmem>>, vector<2x16x1x128xf32>
    tpu.vector_store %arg9[%c0_86, %c1_87, %c0_88, %c0_89], %48 {strides = array<i32>} : memref<2x18x18x128xf32, #tpu.memory_space<vmem>>, vector<2x16x1x128xf32>,
    %c0_90 = arith.constant 0 : index
    %c1_91 = arith.constant 1 : index
    %c17_92 = arith.constant 17 : index
    %c0_93 = arith.constant 0 : index
    %52 = vector.load %arg9[%c0_90, %c1_91, %c17_92, %c0_93] : memref<2x18x18x128xf32, #tpu.memory_space<vmem>>, vector<2x16x1x128xf32>
    tpu.vector_store %arg9[%c0_90, %c1_91, %c17_92, %c0_93], %48 {strides = array<i32>} : memref<2x18x18x128xf32, #tpu.memory_space<vmem>>, vector<2x16x1x128xf32>,
    %53 = vector.shape_cast %46 : vector<512x128xf32> to vector<2x16x16x128xf32>
    %c0_94 = arith.constant 0 : index
    %c1_95 = arith.constant 1 : index
    %c1_96 = arith.constant 1 : index
    %c0_97 = arith.constant 0 : index
    %54 = vector.load %arg9[%c0_94, %c1_95, %c1_96, %c0_97] : memref<2x18x18x128xf32, #tpu.memory_space<vmem>>, vector<2x16x16x128xf32>
    tpu.vector_store %arg9[%c0_94, %c1_95, %c1_96, %c0_97], %53 {strides = array<i32>} : memref<2x18x18x128xf32, #tpu.memory_space<vmem>>, vector<2x16x16x128xf32>,
    %c0_98 = arith.constant 0 : index
    %c0_99 = arith.constant 0 : index
    %c0_100 = arith.constant 0 : index
    %c0_101 = arith.constant 0 : index
    %55 = vector.load %arg9[%c0_98, %c0_99, %c0_100, %c0_101] : memref<2x18x18x128xf32, #tpu.memory_space<vmem>>, vector<2x16x16x128xf32>
    %c0_102 = arith.constant 0 : index
    %c0_103 = arith.constant 0 : index
    %c0_104 = arith.constant 0 : index
    %c0_105 = arith.constant 0 : index
    %56 = vector.load %arg10[%c0_102, %c0_103, %c0_104, %c0_105] : memref<2x16x16x1152xf32, #tpu.memory_space<vmem>>, vector<2x16x16x128xf32>
    tpu.vector_store %arg10[%c0_102, %c0_103, %c0_104, %c0_105], %55 {strides = array<i32>} : memref<2x16x16x1152xf32, #tpu.memory_space<vmem>>, vector<2x16x16x128xf32>,
    %c0_106 = arith.constant 0 : index
    %c0_107 = arith.constant 0 : index
    %c1_108 = arith.constant 1 : index
    %c0_109 = arith.constant 0 : index
    %57 = vector.load %arg9[%c0_106, %c0_107, %c1_108, %c0_109] : memref<2x18x18x128xf32, #tpu.memory_space<vmem>>, vector<2x16x16x128xf32>
    %c0_110 = arith.constant 0 : index
    %c0_111 = arith.constant 0 : index
    %c0_112 = arith.constant 0 : index
    %c128 = arith.constant 128 : index
    %58 = vector.load %arg10[%c0_110, %c0_111, %c0_112, %c128] : memref<2x16x16x1152xf32, #tpu.memory_space<vmem>>, vector<2x16x16x128xf32>
    tpu.vector_store %arg10[%c0_110, %c0_111, %c0_112, %c128], %57 {strides = array<i32>} : memref<2x16x16x1152xf32, #tpu.memory_space<vmem>>, vector<2x16x16x128xf32>,
    %c0_113 = arith.constant 0 : index
    %c0_114 = arith.constant 0 : index
    %c2_115 = arith.constant 2 : index
    %c0_116 = arith.constant 0 : index
    %59 = vector.load %arg9[%c0_113, %c0_114, %c2_115, %c0_116] : memref<2x18x18x128xf32, #tpu.memory_space<vmem>>, vector<2x16x16x128xf32>
    %c0_117 = arith.constant 0 : index
    %c0_118 = arith.constant 0 : index
    %c0_119 = arith.constant 0 : index
    %c256 = arith.constant 256 : index
    %60 = vector.load %arg10[%c0_117, %c0_118, %c0_119, %c256] : memref<2x16x16x1152xf32, #tpu.memory_space<vmem>>, vector<2x16x16x128xf32>
    tpu.vector_store %arg10[%c0_117, %c0_118, %c0_119, %c256], %59 {strides = array<i32>} : memref<2x16x16x1152xf32, #tpu.memory_space<vmem>>, vector<2x16x16x128xf32>,
    %c0_120 = arith.constant 0 : index
    %c1_121 = arith.constant 1 : index
    %c0_122 = arith.constant 0 : index
    %c0_123 = arith.constant 0 : index
    %61 = vector.load %arg9[%c0_120, %c1_121, %c0_122, %c0_123] : memref<2x18x18x128xf32, #tpu.memory_space<vmem>>, vector<2x16x16x128xf32>
    %c0_124 = arith.constant 0 : index
    %c0_125 = arith.constant 0 : index
    %c0_126 = arith.constant 0 : index
    %c384 = arith.constant 384 : index
    %62 = vector.load %arg10[%c0_124, %c0_125, %c0_126, %c384] : memref<2x16x16x1152xf32, #tpu.memory_space<vmem>>, vector<2x16x16x128xf32>
    tpu.vector_store %arg10[%c0_124, %c0_125, %c0_126, %c384], %61 {strides = array<i32>} : memref<2x16x16x1152xf32, #tpu.memory_space<vmem>>, vector<2x16x16x128xf32>,
    %c0_127 = arith.constant 0 : index
    %c1_128 = arith.constant 1 : index
    %c1_129 = arith.constant 1 : index
    %c0_130 = arith.constant 0 : index
    %63 = vector.load %arg9[%c0_127, %c1_128, %c1_129, %c0_130] : memref<2x18x18x128xf32, #tpu.memory_space<vmem>>, vector<2x16x16x128xf32>
    %c0_131 = arith.constant 0 : index
    %c0_132 = arith.constant 0 : index
    %c0_133 = arith.constant 0 : index
    %c512 = arith.constant 512 : index
    %64 = vector.load %arg10[%c0_131, %c0_132, %c0_133, %c512] : memref<2x16x16x1152xf32, #tpu.memory_space<vmem>>, vector<2x16x16x128xf32>
    tpu.vector_store %arg10[%c0_131, %c0_132, %c0_133, %c512], %63 {strides = array<i32>} : memref<2x16x16x1152xf32, #tpu.memory_space<vmem>>, vector<2x16x16x128xf32>,
    %c0_134 = arith.constant 0 : index
    %c1_135 = arith.constant 1 : index
    %c2_136 = arith.constant 2 : index
    %c0_137 = arith.constant 0 : index
    %65 = vector.load %arg9[%c0_134, %c1_135, %c2_136, %c0_137] : memref<2x18x18x128xf32, #tpu.memory_space<vmem>>, vector<2x16x16x128xf32>
    %c0_138 = arith.constant 0 : index
    %c0_139 = arith.constant 0 : index
    %c0_140 = arith.constant 0 : index
    %c640 = arith.constant 640 : index
    %66 = vector.load %arg10[%c0_138, %c0_139, %c0_140, %c640] : memref<2x16x16x1152xf32, #tpu.memory_space<vmem>>, vector<2x16x16x128xf32>
    tpu.vector_store %arg10[%c0_138, %c0_139, %c0_140, %c640], %65 {strides = array<i32>} : memref<2x16x16x1152xf32, #tpu.memory_space<vmem>>, vector<2x16x16x128xf32>,
    %c0_141 = arith.constant 0 : index
    %c2_142 = arith.constant 2 : index
    %c0_143 = arith.constant 0 : index
    %c0_144 = arith.constant 0 : index
    %67 = vector.load %arg9[%c0_141, %c2_142, %c0_143, %c0_144] : memref<2x18x18x128xf32, #tpu.memory_space<vmem>>, vector<2x16x16x128xf32>
    %c0_145 = arith.constant 0 : index
    %c0_146 = arith.constant 0 : index
    %c0_147 = arith.constant 0 : index
    %c768 = arith.constant 768 : index
    %68 = vector.load %arg10[%c0_145, %c0_146, %c0_147, %c768] : memref<2x16x16x1152xf32, #tpu.memory_space<vmem>>, vector<2x16x16x128xf32>
    tpu.vector_store %arg10[%c0_145, %c0_146, %c0_147, %c768], %67 {strides = array<i32>} : memref<2x16x16x1152xf32, #tpu.memory_space<vmem>>, vector<2x16x16x128xf32>,
    %c0_148 = arith.constant 0 : index
    %c2_149 = arith.constant 2 : index
    %c1_150 = arith.constant 1 : index
    %c0_151 = arith.constant 0 : index
    %69 = vector.load %arg9[%c0_148, %c2_149, %c1_150, %c0_151] : memref<2x18x18x128xf32, #tpu.memory_space<vmem>>, vector<2x16x16x128xf32>
    %c0_152 = arith.constant 0 : index
    %c0_153 = arith.constant 0 : index
    %c0_154 = arith.constant 0 : index
    %c896 = arith.constant 896 : index
    %70 = vector.load %arg10[%c0_152, %c0_153, %c0_154, %c896] : memref<2x16x16x1152xf32, #tpu.memory_space<vmem>>, vector<2x16x16x128xf32>
    tpu.vector_store %arg10[%c0_152, %c0_153, %c0_154, %c896], %69 {strides = array<i32>} : memref<2x16x16x1152xf32, #tpu.memory_space<vmem>>, vector<2x16x16x128xf32>,
    %c0_155 = arith.constant 0 : index
    %c2_156 = arith.constant 2 : index
    %c2_157 = arith.constant 2 : index
    %c0_158 = arith.constant 0 : index
    %71 = vector.load %arg9[%c0_155, %c2_156, %c2_157, %c0_158] : memref<2x18x18x128xf32, #tpu.memory_space<vmem>>, vector<2x16x16x128xf32>
    %c0_159 = arith.constant 0 : index
    %c0_160 = arith.constant 0 : index
    %c0_161 = arith.constant 0 : index
    %c1024 = arith.constant 1024 : index
    %72 = vector.load %arg10[%c0_159, %c0_160, %c0_161, %c1024] : memref<2x16x16x1152xf32, #tpu.memory_space<vmem>>, vector<2x16x16x128xf32>
    tpu.vector_store %arg10[%c0_159, %c0_160, %c0_161, %c1024], %71 {strides = array<i32>} : memref<2x16x16x1152xf32, #tpu.memory_space<vmem>>, vector<2x16x16x128xf32>,
    %c0_162 = arith.constant 0 : index
    %c0_163 = arith.constant 0 : index
    %c0_164 = arith.constant 0 : index
    %c0_165 = arith.constant 0 : index
    %73 = vector.load %arg10[%c0_162, %c0_163, %c0_164, %c0_165] : memref<2x16x16x1152xf32, #tpu.memory_space<vmem>>, vector<2x16x16x1152xf32>
    %74 = vector.shape_cast %73 : vector<2x16x16x1152xf32> to vector<512x1152xf32>
    %c0_166 = arith.constant 0 : index
    %c0_167 = arith.constant 0 : index
    %75 = vector.load %arg4[%c0_166, %c0_167] : memref<1152x128xf32, #tpu.memory_space<vmem>>, vector<1152x128xf32>
    %cst_168 = arith.constant dense<0.000000e+00> : vector<512x128xf32>
    %76 = tpu.matmul %74, %75, %cst_168 {dimension_numbers = #tpu.dot_dimension_numbers<[1], [0], [0], [1], [0, 0, 1, 1], [], []>} : vector<512x1152xf32>, vector<1152x128xf32>, vector<512x128xf32> -> vector<512x128xf32>
    %cst_169 = arith.constant dense<0.000000e+00> : vector<128xf32>
    %77 = vector.multi_reduction <add>, %76, %cst_169 [0] : vector<512x128xf32> to vector<128xf32>
    %78 = vector.shape_cast %77 : vector<128xf32> to vector<1x128xf32>
    %79 = arith.mulf %76, %76 : vector<512x128xf32>
    %cst_170 = arith.constant dense<0.000000e+00> : vector<128xf32>
    %80 = vector.multi_reduction <add>, %79, %cst_170 [0] : vector<512x128xf32> to vector<128xf32>
    %81 = vector.shape_cast %80 : vector<128xf32> to vector<1x128xf32>
    %cst_171 = arith.constant 0.001953125 : f32
    %82 = vector.broadcast %cst_171 : f32 to vector<1x128xf32>
    %83 = arith.mulf %78, %82 : vector<1x128xf32>
    %cst_172 = arith.constant 0.001953125 : f32
    %84 = vector.broadcast %cst_172 : f32 to vector<1x128xf32>
    %85 = arith.mulf %81, %84 : vector<1x128xf32>
    %86 = arith.mulf %83, %83 : vector<1x128xf32>
    %87 = arith.subf %85, %86 : vector<1x128xf32>
    %c0_173 = arith.constant 0 : index
    %c0_174 = arith.constant 0 : index
    %88 = vector.load %arg5[%c0_173, %c0_174] : memref<1x128xf32, #tpu.memory_space<vmem>>, vector<1x128xf32>
    %cst_175 = arith.constant 9.99999974E-6 : f32
    %89 = vector.broadcast %cst_175 : f32 to vector<1x128xf32>
    %90 = arith.addf %87, %89 : vector<1x128xf32>
    %91 = math.rsqrt %90 : vector<1x128xf32>
    %92 = arith.mulf %88, %91 : vector<1x128xf32>
    %c0_176 = arith.constant 0 : index
    %c0_177 = arith.constant 0 : index
    %93 = vector.load %arg6[%c0_176, %c0_177] : memref<1x128xf32, #tpu.memory_space<vmem>>, vector<1x128xf32>
    %94 = arith.mulf %83, %92 : vector<1x128xf32>
    %95 = arith.subf %93, %94 : vector<1x128xf32>
    %96 = vector.broadcast %92 : vector<1x128xf32> to vector<512x128xf32>
    %97 = arith.mulf %76, %96 : vector<512x128xf32>
    %98 = vector.broadcast %95 : vector<1x128xf32> to vector<512x128xf32>
    %99 = arith.addf %97, %98 : vector<512x128xf32>
    %cst_178 = arith.constant 0.000000e+00 : f32
    %100 = vector.broadcast %cst_178 : f32 to vector<512x128xf32>
    %101 = arith.maximumf %99, %100 : vector<512x128xf32>
    %c0_179 = arith.constant 0 : index
    %c0_180 = arith.constant 0 : index
    %102 = vector.load %arg7[%c0_179, %c0_180] : memref<512x128xf32, #tpu.memory_space<vmem>>, vector<512x128xf32>
    tpu.vector_store %arg7[%c0_179, %c0_180], %101 {strides = array<i32>} : memref<512x128xf32, #tpu.memory_space<vmem>>, vector<512x128xf32>,
    return
  }
}

</mosaic_0001>

<llo_original>
// kernel: tpu_custom_call.1
$region0: #{tpu_custom_call.1}
  #allocation0 [shape = 'u32[]', space=smem, size = 0x4, offset = 0x4, fixed_abs, tag = 'smem constant byte address 0x4 - core index']
  #allocation1 [shape = 'u32[144,128]{1,0:T(1,128)}', space=vmem, size = 0x12000, scoped, tag = 'internal scratch']
  #allocation2 [shape = 'f32[2,16,16,36]{3,2,1,0:T(8,128)}', space=vmem, size = 0x40000, scoped, tag = 'scratch operand']
  #allocation3 [shape = 'f32[2,18,18,128]{3,2,1,0:T(8,128)}', space=vmem, size = 0x6c000, scoped, tag = 'scratch operand']
  #allocation4 [shape = 'f32[2,16,16,1152]{3,2,1,0:T(8,128)}', space=vmem, size = 0x240000, scoped, tag = 'scratch operand']
  %s0 = inlined_call_operand.vmem [shape: f32[2,18,18,4], index: 0, kind: input, shape index: {}]
  %s1 = inlined_call_operand.vmem [shape: f32[36,128], index: 1, kind: input, shape index: {}]
  %s2 = inlined_call_operand.vmem [shape: f32[1,128], index: 2, kind: input, shape index: {}]
  %s3 = inlined_call_operand.vmem [shape: f32[1,128], index: 3, kind: input, shape index: {}]
  %s4 = inlined_call_operand.hbm [shape: f32[1152,128], index: 4, kind: input, shape index: {}]
  %s5 = inlined_call_operand.vmem [shape: f32[1,128], index: 5, kind: input, shape index: {}]
  %s6 = inlined_call_operand.vmem [shape: f32[1,128], index: 6, kind: input, shape index: {}]
  %s7 = inlined_call_operand.hbm [shape: f32[512,128], index: 7, kind: output, shape index: {}]
  %s8 = sld [smem:[#allocation0]]
  $region42: #{tpu_custom_call.1} parent=0
    _
  %s10 = ssub.s32 1, %s8
  %s11 = scalar_select 0, %s10, %s8
  $region1: #{tpu_custom_call.1} parent=0
    #allocation5 [shape = 'u8[589824]{0}', space=vmem, size = 0x90000, scoped, tag = 'input window, operand 4, single buffered']
    #allocation6 [shape = 's32[1]{0}', space=sflag, size = 0x4, scoped, tag = 'scoped memory for tpu_custom_call.1']
    #allocation7 [shape = 's32[1]{0}', space=sflag, size = 0x4, scoped, tag = 'scoped memory for tpu_custom_call.1']
    #allocation8 [shape = 'u8[262144]{0}', space=vmem, size = 0x40000, scoped, tag = 'output window, operand 0, single buffered']
    %12 = vsyncpa [#allocation6], 0
    %13 = vsyncpa [#allocation7], 0
    // Predicated region
    $region2: #{tpu_custom_call.1} parent=1 // pred_check
      _
    $region3: #{tpu_custom_call.1} parent=1 // pred_check_branch
      %15 = sbr.rel (0) target = $region5
    $region4: #{tpu_custom_call.1} parent=1 // pred_region
      _
    $region5: #{tpu_custom_call.1} parent=1 // pred_fallthru
      _
    // Predicated region
    $region6: #{tpu_custom_call.1} parent=1 // pred_check
      _
    $region7: #{tpu_custom_call.1} parent=1 // pred_check_branch
      %17 = sbr.rel (0) target = $region9
    $region8: #{tpu_custom_call.1} parent=1 // pred_region
      _
    $region9: #{tpu_custom_call.1} parent=1 // pred_fallthru
      _
    // Predicated region
    $region10: #{tpu_custom_call.1} parent=1 // pred_check
      _
    $region11: #{tpu_custom_call.1} parent=1 // pred_check_branch
      %19 = sbr.rel (0) target = $region13
    $region12: #{tpu_custom_call.1} parent=1 // pred_region
      _
    $region13: #{tpu_custom_call.1} parent=1 // pred_fallthru
      _
    // Predicated region
    $region14: #{tpu_custom_call.1} parent=1 // pred_check
      _
    $region15: #{tpu_custom_call.1} parent=1 // pred_check_branch
      %21 = sbr.rel (0) target = $region17
    $region16: #{tpu_custom_call.1} parent=1 // pred_region
      _
    $region17: #{tpu_custom_call.1} parent=1 // pred_fallthru
      _
    // Predicated region
    $region18: #{tpu_custom_call.1} parent=1 // pred_check
      _
    $region19: #{tpu_custom_call.1} parent=1 // pred_check_branch
      %23 = sbr.rel (0) target = $region21
    $region20: #{tpu_custom_call.1} parent=1 // pred_region
      %s25 = ssub.s32 18432, 18432
      %26 = vsyncadd [#allocation6], %s25
      %s27 = sshll.u32 [#allocation5], 4
      %s28 = int_to_ptr.vmem [resolvable:$true] %s27
      %33 = dma.hbm_to_vmem [thread:$0]  %s4, 18432, %s28, [#allocation6], 128, 128, 8
    $region21: #{tpu_custom_call.1} parent=1 // pred_fallthru
      _
    // Predicated region
    $region22: #{tpu_custom_call.1} parent=1 // pred_check
      _
    $region23: #{tpu_custom_call.1} parent=1 // pred_check_branch
      %35 = sbr.rel (0) target = $region25
    $region24: #{tpu_custom_call.1} parent=1 // pred_region
      _
    $region25: #{tpu_custom_call.1} parent=1 // pred_fallthru
      _
    // Predicated region
    $region26: #{tpu_custom_call.1} parent=1 // pred_check
      _
    $region27: #{tpu_custom_call.1} parent=1 // pred_check_branch
      %37 = sbr.rel (0) target = $region29
    $region28: #{tpu_custom_call.1} parent=1 // pred_region
      _
    $region29: #{tpu_custom_call.1} parent=1 // pred_fallthru
      _
    // Predicated region
    $region30: #{tpu_custom_call.1} parent=1 // pred_check
      _
    $region31: #{tpu_custom_call.1} parent=1 // pred_check_branch
      %39 = sbr.rel (0) target = $region33
    $region32: #{tpu_custom_call.1} parent=1 // pred_region
      %40 = dma.done [#allocation6], 18432
    $region33: #{tpu_custom_call.1} parent=1 // pred_fallthru
      _
    %v41 = vld [vmem:[%s0] sm:$0xff]
    %v42 = vld [vmem:[%s0 + $0x8] sm:$0xff]
    %v43 = vld [vmem:[%s0 + $0x18] sm:$0xff]
    %v44 = vld [vmem:[%s0 + $0x20] sm:$0xff]
    %v45 = vld [vmem:[%s0 + $0x30] sm:$0xff]
    %v46 = vld [vmem:[%s0 + $0x38] sm:$0xff]
    %v47 = vld [vmem:[%s0 + $0x48] sm:$0xff]
    %v48 = vld [vmem:[%s0 + $0x50] sm:$0xff]
    %v49 = vld [vmem:[%s0 + $0x60] sm:$0xff]
    %v50 = vld [vmem:[%s0 + $0x68] sm:$0xff]
    %v51 = vld [vmem:[%s0 + $0x78] sm:$0xff]
    %v52 = vld [vmem:[%s0 + $0x80] sm:$0xff]
    %v53 = vld [vmem:[%s0 + $0x90] sm:$0xff]
    %v54 = vld [vmem:[%s0 + $0x98] sm:$0xff]
    %v55 = vld [vmem:[%s0 + $0xa8] sm:$0xff]
    %v56 = vld [vmem:[%s0 + $0xb0] sm:$0xff]
    %v57 = vld [vmem:[%s0 + $0xc0] sm:$0xff]
    %v58 = vld [vmem:[%s0 + $0xc8] sm:$0xff]
    %v59 = vld [vmem:[%s0 + $0xd8] sm:$0xff]
    %v60 = vld [vmem:[%s0 + $0xe0] sm:$0xff]
    %v61 = vld [vmem:[%s0 + $0xf0] sm:$0xff]
    %v62 = vld [vmem:[%s0 + $0xf8] sm:$0xff]
    %v63 = vld [vmem:[%s0 + $0x108] sm:$0xff]
    %v64 = vld [vmem:[%s0 + $0x110] sm:$0xff]
    %v65 = vld [vmem:[%s0 + $0x120] sm:$0xff]
    %v66 = vld [vmem:[%s0 + $0x128] sm:$0xff]
    %v67 = vld [vmem:[%s0 + $0x138] sm:$0xff]
    %v68 = vld [vmem:[%s0 + $0x140] sm:$0xff]
    %v69 = vld [vmem:[%s0 + $0x150] sm:$0xff]
    %v70 = vld [vmem:[%s0 + $0x158] sm:$0xff]
    %v71 = vld [vmem:[%s0 + $0x168] sm:$0xff]
    %v72 = vld [vmem:[%s0 + $0x170] sm:$0xff]
    %v73 = vld [vmem:[%s0 + $0x1b0] sm:$0xff]
    %v74 = vld [vmem:[%s0 + $0x1b8] sm:$0xff]
    %v75 = vld [vmem:[%s0 + $0x1c8] sm:$0xff]
    %v76 = vld [vmem:[%s0 + $0x1d0] sm:$0xff]
    %v77 = vld [vmem:[%s0 + $0x1e0] sm:$0xff]
    %v78 = vld [vmem:[%s0 + $0x1e8] sm:$0xff]
    %v79 = vld [vmem:[%s0 + $0x1f8] sm:$0xff]
    %v80 = vld [vmem:[%s0 + $0x200] sm:$0xff]
    %v81 = vld [vmem:[%s0 + $0x210] sm:$0xff]
    %v82 = vld [vmem:[%s0 + $0x218] sm:$0xff]
    %v83 = vld [vmem:[%s0 + $0x228] sm:$0xff]
    %v84 = vld [vmem:[%s0 + $0x230] sm:$0xff]
    %v85 = vld [vmem:[%s0 + $0x240] sm:$0xff]
    %v86 = vld [vmem:[%s0 + $0x248] sm:$0xff]
    %v87 = vld [vmem:[%s0 + $0x258] sm:$0xff]
    %v88 = vld [vmem:[%s0 + $0x260] sm:$0xff]
    %v89 = vld [vmem:[%s0 + $0x270] sm:$0xff]
    %v90 = vld [vmem:[%s0 + $0x278] sm:$0xff]
    %v91 = vld [vmem:[%s0 + $0x288] sm:$0xff]
    %v92 = vld [vmem:[%s0 + $0x290] sm:$0xff]
    %v93 = vld [vmem:[%s0 + $0x2a0] sm:$0xff]
    %v94 = vld [vmem:[%s0 + $0x2a8] sm:$0xff]
    %v95 = vld [vmem:[%s0 + $0x2b8] sm:$0xff]
    %v96 = vld [vmem:[%s0 + $0x2c0] sm:$0xff]
    %v97 = vld [vmem:[%s0 + $0x2d0] sm:$0xff]
    %v98 = vld [vmem:[%s0 + $0x2d8] sm:$0xff]
    %v99 = vld [vmem:[%s0 + $0x2e8] sm:$0xff]
    %v100 = vld [vmem:[%s0 + $0x2f0] sm:$0xff]
    %v101 = vld [vmem:[%s0 + $0x300] sm:$0xff]
    %v102 = vld [vmem:[%s0 + $0x308] sm:$0xff]
    %v103 = vld [vmem:[%s0 + $0x318] sm:$0xff]
    %v104 = vld [vmem:[%s0 + $0x320] sm:$0xff]
    %vm105 = vcmask 31744
    %106 = vst.msk [vmem:[#allocation2] sm:$0xff] %vm105, %v41
    %107 = vst.msk [vmem:[#allocation2 + $0x8] sm:$0xff] %vm105, %v42
    %108 = vst.msk [vmem:[#allocation2 + $0x10] sm:$0xff] %vm105, %v43
    %109 = vst.msk [vmem:[#allocation2 + $0x18] sm:$0xff] %vm105, %v44
    %110 = vst.msk [vmem:[#allocation2 + $0x20] sm:$0xff] %vm105, %v45
    %111 = vst.msk [vmem:[#allocation2 + $0x28] sm:$0xff] %vm105, %v46
    %112 = vst.msk [vmem:[#allocation2 + $0x30] sm:$0xff] %vm105, %v47
    %113 = vst.msk [vmem:[#allocation2 + $0x38] sm:$0xff] %vm105, %v48
    %114 = vst.msk [vmem:[#allocation2 + $0x40] sm:$0xff] %vm105, %v49
    %115 = vst.msk [vmem:[#allocation2 + $0x48] sm:$0xff] %vm105, %v50
    %116 = vst.msk [vmem:[#allocation2 + $0x50] sm:$0xff] %vm105, %v51
    %117 = vst.msk [vmem:[#allocation2 + $0x58] sm:$0xff] %vm105, %v52
    %118 = vst.msk [vmem:[#allocation2 + $0x60] sm:$0xff] %vm105, %v53
    %119 = vst.msk [vmem:[#allocation2 + $0x68] sm:$0xff] %vm105, %v54
    %120 = vst.msk [vmem:[#allocation2 + $0x70] sm:$0xff] %vm105, %v55
    %121 = vst.msk [vmem:[#allocation2 + $0x78] sm:$0xff] %vm105, %v56
    %122 = vst.msk [vmem:[#allocation2 + $0x80] sm:$0xff] %vm105, %v57
    %123 = vst.msk [vmem:[#allocation2 + $0x88] sm:$0xff] %vm105, %v58
    %124 = vst.msk [vmem:[#allocation2 + $0x90] sm:$0xff] %vm105, %v59
    %125 = vst.msk [vmem:[#allocation2 + $0x98] sm:$0xff] %vm105, %v60
    %126 = vst.msk [vmem:[#allocation2 + $0xa0] sm:$0xff] %vm105, %v61
    %127 = vst.msk [vmem:[#allocation2 + $0xa8] sm:$0xff] %vm105, %v62
    %128 = vst.msk [vmem:[#allocation2 + $0xb0] sm:$0xff] %vm105, %v63
    %129 = vst.msk [vmem:[#allocation2 + $0xb8] sm:$0xff] %vm105, %v64
    %130 = vst.msk [vmem:[#allocation2 + $0xc0] sm:$0xff] %vm105, %v65
    %131 = vst.msk [vmem:[#allocation2 + $0xc8] sm:$0xff] %vm105, %v66
    %132 = vst.msk [vmem:[#allocation2 + $0xd0] sm:$0xff] %vm105, %v67
    %133 = vst.msk [vmem:[#allocation2 + $0xd8] sm:$0xff] %vm105, %v68
    %134 = vst.msk [vmem:[#allocation2 + $0xe0] sm:$0xff] %vm105, %v69
    %135 = vst.msk [vmem:[#allocation2 + $0xe8] sm:$0xff] %vm105, %v70
    %136 = vst.msk [vmem:[#allocation2 + $0xf0] sm:$0xff] %vm105, %v71
    %137 = vst.msk [vmem:[#allocation2 + $0xf8] sm:$0xff] %vm105, %v72
    %138 = vst.msk [vmem:[#allocation2 + $0x100] sm:$0xff] %vm105, %v73
    %139 = vst.msk [vmem:[#allocation2 + $0x108] sm:$0xff] %vm105, %v74
    %140 = vst.msk [vmem:[#allocation2 + $0x110] sm:$0xff] %vm105, %v75
    %141 = vst.msk [vmem:[#allocation2 + $0x118] sm:$0xff] %vm105, %v76
    %142 = vst.msk [vmem:[#allocation2 + $0x120] sm:$0xff] %vm105, %v77
    %143 = vst.msk [vmem:[#allocation2 + $0x128] sm:$0xff] %vm105, %v78
    %144 = vst.msk [vmem:[#allocation2 + $0x130] sm:$0xff] %vm105, %v79
    %145 = vst.msk [vmem:[#allocation2 + $0x138] sm:$0xff] %vm105, %v80
    %146 = vst.msk [vmem:[#allocation2 + $0x140] sm:$0xff] %vm105, %v81
    %147 = vst.msk [vmem:[#allocation2 + $0x148] sm:$0xff] %vm105, %v82
    %148 = vst.msk [vmem:[#allocation2 + $0x150] sm:$0xff] %vm105, %v83
    %149 = vst.msk [vmem:[#allocation2 + $0x158] sm:$0xff] %vm105, %v84
    %150 = vst.msk [vmem:[#allocation2 + $0x160] sm:$0xff] %vm105, %v85
    %151 = vst.msk [vmem:[#allocation2 + $0x168] sm:$0xff] %vm105, %v86
    %152 = vst.msk [vmem:[#allocation2 + $0x170] sm:$0xff] %vm105, %v87
    %153 = vst.msk [vmem:[#allocation2 + $0x178] sm:$0xff] %vm105, %v88
    %154 = vst.msk [vmem:[#allocation2 + $0x180] sm:$0xff] %vm105, %v89
    %155 = vst.msk [vmem:[#allocation2 + $0x188] sm:$0xff] %vm105, %v90
    %156 = vst.msk [vmem:[#allocation2 + $0x190] sm:$0xff] %vm105, %v91
    %157 = vst.msk [vmem:[#allocation2 + $0x198] sm:$0xff] %vm105, %v92
    %158 = vst.msk [vmem:[#allocation2 + $0x1a0] sm:$0xff] %vm105, %v93
    %159 = vst.msk [vmem:[#allocation2 + $0x1a8] sm:$0xff] %vm105, %v94
    %160 = vst.msk [vmem:[#allocation2 + $0x1b0] sm:$0xff] %vm105, %v95
    %161 = vst.msk [vmem:[#allocation2 + $0x1b8] sm:$0xff] %vm105, %v96
    %162 = vst.msk [vmem:[#allocation2 + $0x1c0] sm:$0xff] %vm105, %v97
    %163 = vst.msk [vmem:[#allocation2 + $0x1c8] sm:$0xff] %vm105, %v98
    %164 = vst.msk [vmem:[#allocation2 + $0x1d0] sm:$0xff] %vm105, %v99
    %165 = vst.msk [vmem:[#allocation2 + $0x1d8] sm:$0xff] %vm105, %v100
    %166 = vst.msk [vmem:[#allocation2 + $0x1e0] sm:$0xff] %vm105, %v101
    %167 = vst.msk [vmem:[#allocation2 + $0x1e8] sm:$0xff] %vm105, %v102
    %168 = vst.msk [vmem:[#allocation2 + $0x1f0] sm:$0xff] %vm105, %v103
    %169 = vst.msk [vmem:[#allocation2 + $0x1f8] sm:$0xff] %vm105, %v104
    %v170 = vld [vmem:[%s0 + $0x1] sm:$0xff]
    %v171 = vld [vmem:[%s0 + $0x9] sm:$0xff]
    %v172 = vld [vmem:[%s0 + $0x19] sm:$0xff]
    %v173 = vld [vmem:[%s0 + $0x21] sm:$0xff]
    %v174 = vld [vmem:[%s0 + $0x31] sm:$0xff]
    %v175 = vld [vmem:[%s0 + $0x39] sm:$0xff]
    %v176 = vld [vmem:[%s0 + $0x49] sm:$0xff]
    %v177 = vld [vmem:[%s0 + $0x51] sm:$0xff]
    %v178 = vld [vmem:[%s0 + $0x61] sm:$0xff]
    %v179 = vld [vmem:[%s0 + $0x69] sm:$0xff]
    %v180 = vld [vmem:[%s0 + $0x79] sm:$0xff]
    %v181 = vld [vmem:[%s0 + $0x81] sm:$0xff]
    %v182 = vld [vmem:[%s0 + $0x91] sm:$0xff]
    %v183 = vld [vmem:[%s0 + $0x99] sm:$0xff]
    %v184 = vld [vmem:[%s0 + $0xa9] sm:$0xff]
    %v185 = vld [vmem:[%s0 + $0xb1] sm:$0xff]
    %v186 = vld [vmem:[%s0 + $0xc1] sm:$0xff]
    %v187 = vld [vmem:[%s0 + $0xc9] sm:$0xff]
    %v188 = vld [vmem:[%s0 + $0xd9] sm:$0xff]
    %v189 = vld [vmem:[%s0 + $0xe1] sm:$0xff]
    %v190 = vld [vmem:[%s0 + $0xf1] sm:$0xff]
    %v191 = vld [vmem:[%s0 + $0xf9] sm:$0xff]
    %v192 = vld [vmem:[%s0 + $0x109] sm:$0xff]
    %v193 = vld [vmem:[%s0 + $0x111] sm:$0xff]
    %v194 = vld [vmem:[%s0 + $0x121] sm:$0xff]
    %v195 = vld [vmem:[%s0 + $0x129] sm:$0xff]
    %v196 = vld [vmem:[%s0 + $0x139] sm:$0xff]
    %v197 = vld [vmem:[%s0 + $0x141] sm:$0xff]
    %v198 = vld [vmem:[%s0 + $0x151] sm:$0xff]
    %v199 = vld [vmem:[%s0 + $0x159] sm:$0xff]
    %v200 = vld [vmem:[%s0 + $0x169] sm:$0xff]
    %v201 = vld [vmem:[%s0 + $0x171] sm:$0xff]
    %v202 = vld [vmem:[%s0 + $0x1b1] sm:$0xff]
    %v203 = vld [vmem:[%s0 + $0x1b9] sm:$0xff]
    %v204 = vld [vmem:[%s0 + $0x1c9] sm:$0xff]
    %v205 = vld [vmem:[%s0 + $0x1d1] sm:$0xff]
    %v206 = vld [vmem:[%s0 + $0x1e1] sm:$0xff]
    %v207 = vld [vmem:[%s0 + $0x1e9] sm:$0xff]
    %v208 = vld [vmem:[%s0 + $0x1f9] sm:$0xff]
    %v209 = vld [vmem:[%s0 + $0x201] sm:$0xff]
    %v210 = vld [vmem:[%s0 + $0x211] sm:$0xff]
    %v211 = vld [vmem:[%s0 + $0x219] sm:$0xff]
    %v212 = vld [vmem:[%s0 + $0x229] sm:$0xff]
    %v213 = vld [vmem:[%s0 + $0x231] sm:$0xff]
    %v214 = vld [vmem:[%s0 + $0x241] sm:$0xff]
    %v215 = vld [vmem:[%s0 + $0x249] sm:$0xff]
    %v216 = vld [vmem:[%s0 + $0x259] sm:$0xff]
    %v217 = vld [vmem:[%s0 + $0x261] sm:$0xff]
    %v218 = vld [vmem:[%s0 + $0x271] sm:$0xff]
    %v219 = vld [vmem:[%s0 + $0x279] sm:$0xff]
    %v220 = vld [vmem:[%s0 + $0x289] sm:$0xff]
    %v221 = vld [vmem:[%s0 + $0x291] sm:$0xff]
    %v222 = vld [vmem:[%s0 + $0x2a1] sm:$0xff]
    %v223 = vld [vmem:[%s0 + $0x2a9] sm:$0xff]
    %v224 = vld [vmem:[%s0 + $0x2b9] sm:$0xff]
    %v225 = vld [vmem:[%s0 + $0x2c1] sm:$0xff]
    %v226 = vld [vmem:[%s0 + $0x2d1] sm:$0xff]
    %v227 = vld [vmem:[%s0 + $0x2d9] sm:$0xff]
    %v228 = vld [vmem:[%s0 + $0x2e9] sm:$0xff]
    %v229 = vld [vmem:[%s0 + $0x2f1] sm:$0xff]
    %v230 = vld [vmem:[%s0 + $0x301] sm:$0xff]
    %v231 = vld [vmem:[%s0 + $0x309] sm:$0xff]
    %v232 = vld [vmem:[%s0 + $0x319] sm:$0xff]
    %v233 = vld [vmem:[%s0 + $0x321] sm:$0xff]
    %298 = vrot.lane.b32.xlu0 %v170, 4
    %v299 = vpop.permute.xlu0 %298
    %300 = vrot.lane.b32.xlu0 %v171, 4
    %v301 = vpop.permute.xlu0 %300
    %302 = vrot.lane.b32.xlu0 %v172, 4
    %v303 = vpop.permute.xlu0 %302
    %304 = vrot.lane.b32.xlu0 %v173, 4
    %v305 = vpop.permute.xlu0 %304
    %306 = vrot.lane.b32.xlu0 %v174, 4
    %v307 = vpop.permute.xlu0 %306
    %308 = vrot.lane.b32.xlu0 %v175, 4
    %v309 = vpop.permute.xlu0 %308
    %310 = vrot.lane.b32.xlu0 %v176, 4
    %v311 = vpop.permute.xlu0 %310
    %312 = vrot.lane.b32.xlu0 %v177, 4
    %v313 = vpop.permute.xlu0 %312
    %314 = vrot.lane.b32.xlu0 %v178, 4
    %v315 = vpop.permute.xlu0 %314
    %316 = vrot.lane.b32.xlu0 %v179, 4
    %v317 = vpop.permute.xlu0 %316
    %318 = vrot.lane.b32.xlu0 %v180, 4
    %v319 = vpop.permute.xlu0 %318
    %320 = vrot.lane.b32.xlu0 %v181, 4
    %v321 = vpop.permute.xlu0 %320
    %322 = vrot.lane.b32.xlu0 %v182, 4
    %v323 = vpop.permute.xlu0 %322
    %324 = vrot.lane.b32.xlu0 %v183, 4
    %v325 = vpop.permute.xlu0 %324
    %326 = vrot.lane.b32.xlu0 %v184, 4
    %v327 = vpop.permute.xlu0 %326
    %328 = vrot.lane.b32.xlu0 %v185, 4
    %v329 = vpop.permute.xlu0 %328
    %330 = vrot.lane.b32.xlu0 %v186, 4
    %v331 = vpop.permute.xlu0 %330
    %332 = vrot.lane.b32.xlu0 %v187, 4
    %v333 = vpop.permute.xlu0 %332
    %334 = vrot.lane.b32.xlu0 %v188, 4
    %v335 = vpop.permute.xlu0 %334
    %336 = vrot.lane.b32.xlu0 %v189, 4
    %v337 = vpop.permute.xlu0 %336
    %338 = vrot.lane.b32.xlu0 %v190, 4
    %v339 = vpop.permute.xlu0 %338
    %340 = vrot.lane.b32.xlu0 %v191, 4
    %v341 = vpop.permute.xlu0 %340
    %342 = vrot.lane.b32.xlu0 %v192, 4
    %v343 = vpop.permute.xlu0 %342
    %344 = vrot.lane.b32.xlu0 %v193, 4
    %v345 = vpop.permute.xlu0 %344
    %346 = vrot.lane.b32.xlu0 %v194, 4
    %v347 = vpop.permute.xlu0 %346
    %348 = vrot.lane.b32.xlu0 %v195, 4
    %v349 = vpop.permute.xlu0 %348
    %350 = vrot.lane.b32.xlu0 %v196, 4
    %v351 = vpop.permute.xlu0 %350
    %352 = vrot.lane.b32.xlu0 %v197, 4
    %v353 = vpop.permute.xlu0 %352
    %354 = vrot.lane.b32.xlu0 %v198, 4
    %v355 = vpop.permute.xlu0 %354
    %356 = vrot.lane.b32.xlu0 %v199, 4
    %v357 = vpop.permute.xlu0 %356
    %358 = vrot.lane.b32.xlu0 %v200, 4
    %v359 = vpop.permute.xlu0 %358
    %360 = vrot.lane.b32.xlu0 %v201, 4
    %v361 = vpop.permute.xlu0 %360
    %362 = vrot.lane.b32.xlu0 %v202, 4
    %v363 = vpop.permute.xlu0 %362
    %364 = vrot.lane.b32.xlu0 %v203, 4
    %v365 = vpop.permute.xlu0 %364
    %366 = vrot.lane.b32.xlu0 %v204, 4
    %v367 = vpop.permute.xlu0 %366
    %368 = vrot.lane.b32.xlu0 %v205, 4
    %v369 = vpop.permute.xlu0 %368
    %370 = vrot.lane.b32.xlu0 %v206, 4
    %v371 = vpop.permute.xlu0 %370
    %372 = vrot.lane.b32.xlu0 %v207, 4
    %v373 = vpop.permute.xlu0 %372
    %374 = vrot.lane.b32.xlu0 %v208, 4
    %v375 = vpop.permute.xlu0 %374
    %376 = vrot.lane.b32.xlu0 %v209, 4
    %v377 = vpop.permute.xlu0 %376
    %378 = vrot.lane.b32.xlu0 %v210, 4
    %v379 = vpop.permute.xlu0 %378
    %380 = vrot.lane.b32.xlu0 %v211, 4
    %v381 = vpop.permute.xlu0 %380
    %382 = vrot.lane.b32.xlu0 %v212, 4
    %v383 = vpop.permute.xlu0 %382
    %384 = vrot.lane.b32.xlu0 %v213, 4
    %v385 = vpop.permute.xlu0 %384
    %386 = vrot.lane.b32.xlu0 %v214, 4
    %v387 = vpop.permute.xlu0 %386
    %388 = vrot.lane.b32.xlu0 %v215, 4
    %v389 = vpop.permute.xlu0 %388
    %390 = vrot.lane.b32.xlu0 %v216, 4
    %v391 = vpop.permute.xlu0 %390
    %392 = vrot.lane.b32.xlu0 %v217, 4
    %v393 = vpop.permute.xlu0 %392
    %394 = vrot.lane.b32.xlu0 %v218, 4
    %v395 = vpop.permute.xlu0 %394
    %396 = vrot.lane.b32.xlu0 %v219, 4
    %v397 = vpop.permute.xlu0 %396
    %398 = vrot.lane.b32.xlu0 %v220, 4
    %v399 = vpop.permute.xlu0 %398
    %400 = vrot.lane.b32.xlu0 %v221, 4
    %v401 = vpop.permute.xlu0 %400
    %402 = vrot.lane.b32.xlu0 %v222, 4
    %v403 = vpop.permute.xlu0 %402
    %404 = vrot.lane.b32.xlu0 %v223, 4
    %v405 = vpop.permute.xlu0 %404
    %406 = vrot.lane.b32.xlu0 %v224, 4
    %v407 = vpop.permute.xlu0 %406
    %408 = vrot.lane.b32.xlu0 %v225, 4
    %v409 = vpop.permute.xlu0 %408
    %410 = vrot.lane.b32.xlu0 %v226, 4
    %v411 = vpop.permute.xlu0 %410
    %412 = vrot.lane.b32.xlu0 %v227, 4
    %v413 = vpop.permute.xlu0 %412
    %414 = vrot.lane.b32.xlu0 %v228, 4
    %v415 = vpop.permute.xlu0 %414
    %416 = vrot.lane.b32.xlu0 %v229, 4
    %v417 = vpop.permute.xlu0 %416
    %418 = vrot.lane.b32.xlu0 %v230, 4
    %v419 = vpop.permute.xlu0 %418
    %420 = vrot.lane.b32.xlu0 %v231, 4
    %v421 = vpop.permute.xlu0 %420
    %422 = vrot.lane.b32.xlu0 %v232, 4
    %v423 = vpop.permute.xlu0 %422
    %424 = vrot.lane.b32.xlu0 %v233, 4
    %v425 = vpop.permute.xlu0 %424
    %vm490 = vcmask 64544
    %491 = vst.msk [vmem:[#allocation2] sm:$0xff] %vm490, %v299
    %492 = vst.msk [vmem:[#allocation2 + $0x8] sm:$0xff] %vm490, %v301
    %493 = vst.msk [vmem:[#allocation2 + $0x10] sm:$0xff] %vm490, %v303
    %494 = vst.msk [vmem:[#allocation2 + $0x18] sm:$0xff] %vm490, %v305
    %495 = vst.msk [vmem:[#allocation2 + $0x20] sm:$0xff] %vm490, %v307
    %496 = vst.msk [vmem:[#allocation2 + $0x28] sm:$0xff] %vm490, %v309
    %497 = vst.msk [vmem:[#allocation2 + $0x30] sm:$0xff] %vm490, %v311
    %498 = vst.msk [vmem:[#allocation2 + $0x38] sm:$0xff] %vm490, %v313
    %499 = vst.msk [vmem:[#allocation2 + $0x40] sm:$0xff] %vm490, %v315
    %500 = vst.msk [vmem:[#allocation2 + $0x48] sm:$0xff] %vm490, %v317
    %501 = vst.msk [vmem:[#allocation2 + $0x50] sm:$0xff] %vm490, %v319
    %502 = vst.msk [vmem:[#allocation2 + $0x58] sm:$0xff] %vm490, %v321
    %503 = vst.msk [vmem:[#allocation2 + $0x60] sm:$0xff] %vm490, %v323
    %504 = vst.msk [vmem:[#allocation2 + $0x68] sm:$0xff] %vm490, %v325
    %505 = vst.msk [vmem:[#allocation2 + $0x70] sm:$0xff] %vm490, %v327
    %506 = vst.msk [vmem:[#allocation2 + $0x78] sm:$0xff] %vm490, %v329
    %507 = vst.msk [vmem:[#allocation2 + $0x80] sm:$0xff] %vm490, %v331
    %508 = vst.msk [vmem:[#allocation2 + $0x88] sm:$0xff] %vm490, %v333
    %509 = vst.msk [vmem:[#allocation2 + $0x90] sm:$0xff] %vm490, %v335
    %510 = vst.msk [vmem:[#allocation2 + $0x98] sm:$0xff] %vm490, %v337
    %511 = vst.msk [vmem:[#allocation2 + $0xa0] sm:$0xff] %vm490, %v339
    %512 = vst.msk [vmem:[#allocation2 + $0xa8] sm:$0xff] %vm490, %v341
    %513 = vst.msk [vmem:[#allocation2 + $0xb0] sm:$0xff] %vm490, %v343
    %514 = vst.msk [vmem:[#allocation2 + $0xb8] sm:$0xff] %vm490, %v345
    %515 = vst.msk [vmem:[#allocation2 + $0xc0] sm:$0xff] %vm490, %v347
    %516 = vst.msk [vmem:[#allocation2 + $0xc8] sm:$0xff] %vm490, %v349
    %517 = vst.msk [vmem:[#allocation2 + $0xd0] sm:$0xff] %vm490, %v351
    %518 = vst.msk [vmem:[#allocation2 + $0xd8] sm:$0xff] %vm490, %v353
    %519 = vst.msk [vmem:[#allocation2 + $0xe0] sm:$0xff] %vm490, %v355
    %520 = vst.msk [vmem:[#allocation2 + $0xe8] sm:$0xff] %vm490, %v357
    %521 = vst.msk [vmem:[#allocation2 + $0xf0] sm:$0xff] %vm490, %v359
    %522 = vst.msk [vmem:[#allocation2 + $0xf8] sm:$0xff] %vm490, %v361
    %523 = vst.msk [vmem:[#allocation2 + $0x100] sm:$0xff] %vm490, %v363
    %524 = vst.msk [vmem:[#allocation2 + $0x108] sm:$0xff] %vm490, %v365
    %525 = vst.msk [vmem:[#allocation2 + $0x110] sm:$0xff] %vm490, %v367
    %526 = vst.msk [vmem:[#allocation2 + $0x118] sm:$0xff] %vm490, %v369
    %527 = vst.msk [vmem:[#allocation2 + $0x120] sm:$0xff] %vm490, %v371
    %528 = vst.msk [vmem:[#allocation2 + $0x128] sm:$0xff] %vm490, %v373
    %529 = vst.msk [vmem:[#allocation2 + $0x130] sm:$0xff] %vm490, %v375
    %530 = vst.msk [vmem:[#allocation2 + $0x138] sm:$0xff] %vm490, %v377
    %531 = vst.msk [vmem:[#allocation2 + $0x140] sm:$0xff] %vm490, %v379
    %532 = vst.msk [vmem:[#allocation2 + $0x148] sm:$0xff] %vm490, %v381
    %533 = vst.msk [vmem:[#allocation2 + $0x150] sm:$0xff] %vm490, %v383
    %534 = vst.msk [vmem:[#allocation2 + $0x158] sm:$0xff] %vm490, %v385
    %535 = vst.msk [vmem:[#allocation2 + $0x160] sm:$0xff] %vm490, %v387
    %536 = vst.msk [vmem:[#allocation2 + $0x168] sm:$0xff] %vm490, %v389
    %537 = vst.msk [vmem:[#allocation2 + $0x170] sm:$0xff] %vm490, %v391
    %538 = vst.msk [vmem:[#allocation2 + $0x178] sm:$0xff] %vm490, %v393
    %539 = vst.msk [vmem:[#allocation2 + $0x180] sm:$0xff] %vm490, %v395
    %540 = vst.msk [vmem:[#allocation2 + $0x188] sm:$0xff] %vm490, %v397
    %541 = vst.msk [vmem:[#allocation2 + $0x190] sm:$0xff] %vm490, %v399
    %542 = vst.msk [vmem:[#allocation2 + $0x198] sm:$0xff] %vm490, %v401
    %543 = vst.msk [vmem:[#allocation2 + $0x1a0] sm:$0xff] %vm490, %v403
    %544 = vst.msk [vmem:[#allocation2 + $0x1a8] sm:$0xff] %vm490, %v405
    %545 = vst.msk [vmem:[#allocation2 + $0x1b0] sm:$0xff] %vm490, %v407
    %546 = vst.msk [vmem:[#allocation2 + $0x1b8] sm:$0xff] %vm490, %v409
    %547 = vst.msk [vmem:[#allocation2 + $0x1c0] sm:$0xff] %vm490, %v411
    %548 = vst.msk [vmem:[#allocation2 + $0x1c8] sm:$0xff] %vm490, %v413
    %549 = vst.msk [vmem:[#allocation2 + $0x1d0] sm:$0xff] %vm490, %v415
    %550 = vst.msk [vmem:[#allocation2 + $0x1d8] sm:$0xff] %vm490, %v417
    %551 = vst.msk [vmem:[#allocation2 + $0x1e0] sm:$0xff] %vm490, %v419
    %552 = vst.msk [vmem:[#allocation2 + $0x1e8] sm:$0xff] %vm490, %v421
    %553 = vst.msk [vmem:[#allocation2 + $0x1f0] sm:$0xff] %vm490, %v423
    %554 = vst.msk [vmem:[#allocation2 + $0x1f8] sm:$0xff] %vm490, %v425
    %v555 = vld [vmem:[%s0 + $0x2] sm:$0xff]
    %v556 = vld [vmem:[%s0 + $0xa] sm:$0xff]
    %v557 = vld [vmem:[%s0 + $0x1a] sm:$0xff]
    %v558 = vld [vmem:[%s0 + $0x22] sm:$0xff]
    %v559 = vld [vmem:[%s0 + $0x32] sm:$0xff]
    %v560 = vld [vmem:[%s0 + $0x3a] sm:$0xff]
    %v561 = vld [vmem:[%s0 + $0x4a] sm:$0xff]
    %v562 = vld [vmem:[%s0 + $0x52] sm:$0xff]
    %v563 = vld [vmem:[%s0 + $0x62] sm:$0xff]
    %v564 = vld [vmem:[%s0 + $0x6a] sm:$0xff]
    %v565 = vld [vmem:[%s0 + $0x7a] sm:$0xff]
    %v566 = vld [vmem:[%s0 + $0x82] sm:$0xff]
    %v567 = vld [vmem:[%s0 + $0x92] sm:$0xff]
    %v568 = vld [vmem:[%s0 + $0x9a] sm:$0xff]
    %v569 = vld [vmem:[%s0 + $0xaa] sm:$0xff]
    %v570 = vld [vmem:[%s0 + $0xb2] sm:$0xff]
    %v571 = vld [vmem:[%s0 + $0xc2] sm:$0xff]
    %v572 = vld [vmem:[%s0 + $0xca] sm:$0xff]
    %v573 = vld [vmem:[%s0 + $0xda] sm:$0xff]
    %v574 = vld [vmem:[%s0 + $0xe2] sm:$0xff]
    %v575 = vld [vmem:[%s0 + $0xf2] sm:$0xff]
    %v576 = vld [vmem:[%s0 + $0xfa] sm:$0xff]
    %v577 = vld [vmem:[%s0 + $0x10a] sm:$0xff]
    %v578 = vld [vmem:[%s0 + $0x112] sm:$0xff]
    %v579 = vld [vmem:[%s0 + $0x122] sm:$0xff]
    %v580 = vld [vmem:[%s0 + $0x12a] sm:$0xff]
    %v581 = vld [vmem:[%s0 + $0x13a] sm:$0xff]
    %v582 = vld [vmem:[%s0 + $0x142] sm:$0xff]
    %v583 = vld [vmem:[%s0 + $0x152] sm:$0xff]
    %v584 = vld [vmem:[%s0 + $0x15a] sm:$0xff]
    %v585 = vld [vmem:[%s0 + $0x16a] sm:$0xff]
    %v586 = vld [vmem:[%s0 + $0x172] sm:$0xff]
    %v587 = vld [vmem:[%s0 + $0x1b2] sm:$0xff]
    %v588 = vld [vmem:[%s0 + $0x1ba] sm:$0xff]
    %v589 = vld [vmem:[%s0 + $0x1ca] sm:$0xff]
    %v590 = vld [vmem:[%s0 + $0x1d2] sm:$0xff]
    %v591 = vld [vmem:[%s0 + $0x1e2] sm:$0xff]
    %v592 = vld [vmem:[%s0 + $0x1ea] sm:$0xff]
    %v593 = vld [vmem:[%s0 + $0x1fa] sm:$0xff]
    %v594 = vld [vmem:[%s0 + $0x202] sm:$0xff]
    %v595 = vld [vmem:[%s0 + $0x212] sm:$0xff]
    %v596 = vld [vmem:[%s0 + $0x21a] sm:$0xff]
    %v597 = vld [vmem:[%s0 + $0x22a] sm:$0xff]
    %v598 = vld [vmem:[%s0 + $0x232] sm:$0xff]
    %v599 = vld [vmem:[%s0 + $0x242] sm:$0xff]
    %v600 = vld [vmem:[%s0 + $0x24a] sm:$0xff]
    %v601 = vld [vmem:[%s0 + $0x25a] sm:$0xff]
    %v602 = vld [vmem:[%s0 + $0x262] sm:$0xff]
    %v603 = vld [vmem:[%s0 + $0x272] sm:$0xff]
    %v604 = vld [vmem:[%s0 + $0x27a] sm:$0xff]
    %v605 = vld [vmem:[%s0 + $0x28a] sm:$0xff]
    %v606 = vld [vmem:[%s0 + $0x292] sm:$0xff]
    %v607 = vld [vmem:[%s0 + $0x2a2] sm:$0xff]
    %v608 = vld [vmem:[%s0 + $0x2aa] sm:$0xff]
    %v609 = vld [vmem:[%s0 + $0x2ba] sm:$0xff]
    %v610 = vld [vmem:[%s0 + $0x2c2] sm:$0xff]
    %v611 = vld [vmem:[%s0 + $0x2d2] sm:$0xff]
    %v612 = vld [vmem:[%s0 + $0x2da] sm:$0xff]
    %v613 = vld [vmem:[%s0 + $0x2ea] sm:$0xff]
    %v614 = vld [vmem:[%s0 + $0x2f2] sm:$0xff]
    %v615 = vld [vmem:[%s0 + $0x302] sm:$0xff]
    %v616 = vld [vmem:[%s0 + $0x30a] sm:$0xff]
    %v617 = vld [vmem:[%s0 + $0x31a] sm:$0xff]
    %v618 = vld [vmem:[%s0 + $0x322] sm:$0xff]
    %683 = vrot.lane.b32.xlu0 %v555, 8
    %v684 = vpop.permute.xlu0 %683
    %685 = vrot.lane.b32.xlu0 %v556, 8
    %v686 = vpop.permute.xlu0 %685
    %687 = vrot.lane.b32.xlu0 %v557, 8
    %v688 = vpop.permute.xlu0 %687
    %689 = vrot.lane.b32.xlu0 %v558, 8
    %v690 = vpop.permute.xlu0 %689
    %691 = vrot.lane.b32.xlu0 %v559, 8
    %v692 = vpop.permute.xlu0 %691
    %693 = vrot.lane.b32.xlu0 %v560, 8
    %v694 = vpop.permute.xlu0 %693
    %695 = vrot.lane.b32.xlu0 %v561, 8
    %v696 = vpop.permute.xlu0 %695
    %697 = vrot.lane.b32.xlu0 %v562, 8
    %v698 = vpop.permute.xlu0 %697
    %699 = vrot.lane.b32.xlu0 %v563, 8
    %v700 = vpop.permute.xlu0 %699
    %701 = vrot.lane.b32.xlu0 %v564, 8
    %v702 = vpop.permute.xlu0 %701
    %703 = vrot.lane.b32.xlu0 %v565, 8
    %v704 = vpop.permute.xlu0 %703
    %705 = vrot.lane.b32.xlu0 %v566, 8
    %v706 = vpop.permute.xlu0 %705
    %707 = vrot.lane.b32.xlu0 %v567, 8
    %v708 = vpop.permute.xlu0 %707
    %709 = vrot.lane.b32.xlu0 %v568, 8
    %v710 = vpop.permute.xlu0 %709
    %711 = vrot.lane.b32.xlu0 %v569, 8
    %v712 = vpop.permute.xlu0 %711
    %713 = vrot.lane.b32.xlu0 %v570, 8
    %v714 = vpop.permute.xlu0 %713
    %715 = vrot.lane.b32.xlu0 %v571, 8
    %v716 = vpop.permute.xlu0 %715
    %717 = vrot.lane.b32.xlu0 %v572, 8
    %v718 = vpop.permute.xlu0 %717
    %719 = vrot.lane.b32.xlu0 %v573, 8
    %v720 = vpop.permute.xlu0 %719
    %721 = vrot.lane.b32.xlu0 %v574, 8
    %v722 = vpop.permute.xlu0 %721
    %723 = vrot.lane.b32.xlu0 %v575, 8
    %v724 = vpop.permute.xlu0 %723
    %725 = vrot.lane.b32.xlu0 %v576, 8
    %v726 = vpop.permute.xlu0 %725
    %727 = vrot.lane.b32.xlu0 %v577, 8
    %v728 = vpop.permute.xlu0 %727
    %729 = vrot.lane.b32.xlu0 %v578, 8
    %v730 = vpop.permute.xlu0 %729
    %731 = vrot.lane.b32.xlu0 %v579, 8
    %v732 = vpop.permute.xlu0 %731
    %733 = vrot.lane.b32.xlu0 %v580, 8
    %v734 = vpop.permute.xlu0 %733
    %735 = vrot.lane.b32.xlu0 %v581, 8
    %v736 = vpop.permute.xlu0 %735
    %737 = vrot.lane.b32.xlu0 %v582, 8
    %v738 = vpop.permute.xlu0 %737
    %739 = vrot.lane.b32.xlu0 %v583, 8
    %v740 = vpop.permute.xlu0 %739
    %741 = vrot.lane.b32.xlu0 %v584, 8
    %v742 = vpop.permute.xlu0 %741
    %743 = vrot.lane.b32.xlu0 %v585, 8
    %v744 = vpop.permute.xlu0 %743
    %745 = vrot.lane.b32.xlu0 %v586, 8
    %v746 = vpop.permute.xlu0 %745
    %747 = vrot.lane.b32.xlu0 %v587, 8
    %v748 = vpop.permute.xlu0 %747
    %749 = vrot.lane.b32.xlu0 %v588, 8
    %v750 = vpop.permute.xlu0 %749
    %751 = vrot.lane.b32.xlu0 %v589, 8
    %v752 = vpop.permute.xlu0 %751
    %753 = vrot.lane.b32.xlu0 %v590, 8
    %v754 = vpop.permute.xlu0 %753
    %755 = vrot.lane.b32.xlu0 %v591, 8
    %v756 = vpop.permute.xlu0 %755
    %757 = vrot.lane.b32.xlu0 %v592, 8
    %v758 = vpop.permute.xlu0 %757
    %759 = vrot.lane.b32.xlu0 %v593, 8
    %v760 = vpop.permute.xlu0 %759
    %761 = vrot.lane.b32.xlu0 %v594, 8
    %v762 = vpop.permute.xlu0 %761
    %763 = vrot.lane.b32.xlu0 %v595, 8
    %v764 = vpop.permute.xlu0 %763
    %765 = vrot.lane.b32.xlu0 %v596, 8
    %v766 = vpop.permute.xlu0 %765
    %767 = vrot.lane.b32.xlu0 %v597, 8
    %v768 = vpop.permute.xlu0 %767
    %769 = vrot.lane.b32.xlu0 %v598, 8
    %v770 = vpop.permute.xlu0 %769
    %771 = vrot.lane.b32.xlu0 %v599, 8
    %v772 = vpop.permute.xlu0 %771
    %773 = vrot.lane.b32.xlu0 %v600, 8
    %v774 = vpop.permute.xlu0 %773
    %775 = vrot.lane.b32.xlu0 %v601, 8
    %v776 = vpop.permute.xlu0 %775
    %777 = vrot.lane.b32.xlu0 %v602, 8
    %v778 = vpop.permute.xlu0 %777
    %779 = vrot.lane.b32.xlu0 %v603, 8
    %v780 = vpop.permute.xlu0 %779
    %781 = vrot.lane.b32.xlu0 %v604, 8
    %v782 = vpop.permute.xlu0 %781
    %783 = vrot.lane.b32.xlu0 %v605, 8
    %v784 = vpop.permute.xlu0 %783
    %785 = vrot.lane.b32.xlu0 %v606, 8
    %v786 = vpop.permute.xlu0 %785
    %787 = vrot.lane.b32.xlu0 %v607, 8
    %v788 = vpop.permute.xlu0 %787
    %789 = vrot.lane.b32.xlu0 %v608, 8
    %v790 = vpop.permute.xlu0 %789
    %791 = vrot.lane.b32.xlu0 %v609, 8
    %v792 = vpop.permute.xlu0 %791
    %793 = vrot.lane.b32.xlu0 %v610, 8
    %v794 = vpop.permute.xlu0 %793
    %795 = vrot.lane.b32.xlu0 %v611, 8
    %v796 = vpop.permute.xlu0 %795
    %797 = vrot.lane.b32.xlu0 %v612, 8
    %v798 = vpop.permute.xlu0 %797
    %799 = vrot.lane.b32.xlu0 %v613, 8
    %v800 = vpop.permute.xlu0 %799
    %801 = vrot.lane.b32.xlu0 %v614, 8
    %v802 = vpop.permute.xlu0 %801
    %803 = vrot.lane.b32.xlu0 %v615, 8
    %v804 = vpop.permute.xlu0 %803
    %805 = vrot.lane.b32.xlu0 %v616, 8
    %v806 = vpop.permute.xlu0 %805
    %807 = vrot.lane.b32.xlu0 %v617, 8
    %v808 = vpop.permute.xlu0 %807
    %809 = vrot.lane.b32.xlu0 %v618, 8
    %v810 = vpop.permute.xlu0 %809
    %vm875 = vcmask 97344
    %876 = vst.msk [vmem:[#allocation2] sm:$0xff] %vm875, %v684
    %877 = vst.msk [vmem:[#allocation2 + $0x8] sm:$0xff] %vm875, %v686
    %878 = vst.msk [vmem:[#allocation2 + $0x10] sm:$0xff] %vm875, %v688
    %879 = vst.msk [vmem:[#allocation2 + $0x18] sm:$0xff] %vm875, %v690
    %880 = vst.msk [vmem:[#allocation2 + $0x20] sm:$0xff] %vm875, %v692
    %881 = vst.msk [vmem:[#allocation2 + $0x28] sm:$0xff] %vm875, %v694
    %882 = vst.msk [vmem:[#allocation2 + $0x30] sm:$0xff] %vm875, %v696
    %883 = vst.msk [vmem:[#allocation2 + $0x38] sm:$0xff] %vm875, %v698
    %884 = vst.msk [vmem:[#allocation2 + $0x40] sm:$0xff] %vm875, %v700
    %885 = vst.msk [vmem:[#allocation2 + $0x48] sm:$0xff] %vm875, %v702
    %886 = vst.msk [vmem:[#allocation2 + $0x50] sm:$0xff] %vm875, %v704
    %887 = vst.msk [vmem:[#allocation2 + $0x58] sm:$0xff] %vm875, %v706
    %888 = vst.msk [vmem:[#allocation2 + $0x60] sm:$0xff] %vm875, %v708
    %889 = vst.msk [vmem:[#allocation2 + $0x68] sm:$0xff] %vm875, %v710
    %890 = vst.msk [vmem:[#allocation2 + $0x70] sm:$0xff] %vm875, %v712
    %891 = vst.msk [vmem:[#allocation2 + $0x78] sm:$0xff] %vm875, %v714
    %892 = vst.msk [vmem:[#allocation2 + $0x80] sm:$0xff] %vm875, %v716
    %893 = vst.msk [vmem:[#allocation2 + $0x88] sm:$0xff] %vm875, %v718
    %894 = vst.msk [vmem:[#allocation2 + $0x90] sm:$0xff] %vm875, %v720
    %895 = vst.msk [vmem:[#allocation2 + $0x98] sm:$0xff] %vm875, %v722
    %896 = vst.msk [vmem:[#allocation2 + $0xa0] sm:$0xff] %vm875, %v724
    %897 = vst.msk [vmem:[#allocation2 + $0xa8] sm:$0xff] %vm875, %v726
    %898 = vst.msk [vmem:[#allocation2 + $0xb0] sm:$0xff] %vm875, %v728
    %899 = vst.msk [vmem:[#allocation2 + $0xb8] sm:$0xff] %vm875, %v730
    %900 = vst.msk [vmem:[#allocation2 + $0xc0] sm:$0xff] %vm875, %v732
    %901 = vst.msk [vmem:[#allocation2 + $0xc8] sm:$0xff] %vm875, %v734
    %902 = vst.msk [vmem:[#allocation2 + $0xd0] sm:$0xff] %vm875, %v736
    %903 = vst.msk [vmem:[#allocation2 + $0xd8] sm:$0xff] %vm875, %v738
    %904 = vst.msk [vmem:[#allocation2 + $0xe0] sm:$0xff] %vm875, %v740
    %905 = vst.msk [vmem:[#allocation2 + $0xe8] sm:$0xff] %vm875, %v742
    %906 = vst.msk [vmem:[#allocation2 + $0xf0] sm:$0xff] %vm875, %v744
    %907 = vst.msk [vmem:[#allocation2 + $0xf8] sm:$0xff] %vm875, %v746
    %908 = vst.msk [vmem:[#allocation2 + $0x100] sm:$0xff] %vm875, %v748
    %909 = vst.msk [vmem:[#allocation2 + $0x108] sm:$0xff] %vm875, %v750
    %910 = vst.msk [vmem:[#allocation2 + $0x110] sm:$0xff] %vm875, %v752
    %911 = vst.msk [vmem:[#allocation2 + $0x118] sm:$0xff] %vm875, %v754
    %912 = vst.msk [vmem:[#allocation2 + $0x120] sm:$0xff] %vm875, %v756
    %913 = vst.msk [vmem:[#allocation2 + $0x128] sm:$0xff] %vm875, %v758
    %914 = vst.msk [vmem:[#allocation2 + $0x130] sm:$0xff] %vm875, %v760
    %915 = vst.msk [vmem:[#allocation2 + $0x138] sm:$0xff] %vm875, %v762
    %916 = vst.msk [vmem:[#allocation2 + $0x140] sm:$0xff] %vm875, %v764
    %917 = vst.msk [vmem:[#allocation2 + $0x148] sm:$0xff] %vm875, %v766
    %918 = vst.msk [vmem:[#allocation2 + $0x150] sm:$0xff] %vm875, %v768
    %919 = vst.msk [vmem:[#allocation2 + $0x158] sm:$0xff] %vm875, %v770
    %920 = vst.msk [vmem:[#allocation2 + $0x160] sm:$0xff] %vm875, %v772
    %921 = vst.msk [vmem:[#allocation2 + $0x168] sm:$0xff] %vm875, %v774
    %922 = vst.msk [vmem:[#allocation2 + $0x170] sm:$0xff] %vm875, %v776
    %923 = vst.msk [vmem:[#allocation2 + $0x178] sm:$0xff] %vm875, %v778
    %924 = vst.msk [vmem:[#allocation2 + $0x180] sm:$0xff] %vm875, %v780
    %925 = vst.msk [vmem:[#allocation2 + $0x188] sm:$0xff] %vm875, %v782
    %926 = vst.msk [vmem:[#allocation2 + $0x190] sm:$0xff] %vm875, %v784
    %927 = vst.msk [vmem:[#allocation2 + $0x198] sm:$0xff] %vm875, %v786
    %928 = vst.msk [vmem:[#allocation2 + $0x1a0] sm:$0xff] %vm875, %v788
    %929 = vst.msk [vmem:[#allocation2 + $0x1a8] sm:$0xff] %vm875, %v790
    %930 = vst.msk [vmem:[#allocation2 + $0x1b0] sm:$0xff] %vm875, %v792
    %931 = vst.msk [vmem:[#allocation2 + $0x1b8] sm:$0xff] %vm875, %v794
    %932 = vst.msk [vmem:[#allocation2 + $0x1c0] sm:$0xff] %vm875, %v796
    %933 = vst.msk [vmem:[#allocation2 + $0x1c8] sm:$0xff] %vm875, %v798
    %934 = vst.msk [vmem:[#allocation2 + $0x1d0] sm:$0xff] %vm875, %v800
    %935 = vst.msk [vmem:[#allocation2 + $0x1d8] sm:$0xff] %vm875, %v802
    %936 = vst.msk [vmem:[#allocation2 + $0x1e0] sm:$0xff] %vm875, %v804
    %937 = vst.msk [vmem:[#allocation2 + $0x1e8] sm:$0xff] %vm875, %v806
    %938 = vst.msk [vmem:[#allocation2 + $0x1f0] sm:$0xff] %vm875, %v808
    %939 = vst.msk [vmem:[#allocation2 + $0x1f8] sm:$0xff] %vm875, %v810
    %s940 = scalar_lea.vmem %s0, 24
    %v941 = vld [vmem:[%s940] sm:$0xff]
    %v942 = vld [vmem:[%s940 + $0x8] sm:$0xff]
    %v943 = vld [vmem:[%s940 + $0x18] sm:$0xff]
    %v944 = vld [vmem:[%s940 + $0x20] sm:$0xff]
    %v945 = vld [vmem:[%s940 + $0x30] sm:$0xff]
    %v946 = vld [vmem:[%s940 + $0x38] sm:$0xff]
    %v947 = vld [vmem:[%s940 + $0x48] sm:$0xff]
    %v948 = vld [vmem:[%s940 + $0x50] sm:$0xff]
    %v949 = vld [vmem:[%s940 + $0x60] sm:$0xff]
    %v950 = vld [vmem:[%s940 + $0x68] sm:$0xff]
    %v951 = vld [vmem:[%s940 + $0x78] sm:$0xff]
    %v952 = vld [vmem:[%s940 + $0x80] sm:$0xff]
    %v953 = vld [vmem:[%s940 + $0x90] sm:$0xff]
    %v954 = vld [vmem:[%s940 + $0x98] sm:$0xff]
    %v955 = vld [vmem:[%s940 + $0xa8] sm:$0xff]
    %v956 = vld [vmem:[%s940 + $0xb0] sm:$0xff]
    %v957 = vld [vmem:[%s940 + $0xc0] sm:$0xff]
    %v958 = vld [vmem:[%s940 + $0xc8] sm:$0xff]
    %v959 = vld [vmem:[%s940 + $0xd8] sm:$0xff]
    %v960 = vld [vmem:[%s940 + $0xe0] sm:$0xff]
    %v961 = vld [vmem:[%s940 + $0xf0] sm:$0xff]
    %v962 = vld [vmem:[%s940 + $0xf8] sm:$0xff]
    %v963 = vld [vmem:[%s940 + $0x108] sm:$0xff]
    %v964 = vld [vmem:[%s940 + $0x110] sm:$0xff]
    %v965 = vld [vmem:[%s940 + $0x120] sm:$0xff]
    %v966 = vld [vmem:[%s940 + $0x128] sm:$0xff]
    %v967 = vld [vmem:[%s940 + $0x138] sm:$0xff]
    %v968 = vld [vmem:[%s940 + $0x140] sm:$0xff]
    %v969 = vld [vmem:[%s940 + $0x150] sm:$0xff]
    %v970 = vld [vmem:[%s940 + $0x158] sm:$0xff]
    %v971 = vld [vmem:[%s940 + $0x168] sm:$0xff]
    %v972 = vld [vmem:[%s940 + $0x170] sm:$0xff]
    %v973 = vld [vmem:[%s940 + $0x1b0] sm:$0xff]
    %v974 = vld [vmem:[%s940 + $0x1b8] sm:$0xff]
    %v975 = vld [vmem:[%s940 + $0x1c8] sm:$0xff]
    %v976 = vld [vmem:[%s940 + $0x1d0] sm:$0xff]
    %v977 = vld [vmem:[%s940 + $0x1e0] sm:$0xff]
    %v978 = vld [vmem:[%s940 + $0x1e8] sm:$0xff]
    %v979 = vld [vmem:[%s940 + $0x1f8] sm:$0xff]
    %v980 = vld [vmem:[%s940 + $0x200] sm:$0xff]
    %v981 = vld [vmem:[%s940 + $0x210] sm:$0xff]
    %v982 = vld [vmem:[%s940 + $0x218] sm:$0xff]
    %v983 = vld [vmem:[%s940 + $0x228] sm:$0xff]
    %v984 = vld [vmem:[%s940 + $0x230] sm:$0xff]
    %v985 = vld [vmem:[%s940 + $0x240] sm:$0xff]
    %v986 = vld [vmem:[%s940 + $0x248] sm:$0xff]
    %v987 = vld [vmem:[%s940 + $0x258] sm:$0xff]
    %v988 = vld [vmem:[%s940 + $0x260] sm:$0xff]
    %v989 = vld [vmem:[%s940 + $0x270] sm:$0xff]
    %v990 = vld [vmem:[%s940 + $0x278] sm:$0xff]
    %v991 = vld [vmem:[%s940 + $0x288] sm:$0xff]
    %v992 = vld [vmem:[%s940 + $0x290] sm:$0xff]
    %v993 = vld [vmem:[%s940 + $0x2a0] sm:$0xff]
    %v994 = vld [vmem:[%s940 + $0x2a8] sm:$0xff]
    %v995 = vld [vmem:[%s940 + $0x2b8] sm:$0xff]
    %v996 = vld [vmem:[%s940 + $0x2c0] sm:$0xff]
    %v997 = vld [vmem:[%s940 + $0x2d0] sm:$0xff]
    %v998 = vld [vmem:[%s940 + $0x2d8] sm:$0xff]
    %v999 = vld [vmem:[%s940 + $0x2e8] sm:$0xff]
    %v1000 = vld [vmem:[%s940 + $0x2f0] sm:$0xff]
    %v1001 = vld [vmem:[%s940 + $0x300] sm:$0xff]
    %v1002 = vld [vmem:[%s940 + $0x308] sm:$0xff]
    %v1003 = vld [vmem:[%s940 + $0x318] sm:$0xff]
    %v1004 = vld [vmem:[%s940 + $0x320] sm:$0xff]
    %1069 = vrot.lane.b32.xlu0 %v941, 12
    %v1070 = vpop.permute.xlu0 %1069
    %1071 = vrot.lane.b32.xlu0 %v942, 12
    %v1072 = vpop.permute.xlu0 %1071
    %1073 = vrot.lane.b32.xlu0 %v943, 12
    %v1074 = vpop.permute.xlu0 %1073
    %1075 = vrot.lane.b32.xlu0 %v944, 12
    %v1076 = vpop.permute.xlu0 %1075
    %1077 = vrot.lane.b32.xlu0 %v945, 12
    %v1078 = vpop.permute.xlu0 %1077
    %1079 = vrot.lane.b32.xlu0 %v946, 12
    %v1080 = vpop.permute.xlu0 %1079
    %1081 = vrot.lane.b32.xlu0 %v947, 12
    %v1082 = vpop.permute.xlu0 %1081
    %1083 = vrot.lane.b32.xlu0 %v948, 12
    %v1084 = vpop.permute.xlu0 %1083
    %1085 = vrot.lane.b32.xlu0 %v949, 12
    %v1086 = vpop.permute.xlu0 %1085
    %1087 = vrot.lane.b32.xlu0 %v950, 12
    %v1088 = vpop.permute.xlu0 %1087
    %1089 = vrot.lane.b32.xlu0 %v951, 12
    %v1090 = vpop.permute.xlu0 %1089
    %1091 = vrot.lane.b32.xlu0 %v952, 12
    %v1092 = vpop.permute.xlu0 %1091
    %1093 = vrot.lane.b32.xlu0 %v953, 12
    %v1094 = vpop.permute.xlu0 %1093
    %1095 = vrot.lane.b32.xlu0 %v954, 12
    %v1096 = vpop.permute.xlu0 %1095
    %1097 = vrot.lane.b32.xlu0 %v955, 12
    %v1098 = vpop.permute.xlu0 %1097
    %1099 = vrot.lane.b32.xlu0 %v956, 12
    %v1100 = vpop.permute.xlu0 %1099
    %1101 = vrot.lane.b32.xlu0 %v957, 12
    %v1102 = vpop.permute.xlu0 %1101
    %1103 = vrot.lane.b32.xlu0 %v958, 12
    %v1104 = vpop.permute.xlu0 %1103
    %1105 = vrot.lane.b32.xlu0 %v959, 12
    %v1106 = vpop.permute.xlu0 %1105
    %1107 = vrot.lane.b32.xlu0 %v960, 12
    %v1108 = vpop.permute.xlu0 %1107
    %1109 = vrot.lane.b32.xlu0 %v961, 12
    %v1110 = vpop.permute.xlu0 %1109
    %1111 = vrot.lane.b32.xlu0 %v962, 12
    %v1112 = vpop.permute.xlu0 %1111
    %1113 = vrot.lane.b32.xlu0 %v963, 12
    %v1114 = vpop.permute.xlu0 %1113
    %1115 = vrot.lane.b32.xlu0 %v964, 12
    %v1116 = vpop.permute.xlu0 %1115
    %1117 = vrot.lane.b32.xlu0 %v965, 12
    %v1118 = vpop.permute.xlu0 %1117
    %1119 = vrot.lane.b32.xlu0 %v966, 12
    %v1120 = vpop.permute.xlu0 %1119
    %1121 = vrot.lane.b32.xlu0 %v967, 12
    %v1122 = vpop.permute.xlu0 %1121
    %1123 = vrot.lane.b32.xlu0 %v968, 12
    %v1124 = vpop.permute.xlu0 %1123
    %1125 = vrot.lane.b32.xlu0 %v969, 12
    %v1126 = vpop.permute.xlu0 %1125
    %1127 = vrot.lane.b32.xlu0 %v970, 12
    %v1128 = vpop.permute.xlu0 %1127
    %1129 = vrot.lane.b32.xlu0 %v971, 12
    %v1130 = vpop.permute.xlu0 %1129
    %1131 = vrot.lane.b32.xlu0 %v972, 12
    %v1132 = vpop.permute.xlu0 %1131
    %1133 = vrot.lane.b32.xlu0 %v973, 12
    %v1134 = vpop.permute.xlu0 %1133
    %1135 = vrot.lane.b32.xlu0 %v974, 12
    %v1136 = vpop.permute.xlu0 %1135
    %1137 = vrot.lane.b32.xlu0 %v975, 12
    %v1138 = vpop.permute.xlu0 %1137
    %1139 = vrot.lane.b32.xlu0 %v976, 12
    %v1140 = vpop.permute.xlu0 %1139
    %1141 = vrot.lane.b32.xlu0 %v977, 12
    %v1142 = vpop.permute.xlu0 %1141
    %1143 = vrot.lane.b32.xlu0 %v978, 12
    %v1144 = vpop.permute.xlu0 %1143
    %1145 = vrot.lane.b32.xlu0 %v979, 12
    %v1146 = vpop.permute.xlu0 %1145
    %1147 = vrot.lane.b32.xlu0 %v980, 12
    %v1148 = vpop.permute.xlu0 %1147
    %1149 = vrot.lane.b32.xlu0 %v981, 12
    %v1150 = vpop.permute.xlu0 %1149
    %1151 = vrot.lane.b32.xlu0 %v982, 12
    %v1152 = vpop.permute.xlu0 %1151
    %1153 = vrot.lane.b32.xlu0 %v983, 12
    %v1154 = vpop.permute.xlu0 %1153
    %1155 = vrot.lane.b32.xlu0 %v984, 12
    %v1156 = vpop.permute.xlu0 %1155
    %1157 = vrot.lane.b32.xlu0 %v985, 12
    %v1158 = vpop.permute.xlu0 %1157
    %1159 = vrot.lane.b32.xlu0 %v986, 12
    %v1160 = vpop.permute.xlu0 %1159
    %1161 = vrot.lane.b32.xlu0 %v987, 12
    %v1162 = vpop.permute.xlu0 %1161
    %1163 = vrot.lane.b32.xlu0 %v988, 12
    %v1164 = vpop.permute.xlu0 %1163
    %1165 = vrot.lane.b32.xlu0 %v989, 12
    %v1166 = vpop.permute.xlu0 %1165
    %1167 = vrot.lane.b32.xlu0 %v990, 12
    %v1168 = vpop.permute.xlu0 %1167
    %1169 = vrot.lane.b32.xlu0 %v991, 12
    %v1170 = vpop.permute.xlu0 %1169
    %1171 = vrot.lane.b32.xlu0 %v992, 12
    %v1172 = vpop.permute.xlu0 %1171
    %1173 = vrot.lane.b32.xlu0 %v993, 12
    %v1174 = vpop.permute.xlu0 %1173
    %1175 = vrot.lane.b32.xlu0 %v994, 12
    %v1176 = vpop.permute.xlu0 %1175
    %1177 = vrot.lane.b32.xlu0 %v995, 12
    %v1178 = vpop.permute.xlu0 %1177
    %1179 = vrot.lane.b32.xlu0 %v996, 12
    %v1180 = vpop.permute.xlu0 %1179
    %1181 = vrot.lane.b32.xlu0 %v997, 12
    %v1182 = vpop.permute.xlu0 %1181
    %1183 = vrot.lane.b32.xlu0 %v998, 12
    %v1184 = vpop.permute.xlu0 %1183
    %1185 = vrot.lane.b32.xlu0 %v999, 12
    %v1186 = vpop.permute.xlu0 %1185
    %1187 = vrot.lane.b32.xlu0 %v1000, 12
    %v1188 = vpop.permute.xlu0 %1187
    %1189 = vrot.lane.b32.xlu0 %v1001, 12
    %v1190 = vpop.permute.xlu0 %1189
    %1191 = vrot.lane.b32.xlu0 %v1002, 12
    %v1192 = vpop.permute.xlu0 %1191
    %1193 = vrot.lane.b32.xlu0 %v1003, 12
    %v1194 = vpop.permute.xlu0 %1193
    %1195 = vrot.lane.b32.xlu0 %v1004, 12
    %v1196 = vpop.permute.xlu0 %1195
    %vm1261 = vcmask 130144
    %1262 = vst.msk [vmem:[#allocation2] sm:$0xff] %vm1261, %v1070
    %1263 = vst.msk [vmem:[#allocation2 + $0x8] sm:$0xff] %vm1261, %v1072
    %1264 = vst.msk [vmem:[#allocation2 + $0x10] sm:$0xff] %vm1261, %v1074
    %1265 = vst.msk [vmem:[#allocation2 + $0x18] sm:$0xff] %vm1261, %v1076
    %1266 = vst.msk [vmem:[#allocation2 + $0x20] sm:$0xff] %vm1261, %v1078
    %1267 = vst.msk [vmem:[#allocation2 + $0x28] sm:$0xff] %vm1261, %v1080
    %1268 = vst.msk [vmem:[#allocation2 + $0x30] sm:$0xff] %vm1261, %v1082
    %1269 = vst.msk [vmem:[#allocation2 + $0x38] sm:$0xff] %vm1261, %v1084
    %1270 = vst.msk [vmem:[#allocation2 + $0x40] sm:$0xff] %vm1261, %v1086
    %1271 = vst.msk [vmem:[#allocation2 + $0x48] sm:$0xff] %vm1261, %v1088
    %1272 = vst.msk [vmem:[#allocation2 + $0x50] sm:$0xff] %vm1261, %v1090
    %1273 = vst.msk [vmem:[#allocation2 + $0x58] sm:$0xff] %vm1261, %v1092
    %1274 = vst.msk [vmem:[#allocation2 + $0x60] sm:$0xff] %vm1261, %v1094
    %1275 = vst.msk [vmem:[#allocation2 + $0x68] sm:$0xff] %vm1261, %v1096
    %1276 = vst.msk [vmem:[#allocation2 + $0x70] sm:$0xff] %vm1261, %v1098
    %1277 = vst.msk [vmem:[#allocation2 + $0x78] sm:$0xff] %vm1261, %v1100
    %1278 = vst.msk [vmem:[#allocation2 + $0x80] sm:$0xff] %vm1261, %v1102
    %1279 = vst.msk [vmem:[#allocation2 + $0x88] sm:$0xff] %vm1261, %v1104
    %1280 = vst.msk [vmem:[#allocation2 + $0x90] sm:$0xff] %vm1261, %v1106
    %1281 = vst.msk [vmem:[#allocation2 + $0x98] sm:$0xff] %vm1261, %v1108
    %1282 = vst.msk [vmem:[#allocation2 + $0xa0] sm:$0xff] %vm1261, %v1110
    %1283 = vst.msk [vmem:[#allocation2 + $0xa8] sm:$0xff] %vm1261, %v1112
    %1284 = vst.msk [vmem:[#allocation2 + $0xb0] sm:$0xff] %vm1261, %v1114
    %1285 = vst.msk [vmem:[#allocation2 + $0xb8] sm:$0xff] %vm1261, %v1116
    %1286 = vst.msk [vmem:[#allocation2 + $0xc0] sm:$0xff] %vm1261, %v1118
    %1287 = vst.msk [vmem:[#allocation2 + $0xc8] sm:$0xff] %vm1261, %v1120
    %1288 = vst.msk [vmem:[#allocation2 + $0xd0] sm:$0xff] %vm1261, %v1122
    %1289 = vst.msk [vmem:[#allocation2 + $0xd8] sm:$0xff] %vm1261, %v1124
    %1290 = vst.msk [vmem:[#allocation2 + $0xe0] sm:$0xff] %vm1261, %v1126
    %1291 = vst.msk [vmem:[#allocation2 + $0xe8] sm:$0xff] %vm1261, %v1128
    %1292 = vst.msk [vmem:[#allocation2 + $0xf0] sm:$0xff] %vm1261, %v1130
    %1293 = vst.msk [vmem:[#allocation2 + $0xf8] sm:$0xff] %vm1261, %v1132
    %1294 = vst.msk [vmem:[#allocation2 + $0x100] sm:$0xff] %vm1261, %v1134
    %1295 = vst.msk [vmem:[#allocation2 + $0x108] sm:$0xff] %vm1261, %v1136
    %1296 = vst.msk [vmem:[#allocation2 + $0x110] sm:$0xff] %vm1261, %v1138
    %1297 = vst.msk [vmem:[#allocation2 + $0x118] sm:$0xff] %vm1261, %v1140
    %1298 = vst.msk [vmem:[#allocation2 + $0x120] sm:$0xff] %vm1261, %v1142
    %1299 = vst.msk [vmem:[#allocation2 + $0x128] sm:$0xff] %vm1261, %v1144
    %1300 = vst.msk [vmem:[#allocation2 + $0x130] sm:$0xff] %vm1261, %v1146
    %1301 = vst.msk [vmem:[#allocation2 + $0x138] sm:$0xff] %vm1261, %v1148
    %1302 = vst.msk [vmem:[#allocation2 + $0x140] sm:$0xff] %vm1261, %v1150
    %1303 = vst.msk [vmem:[#allocation2 + $0x148] sm:$0xff] %vm1261, %v1152
    %1304 = vst.msk [vmem:[#allocation2 + $0x150] sm:$0xff] %vm1261, %v1154
    %1305 = vst.msk [vmem:[#allocation2 + $0x158] sm:$0xff] %vm1261, %v1156
    %1306 = vst.msk [vmem:[#allocation2 + $0x160] sm:$0xff] %vm1261, %v1158
    %1307 = vst.msk [vmem:[#allocation2 + $0x168] sm:$0xff] %vm1261, %v1160
    %1308 = vst.msk [vmem:[#allocation2 + $0x170] sm:$0xff] %vm1261, %v1162
    %1309 = vst.msk [vmem:[#allocation2 + $0x178] sm:$0xff] %vm1261, %v1164
    %1310 = vst.msk [vmem:[#allocation2 + $0x180] sm:$0xff] %vm1261, %v1166
    %1311 = vst.msk [vmem:[#allocation2 + $0x188] sm:$0xff] %vm1261, %v1168
    %1312 = vst.msk [vmem:[#allocation2 + $0x190] sm:$0xff] %vm1261, %v1170
    %1313 = vst.msk [vmem:[#allocation2 + $0x198] sm:$0xff] %vm1261, %v1172
    %1314 = vst.msk [vmem:[#allocation2 + $0x1a0] sm:$0xff] %vm1261, %v1174
    %1315 = vst.msk [vmem:[#allocation2 + $0x1a8] sm:$0xff] %vm1261, %v1176
    %1316 = vst.msk [vmem:[#allocation2 + $0x1b0] sm:$0xff] %vm1261, %v1178
    %1317 = vst.msk [vmem:[#allocation2 + $0x1b8] sm:$0xff] %vm1261, %v1180
    %1318 = vst.msk [vmem:[#allocation2 + $0x1c0] sm:$0xff] %vm1261, %v1182
    %1319 = vst.msk [vmem:[#allocation2 + $0x1c8] sm:$0xff] %vm1261, %v1184
    %1320 = vst.msk [vmem:[#allocation2 + $0x1d0] sm:$0xff] %vm1261, %v1186
    %1321 = vst.msk [vmem:[#allocation2 + $0x1d8] sm:$0xff] %vm1261, %v1188
    %1322 = vst.msk [vmem:[#allocation2 + $0x1e0] sm:$0xff] %vm1261, %v1190
    %1323 = vst.msk [vmem:[#allocation2 + $0x1e8] sm:$0xff] %vm1261, %v1192
    %1324 = vst.msk [vmem:[#allocation2 + $0x1f0] sm:$0xff] %vm1261, %v1194
    %1325 = vst.msk [vmem:[#allocation2 + $0x1f8] sm:$0xff] %vm1261, %v1196
    %v1326 = vld [vmem:[%s940 + $0x1] sm:$0xff]
    %v1327 = vld [vmem:[%s940 + $0x9] sm:$0xff]
    %v1328 = vld [vmem:[%s940 + $0x19] sm:$0xff]
    %v1329 = vld [vmem:[%s940 + $0x21] sm:$0xff]
    %v1330 = vld [vmem:[%s940 + $0x31] sm:$0xff]
    %v1331 = vld [vmem:[%s940 + $0x39] sm:$0xff]
    %v1332 = vld [vmem:[%s940 + $0x49] sm:$0xff]
    %v1333 = vld [vmem:[%s940 + $0x51] sm:$0xff]
    %v1334 = vld [vmem:[%s940 + $0x61] sm:$0xff]
    %v1335 = vld [vmem:[%s940 + $0x69] sm:$0xff]
    %v1336 = vld [vmem:[%s940 + $0x79] sm:$0xff]
    %v1337 = vld [vmem:[%s940 + $0x81] sm:$0xff]
    %v1338 = vld [vmem:[%s940 + $0x91] sm:$0xff]
    %v1339 = vld [vmem:[%s940 + $0x99] sm:$0xff]
    %v1340 = vld [vmem:[%s940 + $0xa9] sm:$0xff]
    %v1341 = vld [vmem:[%s940 + $0xb1] sm:$0xff]
    %v1342 = vld [vmem:[%s940 + $0xc1] sm:$0xff]
    %v1343 = vld [vmem:[%s940 + $0xc9] sm:$0xff]
    %v1344 = vld [vmem:[%s940 + $0xd9] sm:$0xff]
    %v1345 = vld [vmem:[%s940 + $0xe1] sm:$0xff]
    %v1346 = vld [vmem:[%s940 + $0xf1] sm:$0xff]
    %v1347 = vld [vmem:[%s940 + $0xf9] sm:$0xff]
    %v1348 = vld [vmem:[%s940 + $0x109] sm:$0xff]
    %v1349 = vld [vmem:[%s940 + $0x111] sm:$0xff]
    %v1350 = vld [vmem:[%s940 + $0x121] sm:$0xff]
    %v1351 = vld [vmem:[%s940 + $0x129] sm:$0xff]
    %v1352 = vld [vmem:[%s940 + $0x139] sm:$0xff]
    %v1353 = vld [vmem:[%s940 + $0x141] sm:$0xff]
    %v1354 = vld [vmem:[%s940 + $0x151] sm:$0xff]
    %v1355 = vld [vmem:[%s940 + $0x159] sm:$0xff]
    %v1356 = vld [vmem:[%s940 + $0x169] sm:$0xff]
    %v1357 = vld [vmem:[%s940 + $0x171] sm:$0xff]
    %v1358 = vld [vmem:[%s940 + $0x1b1] sm:$0xff]
    %v1359 = vld [vmem:[%s940 + $0x1b9] sm:$0xff]
    %v1360 = vld [vmem:[%s940 + $0x1c9] sm:$0xff]
    %v1361 = vld [vmem:[%s940 + $0x1d1] sm:$0xff]
    %v1362 = vld [vmem:[%s940 + $0x1e1] sm:$0xff]
    %v1363 = vld [vmem:[%s940 + $0x1e9] sm:$0xff]
    %v1364 = vld [vmem:[%s940 + $0x1f9] sm:$0xff]
    %v1365 = vld [vmem:[%s940 + $0x201] sm:$0xff]
    %v1366 = vld [vmem:[%s940 + $0x211] sm:$0xff]
    %v1367 = vld [vmem:[%s940 + $0x219] sm:$0xff]
    %v1368 = vld [vmem:[%s940 + $0x229] sm:$0xff]
    %v1369 = vld [vmem:[%s940 + $0x231] sm:$0xff]
    %v1370 = vld [vmem:[%s940 + $0x241] sm:$0xff]
    %v1371 = vld [vmem:[%s940 + $0x249] sm:$0xff]
    %v1372 = vld [vmem:[%s940 + $0x259] sm:$0xff]
    %v1373 = vld [vmem:[%s940 + $0x261] sm:$0xff]
    %v1374 = vld [vmem:[%s940 + $0x271] sm:$0xff]
    %v1375 = vld [vmem:[%s940 + $0x279] sm:$0xff]
    %v1376 = vld [vmem:[%s940 + $0x289] sm:$0xff]
    %v1377 = vld [vmem:[%s940 + $0x291] sm:$0xff]
    %v1378 = vld [vmem:[%s940 + $0x2a1] sm:$0xff]
    %v1379 = vld [vmem:[%s940 + $0x2a9] sm:$0xff]
    %v1380 = vld [vmem:[%s940 + $0x2b9] sm:$0xff]
    %v1381 = vld [vmem:[%s940 + $0x2c1] sm:$0xff]
    %v1382 = vld [vmem:[%s940 + $0x2d1] sm:$0xff]
    %v1383 = vld [vmem:[%s940 + $0x2d9] sm:$0xff]
    %v1384 = vld [vmem:[%s940 + $0x2e9] sm:$0xff]
    %v1385 = vld [vmem:[%s940 + $0x2f1] sm:$0xff]
    %v1386 = vld [vmem:[%s940 + $0x301] sm:$0xff]
    %v1387 = vld [vmem:[%s940 + $0x309] sm:$0xff]
    %v1388 = vld [vmem:[%s940 + $0x319] sm:$0xff]
    %v1389 = vld [vmem:[%s940 + $0x321] sm:$0xff]
    %1454 = vrot.lane.b32.xlu0 %v1326, 16
    %v1455 = vpop.permute.xlu0 %1454
    %1456 = vrot.lane.b32.xlu0 %v1327, 16
    %v1457 = vpop.permute.xlu0 %1456
    %1458 = vrot.lane.b32.xlu0 %v1328, 16
    %v1459 = vpop.permute.xlu0 %1458
    %1460 = vrot.lane.b32.xlu0 %v1329, 16
    %v1461 = vpop.permute.xlu0 %1460
    %1462 = vrot.lane.b32.xlu0 %v1330, 16
    %v1463 = vpop.permute.xlu0 %1462
    %1464 = vrot.lane.b32.xlu0 %v1331, 16
    %v1465 = vpop.permute.xlu0 %1464
    %1466 = vrot.lane.b32.xlu0 %v1332, 16
    %v1467 = vpop.permute.xlu0 %1466
    %1468 = vrot.lane.b32.xlu0 %v1333, 16
    %v1469 = vpop.permute.xlu0 %1468
    %1470 = vrot.lane.b32.xlu0 %v1334, 16
    %v1471 = vpop.permute.xlu0 %1470
    %1472 = vrot.lane.b32.xlu0 %v1335, 16
    %v1473 = vpop.permute.xlu0 %1472
    %1474 = vrot.lane.b32.xlu0 %v1336, 16
    %v1475 = vpop.permute.xlu0 %1474
    %1476 = vrot.lane.b32.xlu0 %v1337, 16
    %v1477 = vpop.permute.xlu0 %1476
    %1478 = vrot.lane.b32.xlu0 %v1338, 16
    %v1479 = vpop.permute.xlu0 %1478
    %1480 = vrot.lane.b32.xlu0 %v1339, 16
    %v1481 = vpop.permute.xlu0 %1480
    %1482 = vrot.lane.b32.xlu0 %v1340, 16
    %v1483 = vpop.permute.xlu0 %1482
    %1484 = vrot.lane.b32.xlu0 %v1341, 16
    %v1485 = vpop.permute.xlu0 %1484
    %1486 = vrot.lane.b32.xlu0 %v1342, 16
    %v1487 = vpop.permute.xlu0 %1486
    %1488 = vrot.lane.b32.xlu0 %v1343, 16
    %v1489 = vpop.permute.xlu0 %1488
    %1490 = vrot.lane.b32.xlu0 %v1344, 16
    %v1491 = vpop.permute.xlu0 %1490
    %1492 = vrot.lane.b32.xlu0 %v1345, 16
    %v1493 = vpop.permute.xlu0 %1492
    %1494 = vrot.lane.b32.xlu0 %v1346, 16
    %v1495 = vpop.permute.xlu0 %1494
    %1496 = vrot.lane.b32.xlu0 %v1347, 16
    %v1497 = vpop.permute.xlu0 %1496
    %1498 = vrot.lane.b32.xlu0 %v1348, 16
    %v1499 = vpop.permute.xlu0 %1498
    %1500 = vrot.lane.b32.xlu0 %v1349, 16
    %v1501 = vpop.permute.xlu0 %1500
    %1502 = vrot.lane.b32.xlu0 %v1350, 16
    %v1503 = vpop.permute.xlu0 %1502
    %1504 = vrot.lane.b32.xlu0 %v1351, 16
    %v1505 = vpop.permute.xlu0 %1504
    %1506 = vrot.lane.b32.xlu0 %v1352, 16
    %v1507 = vpop.permute.xlu0 %1506
    %1508 = vrot.lane.b32.xlu0 %v1353, 16
    %v1509 = vpop.permute.xlu0 %1508
    %1510 = vrot.lane.b32.xlu0 %v1354, 16
    %v1511 = vpop.permute.xlu0 %1510
    %1512 = vrot.lane.b32.xlu0 %v1355, 16
    %v1513 = vpop.permute.xlu0 %1512
    %1514 = vrot.lane.b32.xlu0 %v1356, 16
    %v1515 = vpop.permute.xlu0 %1514
    %1516 = vrot.lane.b32.xlu0 %v1357, 16
    %v1517 = vpop.permute.xlu0 %1516
    %1518 = vrot.lane.b32.xlu0 %v1358, 16
    %v1519 = vpop.permute.xlu0 %1518
    %1520 = vrot.lane.b32.xlu0 %v1359, 16
    %v1521 = vpop.permute.xlu0 %1520
    %1522 = vrot.lane.b32.xlu0 %v1360, 16
    %v1523 = vpop.permute.xlu0 %1522
    %1524 = vrot.lane.b32.xlu0 %v1361, 16
    %v1525 = vpop.permute.xlu0 %1524
    %1526 = vrot.lane.b32.xlu0 %v1362, 16
    %v1527 = vpop.permute.xlu0 %1526
    %1528 = vrot.lane.b32.xlu0 %v1363, 16
    %v1529 = vpop.permute.xlu0 %1528
    %1530 = vrot.lane.b32.xlu0 %v1364, 16
    %v1531 = vpop.permute.xlu0 %1530
    %1532 = vrot.lane.b32.xlu0 %v1365, 16
    %v1533 = vpop.permute.xlu0 %1532
    %1534 = vrot.lane.b32.xlu0 %v1366, 16
    %v1535 = vpop.permute.xlu0 %1534
    %1536 = vrot.lane.b32.xlu0 %v1367, 16
    %v1537 = vpop.permute.xlu0 %1536
    %1538 = vrot.lane.b32.xlu0 %v1368, 16
    %v1539 = vpop.permute.xlu0 %1538
    %1540 = vrot.lane.b32.xlu0 %v1369, 16
    %v1541 = vpop.permute.xlu0 %1540
    %1542 = vrot.lane.b32.xlu0 %v1370, 16
    %v1543 = vpop.permute.xlu0 %1542
    %1544 = vrot.lane.b32.xlu0 %v1371, 16
    %v1545 = vpop.permute.xlu0 %1544
    %1546 = vrot.lane.b32.xlu0 %v1372, 16
    %v1547 = vpop.permute.xlu0 %1546
    %1548 = vrot.lane.b32.xlu0 %v1373, 16
    %v1549 = vpop.permute.xlu0 %1548
    %1550 = vrot.lane.b32.xlu0 %v1374, 16
    %v1551 = vpop.permute.xlu0 %1550
    %1552 = vrot.lane.b32.xlu0 %v1375, 16
    %v1553 = vpop.permute.xlu0 %1552
    %1554 = vrot.lane.b32.xlu0 %v1376, 16
    %v1555 = vpop.permute.xlu0 %1554
    %1556 = vrot.lane.b32.xlu0 %v1377, 16
    %v1557 = vpop.permute.xlu0 %1556
    %1558 = vrot.lane.b32.xlu0 %v1378, 16
    %v1559 = vpop.permute.xlu0 %1558
    %1560 = vrot.lane.b32.xlu0 %v1379, 16
    %v1561 = vpop.permute.xlu0 %1560
    %1562 = vrot.lane.b32.xlu0 %v1380, 16
    %v1563 = vpop.permute.xlu0 %1562
    %1564 = vrot.lane.b32.xlu0 %v1381, 16
    %v1565 = vpop.permute.xlu0 %1564
    %1566 = vrot.lane.b32.xlu0 %v1382, 16
    %v1567 = vpop.permute.xlu0 %1566
    %1568 = vrot.lane.b32.xlu0 %v1383, 16
    %v1569 = vpop.permute.xlu0 %1568
    %1570 = vrot.lane.b32.xlu0 %v1384, 16
    %v1571 = vpop.permute.xlu0 %1570
    %1572 = vrot.lane.b32.xlu0 %v1385, 16
    %v1573 = vpop.permute.xlu0 %1572
    %1574 = vrot.lane.b32.xlu0 %v1386, 16
    %v1575 = vpop.permute.xlu0 %1574
    %1576 = vrot.lane.b32.xlu0 %v1387, 16
    %v1577 = vpop.permute.xlu0 %1576
    %1578 = vrot.lane.b32.xlu0 %v1388, 16
    %v1579 = vpop.permute.xlu0 %1578
    %1580 = vrot.lane.b32.xlu0 %v1389, 16
    %v1581 = vpop.permute.xlu0 %1580
    %vm1646 = vcmask 162944
    %1647 = vst.msk [vmem:[#allocation2] sm:$0xff] %vm1646, %v1455
    %1648 = vst.msk [vmem:[#allocation2 + $0x8] sm:$0xff] %vm1646, %v1457
    %1649 = vst.msk [vmem:[#allocation2 + $0x10] sm:$0xff] %vm1646, %v1459
    %1650 = vst.msk [vmem:[#allocation2 + $0x18] sm:$0xff] %vm1646, %v1461
    %1651 = vst.msk [vmem:[#allocation2 + $0x20] sm:$0xff] %vm1646, %v1463
    %1652 = vst.msk [vmem:[#allocation2 + $0x28] sm:$0xff] %vm1646, %v1465
    %1653 = vst.msk [vmem:[#allocation2 + $0x30] sm:$0xff] %vm1646, %v1467
    %1654 = vst.msk [vmem:[#allocation2 + $0x38] sm:$0xff] %vm1646, %v1469
    %1655 = vst.msk [vmem:[#allocation2 + $0x40] sm:$0xff] %vm1646, %v1471
    %1656 = vst.msk [vmem:[#allocation2 + $0x48] sm:$0xff] %vm1646, %v1473
    %1657 = vst.msk [vmem:[#allocation2 + $0x50] sm:$0xff] %vm1646, %v1475
    %1658 = vst.msk [vmem:[#allocation2 + $0x58] sm:$0xff] %vm1646, %v1477
    %1659 = vst.msk [vmem:[#allocation2 + $0x60] sm:$0xff] %vm1646, %v1479
    %1660 = vst.msk [vmem:[#allocation2 + $0x68] sm:$0xff] %vm1646, %v1481
    %1661 = vst.msk [vmem:[#allocation2 + $0x70] sm:$0xff] %vm1646, %v1483
    %1662 = vst.msk [vmem:[#allocation2 + $0x78] sm:$0xff] %vm1646, %v1485
    %1663 = vst.msk [vmem:[#allocation2 + $0x80] sm:$0xff] %vm1646, %v1487
    %1664 = vst.msk [vmem:[#allocation2 + $0x88] sm:$0xff] %vm1646, %v1489
    %1665 = vst.msk [vmem:[#allocation2 + $0x90] sm:$0xff] %vm1646, %v1491
    %1666 = vst.msk [vmem:[#allocation2 + $0x98] sm:$0xff] %vm1646, %v1493
    %1667 = vst.msk [vmem:[#allocation2 + $0xa0] sm:$0xff] %vm1646, %v1495
    %1668 = vst.msk [vmem:[#allocation2 + $0xa8] sm:$0xff] %vm1646, %v1497
    %1669 = vst.msk [vmem:[#allocation2 + $0xb0] sm:$0xff] %vm1646, %v1499
    %1670 = vst.msk [vmem:[#allocation2 + $0xb8] sm:$0xff] %vm1646, %v1501
    %1671 = vst.msk [vmem:[#allocation2 + $0xc0] sm:$0xff] %vm1646, %v1503
    %1672 = vst.msk [vmem:[#allocation2 + $0xc8] sm:$0xff] %vm1646, %v1505
    %1673 = vst.msk [vmem:[#allocation2 + $0xd0] sm:$0xff] %vm1646, %v1507
    %1674 = vst.msk [vmem:[#allocation2 + $0xd8] sm:$0xff] %vm1646, %v1509
    %1675 = vst.msk [vmem:[#allocation2 + $0xe0] sm:$0xff] %vm1646, %v1511
    %1676 = vst.msk [vmem:[#allocation2 + $0xe8] sm:$0xff] %vm1646, %v1513
    %1677 = vst.msk [vmem:[#allocation2 + $0xf0] sm:$0xff] %vm1646, %v1515
    %1678 = vst.msk [vmem:[#allocation2 + $0xf8] sm:$0xff] %vm1646, %v1517
    %1679 = vst.msk [vmem:[#allocation2 + $0x100] sm:$0xff] %vm1646, %v1519
    %1680 = vst.msk [vmem:[#allocation2 + $0x108] sm:$0xff] %vm1646, %v1521
    %1681 = vst.msk [vmem:[#allocation2 + $0x110] sm:$0xff] %vm1646, %v1523
    %1682 = vst.msk [vmem:[#allocation2 + $0x118] sm:$0xff] %vm1646, %v1525
    %1683 = vst.msk [vmem:[#allocation2 + $0x120] sm:$0xff] %vm1646, %v1527
    %1684 = vst.msk [vmem:[#allocation2 + $0x128] sm:$0xff] %vm1646, %v1529
    %1685 = vst.msk [vmem:[#allocation2 + $0x130] sm:$0xff] %vm1646, %v1531
    %1686 = vst.msk [vmem:[#allocation2 + $0x138] sm:$0xff] %vm1646, %v1533
    %1687 = vst.msk [vmem:[#allocation2 + $0x140] sm:$0xff] %vm1646, %v1535
    %1688 = vst.msk [vmem:[#allocation2 + $0x148] sm:$0xff] %vm1646, %v1537
    %1689 = vst.msk [vmem:[#allocation2 + $0x150] sm:$0xff] %vm1646, %v1539
    %1690 = vst.msk [vmem:[#allocation2 + $0x158] sm:$0xff] %vm1646, %v1541
    %1691 = vst.msk [vmem:[#allocation2 + $0x160] sm:$0xff] %vm1646, %v1543
    %1692 = vst.msk [vmem:[#allocation2 + $0x168] sm:$0xff] %vm1646, %v1545
    %1693 = vst.msk [vmem:[#allocation2 + $0x170] sm:$0xff] %vm1646, %v1547
    %1694 = vst.msk [vmem:[#allocation2 + $0x178] sm:$0xff] %vm1646, %v1549
    %1695 = vst.msk [vmem:[#allocation2 + $0x180] sm:$0xff] %vm1646, %v1551
    %1696 = vst.msk [vmem:[#allocation2 + $0x188] sm:$0xff] %vm1646, %v1553
    %1697 = vst.msk [vmem:[#allocation2 + $0x190] sm:$0xff] %vm1646, %v1555
    %1698 = vst.msk [vmem:[#allocation2 + $0x198] sm:$0xff] %vm1646, %v1557
    %1699 = vst.msk [vmem:[#allocation2 + $0x1a0] sm:$0xff] %vm1646, %v1559
    %1700 = vst.msk [vmem:[#allocation2 + $0x1a8] sm:$0xff] %vm1646, %v1561
    %1701 = vst.msk [vmem:[#allocation2 + $0x1b0] sm:$0xff] %vm1646, %v1563
    %1702 = vst.msk [vmem:[#allocation2 + $0x1b8] sm:$0xff] %vm1646, %v1565
    %1703 = vst.msk [vmem:[#allocation2 + $0x1c0] sm:$0xff] %vm1646, %v1567
    %1704 = vst.msk [vmem:[#allocation2 + $0x1c8] sm:$0xff] %vm1646, %v1569
    %1705 = vst.msk [vmem:[#allocation2 + $0x1d0] sm:$0xff] %vm1646, %v1571
    %1706 = vst.msk [vmem:[#allocation2 + $0x1d8] sm:$0xff] %vm1646, %v1573
    %1707 = vst.msk [vmem:[#allocation2 + $0x1e0] sm:$0xff] %vm1646, %v1575
    %1708 = vst.msk [vmem:[#allocation2 + $0x1e8] sm:$0xff] %vm1646, %v1577
    %1709 = vst.msk [vmem:[#allocation2 + $0x1f0] sm:$0xff] %vm1646, %v1579
    %1710 = vst.msk [vmem:[#allocation2 + $0x1f8] sm:$0xff] %vm1646, %v1581
    %v1711 = vld [vmem:[%s940 + $0x2] sm:$0xff]
    %v1712 = vld [vmem:[%s940 + $0xa] sm:$0xff]
    %v1713 = vld [vmem:[%s940 + $0x1a] sm:$0xff]
    %v1714 = vld [vmem:[%s940 + $0x22] sm:$0xff]
    %v1715 = vld [vmem:[%s940 + $0x32] sm:$0xff]
    %v1716 = vld [vmem:[%s940 + $0x3a] sm:$0xff]
    %v1717 = vld [vmem:[%s940 + $0x4a] sm:$0xff]
    %v1718 = vld [vmem:[%s940 + $0x52] sm:$0xff]
    %v1719 = vld [vmem:[%s940 + $0x62] sm:$0xff]
    %v1720 = vld [vmem:[%s940 + $0x6a] sm:$0xff]
    %v1721 = vld [vmem:[%s940 + $0x7a] sm:$0xff]
    %v1722 = vld [vmem:[%s940 + $0x82] sm:$0xff]
    %v1723 = vld [vmem:[%s940 + $0x92] sm:$0xff]
    %v1724 = vld [vmem:[%s940 + $0x9a] sm:$0xff]
    %v1725 = vld [vmem:[%s940 + $0xaa] sm:$0xff]
    %v1726 = vld [vmem:[%s940 + $0xb2] sm:$0xff]
    %v1727 = vld [vmem:[%s940 + $0xc2] sm:$0xff]
    %v1728 = vld [vmem:[%s940 + $0xca] sm:$0xff]
    %v1729 = vld [vmem:[%s940 + $0xda] sm:$0xff]
    %v1730 = vld [vmem:[%s940 + $0xe2] sm:$0xff]
    %v1731 = vld [vmem:[%s940 + $0xf2] sm:$0xff]
    %v1732 = vld [vmem:[%s940 + $0xfa] sm:$0xff]
    %v1733 = vld [vmem:[%s940 + $0x10a] sm:$0xff]
    %v1734 = vld [vmem:[%s940 + $0x112] sm:$0xff]
    %v1735 = vld [vmem:[%s940 + $0x122] sm:$0xff]
    %v1736 = vld [vmem:[%s940 + $0x12a] sm:$0xff]
    %v1737 = vld [vmem:[%s940 + $0x13a] sm:$0xff]
    %v1738 = vld [vmem:[%s940 + $0x142] sm:$0xff]
    %v1739 = vld [vmem:[%s940 + $0x152] sm:$0xff]
    %v1740 = vld [vmem:[%s940 + $0x15a] sm:$0xff]
    %v1741 = vld [vmem:[%s940 + $0x16a] sm:$0xff]
    %v1742 = vld [vmem:[%s940 + $0x172] sm:$0xff]
    %v1743 = vld [vmem:[%s940 + $0x1b2] sm:$0xff]
    %v1744 = vld [vmem:[%s940 + $0x1ba] sm:$0xff]
    %v1745 = vld [vmem:[%s940 + $0x1ca] sm:$0xff]
    %v1746 = vld [vmem:[%s940 + $0x1d2] sm:$0xff]
    %v1747 = vld [vmem:[%s940 + $0x1e2] sm:$0xff]
    %v1748 = vld [vmem:[%s940 + $0x1ea] sm:$0xff]
    %v1749 = vld [vmem:[%s940 + $0x1fa] sm:$0xff]
    %v1750 = vld [vmem:[%s940 + $0x202] sm:$0xff]
    %v1751 = vld [vmem:[%s940 + $0x212] sm:$0xff]
    %v1752 = vld [vmem:[%s940 + $0x21a] sm:$0xff]
    %v1753 = vld [vmem:[%s940 + $0x22a] sm:$0xff]
    %v1754 = vld [vmem:[%s940 + $0x232] sm:$0xff]
    %v1755 = vld [vmem:[%s940 + $0x242] sm:$0xff]
    %v1756 = vld [vmem:[%s940 + $0x24a] sm:$0xff]
    %v1757 = vld [vmem:[%s940 + $0x25a] sm:$0xff]
    %v1758 = vld [vmem:[%s940 + $0x262] sm:$0xff]
    %v1759 = vld [vmem:[%s940 + $0x272] sm:$0xff]
    %v1760 = vld [vmem:[%s940 + $0x27a] sm:$0xff]
    %v1761 = vld [vmem:[%s940 + $0x28a] sm:$0xff]
    %v1762 = vld [vmem:[%s940 + $0x292] sm:$0xff]
    %v1763 = vld [vmem:[%s940 + $0x2a2] sm:$0xff]
    %v1764 = vld [vmem:[%s940 + $0x2aa] sm:$0xff]
    %v1765 = vld [vmem:[%s940 + $0x2ba] sm:$0xff]
    %v1766 = vld [vmem:[%s940 + $0x2c2] sm:$0xff]
    %v1767 = vld [vmem:[%s940 + $0x2d2] sm:$0xff]
    %v1768 = vld [vmem:[%s940 + $0x2da] sm:$0xff]
    %v1769 = vld [vmem:[%s940 + $0x2ea] sm:$0xff]
    %v1770 = vld [vmem:[%s940 + $0x2f2] sm:$0xff]
    %v1771 = vld [vmem:[%s940 + $0x302] sm:$0xff]
    %v1772 = vld [vmem:[%s940 + $0x30a] sm:$0xff]
    %v1773 = vld [vmem:[%s940 + $0x31a] sm:$0xff]
    %v1774 = vld [vmem:[%s940 + $0x322] sm:$0xff]
    %1839 = vrot.lane.b32.xlu0 %v1711, 20
    %v1840 = vpop.permute.xlu0 %1839
    %1841 = vrot.lane.b32.xlu0 %v1712, 20
    %v1842 = vpop.permute.xlu0 %1841
    %1843 = vrot.lane.b32.xlu0 %v1713, 20
    %v1844 = vpop.permute.xlu0 %1843
    %1845 = vrot.lane.b32.xlu0 %v1714, 20
    %v1846 = vpop.permute.xlu0 %1845
    %1847 = vrot.lane.b32.xlu0 %v1715, 20
    %v1848 = vpop.permute.xlu0 %1847
    %1849 = vrot.lane.b32.xlu0 %v1716, 20
    %v1850 = vpop.permute.xlu0 %1849
    %1851 = vrot.lane.b32.xlu0 %v1717, 20
    %v1852 = vpop.permute.xlu0 %1851
    %1853 = vrot.lane.b32.xlu0 %v1718, 20
    %v1854 = vpop.permute.xlu0 %1853
    %1855 = vrot.lane.b32.xlu0 %v1719, 20
    %v1856 = vpop.permute.xlu0 %1855
    %1857 = vrot.lane.b32.xlu0 %v1720, 20
    %v1858 = vpop.permute.xlu0 %1857
    %1859 = vrot.lane.b32.xlu0 %v1721, 20
    %v1860 = vpop.permute.xlu0 %1859
    %1861 = vrot.lane.b32.xlu0 %v1722, 20
    %v1862 = vpop.permute.xlu0 %1861
    %1863 = vrot.lane.b32.xlu0 %v1723, 20
    %v1864 = vpop.permute.xlu0 %1863
    %1865 = vrot.lane.b32.xlu0 %v1724, 20
    %v1866 = vpop.permute.xlu0 %1865
    %1867 = vrot.lane.b32.xlu0 %v1725, 20
    %v1868 = vpop.permute.xlu0 %1867
    %1869 = vrot.lane.b32.xlu0 %v1726, 20
    %v1870 = vpop.permute.xlu0 %1869
    %1871 = vrot.lane.b32.xlu0 %v1727, 20
    %v1872 = vpop.permute.xlu0 %1871
    %1873 = vrot.lane.b32.xlu0 %v1728, 20
    %v1874 = vpop.permute.xlu0 %1873
    %1875 = vrot.lane.b32.xlu0 %v1729, 20
    %v1876 = vpop.permute.xlu0 %1875
    %1877 = vrot.lane.b32.xlu0 %v1730, 20
    %v1878 = vpop.permute.xlu0 %1877
    %1879 = vrot.lane.b32.xlu0 %v1731, 20
    %v1880 = vpop.permute.xlu0 %1879
    %1881 = vrot.lane.b32.xlu0 %v1732, 20
    %v1882 = vpop.permute.xlu0 %1881
    %1883 = vrot.lane.b32.xlu0 %v1733, 20
    %v1884 = vpop.permute.xlu0 %1883
    %1885 = vrot.lane.b32.xlu0 %v1734, 20
    %v1886 = vpop.permute.xlu0 %1885
    %1887 = vrot.lane.b32.xlu0 %v1735, 20
    %v1888 = vpop.permute.xlu0 %1887
    %1889 = vrot.lane.b32.xlu0 %v1736, 20
    %v1890 = vpop.permute.xlu0 %1889
    %1891 = vrot.lane.b32.xlu0 %v1737, 20
    %v1892 = vpop.permute.xlu0 %1891
    %1893 = vrot.lane.b32.xlu0 %v1738, 20
    %v1894 = vpop.permute.xlu0 %1893
    %1895 = vrot.lane.b32.xlu0 %v1739, 20
    %v1896 = vpop.permute.xlu0 %1895
    %1897 = vrot.lane.b32.xlu0 %v1740, 20
    %v1898 = vpop.permute.xlu0 %1897
    %1899 = vrot.lane.b32.xlu0 %v1741, 20
    %v1900 = vpop.permute.xlu0 %1899
    %1901 = vrot.lane.b32.xlu0 %v1742, 20
    %v1902 = vpop.permute.xlu0 %1901
    %1903 = vrot.lane.b32.xlu0 %v1743, 20
    %v1904 = vpop.permute.xlu0 %1903
    %1905 = vrot.lane.b32.xlu0 %v1744, 20
    %v1906 = vpop.permute.xlu0 %1905
    %1907 = vrot.lane.b32.xlu0 %v1745, 20
    %v1908 = vpop.permute.xlu0 %1907
    %1909 = vrot.lane.b32.xlu0 %v1746, 20
    %v1910 = vpop.permute.xlu0 %1909
    %1911 = vrot.lane.b32.xlu0 %v1747, 20
    %v1912 = vpop.permute.xlu0 %1911
    %1913 = vrot.lane.b32.xlu0 %v1748, 20
    %v1914 = vpop.permute.xlu0 %1913
    %1915 = vrot.lane.b32.xlu0 %v1749, 20
    %v1916 = vpop.permute.xlu0 %1915
    %1917 = vrot.lane.b32.xlu0 %v1750, 20
    %v1918 = vpop.permute.xlu0 %1917
    %1919 = vrot.lane.b32.xlu0 %v1751, 20
    %v1920 = vpop.permute.xlu0 %1919
    %1921 = vrot.lane.b32.xlu0 %v1752, 20
    %v1922 = vpop.permute.xlu0 %1921
    %1923 = vrot.lane.b32.xlu0 %v1753, 20
    %v1924 = vpop.permute.xlu0 %1923
    %1925 = vrot.lane.b32.xlu0 %v1754, 20
    %v1926 = vpop.permute.xlu0 %1925
    %1927 = vrot.lane.b32.xlu0 %v1755, 20
    %v1928 = vpop.permute.xlu0 %1927
    %1929 = vrot.lane.b32.xlu0 %v1756, 20
    %v1930 = vpop.permute.xlu0 %1929
    %1931 = vrot.lane.b32.xlu0 %v1757, 20
    %v1932 = vpop.permute.xlu0 %1931
    %1933 = vrot.lane.b32.xlu0 %v1758, 20
    %v1934 = vpop.permute.xlu0 %1933
    %1935 = vrot.lane.b32.xlu0 %v1759, 20
    %v1936 = vpop.permute.xlu0 %1935
    %1937 = vrot.lane.b32.xlu0 %v1760, 20
    %v1938 = vpop.permute.xlu0 %1937
    %1939 = vrot.lane.b32.xlu0 %v1761, 20
    %v1940 = vpop.permute.xlu0 %1939
    %1941 = vrot.lane.b32.xlu0 %v1762, 20
    %v1942 = vpop.permute.xlu0 %1941
    %1943 = vrot.lane.b32.xlu0 %v1763, 20
    %v1944 = vpop.permute.xlu0 %1943
    %1945 = vrot.lane.b32.xlu0 %v1764, 20
    %v1946 = vpop.permute.xlu0 %1945
    %1947 = vrot.lane.b32.xlu0 %v1765, 20
    %v1948 = vpop.permute.xlu0 %1947
    %1949 = vrot.lane.b32.xlu0 %v1766, 20
    %v1950 = vpop.permute.xlu0 %1949
    %1951 = vrot.lane.b32.xlu0 %v1767, 20
    %v1952 = vpop.permute.xlu0 %1951
    %1953 = vrot.lane.b32.xlu0 %v1768, 20
    %v1954 = vpop.permute.xlu0 %1953
    %1955 = vrot.lane.b32.xlu0 %v1769, 20
    %v1956 = vpop.permute.xlu0 %1955
    %1957 = vrot.lane.b32.xlu0 %v1770, 20
    %v1958 = vpop.permute.xlu0 %1957
    %1959 = vrot.lane.b32.xlu0 %v1771, 20
    %v1960 = vpop.permute.xlu0 %1959
    %1961 = vrot.lane.b32.xlu0 %v1772, 20
    %v1962 = vpop.permute.xlu0 %1961
    %1963 = vrot.lane.b32.xlu0 %v1773, 20
    %v1964 = vpop.permute.xlu0 %1963
    %1965 = vrot.lane.b32.xlu0 %v1774, 20
    %v1966 = vpop.permute.xlu0 %1965
    %vm2031 = vcmask 195744
    %2032 = vst.msk [vmem:[#allocation2] sm:$0xff] %vm2031, %v1840
    %2033 = vst.msk [vmem:[#allocation2 + $0x8] sm:$0xff] %vm2031, %v1842
    %2034 = vst.msk [vmem:[#allocation2 + $0x10] sm:$0xff] %vm2031, %v1844
    %2035 = vst.msk [vmem:[#allocation2 + $0x18] sm:$0xff] %vm2031, %v1846
    %2036 = vst.msk [vmem:[#allocation2 + $0x20] sm:$0xff] %vm2031, %v1848
    %2037 = vst.msk [vmem:[#allocation2 + $0x28] sm:$0xff] %vm2031, %v1850
    %2038 = vst.msk [vmem:[#allocation2 + $0x30] sm:$0xff] %vm2031, %v1852
    %2039 = vst.msk [vmem:[#allocation2 + $0x38] sm:$0xff] %vm2031, %v1854
    %2040 = vst.msk [vmem:[#allocation2 + $0x40] sm:$0xff] %vm2031, %v1856
    %2041 = vst.msk [vmem:[#allocation2 + $0x48] sm:$0xff] %vm2031, %v1858
    %2042 = vst.msk [vmem:[#allocation2 + $0x50] sm:$0xff] %vm2031, %v1860
    %2043 = vst.msk [vmem:[#allocation2 + $0x58] sm:$0xff] %vm2031, %v1862
    %2044 = vst.msk [vmem:[#allocation2 + $0x60] sm:$0xff] %vm2031, %v1864
    %2045 = vst.msk [vmem:[#allocation2 + $0x68] sm:$0xff] %vm2031, %v1866
    %2046 = vst.msk [vmem:[#allocation2 + $0x70] sm:$0xff] %vm2031, %v1868
    %2047 = vst.msk [vmem:[#allocation2 + $0x78] sm:$0xff] %vm2031, %v1870
    %2048 = vst.msk [vmem:[#allocation2 + $0x80] sm:$0xff] %vm2031, %v1872
    %2049 = vst.msk [vmem:[#allocation2 + $0x88] sm:$0xff] %vm2031, %v1874
    %2050 = vst.msk [vmem:[#allocation2 + $0x90] sm:$0xff] %vm2031, %v1876
    %2051 = vst.msk [vmem:[#allocation2 + $0x98] sm:$0xff] %vm2031, %v1878
    %2052 = vst.msk [vmem:[#allocation2 + $0xa0] sm:$0xff] %vm2031, %v1880
    %2053 = vst.msk [vmem:[#allocation2 + $0xa8] sm:$0xff] %vm2031, %v1882
    %2054 = vst.msk [vmem:[#allocation2 + $0xb0] sm:$0xff] %vm2031, %v1884
    %2055 = vst.msk [vmem:[#allocation2 + $0xb8] sm:$0xff] %vm2031, %v1886
    %2056 = vst.msk [vmem:[#allocation2 + $0xc0] sm:$0xff] %vm2031, %v1888
    %2057 = vst.msk [vmem:[#allocation2 + $0xc8] sm:$0xff] %vm2031, %v1890
    %2058 = vst.msk [vmem:[#allocation2 + $0xd0] sm:$0xff] %vm2031, %v1892
    %2059 = vst.msk [vmem:[#allocation2 + $0xd8] sm:$0xff] %vm2031, %v1894
    %2060 = vst.msk [vmem:[#allocation2 + $0xe0] sm:$0xff] %vm2031, %v1896
    %2061 = vst.msk [vmem:[#allocation2 + $0xe8] sm:$0xff] %vm2031, %v1898
    %2062 = vst.msk [vmem:[#allocation2 + $0xf0] sm:$0xff] %vm2031, %v1900
    %2063 = vst.msk [vmem:[#allocation2 + $0xf8] sm:$0xff] %vm2031, %v1902
    %2064 = vst.msk [vmem:[#allocation2 + $0x100] sm:$0xff] %vm2031, %v1904
    %2065 = vst.msk [vmem:[#allocation2 + $0x108] sm:$0xff] %vm2031, %v1906
    %2066 = vst.msk [vmem:[#allocation2 + $0x110] sm:$0xff] %vm2031, %v1908
    %2067 = vst.msk [vmem:[#allocation2 + $0x118] sm:$0xff] %vm2031, %v1910
    %2068 = vst.msk [vmem:[#allocation2 + $0x120] sm:$0xff] %vm2031, %v1912
    %2069 = vst.msk [vmem:[#allocation2 + $0x128] sm:$0xff] %vm2031, %v1914
    %2070 = vst.msk [vmem:[#allocation2 + $0x130] sm:$0xff] %vm2031, %v1916
    %2071 = vst.msk [vmem:[#allocation2 + $0x138] sm:$0xff] %vm2031, %v1918
    %2072 = vst.msk [vmem:[#allocation2 + $0x140] sm:$0xff] %vm2031, %v1920
    %2073 = vst.msk [vmem:[#allocation2 + $0x148] sm:$0xff] %vm2031, %v1922
    %2074 = vst.msk [vmem:[#allocation2 + $0x150] sm:$0xff] %vm2031, %v1924
    %2075 = vst.msk [vmem:[#allocation2 + $0x158] sm:$0xff] %vm2031, %v1926
    %2076 = vst.msk [vmem:[#allocation2 + $0x160] sm:$0xff] %vm2031, %v1928
    %2077 = vst.msk [vmem:[#allocation2 + $0x168] sm:$0xff] %vm2031, %v1930
    %2078 = vst.msk [vmem:[#allocation2 + $0x170] sm:$0xff] %vm2031, %v1932
    %2079 = vst.msk [vmem:[#allocation2 + $0x178] sm:$0xff] %vm2031, %v1934
    %2080 = vst.msk [vmem:[#allocation2 + $0x180] sm:$0xff] %vm2031, %v1936
    %2081 = vst.msk [vmem:[#allocation2 + $0x188] sm:$0xff] %vm2031, %v1938
    %2082 = vst.msk [vmem:[#allocation2 + $0x190] sm:$0xff] %vm2031, %v1940
    %2083 = vst.msk [vmem:[#allocation2 + $0x198] sm:$0xff] %vm2031, %v1942
    %2084 = vst.msk [vmem:[#allocation2 + $0x1a0] sm:$0xff] %vm2031, %v1944
    %2085 = vst.msk [vmem:[#allocation2 + $0x1a8] sm:$0xff] %vm2031, %v1946
    %2086 = vst.msk [vmem:[#allocation2 + $0x1b0] sm:$0xff] %vm2031, %v1948
    %2087 = vst.msk [vmem:[#allocation2 + $0x1b8] sm:$0xff] %vm2031, %v1950
    %2088 = vst.msk [vmem:[#allocation2 + $0x1c0] sm:$0xff] %vm2031, %v1952
    %2089 = vst.msk [vmem:[#allocation2 + $0x1c8] sm:$0xff] %vm2031, %v1954
    %2090 = vst.msk [vmem:[#allocation2 + $0x1d0] sm:$0xff] %vm2031, %v1956
    %2091 = vst.msk [vmem:[#allocation2 + $0x1d8] sm:$0xff] %vm2031, %v1958
    %2092 = vst.msk [vmem:[#allocation2 + $0x1e0] sm:$0xff] %vm2031, %v1960
    %2093 = vst.msk [vmem:[#allocation2 + $0x1e8] sm:$0xff] %vm2031, %v1962
    %2094 = vst.msk [vmem:[#allocation2 + $0x1f0] sm:$0xff] %vm2031, %v1964
    %2095 = vst.msk [vmem:[#allocation2 + $0x1f8] sm:$0xff] %vm2031, %v1966
    %s2096 = scalar_lea.vmem %s0, 48
    %v2097 = vld [vmem:[%s2096] sm:$0xff]
    %v2098 = vld [vmem:[%s2096 + $0x8] sm:$0xff]
    %v2099 = vld [vmem:[%s2096 + $0x18] sm:$0xff]
    %v2100 = vld [vmem:[%s2096 + $0x20] sm:$0xff]
    %v2101 = vld [vmem:[%s2096 + $0x30] sm:$0xff]
    %v2102 = vld [vmem:[%s2096 + $0x38] sm:$0xff]
    %v2103 = vld [vmem:[%s2096 + $0x48] sm:$0xff]
    %v2104 = vld [vmem:[%s2096 + $0x50] sm:$0xff]
    %v2105 = vld [vmem:[%s2096 + $0x60] sm:$0xff]
    %v2106 = vld [vmem:[%s2096 + $0x68] sm:$0xff]
    %v2107 = vld [vmem:[%s2096 + $0x78] sm:$0xff]
    %v2108 = vld [vmem:[%s2096 + $0x80] sm:$0xff]
    %v2109 = vld [vmem:[%s2096 + $0x90] sm:$0xff]
    %v2110 = vld [vmem:[%s2096 + $0x98] sm:$0xff]
    %v2111 = vld [vmem:[%s2096 + $0xa8] sm:$0xff]
    %v2112 = vld [vmem:[%s2096 + $0xb0] sm:$0xff]
    %v2113 = vld [vmem:[%s2096 + $0xc0] sm:$0xff]
    %v2114 = vld [vmem:[%s2096 + $0xc8] sm:$0xff]
    %v2115 = vld [vmem:[%s2096 + $0xd8] sm:$0xff]
    %v2116 = vld [vmem:[%s2096 + $0xe0] sm:$0xff]
    %v2117 = vld [vmem:[%s2096 + $0xf0] sm:$0xff]
    %v2118 = vld [vmem:[%s2096 + $0xf8] sm:$0xff]
    %v2119 = vld [vmem:[%s2096 + $0x108] sm:$0xff]
    %v2120 = vld [vmem:[%s2096 + $0x110] sm:$0xff]
    %v2121 = vld [vmem:[%s2096 + $0x120] sm:$0xff]
    %v2122 = vld [vmem:[%s2096 + $0x128] sm:$0xff]
    %v2123 = vld [vmem:[%s2096 + $0x138] sm:$0xff]
    %v2124 = vld [vmem:[%s2096 + $0x140] sm:$0xff]
    %v2125 = vld [vmem:[%s2096 + $0x150] sm:$0xff]
    %v2126 = vld [vmem:[%s2096 + $0x158] sm:$0xff]
    %v2127 = vld [vmem:[%s2096 + $0x168] sm:$0xff]
    %v2128 = vld [vmem:[%s2096 + $0x170] sm:$0xff]
    %v2129 = vld [vmem:[%s2096 + $0x1b0] sm:$0xff]
    %v2130 = vld [vmem:[%s2096 + $0x1b8] sm:$0xff]
    %v2131 = vld [vmem:[%s2096 + $0x1c8] sm:$0xff]
    %v2132 = vld [vmem:[%s2096 + $0x1d0] sm:$0xff]
    %v2133 = vld [vmem:[%s2096 + $0x1e0] sm:$0xff]
    %v2134 = vld [vmem:[%s2096 + $0x1e8] sm:$0xff]
    %v2135 = vld [vmem:[%s2096 + $0x1f8] sm:$0xff]
    %v2136 = vld [vmem:[%s2096 + $0x200] sm:$0xff]
    %v2137 = vld [vmem:[%s2096 + $0x210] sm:$0xff]
    %v2138 = vld [vmem:[%s2096 + $0x218] sm:$0xff]
    %v2139 = vld [vmem:[%s2096 + $0x228] sm:$0xff]
    %v2140 = vld [vmem:[%s2096 + $0x230] sm:$0xff]
    %v2141 = vld [vmem:[%s2096 + $0x240] sm:$0xff]
    %v2142 = vld [vmem:[%s2096 + $0x248] sm:$0xff]
    %v2143 = vld [vmem:[%s2096 + $0x258] sm:$0xff]
    %v2144 = vld [vmem:[%s2096 + $0x260] sm:$0xff]
    %v2145 = vld [vmem:[%s2096 + $0x270] sm:$0xff]
    %v2146 = vld [vmem:[%s2096 + $0x278] sm:$0xff]
    %v2147 = vld [vmem:[%s2096 + $0x288] sm:$0xff]
    %v2148 = vld [vmem:[%s2096 + $0x290] sm:$0xff]
    %v2149 = vld [vmem:[%s2096 + $0x2a0] sm:$0xff]
    %v2150 = vld [vmem:[%s2096 + $0x2a8] sm:$0xff]
    %v2151 = vld [vmem:[%s2096 + $0x2b8] sm:$0xff]
    %v2152 = vld [vmem:[%s2096 + $0x2c0] sm:$0xff]
    %v2153 = vld [vmem:[%s2096 + $0x2d0] sm:$0xff]
    %v2154 = vld [vmem:[%s2096 + $0x2d8] sm:$0xff]
    %v2155 = vld [vmem:[%s2096 + $0x2e8] sm:$0xff]
    %v2156 = vld [vmem:[%s2096 + $0x2f0] sm:$0xff]
    %v2157 = vld [vmem:[%s2096 + $0x300] sm:$0xff]
    %v2158 = vld [vmem:[%s2096 + $0x308] sm:$0xff]
    %v2159 = vld [vmem:[%s2096 + $0x318] sm:$0xff]
    %v2160 = vld [vmem:[%s2096 + $0x320] sm:$0xff]
    %2225 = vrot.lane.b32.xlu0 %v2097, 24
    %v2226 = vpop.permute.xlu0 %2225
    %2227 = vrot.lane.b32.xlu0 %v2098, 24
    %v2228 = vpop.permute.xlu0 %2227
    %2229 = vrot.lane.b32.xlu0 %v2099, 24
    %v2230 = vpop.permute.xlu0 %2229
    %2231 = vrot.lane.b32.xlu0 %v2100, 24
    %v2232 = vpop.permute.xlu0 %2231
    %2233 = vrot.lane.b32.xlu0 %v2101, 24
    %v2234 = vpop.permute.xlu0 %2233
    %2235 = vrot.lane.b32.xlu0 %v2102, 24
    %v2236 = vpop.permute.xlu0 %2235
    %2237 = vrot.lane.b32.xlu0 %v2103, 24
    %v2238 = vpop.permute.xlu0 %2237
    %2239 = vrot.lane.b32.xlu0 %v2104, 24
    %v2240 = vpop.permute.xlu0 %2239
    %2241 = vrot.lane.b32.xlu0 %v2105, 24
    %v2242 = vpop.permute.xlu0 %2241
    %2243 = vrot.lane.b32.xlu0 %v2106, 24
    %v2244 = vpop.permute.xlu0 %2243
    %2245 = vrot.lane.b32.xlu0 %v2107, 24
    %v2246 = vpop.permute.xlu0 %2245
    %2247 = vrot.lane.b32.xlu0 %v2108, 24
    %v2248 = vpop.permute.xlu0 %2247
    %2249 = vrot.lane.b32.xlu0 %v2109, 24
    %v2250 = vpop.permute.xlu0 %2249
    %2251 = vrot.lane.b32.xlu0 %v2110, 24
    %v2252 = vpop.permute.xlu0 %2251
    %2253 = vrot.lane.b32.xlu0 %v2111, 24
    %v2254 = vpop.permute.xlu0 %2253
    %2255 = vrot.lane.b32.xlu0 %v2112, 24
    %v2256 = vpop.permute.xlu0 %2255
    %2257 = vrot.lane.b32.xlu0 %v2113, 24
    %v2258 = vpop.permute.xlu0 %2257
    %2259 = vrot.lane.b32.xlu0 %v2114, 24
    %v2260 = vpop.permute.xlu0 %2259
    %2261 = vrot.lane.b32.xlu0 %v2115, 24
    %v2262 = vpop.permute.xlu0 %2261
    %2263 = vrot.lane.b32.xlu0 %v2116, 24
    %v2264 = vpop.permute.xlu0 %2263
    %2265 = vrot.lane.b32.xlu0 %v2117, 24
    %v2266 = vpop.permute.xlu0 %2265
    %2267 = vrot.lane.b32.xlu0 %v2118, 24
    %v2268 = vpop.permute.xlu0 %2267
    %2269 = vrot.lane.b32.xlu0 %v2119, 24
    %v2270 = vpop.permute.xlu0 %2269
    %2271 = vrot.lane.b32.xlu0 %v2120, 24
    %v2272 = vpop.permute.xlu0 %2271
    %2273 = vrot.lane.b32.xlu0 %v2121, 24
    %v2274 = vpop.permute.xlu0 %2273
    %2275 = vrot.lane.b32.xlu0 %v2122, 24
    %v2276 = vpop.permute.xlu0 %2275
    %2277 = vrot.lane.b32.xlu0 %v2123, 24
    %v2278 = vpop.permute.xlu0 %2277
    %2279 = vrot.lane.b32.xlu0 %v2124, 24
    %v2280 = vpop.permute.xlu0 %2279
    %2281 = vrot.lane.b32.xlu0 %v2125, 24
    %v2282 = vpop.permute.xlu0 %2281
    %2283 = vrot.lane.b32.xlu0 %v2126, 24
    %v2284 = vpop.permute.xlu0 %2283
    %2285 = vrot.lane.b32.xlu0 %v2127, 24
    %v2286 = vpop.permute.xlu0 %2285
    %2287 = vrot.lane.b32.xlu0 %v2128, 24
    %v2288 = vpop.permute.xlu0 %2287
    %2289 = vrot.lane.b32.xlu0 %v2129, 24
    %v2290 = vpop.permute.xlu0 %2289
    %2291 = vrot.lane.b32.xlu0 %v2130, 24
    %v2292 = vpop.permute.xlu0 %2291
    %2293 = vrot.lane.b32.xlu0 %v2131, 24
    %v2294 = vpop.permute.xlu0 %2293
    %2295 = vrot.lane.b32.xlu0 %v2132, 24
    %v2296 = vpop.permute.xlu0 %2295
    %2297 = vrot.lane.b32.xlu0 %v2133, 24
    %v2298 = vpop.permute.xlu0 %2297
    %2299 = vrot.lane.b32.xlu0 %v2134, 24
    %v2300 = vpop.permute.xlu0 %2299
    %2301 = vrot.lane.b32.xlu0 %v2135, 24
    %v2302 = vpop.permute.xlu0 %2301
    %2303 = vrot.lane.b32.xlu0 %v2136, 24
    %v2304 = vpop.permute.xlu0 %2303
    %2305 = vrot.lane.b32.xlu0 %v2137, 24
    %v2306 = vpop.permute.xlu0 %2305
    %2307 = vrot.lane.b32.xlu0 %v2138, 24
    %v2308 = vpop.permute.xlu0 %2307
    %2309 = vrot.lane.b32.xlu0 %v2139, 24
    %v2310 = vpop.permute.xlu0 %2309
    %2311 = vrot.lane.b32.xlu0 %v2140, 24
    %v2312 = vpop.permute.xlu0 %2311
    %2313 = vrot.lane.b32.xlu0 %v2141, 24
    %v2314 = vpop.permute.xlu0 %2313
    %2315 = vrot.lane.b32.xlu0 %v2142, 24
    %v2316 = vpop.permute.xlu0 %2315
    %2317 = vrot.lane.b32.xlu0 %v2143, 24
    %v2318 = vpop.permute.xlu0 %2317
    %2319 = vrot.lane.b32.xlu0 %v2144, 24
    %v2320 = vpop.permute.xlu0 %2319
    %2321 = vrot.lane.b32.xlu0 %v2145, 24
    %v2322 = vpop.permute.xlu0 %2321
    %2323 = vrot.lane.b32.xlu0 %v2146, 24
    %v2324 = vpop.permute.xlu0 %2323
    %2325 = vrot.lane.b32.xlu0 %v2147, 24
    %v2326 = vpop.permute.xlu0 %2325
    %2327 = vrot.lane.b32.xlu0 %v2148, 24
    %v2328 = vpop.permute.xlu0 %2327
    %2329 = vrot.lane.b32.xlu0 %v2149, 24
    %v2330 = vpop.permute.xlu0 %2329
    %2331 = vrot.lane.b32.xlu0 %v2150, 24
    %v2332 = vpop.permute.xlu0 %2331
    %2333 = vrot.lane.b32.xlu0 %v2151, 24
    %v2334 = vpop.permute.xlu0 %2333
    %2335 = vrot.lane.b32.xlu0 %v2152, 24
    %v2336 = vpop.permute.xlu0 %2335
    %2337 = vrot.lane.b32.xlu0 %v2153, 24
    %v2338 = vpop.permute.xlu0 %2337
    %2339 = vrot.lane.b32.xlu0 %v2154, 24
    %v2340 = vpop.permute.xlu0 %2339
    %2341 = vrot.lane.b32.xlu0 %v2155, 24
    %v2342 = vpop.permute.xlu0 %2341
    %2343 = vrot.lane.b32.xlu0 %v2156, 24
    %v2344 = vpop.permute.xlu0 %2343
    %2345 = vrot.lane.b32.xlu0 %v2157, 24
    %v2346 = vpop.permute.xlu0 %2345
    %2347 = vrot.lane.b32.xlu0 %v2158, 24
    %v2348 = vpop.permute.xlu0 %2347
    %2349 = vrot.lane.b32.xlu0 %v2159, 24
    %v2350 = vpop.permute.xlu0 %2349
    %2351 = vrot.lane.b32.xlu0 %v2160, 24
    %v2352 = vpop.permute.xlu0 %2351
    %vm2417 = vcmask 228544
    %2418 = vst.msk [vmem:[#allocation2] sm:$0xff] %vm2417, %v2226
    %2419 = vst.msk [vmem:[#allocation2 + $0x8] sm:$0xff] %vm2417, %v2228
    %2420 = vst.msk [vmem:[#allocation2 + $0x10] sm:$0xff] %vm2417, %v2230
    %2421 = vst.msk [vmem:[#allocation2 + $0x18] sm:$0xff] %vm2417, %v2232
    %2422 = vst.msk [vmem:[#allocation2 + $0x20] sm:$0xff] %vm2417, %v2234
    %2423 = vst.msk [vmem:[#allocation2 + $0x28] sm:$0xff] %vm2417, %v2236
    %2424 = vst.msk [vmem:[#allocation2 + $0x30] sm:$0xff] %vm2417, %v2238
    %2425 = vst.msk [vmem:[#allocation2 + $0x38] sm:$0xff] %vm2417, %v2240
    %2426 = vst.msk [vmem:[#allocation2 + $0x40] sm:$0xff] %vm2417, %v2242
    %2427 = vst.msk [vmem:[#allocation2 + $0x48] sm:$0xff] %vm2417, %v2244
    %2428 = vst.msk [vmem:[#allocation2 + $0x50] sm:$0xff] %vm2417, %v2246
    %2429 = vst.msk [vmem:[#allocation2 + $0x58] sm:$0xff] %vm2417, %v2248
    %2430 = vst.msk [vmem:[#allocation2 + $0x60] sm:$0xff] %vm2417, %v2250
    %2431 = vst.msk [vmem:[#allocation2 + $0x68] sm:$0xff] %vm2417, %v2252
    %2432 = vst.msk [vmem:[#allocation2 + $0x70] sm:$0xff] %vm2417, %v2254
    %2433 = vst.msk [vmem:[#allocation2 + $0x78] sm:$0xff] %vm2417, %v2256
    %2434 = vst.msk [vmem:[#allocation2 + $0x80] sm:$0xff] %vm2417, %v2258
    %2435 = vst.msk [vmem:[#allocation2 + $0x88] sm:$0xff] %vm2417, %v2260
    %2436 = vst.msk [vmem:[#allocation2 + $0x90] sm:$0xff] %vm2417, %v2262
    %2437 = vst.msk [vmem:[#allocation2 + $0x98] sm:$0xff] %vm2417, %v2264
    %2438 = vst.msk [vmem:[#allocation2 + $0xa0] sm:$0xff] %vm2417, %v2266
    %2439 = vst.msk [vmem:[#allocation2 + $0xa8] sm:$0xff] %vm2417, %v2268
    %2440 = vst.msk [vmem:[#allocation2 + $0xb0] sm:$0xff] %vm2417, %v2270
    %2441 = vst.msk [vmem:[#allocation2 + $0xb8] sm:$0xff] %vm2417, %v2272
    %2442 = vst.msk [vmem:[#allocation2 + $0xc0] sm:$0xff] %vm2417, %v2274
    %2443 = vst.msk [vmem:[#allocation2 + $0xc8] sm:$0xff] %vm2417, %v2276
    %2444 = vst.msk [vmem:[#allocation2 + $0xd0] sm:$0xff] %vm2417, %v2278
    %2445 = vst.msk [vmem:[#allocation2 + $0xd8] sm:$0xff] %vm2417, %v2280
    %2446 = vst.msk [vmem:[#allocation2 + $0xe0] sm:$0xff] %vm2417, %v2282
    %2447 = vst.msk [vmem:[#allocation2 + $0xe8] sm:$0xff] %vm2417, %v2284
    %2448 = vst.msk [vmem:[#allocation2 + $0xf0] sm:$0xff] %vm2417, %v2286
    %2449 = vst.msk [vmem:[#allocation2 + $0xf8] sm:$0xff] %vm2417, %v2288
    %2450 = vst.msk [vmem:[#allocation2 + $0x100] sm:$0xff] %vm2417, %v2290
    %2451 = vst.msk [vmem:[#allocation2 + $0x108] sm:$0xff] %vm2417, %v2292
    %2452 = vst.msk [vmem:[#allocation2 + $0x110] sm:$0xff] %vm2417, %v2294
    %2453 = vst.msk [vmem:[#allocation2 + $0x118] sm:$0xff] %vm2417, %v2296
    %2454 = vst.msk [vmem:[#allocation2 + $0x120] sm:$0xff] %vm2417, %v2298
    %2455 = vst.msk [vmem:[#allocation2 + $0x128] sm:$0xff] %vm2417, %v2300
    %2456 = vst.msk [vmem:[#allocation2 + $0x130] sm:$0xff] %vm2417, %v2302
    %2457 = vst.msk [vmem:[#allocation2 + $0x138] sm:$0xff] %vm2417, %v2304
    %2458 = vst.msk [vmem:[#allocation2 + $0x140] sm:$0xff] %vm2417, %v2306
    %2459 = vst.msk [vmem:[#allocation2 + $0x148] sm:$0xff] %vm2417, %v2308
    %2460 = vst.msk [vmem:[#allocation2 + $0x150] sm:$0xff] %vm2417, %v2310
    %2461 = vst.msk [vmem:[#allocation2 + $0x158] sm:$0xff] %vm2417, %v2312
    %2462 = vst.msk [vmem:[#allocation2 + $0x160] sm:$0xff] %vm2417, %v2314
    %2463 = vst.msk [vmem:[#allocation2 + $0x168] sm:$0xff] %vm2417, %v2316
    %2464 = vst.msk [vmem:[#allocation2 + $0x170] sm:$0xff] %vm2417, %v2318
    %2465 = vst.msk [vmem:[#allocation2 + $0x178] sm:$0xff] %vm2417, %v2320
    %2466 = vst.msk [vmem:[#allocation2 + $0x180] sm:$0xff] %vm2417, %v2322
    %2467 = vst.msk [vmem:[#allocation2 + $0x188] sm:$0xff] %vm2417, %v2324
    %2468 = vst.msk [vmem:[#allocation2 + $0x190] sm:$0xff] %vm2417, %v2326
    %2469 = vst.msk [vmem:[#allocation2 + $0x198] sm:$0xff] %vm2417, %v2328
    %2470 = vst.msk [vmem:[#allocation2 + $0x1a0] sm:$0xff] %vm2417, %v2330
    %2471 = vst.msk [vmem:[#allocation2 + $0x1a8] sm:$0xff] %vm2417, %v2332
    %2472 = vst.msk [vmem:[#allocation2 + $0x1b0] sm:$0xff] %vm2417, %v2334
    %2473 = vst.msk [vmem:[#allocation2 + $0x1b8] sm:$0xff] %vm2417, %v2336
    %2474 = vst.msk [vmem:[#allocation2 + $0x1c0] sm:$0xff] %vm2417, %v2338
    %2475 = vst.msk [vmem:[#allocation2 + $0x1c8] sm:$0xff] %vm2417, %v2340
    %2476 = vst.msk [vmem:[#allocation2 + $0x1d0] sm:$0xff] %vm2417, %v2342
    %2477 = vst.msk [vmem:[#allocation2 + $0x1d8] sm:$0xff] %vm2417, %v2344
    %2478 = vst.msk [vmem:[#allocation2 + $0x1e0] sm:$0xff] %vm2417, %v2346
    %2479 = vst.msk [vmem:[#allocation2 + $0x1e8] sm:$0xff] %vm2417, %v2348
    %2480 = vst.msk [vmem:[#allocation2 + $0x1f0] sm:$0xff] %vm2417, %v2350
    %2481 = vst.msk [vmem:[#allocation2 + $0x1f8] sm:$0xff] %vm2417, %v2352
    %v2482 = vld [vmem:[%s2096 + $0x1] sm:$0xff]
    %v2483 = vld [vmem:[%s2096 + $0x9] sm:$0xff]
    %v2484 = vld [vmem:[%s2096 + $0x19] sm:$0xff]
    %v2485 = vld [vmem:[%s2096 + $0x21] sm:$0xff]
    %v2486 = vld [vmem:[%s2096 + $0x31] sm:$0xff]
    %v2487 = vld [vmem:[%s2096 + $0x39] sm:$0xff]
    %v2488 = vld [vmem:[%s2096 + $0x49] sm:$0xff]
    %v2489 = vld [vmem:[%s2096 + $0x51] sm:$0xff]
    %v2490 = vld [vmem:[%s2096 + $0x61] sm:$0xff]
    %v2491 = vld [vmem:[%s2096 + $0x69] sm:$0xff]
    %v2492 = vld [vmem:[%s2096 + $0x79] sm:$0xff]
    %v2493 = vld [vmem:[%s2096 + $0x81] sm:$0xff]
    %v2494 = vld [vmem:[%s2096 + $0x91] sm:$0xff]
    %v2495 = vld [vmem:[%s2096 + $0x99] sm:$0xff]
    %v2496 = vld [vmem:[%s2096 + $0xa9] sm:$0xff]
    %v2497 = vld [vmem:[%s2096 + $0xb1] sm:$0xff]
    %v2498 = vld [vmem:[%s2096 + $0xc1] sm:$0xff]
    %v2499 = vld [vmem:[%s2096 + $0xc9] sm:$0xff]
    %v2500 = vld [vmem:[%s2096 + $0xd9] sm:$0xff]
    %v2501 = vld [vmem:[%s2096 + $0xe1] sm:$0xff]
    %v2502 = vld [vmem:[%s2096 + $0xf1] sm:$0xff]
    %v2503 = vld [vmem:[%s2096 + $0xf9] sm:$0xff]
    %v2504 = vld [vmem:[%s2096 + $0x109] sm:$0xff]
    %v2505 = vld [vmem:[%s2096 + $0x111] sm:$0xff]
    %v2506 = vld [vmem:[%s2096 + $0x121] sm:$0xff]
    %v2507 = vld [vmem:[%s2096 + $0x129] sm:$0xff]
    %v2508 = vld [vmem:[%s2096 + $0x139] sm:$0xff]
    %v2509 = vld [vmem:[%s2096 + $0x141] sm:$0xff]
    %v2510 = vld [vmem:[%s2096 + $0x151] sm:$0xff]
    %v2511 = vld [vmem:[%s2096 + $0x159] sm:$0xff]
    %v2512 = vld [vmem:[%s2096 + $0x169] sm:$0xff]
    %v2513 = vld [vmem:[%s2096 + $0x171] sm:$0xff]
    %v2514 = vld [vmem:[%s2096 + $0x1b1] sm:$0xff]
    %v2515 = vld [vmem:[%s2096 + $0x1b9] sm:$0xff]
    %v2516 = vld [vmem:[%s2096 + $0x1c9] sm:$0xff]
    %v2517 = vld [vmem:[%s2096 + $0x1d1] sm:$0xff]
    %v2518 = vld [vmem:[%s2096 + $0x1e1] sm:$0xff]
    %v2519 = vld [vmem:[%s2096 + $0x1e9] sm:$0xff]
    %v2520 = vld [vmem:[%s2096 + $0x1f9] sm:$0xff]
    %v2521 = vld [vmem:[%s2096 + $0x201] sm:$0xff]
    %v2522 = vld [vmem:[%s2096 + $0x211] sm:$0xff]
    %v2523 = vld [vmem:[%s2096 + $0x219] sm:$0xff]
    %v2524 = vld [vmem:[%s2096 + $0x229] sm:$0xff]
    %v2525 = vld [vmem:[%s2096 + $0x231] sm:$0xff]
    %v2526 = vld [vmem:[%s2096 + $0x241] sm:$0xff]
    %v2527 = vld [vmem:[%s2096 + $0x249] sm:$0xff]
    %v2528 = vld [vmem:[%s2096 + $0x259] sm:$0xff]
    %v2529 = vld [vmem:[%s2096 + $0x261] sm:$0xff]
    %v2530 = vld [vmem:[%s2096 + $0x271] sm:$0xff]
    %v2531 = vld [vmem:[%s2096 + $0x279] sm:$0xff]
    %v2532 = vld [vmem:[%s2096 + $0x289] sm:$0xff]
    %v2533 = vld [vmem:[%s2096 + $0x291] sm:$0xff]
    %v2534 = vld [vmem:[%s2096 + $0x2a1] sm:$0xff]
    %v2535 = vld [vmem:[%s2096 + $0x2a9] sm:$0xff]
    %v2536 = vld [vmem:[%s2096 + $0x2b9] sm:$0xff]
    %v2537 = vld [vmem:[%s2096 + $0x2c1] sm:$0xff]
    %v2538 = vld [vmem:[%s2096 + $0x2d1] sm:$0xff]
    %v2539 = vld [vmem:[%s2096 + $0x2d9] sm:$0xff]
    %v2540 = vld [vmem:[%s2096 + $0x2e9] sm:$0xff]
    %v2541 = vld [vmem:[%s2096 + $0x2f1] sm:$0xff]
    %v2542 = vld [vmem:[%s2096 + $0x301] sm:$0xff]
    %v2543 = vld [vmem:[%s2096 + $0x309] sm:$0xff]
    %v2544 = vld [vmem:[%s2096 + $0x319] sm:$0xff]
    %v2545 = vld [vmem:[%s2096 + $0x321] sm:$0xff]
    %2610 = vrot.lane.b32.xlu0 %v2482, 28
    %v2611 = vpop.permute.xlu0 %2610
    %2612 = vrot.lane.b32.xlu0 %v2483, 28
    %v2613 = vpop.permute.xlu0 %2612
    %2614 = vrot.lane.b32.xlu0 %v2484, 28
    %v2615 = vpop.permute.xlu0 %2614
    %2616 = vrot.lane.b32.xlu0 %v2485, 28
    %v2617 = vpop.permute.xlu0 %2616
    %2618 = vrot.lane.b32.xlu0 %v2486, 28
    %v2619 = vpop.permute.xlu0 %2618
    %2620 = vrot.lane.b32.xlu0 %v2487, 28
    %v2621 = vpop.permute.xlu0 %2620
    %2622 = vrot.lane.b32.xlu0 %v2488, 28
    %v2623 = vpop.permute.xlu0 %2622
    %2624 = vrot.lane.b32.xlu0 %v2489, 28
    %v2625 = vpop.permute.xlu0 %2624
    %2626 = vrot.lane.b32.xlu0 %v2490, 28
    %v2627 = vpop.permute.xlu0 %2626
    %2628 = vrot.lane.b32.xlu0 %v2491, 28
    %v2629 = vpop.permute.xlu0 %2628
    %2630 = vrot.lane.b32.xlu0 %v2492, 28
    %v2631 = vpop.permute.xlu0 %2630
    %2632 = vrot.lane.b32.xlu0 %v2493, 28
    %v2633 = vpop.permute.xlu0 %2632
    %2634 = vrot.lane.b32.xlu0 %v2494, 28
    %v2635 = vpop.permute.xlu0 %2634
    %2636 = vrot.lane.b32.xlu0 %v2495, 28
    %v2637 = vpop.permute.xlu0 %2636
    %2638 = vrot.lane.b32.xlu0 %v2496, 28
    %v2639 = vpop.permute.xlu0 %2638
    %2640 = vrot.lane.b32.xlu0 %v2497, 28
    %v2641 = vpop.permute.xlu0 %2640
    %2642 = vrot.lane.b32.xlu0 %v2498, 28
    %v2643 = vpop.permute.xlu0 %2642
    %2644 = vrot.lane.b32.xlu0 %v2499, 28
    %v2645 = vpop.permute.xlu0 %2644
    %2646 = vrot.lane.b32.xlu0 %v2500, 28
    %v2647 = vpop.permute.xlu0 %2646
    %2648 = vrot.lane.b32.xlu0 %v2501, 28
    %v2649 = vpop.permute.xlu0 %2648
    %2650 = vrot.lane.b32.xlu0 %v2502, 28
    %v2651 = vpop.permute.xlu0 %2650
    %2652 = vrot.lane.b32.xlu0 %v2503, 28
    %v2653 = vpop.permute.xlu0 %2652
    %2654 = vrot.lane.b32.xlu0 %v2504, 28
    %v2655 = vpop.permute.xlu0 %2654
    %2656 = vrot.lane.b32.xlu0 %v2505, 28
    %v2657 = vpop.permute.xlu0 %2656
    %2658 = vrot.lane.b32.xlu0 %v2506, 28
    %v2659 = vpop.permute.xlu0 %2658
    %2660 = vrot.lane.b32.xlu0 %v2507, 28
    %v2661 = vpop.permute.xlu0 %2660
    %2662 = vrot.lane.b32.xlu0 %v2508, 28
    %v2663 = vpop.permute.xlu0 %2662
    %2664 = vrot.lane.b32.xlu0 %v2509, 28
    %v2665 = vpop.permute.xlu0 %2664
    %2666 = vrot.lane.b32.xlu0 %v2510, 28
    %v2667 = vpop.permute.xlu0 %2666
    %2668 = vrot.lane.b32.xlu0 %v2511, 28
    %v2669 = vpop.permute.xlu0 %2668
    %2670 = vrot.lane.b32.xlu0 %v2512, 28
    %v2671 = vpop.permute.xlu0 %2670
    %2672 = vrot.lane.b32.xlu0 %v2513, 28
    %v2673 = vpop.permute.xlu0 %2672
    %2674 = vrot.lane.b32.xlu0 %v2514, 28
    %v2675 = vpop.permute.xlu0 %2674
    %2676 = vrot.lane.b32.xlu0 %v2515, 28
    %v2677 = vpop.permute.xlu0 %2676
    %2678 = vrot.lane.b32.xlu0 %v2516, 28
    %v2679 = vpop.permute.xlu0 %2678
    %2680 = vrot.lane.b32.xlu0 %v2517, 28
    %v2681 = vpop.permute.xlu0 %2680
    %2682 = vrot.lane.b32.xlu0 %v2518, 28
    %v2683 = vpop.permute.xlu0 %2682
    %2684 = vrot.lane.b32.xlu0 %v2519, 28
    %v2685 = vpop.permute.xlu0 %2684
    %2686 = vrot.lane.b32.xlu0 %v2520, 28
    %v2687 = vpop.permute.xlu0 %2686
    %2688 = vrot.lane.b32.xlu0 %v2521, 28
    %v2689 = vpop.permute.xlu0 %2688
    %2690 = vrot.lane.b32.xlu0 %v2522, 28
    %v2691 = vpop.permute.xlu0 %2690
    %2692 = vrot.lane.b32.xlu0 %v2523, 28
    %v2693 = vpop.permute.xlu0 %2692
    %2694 = vrot.lane.b32.xlu0 %v2524, 28
    %v2695 = vpop.permute.xlu0 %2694
    %2696 = vrot.lane.b32.xlu0 %v2525, 28
    %v2697 = vpop.permute.xlu0 %2696
    %2698 = vrot.lane.b32.xlu0 %v2526, 28
    %v2699 = vpop.permute.xlu0 %2698
    %2700 = vrot.lane.b32.xlu0 %v2527, 28
    %v2701 = vpop.permute.xlu0 %2700
    %2702 = vrot.lane.b32.xlu0 %v2528, 28
    %v2703 = vpop.permute.xlu0 %2702
    %2704 = vrot.lane.b32.xlu0 %v2529, 28
    %v2705 = vpop.permute.xlu0 %2704
    %2706 = vrot.lane.b32.xlu0 %v2530, 28
    %v2707 = vpop.permute.xlu0 %2706
    %2708 = vrot.lane.b32.xlu0 %v2531, 28
    %v2709 = vpop.permute.xlu0 %2708
    %2710 = vrot.lane.b32.xlu0 %v2532, 28
    %v2711 = vpop.permute.xlu0 %2710
    %2712 = vrot.lane.b32.xlu0 %v2533, 28
    %v2713 = vpop.permute.xlu0 %2712
    %2714 = vrot.lane.b32.xlu0 %v2534, 28
    %v2715 = vpop.permute.xlu0 %2714
    %2716 = vrot.lane.b32.xlu0 %v2535, 28
    %v2717 = vpop.permute.xlu0 %2716
    %2718 = vrot.lane.b32.xlu0 %v2536, 28
    %v2719 = vpop.permute.xlu0 %2718
    %2720 = vrot.lane.b32.xlu0 %v2537, 28
    %v2721 = vpop.permute.xlu0 %2720
    %2722 = vrot.lane.b32.xlu0 %v2538, 28
    %v2723 = vpop.permute.xlu0 %2722
    %2724 = vrot.lane.b32.xlu0 %v2539, 28
    %v2725 = vpop.permute.xlu0 %2724
    %2726 = vrot.lane.b32.xlu0 %v2540, 28
    %v2727 = vpop.permute.xlu0 %2726
    %2728 = vrot.lane.b32.xlu0 %v2541, 28
    %v2729 = vpop.permute.xlu0 %2728
    %2730 = vrot.lane.b32.xlu0 %v2542, 28
    %v2731 = vpop.permute.xlu0 %2730
    %2732 = vrot.lane.b32.xlu0 %v2543, 28
    %v2733 = vpop.permute.xlu0 %2732
    %2734 = vrot.lane.b32.xlu0 %v2544, 28
    %v2735 = vpop.permute.xlu0 %2734
    %2736 = vrot.lane.b32.xlu0 %v2545, 28
    %v2737 = vpop.permute.xlu0 %2736
    %vm2802 = vcmask 261344
    %2803 = vst.msk [vmem:[#allocation2] sm:$0xff] %vm2802, %v2611
    %2804 = vst.msk [vmem:[#allocation2 + $0x8] sm:$0xff] %vm2802, %v2613
    %2805 = vst.msk [vmem:[#allocation2 + $0x10] sm:$0xff] %vm2802, %v2615
    %2806 = vst.msk [vmem:[#allocation2 + $0x18] sm:$0xff] %vm2802, %v2617
    %2807 = vst.msk [vmem:[#allocation2 + $0x20] sm:$0xff] %vm2802, %v2619
    %2808 = vst.msk [vmem:[#allocation2 + $0x28] sm:$0xff] %vm2802, %v2621
    %2809 = vst.msk [vmem:[#allocation2 + $0x30] sm:$0xff] %vm2802, %v2623
    %2810 = vst.msk [vmem:[#allocation2 + $0x38] sm:$0xff] %vm2802, %v2625
    %2811 = vst.msk [vmem:[#allocation2 + $0x40] sm:$0xff] %vm2802, %v2627
    %2812 = vst.msk [vmem:[#allocation2 + $0x48] sm:$0xff] %vm2802, %v2629
    %2813 = vst.msk [vmem:[#allocation2 + $0x50] sm:$0xff] %vm2802, %v2631
    %2814 = vst.msk [vmem:[#allocation2 + $0x58] sm:$0xff] %vm2802, %v2633
    %2815 = vst.msk [vmem:[#allocation2 + $0x60] sm:$0xff] %vm2802, %v2635
    %2816 = vst.msk [vmem:[#allocation2 + $0x68] sm:$0xff] %vm2802, %v2637
    %2817 = vst.msk [vmem:[#allocation2 + $0x70] sm:$0xff] %vm2802, %v2639
    %2818 = vst.msk [vmem:[#allocation2 + $0x78] sm:$0xff] %vm2802, %v2641
    %2819 = vst.msk [vmem:[#allocation2 + $0x80] sm:$0xff] %vm2802, %v2643
    %2820 = vst.msk [vmem:[#allocation2 + $0x88] sm:$0xff] %vm2802, %v2645
    %2821 = vst.msk [vmem:[#allocation2 + $0x90] sm:$0xff] %vm2802, %v2647
    %2822 = vst.msk [vmem:[#allocation2 + $0x98] sm:$0xff] %vm2802, %v2649
    %2823 = vst.msk [vmem:[#allocation2 + $0xa0] sm:$0xff] %vm2802, %v2651
    %2824 = vst.msk [vmem:[#allocation2 + $0xa8] sm:$0xff] %vm2802, %v2653
    %2825 = vst.msk [vmem:[#allocation2 + $0xb0] sm:$0xff] %vm2802, %v2655
    %2826 = vst.msk [vmem:[#allocation2 + $0xb8] sm:$0xff] %vm2802, %v2657
    %2827 = vst.msk [vmem:[#allocation2 + $0xc0] sm:$0xff] %vm2802, %v2659
    %2828 = vst.msk [vmem:[#allocation2 + $0xc8] sm:$0xff] %vm2802, %v2661
    %2829 = vst.msk [vmem:[#allocation2 + $0xd0] sm:$0xff] %vm2802, %v2663
    %2830 = vst.msk [vmem:[#allocation2 + $0xd8] sm:$0xff] %vm2802, %v2665
    %2831 = vst.msk [vmem:[#allocation2 + $0xe0] sm:$0xff] %vm2802, %v2667
    %2832 = vst.msk [vmem:[#allocation2 + $0xe8] sm:$0xff] %vm2802, %v2669
    %2833 = vst.msk [vmem:[#allocation2 + $0xf0] sm:$0xff] %vm2802, %v2671
    %2834 = vst.msk [vmem:[#allocation2 + $0xf8] sm:$0xff] %vm2802, %v2673
    %2835 = vst.msk [vmem:[#allocation2 + $0x100] sm:$0xff] %vm2802, %v2675
    %2836 = vst.msk [vmem:[#allocation2 + $0x108] sm:$0xff] %vm2802, %v2677
    %2837 = vst.msk [vmem:[#allocation2 + $0x110] sm:$0xff] %vm2802, %v2679
    %2838 = vst.msk [vmem:[#allocation2 + $0x118] sm:$0xff] %vm2802, %v2681
    %2839 = vst.msk [vmem:[#allocation2 + $0x120] sm:$0xff] %vm2802, %v2683
    %2840 = vst.msk [vmem:[#allocation2 + $0x128] sm:$0xff] %vm2802, %v2685
    %2841 = vst.msk [vmem:[#allocation2 + $0x130] sm:$0xff] %vm2802, %v2687
    %2842 = vst.msk [vmem:[#allocation2 + $0x138] sm:$0xff] %vm2802, %v2689
    %2843 = vst.msk [vmem:[#allocation2 + $0x140] sm:$0xff] %vm2802, %v2691
    %2844 = vst.msk [vmem:[#allocation2 + $0x148] sm:$0xff] %vm2802, %v2693
    %2845 = vst.msk [vmem:[#allocation2 + $0x150] sm:$0xff] %vm2802, %v2695
    %2846 = vst.msk [vmem:[#allocation2 + $0x158] sm:$0xff] %vm2802, %v2697
    %2847 = vst.msk [vmem:[#allocation2 + $0x160] sm:$0xff] %vm2802, %v2699
    %2848 = vst.msk [vmem:[#allocation2 + $0x168] sm:$0xff] %vm2802, %v2701
    %2849 = vst.msk [vmem:[#allocation2 + $0x170] sm:$0xff] %vm2802, %v2703
    %2850 = vst.msk [vmem:[#allocation2 + $0x178] sm:$0xff] %vm2802, %v2705
    %2851 = vst.msk [vmem:[#allocation2 + $0x180] sm:$0xff] %vm2802, %v2707
    %2852 = vst.msk [vmem:[#allocation2 + $0x188] sm:$0xff] %vm2802, %v2709
    %2853 = vst.msk [vmem:[#allocation2 + $0x190] sm:$0xff] %vm2802, %v2711
    %2854 = vst.msk [vmem:[#allocation2 + $0x198] sm:$0xff] %vm2802, %v2713
    %2855 = vst.msk [vmem:[#allocation2 + $0x1a0] sm:$0xff] %vm2802, %v2715
    %2856 = vst.msk [vmem:[#allocation2 + $0x1a8] sm:$0xff] %vm2802, %v2717
    %2857 = vst.msk [vmem:[#allocation2 + $0x1b0] sm:$0xff] %vm2802, %v2719
    %2858 = vst.msk [vmem:[#allocation2 + $0x1b8] sm:$0xff] %vm2802, %v2721
    %2859 = vst.msk [vmem:[#allocation2 + $0x1c0] sm:$0xff] %vm2802, %v2723
    %2860 = vst.msk [vmem:[#allocation2 + $0x1c8] sm:$0xff] %vm2802, %v2725
    %2861 = vst.msk [vmem:[#allocation2 + $0x1d0] sm:$0xff] %vm2802, %v2727
    %2862 = vst.msk [vmem:[#allocation2 + $0x1d8] sm:$0xff] %vm2802, %v2729
    %2863 = vst.msk [vmem:[#allocation2 + $0x1e0] sm:$0xff] %vm2802, %v2731
    %2864 = vst.msk [vmem:[#allocation2 + $0x1e8] sm:$0xff] %vm2802, %v2733
    %2865 = vst.msk [vmem:[#allocation2 + $0x1f0] sm:$0xff] %vm2802, %v2735
    %2866 = vst.msk [vmem:[#allocation2 + $0x1f8] sm:$0xff] %vm2802, %v2737
    %v2867 = vld [vmem:[%s2096 + $0x2] sm:$0xff]
    %v2868 = vld [vmem:[%s2096 + $0xa] sm:$0xff]
    %v2869 = vld [vmem:[%s2096 + $0x1a] sm:$0xff]
    %v2870 = vld [vmem:[%s2096 + $0x22] sm:$0xff]
    %v2871 = vld [vmem:[%s2096 + $0x32] sm:$0xff]
    %v2872 = vld [vmem:[%s2096 + $0x3a] sm:$0xff]
    %v2873 = vld [vmem:[%s2096 + $0x4a] sm:$0xff]
    %v2874 = vld [vmem:[%s2096 + $0x52] sm:$0xff]
    %v2875 = vld [vmem:[%s2096 + $0x62] sm:$0xff]
    %v2876 = vld [vmem:[%s2096 + $0x6a] sm:$0xff]
    %v2877 = vld [vmem:[%s2096 + $0x7a] sm:$0xff]
    %v2878 = vld [vmem:[%s2096 + $0x82] sm:$0xff]
    %v2879 = vld [vmem:[%s2096 + $0x92] sm:$0xff]
    %v2880 = vld [vmem:[%s2096 + $0x9a] sm:$0xff]
    %v2881 = vld [vmem:[%s2096 + $0xaa] sm:$0xff]
    %v2882 = vld [vmem:[%s2096 + $0xb2] sm:$0xff]
    %v2883 = vld [vmem:[%s2096 + $0xc2] sm:$0xff]
    %v2884 = vld [vmem:[%s2096 + $0xca] sm:$0xff]
    %v2885 = vld [vmem:[%s2096 + $0xda] sm:$0xff]
    %v2886 = vld [vmem:[%s2096 + $0xe2] sm:$0xff]
    %v2887 = vld [vmem:[%s2096 + $0xf2] sm:$0xff]
    %v2888 = vld [vmem:[%s2096 + $0xfa] sm:$0xff]
    %v2889 = vld [vmem:[%s2096 + $0x10a] sm:$0xff]
    %v2890 = vld [vmem:[%s2096 + $0x112] sm:$0xff]
    %v2891 = vld [vmem:[%s2096 + $0x122] sm:$0xff]
    %v2892 = vld [vmem:[%s2096 + $0x12a] sm:$0xff]
    %v2893 = vld [vmem:[%s2096 + $0x13a] sm:$0xff]
    %v2894 = vld [vmem:[%s2096 + $0x142] sm:$0xff]
    %v2895 = vld [vmem:[%s2096 + $0x152] sm:$0xff]
    %v2896 = vld [vmem:[%s2096 + $0x15a] sm:$0xff]
    %v2897 = vld [vmem:[%s2096 + $0x16a] sm:$0xff]
    %v2898 = vld [vmem:[%s2096 + $0x172] sm:$0xff]
    %v2899 = vld [vmem:[%s2096 + $0x1b2] sm:$0xff]
    %v2900 = vld [vmem:[%s2096 + $0x1ba] sm:$0xff]
    %v2901 = vld [vmem:[%s2096 + $0x1ca] sm:$0xff]
    %v2902 = vld [vmem:[%s2096 + $0x1d2] sm:$0xff]
    %v2903 = vld [vmem:[%s2096 + $0x1e2] sm:$0xff]
    %v2904 = vld [vmem:[%s2096 + $0x1ea] sm:$0xff]
    %v2905 = vld [vmem:[%s2096 + $0x1fa] sm:$0xff]
    %v2906 = vld [vmem:[%s2096 + $0x202] sm:$0xff]
    %v2907 = vld [vmem:[%s2096 + $0x212] sm:$0xff]
    %v2908 = vld [vmem:[%s2096 + $0x21a] sm:$0xff]
    %v2909 = vld [vmem:[%s2096 + $0x22a] sm:$0xff]
    %v2910 = vld [vmem:[%s2096 + $0x232] sm:$0xff]
    %v2911 = vld [vmem:[%s2096 + $0x242] sm:$0xff]
    %v2912 = vld [vmem:[%s2096 + $0x24a] sm:$0xff]
    %v2913 = vld [vmem:[%s2096 + $0x25a] sm:$0xff]
    %v2914 = vld [vmem:[%s2096 + $0x262] sm:$0xff]
    %v2915 = vld [vmem:[%s2096 + $0x272] sm:$0xff]
    %v2916 = vld [vmem:[%s2096 + $0x27a] sm:$0xff]
    %v2917 = vld [vmem:[%s2096 + $0x28a] sm:$0xff]
    %v2918 = vld [vmem:[%s2096 + $0x292] sm:$0xff]
    %v2919 = vld [vmem:[%s2096 + $0x2a2] sm:$0xff]
    %v2920 = vld [vmem:[%s2096 + $0x2aa] sm:$0xff]
    %v2921 = vld [vmem:[%s2096 + $0x2ba] sm:$0xff]
    %v2922 = vld [vmem:[%s2096 + $0x2c2] sm:$0xff]
    %v2923 = vld [vmem:[%s2096 + $0x2d2] sm:$0xff]
    %v2924 = vld [vmem:[%s2096 + $0x2da] sm:$0xff]
    %v2925 = vld [vmem:[%s2096 + $0x2ea] sm:$0xff]
    %v2926 = vld [vmem:[%s2096 + $0x2f2] sm:$0xff]
    %v2927 = vld [vmem:[%s2096 + $0x302] sm:$0xff]
    %v2928 = vld [vmem:[%s2096 + $0x30a] sm:$0xff]
    %v2929 = vld [vmem:[%s2096 + $0x31a] sm:$0xff]
    %v2930 = vld [vmem:[%s2096 + $0x322] sm:$0xff]
    %2995 = vrot.lane.b32.xlu0 %v2867, 32
    %v2996 = vpop.permute.xlu0 %2995
    %2997 = vrot.lane.b32.xlu0 %v2868, 32
    %v2998 = vpop.permute.xlu0 %2997
    %2999 = vrot.lane.b32.xlu0 %v2869, 32
    %v3000 = vpop.permute.xlu0 %2999
    %3001 = vrot.lane.b32.xlu0 %v2870, 32
    %v3002 = vpop.permute.xlu0 %3001
    %3003 = vrot.lane.b32.xlu0 %v2871, 32
    %v3004 = vpop.permute.xlu0 %3003
    %3005 = vrot.lane.b32.xlu0 %v2872, 32
    %v3006 = vpop.permute.xlu0 %3005
    %3007 = vrot.lane.b32.xlu0 %v2873, 32
    %v3008 = vpop.permute.xlu0 %3007
    %3009 = vrot.lane.b32.xlu0 %v2874, 32
    %v3010 = vpop.permute.xlu0 %3009
    %3011 = vrot.lane.b32.xlu0 %v2875, 32
    %v3012 = vpop.permute.xlu0 %3011
    %3013 = vrot.lane.b32.xlu0 %v2876, 32
    %v3014 = vpop.permute.xlu0 %3013
    %3015 = vrot.lane.b32.xlu0 %v2877, 32
    %v3016 = vpop.permute.xlu0 %3015
    %3017 = vrot.lane.b32.xlu0 %v2878, 32
    %v3018 = vpop.permute.xlu0 %3017
    %3019 = vrot.lane.b32.xlu0 %v2879, 32
    %v3020 = vpop.permute.xlu0 %3019
    %3021 = vrot.lane.b32.xlu0 %v2880, 32
    %v3022 = vpop.permute.xlu0 %3021
    %3023 = vrot.lane.b32.xlu0 %v2881, 32
    %v3024 = vpop.permute.xlu0 %3023
    %3025 = vrot.lane.b32.xlu0 %v2882, 32
    %v3026 = vpop.permute.xlu0 %3025
    %3027 = vrot.lane.b32.xlu0 %v2883, 32
    %v3028 = vpop.permute.xlu0 %3027
    %3029 = vrot.lane.b32.xlu0 %v2884, 32
    %v3030 = vpop.permute.xlu0 %3029
    %3031 = vrot.lane.b32.xlu0 %v2885, 32
    %v3032 = vpop.permute.xlu0 %3031
    %3033 = vrot.lane.b32.xlu0 %v2886, 32
    %v3034 = vpop.permute.xlu0 %3033
    %3035 = vrot.lane.b32.xlu0 %v2887, 32
    %v3036 = vpop.permute.xlu0 %3035
    %3037 = vrot.lane.b32.xlu0 %v2888, 32
    %v3038 = vpop.permute.xlu0 %3037
    %3039 = vrot.lane.b32.xlu0 %v2889, 32
    %v3040 = vpop.permute.xlu0 %3039
    %3041 = vrot.lane.b32.xlu0 %v2890, 32
    %v3042 = vpop.permute.xlu0 %3041
    %3043 = vrot.lane.b32.xlu0 %v2891, 32
    %v3044 = vpop.permute.xlu0 %3043
    %3045 = vrot.lane.b32.xlu0 %v2892, 32
    %v3046 = vpop.permute.xlu0 %3045
    %3047 = vrot.lane.b32.xlu0 %v2893, 32
    %v3048 = vpop.permute.xlu0 %3047
    %3049 = vrot.lane.b32.xlu0 %v2894, 32
    %v3050 = vpop.permute.xlu0 %3049
    %3051 = vrot.lane.b32.xlu0 %v2895, 32
    %v3052 = vpop.permute.xlu0 %3051
    %3053 = vrot.lane.b32.xlu0 %v2896, 32
    %v3054 = vpop.permute.xlu0 %3053
    %3055 = vrot.lane.b32.xlu0 %v2897, 32
    %v3056 = vpop.permute.xlu0 %3055
    %3057 = vrot.lane.b32.xlu0 %v2898, 32
    %v3058 = vpop.permute.xlu0 %3057
    %3059 = vrot.lane.b32.xlu0 %v2899, 32
    %v3060 = vpop.permute.xlu0 %3059
    %3061 = vrot.lane.b32.xlu0 %v2900, 32
    %v3062 = vpop.permute.xlu0 %3061
    %3063 = vrot.lane.b32.xlu0 %v2901, 32
    %v3064 = vpop.permute.xlu0 %3063
    %3065 = vrot.lane.b32.xlu0 %v2902, 32
    %v3066 = vpop.permute.xlu0 %3065
    %3067 = vrot.lane.b32.xlu0 %v2903, 32
    %v3068 = vpop.permute.xlu0 %3067
    %3069 = vrot.lane.b32.xlu0 %v2904, 32
    %v3070 = vpop.permute.xlu0 %3069
    %3071 = vrot.lane.b32.xlu0 %v2905, 32
    %v3072 = vpop.permute.xlu0 %3071
    %3073 = vrot.lane.b32.xlu0 %v2906, 32
    %v3074 = vpop.permute.xlu0 %3073
    %3075 = vrot.lane.b32.xlu0 %v2907, 32
    %v3076 = vpop.permute.xlu0 %3075
    %3077 = vrot.lane.b32.xlu0 %v2908, 32
    %v3078 = vpop.permute.xlu0 %3077
    %3079 = vrot.lane.b32.xlu0 %v2909, 32
    %v3080 = vpop.permute.xlu0 %3079
    %3081 = vrot.lane.b32.xlu0 %v2910, 32
    %v3082 = vpop.permute.xlu0 %3081
    %3083 = vrot.lane.b32.xlu0 %v2911, 32
    %v3084 = vpop.permute.xlu0 %3083
    %3085 = vrot.lane.b32.xlu0 %v2912, 32
    %v3086 = vpop.permute.xlu0 %3085
    %3087 = vrot.lane.b32.xlu0 %v2913, 32
    %v3088 = vpop.permute.xlu0 %3087
    %3089 = vrot.lane.b32.xlu0 %v2914, 32
    %v3090 = vpop.permute.xlu0 %3089
    %3091 = vrot.lane.b32.xlu0 %v2915, 32
    %v3092 = vpop.permute.xlu0 %3091
    %3093 = vrot.lane.b32.xlu0 %v2916, 32
    %v3094 = vpop.permute.xlu0 %3093
    %3095 = vrot.lane.b32.xlu0 %v2917, 32
    %v3096 = vpop.permute.xlu0 %3095
    %3097 = vrot.lane.b32.xlu0 %v2918, 32
    %v3098 = vpop.permute.xlu0 %3097
    %3099 = vrot.lane.b32.xlu0 %v2919, 32
    %v3100 = vpop.permute.xlu0 %3099
    %3101 = vrot.lane.b32.xlu0 %v2920, 32
    %v3102 = vpop.permute.xlu0 %3101
    %3103 = vrot.lane.b32.xlu0 %v2921, 32
    %v3104 = vpop.permute.xlu0 %3103
    %3105 = vrot.lane.b32.xlu0 %v2922, 32
    %v3106 = vpop.permute.xlu0 %3105
    %3107 = vrot.lane.b32.xlu0 %v2923, 32
    %v3108 = vpop.permute.xlu0 %3107
    %3109 = vrot.lane.b32.xlu0 %v2924, 32
    %v3110 = vpop.permute.xlu0 %3109
    %3111 = vrot.lane.b32.xlu0 %v2925, 32
    %v3112 = vpop.permute.xlu0 %3111
    %3113 = vrot.lane.b32.xlu0 %v2926, 32
    %v3114 = vpop.permute.xlu0 %3113
    %3115 = vrot.lane.b32.xlu0 %v2927, 32
    %v3116 = vpop.permute.xlu0 %3115
    %3117 = vrot.lane.b32.xlu0 %v2928, 32
    %v3118 = vpop.permute.xlu0 %3117
    %3119 = vrot.lane.b32.xlu0 %v2929, 32
    %v3120 = vpop.permute.xlu0 %3119
    %3121 = vrot.lane.b32.xlu0 %v2930, 32
    %v3122 = vpop.permute.xlu0 %3121
    %vm3187 = vcmask 294144
    %3188 = vst.msk [vmem:[#allocation2] sm:$0xff] %vm3187, %v2996
    %3189 = vst.msk [vmem:[#allocation2 + $0x8] sm:$0xff] %vm3187, %v2998
    %3190 = vst.msk [vmem:[#allocation2 + $0x10] sm:$0xff] %vm3187, %v3000
    %3191 = vst.msk [vmem:[#allocation2 + $0x18] sm:$0xff] %vm3187, %v3002
    %3192 = vst.msk [vmem:[#allocation2 + $0x20] sm:$0xff] %vm3187, %v3004
    %3193 = vst.msk [vmem:[#allocation2 + $0x28] sm:$0xff] %vm3187, %v3006
    %3194 = vst.msk [vmem:[#allocation2 + $0x30] sm:$0xff] %vm3187, %v3008
    %3195 = vst.msk [vmem:[#allocation2 + $0x38] sm:$0xff] %vm3187, %v3010
    %3196 = vst.msk [vmem:[#allocation2 + $0x40] sm:$0xff] %vm3187, %v3012
    %3197 = vst.msk [vmem:[#allocation2 + $0x48] sm:$0xff] %vm3187, %v3014
    %3198 = vst.msk [vmem:[#allocation2 + $0x50] sm:$0xff] %vm3187, %v3016
    %3199 = vst.msk [vmem:[#allocation2 + $0x58] sm:$0xff] %vm3187, %v3018
    %3200 = vst.msk [vmem:[#allocation2 + $0x60] sm:$0xff] %vm3187, %v3020
    %3201 = vst.msk [vmem:[#allocation2 + $0x68] sm:$0xff] %vm3187, %v3022
    %3202 = vst.msk [vmem:[#allocation2 + $0x70] sm:$0xff] %vm3187, %v3024
    %3203 = vst.msk [vmem:[#allocation2 + $0x78] sm:$0xff] %vm3187, %v3026
    %3204 = vst.msk [vmem:[#allocation2 + $0x80] sm:$0xff] %vm3187, %v3028
    %3205 = vst.msk [vmem:[#allocation2 + $0x88] sm:$0xff] %vm3187, %v3030
    %3206 = vst.msk [vmem:[#allocation2 + $0x90] sm:$0xff] %vm3187, %v3032
    %3207 = vst.msk [vmem:[#allocation2 + $0x98] sm:$0xff] %vm3187, %v3034
    %3208 = vst.msk [vmem:[#allocation2 + $0xa0] sm:$0xff] %vm3187, %v3036
    %3209 = vst.msk [vmem:[#allocation2 + $0xa8] sm:$0xff] %vm3187, %v3038
    %3210 = vst.msk [vmem:[#allocation2 + $0xb0] sm:$0xff] %vm3187, %v3040
    %3211 = vst.msk [vmem:[#allocation2 + $0xb8] sm:$0xff] %vm3187, %v3042
    %3212 = vst.msk [vmem:[#allocation2 + $0xc0] sm:$0xff] %vm3187, %v3044
    %3213 = vst.msk [vmem:[#allocation2 + $0xc8] sm:$0xff] %vm3187, %v3046
    %3214 = vst.msk [vmem:[#allocation2 + $0xd0] sm:$0xff] %vm3187, %v3048
    %3215 = vst.msk [vmem:[#allocation2 + $0xd8] sm:$0xff] %vm3187, %v3050
    %3216 = vst.msk [vmem:[#allocation2 + $0xe0] sm:$0xff] %vm3187, %v3052
    %3217 = vst.msk [vmem:[#allocation2 + $0xe8] sm:$0xff] %vm3187, %v3054
    %3218 = vst.msk [vmem:[#allocation2 + $0xf0] sm:$0xff] %vm3187, %v3056
    %3219 = vst.msk [vmem:[#allocation2 + $0xf8] sm:$0xff] %vm3187, %v3058
    %3220 = vst.msk [vmem:[#allocation2 + $0x100] sm:$0xff] %vm3187, %v3060
    %3221 = vst.msk [vmem:[#allocation2 + $0x108] sm:$0xff] %vm3187, %v3062
    %3222 = vst.msk [vmem:[#allocation2 + $0x110] sm:$0xff] %vm3187, %v3064
    %3223 = vst.msk [vmem:[#allocation2 + $0x118] sm:$0xff] %vm3187, %v3066
    %3224 = vst.msk [vmem:[#allocation2 + $0x120] sm:$0xff] %vm3187, %v3068
    %3225 = vst.msk [vmem:[#allocation2 + $0x128] sm:$0xff] %vm3187, %v3070
    %3226 = vst.msk [vmem:[#allocation2 + $0x130] sm:$0xff] %vm3187, %v3072
    %3227 = vst.msk [vmem:[#allocation2 + $0x138] sm:$0xff] %vm3187, %v3074
    %3228 = vst.msk [vmem:[#allocation2 + $0x140] sm:$0xff] %vm3187, %v3076
    %3229 = vst.msk [vmem:[#allocation2 + $0x148] sm:$0xff] %vm3187, %v3078
    %3230 = vst.msk [vmem:[#allocation2 + $0x150] sm:$0xff] %vm3187, %v3080
    %3231 = vst.msk [vmem:[#allocation2 + $0x158] sm:$0xff] %vm3187, %v3082
    %3232 = vst.msk [vmem:[#allocation2 + $0x160] sm:$0xff] %vm3187, %v3084
    %3233 = vst.msk [vmem:[#allocation2 + $0x168] sm:$0xff] %vm3187, %v3086
    %3234 = vst.msk [vmem:[#allocation2 + $0x170] sm:$0xff] %vm3187, %v3088
    %3235 = vst.msk [vmem:[#allocation2 + $0x178] sm:$0xff] %vm3187, %v3090
    %3236 = vst.msk [vmem:[#allocation2 + $0x180] sm:$0xff] %vm3187, %v3092
    %3237 = vst.msk [vmem:[#allocation2 + $0x188] sm:$0xff] %vm3187, %v3094
    %3238 = vst.msk [vmem:[#allocation2 + $0x190] sm:$0xff] %vm3187, %v3096
    %3239 = vst.msk [vmem:[#allocation2 + $0x198] sm:$0xff] %vm3187, %v3098
    %3240 = vst.msk [vmem:[#allocation2 + $0x1a0] sm:$0xff] %vm3187, %v3100
    %3241 = vst.msk [vmem:[#allocation2 + $0x1a8] sm:$0xff] %vm3187, %v3102
    %3242 = vst.msk [vmem:[#allocation2 + $0x1b0] sm:$0xff] %vm3187, %v3104
    %3243 = vst.msk [vmem:[#allocation2 + $0x1b8] sm:$0xff] %vm3187, %v3106
    %3244 = vst.msk [vmem:[#allocation2 + $0x1c0] sm:$0xff] %vm3187, %v3108
    %3245 = vst.msk [vmem:[#allocation2 + $0x1c8] sm:$0xff] %vm3187, %v3110
    %3246 = vst.msk [vmem:[#allocation2 + $0x1d0] sm:$0xff] %vm3187, %v3112
    %3247 = vst.msk [vmem:[#allocation2 + $0x1d8] sm:$0xff] %vm3187, %v3114
    %3248 = vst.msk [vmem:[#allocation2 + $0x1e0] sm:$0xff] %vm3187, %v3116
    %3249 = vst.msk [vmem:[#allocation2 + $0x1e8] sm:$0xff] %vm3187, %v3118
    %3250 = vst.msk [vmem:[#allocation2 + $0x1f0] sm:$0xff] %vm3187, %v3120
    %3251 = vst.msk [vmem:[#allocation2 + $0x1f8] sm:$0xff] %vm3187, %v3122
    %v3252 = vld [vmem:[#allocation2] sm:$0xff]
    %v3253 = vld [vmem:[#allocation2 + $0x8] sm:$0xff]
    %v3254 = vld [vmem:[#allocation2 + $0x10] sm:$0xff]
    %v3255 = vld [vmem:[#allocation2 + $0x18] sm:$0xff]
    %v3256 = vld [vmem:[#allocation2 + $0x20] sm:$0xff]
    %v3257 = vld [vmem:[#allocation2 + $0x28] sm:$0xff]
    %v3258 = vld [vmem:[#allocation2 + $0x30] sm:$0xff]
    %v3259 = vld [vmem:[#allocation2 + $0x38] sm:$0xff]
    %v3260 = vld [vmem:[#allocation2 + $0x40] sm:$0xff]
    %v3261 = vld [vmem:[#allocation2 + $0x48] sm:$0xff]
    %v3262 = vld [vmem:[#allocation2 + $0x50] sm:$0xff]
    %v3263 = vld [vmem:[#allocation2 + $0x58] sm:$0xff]
    %v3264 = vld [vmem:[#allocation2 + $0x60] sm:$0xff]
    %v3265 = vld [vmem:[#allocation2 + $0x68] sm:$0xff]
    %v3266 = vld [vmem:[#allocation2 + $0x70] sm:$0xff]
    %v3267 = vld [vmem:[#allocation2 + $0x78] sm:$0xff]
    %v3268 = vld [vmem:[#allocation2 + $0x80] sm:$0xff]
    %v3269 = vld [vmem:[#allocation2 + $0x88] sm:$0xff]
    %v3270 = vld [vmem:[#allocation2 + $0x90] sm:$0xff]
    %v3271 = vld [vmem:[#allocation2 + $0x98] sm:$0xff]
    %v3272 = vld [vmem:[#allocation2 + $0xa0] sm:$0xff]
    %v3273 = vld [vmem:[#allocation2 + $0xa8] sm:$0xff]
    %v3274 = vld [vmem:[#allocation2 + $0xb0] sm:$0xff]
    %v3275 = vld [vmem:[#allocation2 + $0xb8] sm:$0xff]
    %v3276 = vld [vmem:[#allocation2 + $0xc0] sm:$0xff]
    %v3277 = vld [vmem:[#allocation2 + $0xc8] sm:$0xff]
    %v3278 = vld [vmem:[#allocation2 + $0xd0] sm:$0xff]
    %v3279 = vld [vmem:[#allocation2 + $0xd8] sm:$0xff]
    %v3280 = vld [vmem:[#allocation2 + $0xe0] sm:$0xff]
    %v3281 = vld [vmem:[#allocation2 + $0xe8] sm:$0xff]
    %v3282 = vld [vmem:[#allocation2 + $0xf0] sm:$0xff]
    %v3283 = vld [vmem:[#allocation2 + $0xf8] sm:$0xff]
    %v3284 = vld [vmem:[#allocation2 + $0x100] sm:$0xff]
    %v3285 = vld [vmem:[#allocation2 + $0x108] sm:$0xff]
    %v3286 = vld [vmem:[#allocation2 + $0x110] sm:$0xff]
    %v3287 = vld [vmem:[#allocation2 + $0x118] sm:$0xff]
    %v3288 = vld [vmem:[#allocation2 + $0x120] sm:$0xff]
    %v3289 = vld [vmem:[#allocation2 + $0x128] sm:$0xff]
    %v3290 = vld [vmem:[#allocation2 + $0x130] sm:$0xff]
    %v3291 = vld [vmem:[#allocation2 + $0x138] sm:$0xff]
    %v3292 = vld [vmem:[#allocation2 + $0x140] sm:$0xff]
    %v3293 = vld [vmem:[#allocation2 + $0x148] sm:$0xff]
    %v3294 = vld [vmem:[#allocation2 + $0x150] sm:$0xff]
    %v3295 = vld [vmem:[#allocation2 + $0x158] sm:$0xff]
    %v3296 = vld [vmem:[#allocation2 + $0x160] sm:$0xff]
    %v3297 = vld [vmem:[#allocation2 + $0x168] sm:$0xff]
    %v3298 = vld [vmem:[#allocation2 + $0x170] sm:$0xff]
    %v3299 = vld [vmem:[#allocation2 + $0x178] sm:$0xff]
    %v3300 = vld [vmem:[#allocation2 + $0x180] sm:$0xff]
    %v3301 = vld [vmem:[#allocation2 + $0x188] sm:$0xff]
    %v3302 = vld [vmem:[#allocation2 + $0x190] sm:$0xff]
    %v3303 = vld [vmem:[#allocation2 + $0x198] sm:$0xff]
    %v3304 = vld [vmem:[#allocation2 + $0x1a0] sm:$0xff]
    %v3305 = vld [vmem:[#allocation2 + $0x1a8] sm:$0xff]
    %v3306 = vld [vmem:[#allocation2 + $0x1b0] sm:$0xff]
    %v3307 = vld [vmem:[#allocation2 + $0x1b8] sm:$0xff]
    %v3308 = vld [vmem:[#allocation2 + $0x1c0] sm:$0xff]
    %v3309 = vld [vmem:[#allocation2 + $0x1c8] sm:$0xff]
    %v3310 = vld [vmem:[#allocation2 + $0x1d0] sm:$0xff]
    %v3311 = vld [vmem:[#allocation2 + $0x1d8] sm:$0xff]
    %v3312 = vld [vmem:[#allocation2 + $0x1e0] sm:$0xff]
    %v3313 = vld [vmem:[#allocation2 + $0x1e8] sm:$0xff]
    %v3314 = vld [vmem:[#allocation2 + $0x1f0] sm:$0xff]
    %v3315 = vld [vmem:[#allocation2 + $0x1f8] sm:$0xff]
    %v3316 = vld [vmem:[%s1] sm:$0xff]
    %v3317 = vld [vmem:[%s1 + $0x8] sm:$0xff]
    %v3318 = vld [vmem:[%s1 + $0x10] sm:$0xff]
    %v3319 = vld [vmem:[%s1 + $0x18] sm:$0xff]
    %v3320 = vld [vmem:[%s1 + $0x20] sm:$0xf]
    %vm3321 = vcmask 293888
    %v3323 = vsel %vm3321, %v3252, 0
    %v3326 = vsel %vm3321, %v3253, 0
    %v3329 = vsel %vm3321, %v3254, 0
    %v3332 = vsel %vm3321, %v3255, 0
    %v3335 = vsel %vm3321, %v3256, 0
    %v3338 = vsel %vm3321, %v3257, 0
    %v3341 = vsel %vm3321, %v3258, 0
    %v3344 = vsel %vm3321, %v3259, 0
    %v3347 = vsel %vm3321, %v3260, 0
    %v3350 = vsel %vm3321, %v3261, 0
    %v3353 = vsel %vm3321, %v3262, 0
    %v3356 = vsel %vm3321, %v3263, 0
    %v3359 = vsel %vm3321, %v3264, 0
    %v3362 = vsel %vm3321, %v3265, 0
    %v3365 = vsel %vm3321, %v3266, 0
    %v3368 = vsel %vm3321, %v3267, 0
    %v3371 = vsel %vm3321, %v3268, 0
    %v3374 = vsel %vm3321, %v3269, 0
    %v3377 = vsel %vm3321, %v3270, 0
    %v3380 = vsel %vm3321, %v3271, 0
    %v3383 = vsel %vm3321, %v3272, 0
    %v3386 = vsel %vm3321, %v3273, 0
    %v3389 = vsel %vm3321, %v3274, 0
    %v3392 = vsel %vm3321, %v3275, 0
    %v3395 = vsel %vm3321, %v3276, 0
    %v3398 = vsel %vm3321, %v3277, 0
    %v3401 = vsel %vm3321, %v3278, 0
    %v3404 = vsel %vm3321, %v3279, 0
    %v3407 = vsel %vm3321, %v3280, 0
    %v3410 = vsel %vm3321, %v3281, 0
    %v3413 = vsel %vm3321, %v3282, 0
    %v3416 = vsel %vm3321, %v3283, 0
    %v3419 = vsel %vm3321, %v3284, 0
    %v3422 = vsel %vm3321, %v3285, 0
    %v3425 = vsel %vm3321, %v3286, 0
    %v3428 = vsel %vm3321, %v3287, 0
    %v3431 = vsel %vm3321, %v3288, 0
    %v3434 = vsel %vm3321, %v3289, 0
    %v3437 = vsel %vm3321, %v3290, 0
    %v3440 = vsel %vm3321, %v3291, 0
    %v3443 = vsel %vm3321, %v3292, 0
    %v3446 = vsel %vm3321, %v3293, 0
    %v3449 = vsel %vm3321, %v3294, 0
    %v3452 = vsel %vm3321, %v3295, 0
    %v3455 = vsel %vm3321, %v3296, 0
    %v3458 = vsel %vm3321, %v3297, 0
    %v3461 = vsel %vm3321, %v3298, 0
    %v3464 = vsel %vm3321, %v3299, 0
    %v3467 = vsel %vm3321, %v3300, 0
    %v3470 = vsel %vm3321, %v3301, 0
    %v3473 = vsel %vm3321, %v3302, 0
    %v3476 = vsel %vm3321, %v3303, 0
    %v3479 = vsel %vm3321, %v3304, 0
    %v3482 = vsel %vm3321, %v3305, 0
    %v3485 = vsel %vm3321, %v3306, 0
    %v3488 = vsel %vm3321, %v3307, 0
    %v3491 = vsel %vm3321, %v3308, 0
    %v3494 = vsel %vm3321, %v3309, 0
    %v3497 = vsel %vm3321, %v3310, 0
    %v3500 = vsel %vm3321, %v3311, 0
    %v3503 = vsel %vm3321, %v3312, 0
    %v3506 = vsel %vm3321, %v3313, 0
    %v3509 = vsel %vm3321, %v3314, 0
    %v3512 = vsel %vm3321, %v3315, 0
    %vm3514 = vcmask 1043456
    %v3516 = vsel %vm3514, %v3320, 0
    %3518 = vmatprep.subr.mxu0 0.0
    %3519 = vmatpush1.msra.mxu0 0.0
    %3520 = vmatprep.subr.mxu0 0.0
    %3521 = vmatpush1.msra.mxu0 0.0
    %3522 = vmatprep.subr.mxu0 0.0
    %3523 = vmatpush1.msra.mxu0 0.0
    %3524 = vmatprep.subr.mxu0 0.0
    %3525 = vmatpush1.msra.mxu0 0.0
    %3526 = vmatprep.subr.mxu0 0.0
    %3527 = vmatpush1.msra.mxu0 0.0
    %3528 = vmatprep.subr.mxu0 0.0
    %3529 = vmatpush1.msra.mxu0 0.0
    %3530 = vmatprep.subr.mxu0 0.0
    %3531 = vmatpush1.msra.mxu0 0.0
    %3532 = vmatprep.subr.mxu0 0.0
    %3533 = vmatpush1.msra.mxu0 0.0
    %3534 = vmatprep.subr.mxu0 0.0
    %3535 = vmatpush1.msra.mxu0 0.0
    %3536 = vmatprep.subr.mxu0 0.0
    %3537 = vmatpush1.msra.mxu0 0.0
    %3538 = vmatprep.subr.mxu0 0.0
    %3539 = vmatpush1.msra.mxu0 0.0
    %3540 = vmatprep.subr.mxu0 0.0
    %3541 = vmatpush1.msra.mxu0 %v3516
    %3542 = vmatprep.subr.mxu0 0.0
    %3543 = vmatpush1.msra.mxu0 %v3319
    %3544 = vmatprep.subr.mxu0 0.0
    %3545 = vmatpush1.msra.mxu0 %v3318
    %3546 = vmatprep.subr.mxu0 0.0
    %3547 = vmatpush1.msra.mxu0 %v3317
    %3548 = vmatprep.subr.mxu0 0.0
    %3549 = vmatpush1.msra.mxu0 %v3316
    %3550 = vmatprep.subr.mxu0 0.0
    %3551 = vmatpush2.msra.mxu0 0.0
    %3552 = vmatprep.subr.mxu0 0.0
    %3553 = vmatpush2.msra.mxu0 0.0
    %3554 = vmatprep.subr.mxu0 0.0
    %3555 = vmatpush2.msra.mxu0 0.0
    %3556 = vmatprep.subr.mxu0 0.0
    %3557 = vmatpush2.msra.mxu0 0.0
    %3558 = vmatprep.subr.mxu0 0.0
    %3559 = vmatpush2.msra.mxu0 0.0
    %3560 = vmatprep.subr.mxu0 0.0
    %3561 = vmatpush2.msra.mxu0 0.0
    %3562 = vmatprep.subr.mxu0 0.0
    %3563 = vmatpush2.msra.mxu0 0.0
    %3564 = vmatprep.subr.mxu0 0.0
    %3565 = vmatpush2.msra.mxu0 0.0
    %3566 = vmatprep.subr.mxu0 0.0
    %3567 = vmatpush2.msra.mxu0 0.0
    %3568 = vmatprep.subr.mxu0 0.0
    %3569 = vmatpush2.msra.mxu0 0.0
    %3570 = vmatprep.subr.mxu0 0.0
    %3571 = vmatpush2.msra.mxu0 0.0
    %3572 = vmatprep.subr.mxu0 0.0
    %3573 = vmatpush2.msra.mxu0 0.0
    %3574 = vmatprep.subr.mxu0 0.0
    %3575 = vmatpush2.msra.mxu0 0.0
    %3576 = vmatprep.subr.mxu0 0.0
    %3577 = vmatpush2.msra.mxu0 0.0
    %3578 = vmatprep.subr.mxu0 0.0
    %3579 = vmatpush2.msra.mxu0 0.0
    %3580 = vmatprep.subr.mxu0 0.0
    %3581 = vmatpush2.msra.mxu0 0.0
    %3582 = vmatprep.mubr.f32.mxu0 0.0
    %3583 = vmatmul.mubr.f32.gmra.mxu0 %v3323
    %v3584 = vpop.f32.mrf.mxu0
    %v3585 = vadd.f32 0.0, %v3584
    %v3586 = vpop.f32.mrf.mxu0
    %3587 = vmatprep.mubr.f32.mxu0 0.0
    %3588 = vmatmul.mubr.f32.gmra.mxu0 %v3326
    %v3589 = vpop.f32.mrf.mxu0
    %v3590 = vadd.f32 0.0, %v3589
    %v3591 = vpop.f32.mrf.mxu0
    %3592 = vmatprep.mubr.f32.mxu0 0.0
    %3593 = vmatmul.mubr.f32.gmra.mxu0 %v3329
    %v3594 = vpop.f32.mrf.mxu0
    %v3595 = vadd.f32 0.0, %v3594
    %v3596 = vpop.f32.mrf.mxu0
    %3597 = vmatprep.mubr.f32.mxu0 0.0
    %3598 = vmatmul.mubr.f32.gmra.mxu0 %v3332
    %v3599 = vpop.f32.mrf.mxu0
    %v3600 = vadd.f32 0.0, %v3599
    %v3601 = vpop.f32.mrf.mxu0
    %3602 = vmatprep.mubr.f32.mxu0 0.0
    %3603 = vmatmul.mubr.f32.gmra.mxu0 %v3335
    %v3604 = vpop.f32.mrf.mxu0
    %v3605 = vadd.f32 0.0, %v3604
    %v3606 = vpop.f32.mrf.mxu0
    %3607 = vmatprep.mubr.f32.mxu0 0.0
    %3608 = vmatmul.mubr.f32.gmra.mxu0 %v3338
    %v3609 = vpop.f32.mrf.mxu0
    %v3610 = vadd.f32 0.0, %v3609
    %v3611 = vpop.f32.mrf.mxu0
    %3612 = vmatprep.mubr.f32.mxu0 0.0
    %3613 = vmatmul.mubr.f32.gmra.mxu0 %v3341
    %v3614 = vpop.f32.mrf.mxu0
    %v3615 = vadd.f32 0.0, %v3614
    %v3616 = vpop.f32.mrf.mxu0
    %3617 = vmatprep.mubr.f32.mxu0 0.0
    %3618 = vmatmul.mubr.f32.gmra.mxu0 %v3344
    %v3619 = vpop.f32.mrf.mxu0
    %v3620 = vadd.f32 0.0, %v3619
    %v3621 = vpop.f32.mrf.mxu0
    %3622 = vmatprep.mubr.f32.mxu0 0.0
    %3623 = vmatmul.mubr.f32.gmra.mxu0 %v3347
    %v3624 = vpop.f32.mrf.mxu0
    %v3625 = vadd.f32 0.0, %v3624
    %v3626 = vpop.f32.mrf.mxu0
    %3627 = vmatprep.mubr.f32.mxu0 0.0
    %3628 = vmatmul.mubr.f32.gmra.mxu0 %v3350
    %v3629 = vpop.f32.mrf.mxu0
    %v3630 = vadd.f32 0.0, %v3629
    %v3631 = vpop.f32.mrf.mxu0
    %3632 = vmatprep.mubr.f32.mxu0 0.0
    %3633 = vmatmul.mubr.f32.gmra.mxu0 %v3353
    %v3634 = vpop.f32.mrf.mxu0
    %v3635 = vadd.f32 0.0, %v3634
    %v3636 = vpop.f32.mrf.mxu0
    %3637 = vmatprep.mubr.f32.mxu0 0.0
    %3638 = vmatmul.mubr.f32.gmra.mxu0 %v3356
    %v3639 = vpop.f32.mrf.mxu0
    %v3640 = vadd.f32 0.0, %v3639
    %v3641 = vpop.f32.mrf.mxu0
    %3642 = vmatprep.mubr.f32.mxu0 0.0
    %3643 = vmatmul.mubr.f32.gmra.mxu0 %v3359
    %v3644 = vpop.f32.mrf.mxu0
    %v3645 = vadd.f32 0.0, %v3644
    %v3646 = vpop.f32.mrf.mxu0
    %3647 = vmatprep.mubr.f32.mxu0 0.0
    %3648 = vmatmul.mubr.f32.gmra.mxu0 %v3362
    %v3649 = vpop.f32.mrf.mxu0
    %v3650 = vadd.f32 0.0, %v3649
    %v3651 = vpop.f32.mrf.mxu0
    %3652 = vmatprep.mubr.f32.mxu0 0.0
    %3653 = vmatmul.mubr.f32.gmra.mxu0 %v3365
    %v3654 = vpop.f32.mrf.mxu0
    %v3655 = vadd.f32 0.0, %v3654
    %v3656 = vpop.f32.mrf.mxu0
    %3657 = vmatprep.mubr.f32.mxu0 0.0
    %3658 = vmatmul.mubr.f32.gmra.mxu0 %v3368
    %v3659 = vpop.f32.mrf.mxu0
    %v3660 = vadd.f32 0.0, %v3659
    %v3661 = vpop.f32.mrf.mxu0
    %3662 = vmatprep.mubr.f32.mxu0 0.0
    %3663 = vmatmul.mubr.f32.gmra.mxu0 %v3371
    %v3664 = vpop.f32.mrf.mxu0
    %v3665 = vadd.f32 0.0, %v3664
    %v3666 = vpop.f32.mrf.mxu0
    %3667 = vmatprep.mubr.f32.mxu0 0.0
    %3668 = vmatmul.mubr.f32.gmra.mxu0 %v3374
    %v3669 = vpop.f32.mrf.mxu0
    %v3670 = vadd.f32 0.0, %v3669
    %v3671 = vpop.f32.mrf.mxu0
    %3672 = vmatprep.mubr.f32.mxu0 0.0
    %3673 = vmatmul.mubr.f32.gmra.mxu0 %v3377
    %v3674 = vpop.f32.mrf.mxu0
    %v3675 = vadd.f32 0.0, %v3674
    %v3676 = vpop.f32.mrf.mxu0
    %3677 = vmatprep.mubr.f32.mxu0 0.0
    %3678 = vmatmul.mubr.f32.gmra.mxu0 %v3380
    %v3679 = vpop.f32.mrf.mxu0
    %v3680 = vadd.f32 0.0, %v3679
    %v3681 = vpop.f32.mrf.mxu0
    %3682 = vmatprep.mubr.f32.mxu0 0.0
    %3683 = vmatmul.mubr.f32.gmra.mxu0 %v3383
    %v3684 = vpop.f32.mrf.mxu0
    %v3685 = vadd.f32 0.0, %v3684
    %v3686 = vpop.f32.mrf.mxu0
    %3687 = vmatprep.mubr.f32.mxu0 0.0
    %3688 = vmatmul.mubr.f32.gmra.mxu0 %v3386
    %v3689 = vpop.f32.mrf.mxu0
    %v3690 = vadd.f32 0.0, %v3689
    %v3691 = vpop.f32.mrf.mxu0
    %3692 = vmatprep.mubr.f32.mxu0 0.0
    %3693 = vmatmul.mubr.f32.gmra.mxu0 %v3389
    %v3694 = vpop.f32.mrf.mxu0
    %v3695 = vadd.f32 0.0, %v3694
    %v3696 = vpop.f32.mrf.mxu0
    %3697 = vmatprep.mubr.f32.mxu0 0.0
    %3698 = vmatmul.mubr.f32.gmra.mxu0 %v3392
    %v3699 = vpop.f32.mrf.mxu0
    %v3700 = vadd.f32 0.0, %v3699
    %v3701 = vpop.f32.mrf.mxu0
    %3702 = vmatprep.mubr.f32.mxu0 0.0
    %3703 = vmatmul.mubr.f32.gmra.mxu0 %v3395
    %v3704 = vpop.f32.mrf.mxu0
    %v3705 = vadd.f32 0.0, %v3704
    %v3706 = vpop.f32.mrf.mxu0
    %3707 = vmatprep.mubr.f32.mxu0 0.0
    %3708 = vmatmul.mubr.f32.gmra.mxu0 %v3398
    %v3709 = vpop.f32.mrf.mxu0
    %v3710 = vadd.f32 0.0, %v3709
    %v3711 = vpop.f32.mrf.mxu0
    %3712 = vmatprep.mubr.f32.mxu0 0.0
    %3713 = vmatmul.mubr.f32.gmra.mxu0 %v3401
    %v3714 = vpop.f32.mrf.mxu0
    %v3715 = vadd.f32 0.0, %v3714
    %v3716 = vpop.f32.mrf.mxu0
    %3717 = vmatprep.mubr.f32.mxu0 0.0
    %3718 = vmatmul.mubr.f32.gmra.mxu0 %v3404
    %v3719 = vpop.f32.mrf.mxu0
    %v3720 = vadd.f32 0.0, %v3719
    %v3721 = vpop.f32.mrf.mxu0
    %3722 = vmatprep.mubr.f32.mxu0 0.0
    %3723 = vmatmul.mubr.f32.gmra.mxu0 %v3407
    %v3724 = vpop.f32.mrf.mxu0
    %v3725 = vadd.f32 0.0, %v3724
    %v3726 = vpop.f32.mrf.mxu0
    %3727 = vmatprep.mubr.f32.mxu0 0.0
    %3728 = vmatmul.mubr.f32.gmra.mxu0 %v3410
    %v3729 = vpop.f32.mrf.mxu0
    %v3730 = vadd.f32 0.0, %v3729
    %v3731 = vpop.f32.mrf.mxu0
    %3732 = vmatprep.mubr.f32.mxu0 0.0
    %3733 = vmatmul.mubr.f32.gmra.mxu0 %v3413
    %v3734 = vpop.f32.mrf.mxu0
    %v3735 = vadd.f32 0.0, %v3734
    %v3736 = vpop.f32.mrf.mxu0
    %3737 = vmatprep.mubr.f32.mxu0 0.0
    %3738 = vmatmul.mubr.f32.gmra.mxu0 %v3416
    %v3739 = vpop.f32.mrf.mxu0
    %v3740 = vadd.f32 0.0, %v3739
    %v3741 = vpop.f32.mrf.mxu0
    %3742 = vmatprep.mubr.f32.mxu0 0.0
    %3743 = vmatmul.mubr.f32.gmra.mxu0 %v3419
    %v3744 = vpop.f32.mrf.mxu0
    %v3745 = vadd.f32 0.0, %v3744
    %v3746 = vpop.f32.mrf.mxu0
    %3747 = vmatprep.mubr.f32.mxu0 0.0
    %3748 = vmatmul.mubr.f32.gmra.mxu0 %v3422
    %v3749 = vpop.f32.mrf.mxu0
    %v3750 = vadd.f32 0.0, %v3749
    %v3751 = vpop.f32.mrf.mxu0
    %3752 = vmatprep.mubr.f32.mxu0 0.0
    %3753 = vmatmul.mubr.f32.gmra.mxu0 %v3425
    %v3754 = vpop.f32.mrf.mxu0
    %v3755 = vadd.f32 0.0, %v3754
    %v3756 = vpop.f32.mrf.mxu0
    %3757 = vmatprep.mubr.f32.mxu0 0.0
    %3758 = vmatmul.mubr.f32.gmra.mxu0 %v3428
    %v3759 = vpop.f32.mrf.mxu0
    %v3760 = vadd.f32 0.0, %v3759
    %v3761 = vpop.f32.mrf.mxu0
    %3762 = vmatprep.mubr.f32.mxu0 0.0
    %3763 = vmatmul.mubr.f32.gmra.mxu0 %v3431
    %v3764 = vpop.f32.mrf.mxu0
    %v3765 = vadd.f32 0.0, %v3764
    %v3766 = vpop.f32.mrf.mxu0
    %3767 = vmatprep.mubr.f32.mxu0 0.0
    %3768 = vmatmul.mubr.f32.gmra.mxu0 %v3434
    %v3769 = vpop.f32.mrf.mxu0
    %v3770 = vadd.f32 0.0, %v3769
    %v3771 = vpop.f32.mrf.mxu0
    %3772 = vmatprep.mubr.f32.mxu0 0.0
    %3773 = vmatmul.mubr.f32.gmra.mxu0 %v3437
    %v3774 = vpop.f32.mrf.mxu0
    %v3775 = vadd.f32 0.0, %v3774
    %v3776 = vpop.f32.mrf.mxu0
    %3777 = vmatprep.mubr.f32.mxu0 0.0
    %3778 = vmatmul.mubr.f32.gmra.mxu0 %v3440
    %v3779 = vpop.f32.mrf.mxu0
    %v3780 = vadd.f32 0.0, %v3779
    %v3781 = vpop.f32.mrf.mxu0
    %3782 = vmatprep.mubr.f32.mxu0 0.0
    %3783 = vmatmul.mubr.f32.gmra.mxu0 %v3443
    %v3784 = vpop.f32.mrf.mxu0
    %v3785 = vadd.f32 0.0, %v3784
    %v3786 = vpop.f32.mrf.mxu0
    %3787 = vmatprep.mubr.f32.mxu0 0.0
    %3788 = vmatmul.mubr.f32.gmra.mxu0 %v3446
    %v3789 = vpop.f32.mrf.mxu0
    %v3790 = vadd.f32 0.0, %v3789
    %v3791 = vpop.f32.mrf.mxu0
    %3792 = vmatprep.mubr.f32.mxu0 0.0
    %3793 = vmatmul.mubr.f32.gmra.mxu0 %v3449
    %v3794 = vpop.f32.mrf.mxu0
    %v3795 = vadd.f32 0.0, %v3794
    %v3796 = vpop.f32.mrf.mxu0
    %3797 = vmatprep.mubr.f32.mxu0 0.0
    %3798 = vmatmul.mubr.f32.gmra.mxu0 %v3452
    %v3799 = vpop.f32.mrf.mxu0
    %v3800 = vadd.f32 0.0, %v3799
    %v3801 = vpop.f32.mrf.mxu0
    %3802 = vmatprep.mubr.f32.mxu0 0.0
    %3803 = vmatmul.mubr.f32.gmra.mxu0 %v3455
    %v3804 = vpop.f32.mrf.mxu0
    %v3805 = vadd.f32 0.0, %v3804
    %v3806 = vpop.f32.mrf.mxu0
    %3807 = vmatprep.mubr.f32.mxu0 0.0
    %3808 = vmatmul.mubr.f32.gmra.mxu0 %v3458
    %v3809 = vpop.f32.mrf.mxu0
    %v3810 = vadd.f32 0.0, %v3809
    %v3811 = vpop.f32.mrf.mxu0
    %3812 = vmatprep.mubr.f32.mxu0 0.0
    %3813 = vmatmul.mubr.f32.gmra.mxu0 %v3461
    %v3814 = vpop.f32.mrf.mxu0
    %v3815 = vadd.f32 0.0, %v3814
    %v3816 = vpop.f32.mrf.mxu0
    %3817 = vmatprep.mubr.f32.mxu0 0.0
    %3818 = vmatmul.mubr.f32.gmra.mxu0 %v3464
    %v3819 = vpop.f32.mrf.mxu0
    %v3820 = vadd.f32 0.0, %v3819
    %v3821 = vpop.f32.mrf.mxu0
    %3822 = vmatprep.mubr.f32.mxu0 0.0
    %3823 = vmatmul.mubr.f32.gmra.mxu0 %v3467
    %v3824 = vpop.f32.mrf.mxu0
    %v3825 = vadd.f32 0.0, %v3824
    %v3826 = vpop.f32.mrf.mxu0
    %3827 = vmatprep.mubr.f32.mxu0 0.0
    %3828 = vmatmul.mubr.f32.gmra.mxu0 %v3470
    %v3829 = vpop.f32.mrf.mxu0
    %v3830 = vadd.f32 0.0, %v3829
    %v3831 = vpop.f32.mrf.mxu0
    %3832 = vmatprep.mubr.f32.mxu0 0.0
    %3833 = vmatmul.mubr.f32.gmra.mxu0 %v3473
    %v3834 = vpop.f32.mrf.mxu0
    %v3835 = vadd.f32 0.0, %v3834
    %v3836 = vpop.f32.mrf.mxu0
    %3837 = vmatprep.mubr.f32.mxu0 0.0
    %3838 = vmatmul.mubr.f32.gmra.mxu0 %v3476
    %v3839 = vpop.f32.mrf.mxu0
    %v3840 = vadd.f32 0.0, %v3839
    %v3841 = vpop.f32.mrf.mxu0
    %3842 = vmatprep.mubr.f32.mxu0 0.0
    %3843 = vmatmul.mubr.f32.gmra.mxu0 %v3479
    %v3844 = vpop.f32.mrf.mxu0
    %v3845 = vadd.f32 0.0, %v3844
    %v3846 = vpop.f32.mrf.mxu0
    %3847 = vmatprep.mubr.f32.mxu0 0.0
    %3848 = vmatmul.mubr.f32.gmra.mxu0 %v3482
    %v3849 = vpop.f32.mrf.mxu0
    %v3850 = vadd.f32 0.0, %v3849
    %v3851 = vpop.f32.mrf.mxu0
    %3852 = vmatprep.mubr.f32.mxu0 0.0
    %3853 = vmatmul.mubr.f32.gmra.mxu0 %v3485
    %v3854 = vpop.f32.mrf.mxu0
    %v3855 = vadd.f32 0.0, %v3854
    %v3856 = vpop.f32.mrf.mxu0
    %3857 = vmatprep.mubr.f32.mxu0 0.0
    %3858 = vmatmul.mubr.f32.gmra.mxu0 %v3488
    %v3859 = vpop.f32.mrf.mxu0
    %v3860 = vadd.f32 0.0, %v3859
    %v3861 = vpop.f32.mrf.mxu0
    %3862 = vmatprep.mubr.f32.mxu0 0.0
    %3863 = vmatmul.mubr.f32.gmra.mxu0 %v3491
    %v3864 = vpop.f32.mrf.mxu0
    %v3865 = vadd.f32 0.0, %v3864
    %v3866 = vpop.f32.mrf.mxu0
    %3867 = vmatprep.mubr.f32.mxu0 0.0
    %3868 = vmatmul.mubr.f32.gmra.mxu0 %v3494
    %v3869 = vpop.f32.mrf.mxu0
    %v3870 = vadd.f32 0.0, %v3869
    %v3871 = vpop.f32.mrf.mxu0
    %3872 = vmatprep.mubr.f32.mxu0 0.0
    %3873 = vmatmul.mubr.f32.gmra.mxu0 %v3497
    %v3874 = vpop.f32.mrf.mxu0
    %v3875 = vadd.f32 0.0, %v3874
    %v3876 = vpop.f32.mrf.mxu0
    %3877 = vmatprep.mubr.f32.mxu0 0.0
    %3878 = vmatmul.mubr.f32.gmra.mxu0 %v3500
    %v3879 = vpop.f32.mrf.mxu0
    %v3880 = vadd.f32 0.0, %v3879
    %v3881 = vpop.f32.mrf.mxu0
    %3882 = vmatprep.mubr.f32.mxu0 0.0
    %3883 = vmatmul.mubr.f32.gmra.mxu0 %v3503
    %v3884 = vpop.f32.mrf.mxu0
    %v3885 = vadd.f32 0.0, %v3884
    %v3886 = vpop.f32.mrf.mxu0
    %3887 = vmatprep.mubr.f32.mxu0 0.0
    %3888 = vmatmul.mubr.f32.gmra.mxu0 %v3506
    %v3889 = vpop.f32.mrf.mxu0
    %v3890 = vadd.f32 0.0, %v3889
    %v3891 = vpop.f32.mrf.mxu0
    %3892 = vmatprep.mubr.f32.mxu0 0.0
    %3893 = vmatmul.mubr.f32.gmra.mxu0 %v3509
    %v3894 = vpop.f32.mrf.mxu0
    %v3895 = vadd.f32 0.0, %v3894
    %v3896 = vpop.f32.mrf.mxu0
    %3897 = vmatprep.mubr.f32.mxu0 0.0
    %3898 = vmatmul.mubr.f32.gmra.mxu0 %v3512
    %v3899 = vpop.f32.mrf.mxu0
    %v3900 = vadd.f32 0.0, %v3899
    %v3901 = vpop.f32.mrf.mxu0
    %3902 = vdwg.mxu0
    %v3903 = vadd.f32 %v3585, %v3590
    %v3904 = vadd.f32 %v3903, %v3595
    %v3905 = vadd.f32 %v3904, %v3600
    %v3906 = vadd.f32 %v3905, %v3605
    %v3907 = vadd.f32 %v3906, %v3610
    %v3908 = vadd.f32 %v3907, %v3615
    %v3909 = vadd.f32 %v3908, %v3620
    %v3910 = vadd.f32 %v3909, %v3625
    %v3911 = vadd.f32 %v3910, %v3630
    %v3912 = vadd.f32 %v3911, %v3635
    %v3913 = vadd.f32 %v3912, %v3640
    %v3914 = vadd.f32 %v3913, %v3645
    %v3915 = vadd.f32 %v3914, %v3650
    %v3916 = vadd.f32 %v3915, %v3655
    %v3917 = vadd.f32 %v3916, %v3660
    %v3918 = vadd.f32 %v3917, %v3665
    %v3919 = vadd.f32 %v3918, %v3670
    %v3920 = vadd.f32 %v3919, %v3675
    %v3921 = vadd.f32 %v3920, %v3680
    %v3922 = vadd.f32 %v3921, %v3685
    %v3923 = vadd.f32 %v3922, %v3690
    %v3924 = vadd.f32 %v3923, %v3695
    %v3925 = vadd.f32 %v3924, %v3700
    %v3926 = vadd.f32 %v3925, %v3705
    %v3927 = vadd.f32 %v3926, %v3710
    %v3928 = vadd.f32 %v3927, %v3715
    %v3929 = vadd.f32 %v3928, %v3720
    %v3930 = vadd.f32 %v3929, %v3725
    %v3931 = vadd.f32 %v3930, %v3730
    %v3932 = vadd.f32 %v3931, %v3735
    %v3933 = vadd.f32 %v3932, %v3740
    %v3934 = vadd.f32 %v3933, %v3745
    %v3935 = vadd.f32 %v3934, %v3750
    %v3936 = vadd.f32 %v3935, %v3755
    %v3937 = vadd.f32 %v3936, %v3760
    %v3938 = vadd.f32 %v3937, %v3765
    %v3939 = vadd.f32 %v3938, %v3770
    %v3940 = vadd.f32 %v3939, %v3775
    %v3941 = vadd.f32 %v3940, %v3780
    %v3942 = vadd.f32 %v3941, %v3785
    %v3943 = vadd.f32 %v3942, %v3790
    %v3944 = vadd.f32 %v3943, %v3795
    %v3945 = vadd.f32 %v3944, %v3800
    %v3946 = vadd.f32 %v3945, %v3805
    %v3947 = vadd.f32 %v3946, %v3810
    %v3948 = vadd.f32 %v3947, %v3815
    %v3949 = vadd.f32 %v3948, %v3820
    %v3950 = vadd.f32 %v3949, %v3825
    %v3951 = vadd.f32 %v3950, %v3830
    %v3952 = vadd.f32 %v3951, %v3835
    %v3953 = vadd.f32 %v3952, %v3840
    %v3954 = vadd.f32 %v3953, %v3845
    %v3955 = vadd.f32 %v3954, %v3850
    %v3956 = vadd.f32 %v3955, %v3855
    %v3957 = vadd.f32 %v3956, %v3860
    %v3958 = vadd.f32 %v3957, %v3865
    %v3959 = vadd.f32 %v3958, %v3870
    %v3960 = vadd.f32 %v3959, %v3875
    %v3961 = vadd.f32 %v3960, %v3880
    %v3962 = vadd.f32 %v3961, %v3885
    %v3963 = vadd.f32 %v3962, %v3890
    %v3964 = vadd.f32 %v3963, %v3895
    %v3965 = vadd.f32 %v3964, %v3900
    %v3966 = vrot.slane %v3965, 4
    %v3967 = vadd.f32 %v3965, %v3966
    %v3968 = vrot.slane %v3967, 2
    %v3969 = vadd.f32 %v3967, %v3968
    %v3970 = vrot.slane %v3969, 1
    %v3971 = vadd.f32 %v3969, %v3970
    %v3972 = vmul.f32 %v3585, %v3585
    %v3973 = vmul.f32 %v3590, %v3590
    %v3974 = vmul.f32 %v3595, %v3595
    %v3975 = vmul.f32 %v3600, %v3600
    %v3976 = vmul.f32 %v3605, %v3605
    %v3977 = vmul.f32 %v3610, %v3610
    %v3978 = vmul.f32 %v3615, %v3615
    %v3979 = vmul.f32 %v3620, %v3620
    %v3980 = vmul.f32 %v3625, %v3625
    %v3981 = vmul.f32 %v3630, %v3630
    %v3982 = vmul.f32 %v3635, %v3635
    %v3983 = vmul.f32 %v3640, %v3640
    %v3984 = vmul.f32 %v3645, %v3645
    %v3985 = vmul.f32 %v3650, %v3650
    %v3986 = vmul.f32 %v3655, %v3655
    %v3987 = vmul.f32 %v3660, %v3660
    %v3988 = vmul.f32 %v3665, %v3665
    %v3989 = vmul.f32 %v3670, %v3670
    %v3990 = vmul.f32 %v3675, %v3675
    %v3991 = vmul.f32 %v3680, %v3680
    %v3992 = vmul.f32 %v3685, %v3685
    %v3993 = vmul.f32 %v3690, %v3690
    %v3994 = vmul.f32 %v3695, %v3695
    %v3995 = vmul.f32 %v3700, %v3700
    %v3996 = vmul.f32 %v3705, %v3705
    %v3997 = vmul.f32 %v3710, %v3710
    %v3998 = vmul.f32 %v3715, %v3715
    %v3999 = vmul.f32 %v3720, %v3720
    %v4000 = vmul.f32 %v3725, %v3725
    %v4001 = vmul.f32 %v3730, %v3730
    %v4002 = vmul.f32 %v3735, %v3735
    %v4003 = vmul.f32 %v3740, %v3740
    %v4004 = vmul.f32 %v3745, %v3745
    %v4005 = vmul.f32 %v3750, %v3750
    %v4006 = vmul.f32 %v3755, %v3755
    %v4007 = vmul.f32 %v3760, %v3760
    %v4008 = vmul.f32 %v3765, %v3765
    %v4009 = vmul.f32 %v3770, %v3770
    %v4010 = vmul.f32 %v3775, %v3775
    %v4011 = vmul.f32 %v3780, %v3780
    %v4012 = vmul.f32 %v3785, %v3785
    %v4013 = vmul.f32 %v3790, %v3790
    %v4014 = vmul.f32 %v3795, %v3795
    %v4015 = vmul.f32 %v3800, %v3800
    %v4016 = vmul.f32 %v3805, %v3805
    %v4017 = vmul.f32 %v3810, %v3810
    %v4018 = vmul.f32 %v3815, %v3815
    %v4019 = vmul.f32 %v3820, %v3820
    %v4020 = vmul.f32 %v3825, %v3825
    %v4021 = vmul.f32 %v3830, %v3830
    %v4022 = vmul.f32 %v3835, %v3835
    %v4023 = vmul.f32 %v3840, %v3840
    %v4024 = vmul.f32 %v3845, %v3845
    %v4025 = vmul.f32 %v3850, %v3850
    %v4026 = vmul.f32 %v3855, %v3855
    %v4027 = vmul.f32 %v3860, %v3860
    %v4028 = vmul.f32 %v3865, %v3865
    %v4029 = vmul.f32 %v3870, %v3870
    %v4030 = vmul.f32 %v3875, %v3875
    %v4031 = vmul.f32 %v3880, %v3880
    %v4032 = vmul.f32 %v3885, %v3885
    %v4033 = vmul.f32 %v3890, %v3890
    %v4034 = vmul.f32 %v3895, %v3895
    %v4035 = vmul.f32 %v3900, %v3900
    %v4036 = vadd.f32 %v3972, %v3973
    %v4037 = vadd.f32 %v4036, %v3974
    %v4038 = vadd.f32 %v4037, %v3975
    %v4039 = vadd.f32 %v4038, %v3976
    %v4040 = vadd.f32 %v4039, %v3977
    %v4041 = vadd.f32 %v4040, %v3978
    %v4042 = vadd.f32 %v4041, %v3979
    %v4043 = vadd.f32 %v4042, %v3980
    %v4044 = vadd.f32 %v4043, %v3981
    %v4045 = vadd.f32 %v4044, %v3982
    %v4046 = vadd.f32 %v4045, %v3983
    %v4047 = vadd.f32 %v4046, %v3984
    %v4048 = vadd.f32 %v4047, %v3985
    %v4049 = vadd.f32 %v4048, %v3986
    %v4050 = vadd.f32 %v4049, %v3987
    %v4051 = vadd.f32 %v4050, %v3988
    %v4052 = vadd.f32 %v4051, %v3989
    %v4053 = vadd.f32 %v4052, %v3990
    %v4054 = vadd.f32 %v4053, %v3991
    %v4055 = vadd.f32 %v4054, %v3992
    %v4056 = vadd.f32 %v4055, %v3993
    %v4057 = vadd.f32 %v4056, %v3994
    %v4058 = vadd.f32 %v4057, %v3995
    %v4059 = vadd.f32 %v4058, %v3996
    %v4060 = vadd.f32 %v4059, %v3997
    %v4061 = vadd.f32 %v4060, %v3998
    %v4062 = vadd.f32 %v4061, %v3999
    %v4063 = vadd.f32 %v4062, %v4000
    %v4064 = vadd.f32 %v4063, %v4001
    %v4065 = vadd.f32 %v4064, %v4002
    %v4066 = vadd.f32 %v4065, %v4003
    %v4067 = vadd.f32 %v4066, %v4004
    %v4068 = vadd.f32 %v4067, %v4005
    %v4069 = vadd.f32 %v4068, %v4006
    %v4070 = vadd.f32 %v4069, %v4007
    %v4071 = vadd.f32 %v4070, %v4008
    %v4072 = vadd.f32 %v4071, %v4009
    %v4073 = vadd.f32 %v4072, %v4010
    %v4074 = vadd.f32 %v4073, %v4011
    %v4075 = vadd.f32 %v4074, %v4012
    %v4076 = vadd.f32 %v4075, %v4013
    %v4077 = vadd.f32 %v4076, %v4014
    %v4078 = vadd.f32 %v4077, %v4015
    %v4079 = vadd.f32 %v4078, %v4016
    %v4080 = vadd.f32 %v4079, %v4017
    %v4081 = vadd.f32 %v4080, %v4018
    %v4082 = vadd.f32 %v4081, %v4019
    %v4083 = vadd.f32 %v4082, %v4020
    %v4084 = vadd.f32 %v4083, %v4021
    %v4085 = vadd.f32 %v4084, %v4022
    %v4086 = vadd.f32 %v4085, %v4023
    %v4087 = vadd.f32 %v4086, %v4024
    %v4088 = vadd.f32 %v4087, %v4025
    %v4089 = vadd.f32 %v4088, %v4026
    %v4090 = vadd.f32 %v4089, %v4027
    %v4091 = vadd.f32 %v4090, %v4028
    %v4092 = vadd.f32 %v4091, %v4029
    %v4093 = vadd.f32 %v4092, %v4030
    %v4094 = vadd.f32 %v4093, %v4031
    %v4095 = vadd.f32 %v4094, %v4032
    %v4096 = vadd.f32 %v4095, %v4033
    %v4097 = vadd.f32 %v4096, %v4034
    %v4098 = vadd.f32 %v4097, %v4035
    %v4099 = vrot.slane %v4098, 4
    %v4100 = vadd.f32 %v4098, %v4099
    %v4101 = vrot.slane %v4100, 2
    %v4102 = vadd.f32 %v4100, %v4101
    %v4103 = vrot.slane %v4102, 1
    %v4104 = vadd.f32 %v4102, %v4103
    %v4105 = vmul.f32 %v3971, 0.001953125
    %v4106 = vmul.f32 %v4104, 0.001953125
    %v4107 = vmul.f32 %v4105, %v4105
    %v4108 = vsub.f32 %v4106, %v4107
    %v4109 = vld [vmem:[%s2] sm:$0x1]
    %v4110 = vadd.f32 %v4108, 1e-05
    %v4111 = vrsqrt.pop %v4110
    %v4112 = vmul.f32 %v4109, %v4111
    %v4113 = vld [vmem:[%s3] sm:$0x1]
    %v4114 = vmul.f32 %v4105, %v4112
    %v4115 = vsub.f32 %v4113, %v4114
    %v4117 = vlaneseq
    %v4118 = vshrl.u32 %v4117, 7
    %v4119 = vsub.s32 0, %v4118
    %v4120 = vrot.slane %v4112, %v4119
    %v4122 = vmul.f32 %v3585, %v4120
    %v4123 = vmul.f32 %v3590, %v4120
    %v4124 = vmul.f32 %v3595, %v4120
    %v4125 = vmul.f32 %v3600, %v4120
    %v4126 = vmul.f32 %v3605, %v4120
    %v4127 = vmul.f32 %v3610, %v4120
    %v4128 = vmul.f32 %v3615, %v4120
    %v4129 = vmul.f32 %v3620, %v4120
    %v4130 = vmul.f32 %v3625, %v4120
    %v4131 = vmul.f32 %v3630, %v4120
    %v4132 = vmul.f32 %v3635, %v4120
    %v4133 = vmul.f32 %v3640, %v4120
    %v4134 = vmul.f32 %v3645, %v4120
    %v4135 = vmul.f32 %v3650, %v4120
    %v4136 = vmul.f32 %v3655, %v4120
    %v4137 = vmul.f32 %v3660, %v4120
    %v4138 = vmul.f32 %v3665, %v4120
    %v4139 = vmul.f32 %v3670, %v4120
    %v4140 = vmul.f32 %v3675, %v4120
    %v4141 = vmul.f32 %v3680, %v4120
    %v4142 = vmul.f32 %v3685, %v4120
    %v4143 = vmul.f32 %v3690, %v4120
    %v4144 = vmul.f32 %v3695, %v4120
    %v4145 = vmul.f32 %v3700, %v4120
    %v4146 = vmul.f32 %v3705, %v4120
    %v4147 = vmul.f32 %v3710, %v4120
    %v4148 = vmul.f32 %v3715, %v4120
    %v4149 = vmul.f32 %v3720, %v4120
    %v4150 = vmul.f32 %v3725, %v4120
    %v4151 = vmul.f32 %v3730, %v4120
    %v4152 = vmul.f32 %v3735, %v4120
    %v4153 = vmul.f32 %v3740, %v4120
    %v4154 = vmul.f32 %v3745, %v4120
    %v4155 = vmul.f32 %v3750, %v4120
    %v4156 = vmul.f32 %v3755, %v4120
    %v4157 = vmul.f32 %v3760, %v4120
    %v4158 = vmul.f32 %v3765, %v4120
    %v4159 = vmul.f32 %v3770, %v4120
    %v4160 = vmul.f32 %v3775, %v4120
    %v4161 = vmul.f32 %v3780, %v4120
    %v4162 = vmul.f32 %v3785, %v4120
    %v4163 = vmul.f32 %v3790, %v4120
    %v4164 = vmul.f32 %v3795, %v4120
    %v4165 = vmul.f32 %v3800, %v4120
    %v4166 = vmul.f32 %v3805, %v4120
    %v4167 = vmul.f32 %v3810, %v4120
    %v4168 = vmul.f32 %v3815, %v4120
    %v4169 = vmul.f32 %v3820, %v4120
    %v4170 = vmul.f32 %v3825, %v4120
    %v4171 = vmul.f32 %v3830, %v4120
    %v4172 = vmul.f32 %v3835, %v4120
    %v4173 = vmul.f32 %v3840, %v4120
    %v4174 = vmul.f32 %v3845, %v4120
    %v4175 = vmul.f32 %v3850, %v4120
    %v4176 = vmul.f32 %v3855, %v4120
    %v4177 = vmul.f32 %v3860, %v4120
    %v4178 = vmul.f32 %v3865, %v4120
    %v4179 = vmul.f32 %v3870, %v4120
    %v4180 = vmul.f32 %v3875, %v4120
    %v4181 = vmul.f32 %v3880, %v4120
    %v4182 = vmul.f32 %v3885, %v4120
    %v4183 = vmul.f32 %v3890, %v4120
    %v4184 = vmul.f32 %v3895, %v4120
    %v4185 = vmul.f32 %v3900, %v4120
    %v4187 = vlaneseq
    %v4188 = vshrl.u32 %v4187, 7
    %v4189 = vsub.s32 0, %v4188
    %v4190 = vrot.slane %v4115, %v4189
    %v4192 = vadd.f32 %v4122, %v4190
    %v4193 = vadd.f32 %v4123, %v4190
    %v4194 = vadd.f32 %v4124, %v4190
    %v4195 = vadd.f32 %v4125, %v4190
    %v4196 = vadd.f32 %v4126, %v4190
    %v4197 = vadd.f32 %v4127, %v4190
    %v4198 = vadd.f32 %v4128, %v4190
    %v4199 = vadd.f32 %v4129, %v4190
    %v4200 = vadd.f32 %v4130, %v4190
    %v4201 = vadd.f32 %v4131, %v4190
    %v4202 = vadd.f32 %v4132, %v4190
    %v4203 = vadd.f32 %v4133, %v4190
    %v4204 = vadd.f32 %v4134, %v4190
    %v4205 = vadd.f32 %v4135, %v4190
    %v4206 = vadd.f32 %v4136, %v4190
    %v4207 = vadd.f32 %v4137, %v4190
    %v4208 = vadd.f32 %v4138, %v4190
    %v4209 = vadd.f32 %v4139, %v4190
    %v4210 = vadd.f32 %v4140, %v4190
    %v4211 = vadd.f32 %v4141, %v4190
    %v4212 = vadd.f32 %v4142, %v4190
    %v4213 = vadd.f32 %v4143, %v4190
    %v4214 = vadd.f32 %v4144, %v4190
    %v4215 = vadd.f32 %v4145, %v4190
    %v4216 = vadd.f32 %v4146, %v4190
    %v4217 = vadd.f32 %v4147, %v4190
    %v4218 = vadd.f32 %v4148, %v4190
    %v4219 = vadd.f32 %v4149, %v4190
    %v4220 = vadd.f32 %v4150, %v4190
    %v4221 = vadd.f32 %v4151, %v4190
    %v4222 = vadd.f32 %v4152, %v4190
    %v4223 = vadd.f32 %v4153, %v4190
    %v4224 = vadd.f32 %v4154, %v4190
    %v4225 = vadd.f32 %v4155, %v4190
    %v4226 = vadd.f32 %v4156, %v4190
    %v4227 = vadd.f32 %v4157, %v4190
    %v4228 = vadd.f32 %v4158, %v4190
    %v4229 = vadd.f32 %v4159, %v4190
    %v4230 = vadd.f32 %v4160, %v4190
    %v4231 = vadd.f32 %v4161, %v4190
    %v4232 = vadd.f32 %v4162, %v4190
    %v4233 = vadd.f32 %v4163, %v4190
    %v4234 = vadd.f32 %v4164, %v4190
    %v4235 = vadd.f32 %v4165, %v4190
    %v4236 = vadd.f32 %v4166, %v4190
    %v4237 = vadd.f32 %v4167, %v4190
    %v4238 = vadd.f32 %v4168, %v4190
    %v4239 = vadd.f32 %v4169, %v4190
    %v4240 = vadd.f32 %v4170, %v4190
    %v4241 = vadd.f32 %v4171, %v4190
    %v4242 = vadd.f32 %v4172, %v4190
    %v4243 = vadd.f32 %v4173, %v4190
    %v4244 = vadd.f32 %v4174, %v4190
    %v4245 = vadd.f32 %v4175, %v4190
    %v4246 = vadd.f32 %v4176, %v4190
    %v4247 = vadd.f32 %v4177, %v4190
    %v4248 = vadd.f32 %v4178, %v4190
    %v4249 = vadd.f32 %v4179, %v4190
    %v4250 = vadd.f32 %v4180, %v4190
    %v4251 = vadd.f32 %v4181, %v4190
    %v4252 = vadd.f32 %v4182, %v4190
    %v4253 = vadd.f32 %v4183, %v4190
    %v4254 = vadd.f32 %v4184, %v4190
    %v4255 = vadd.f32 %v4185, %v4190
    %v4256 = vmax.f32 %v4192, 0.0
    %v4257 = vmax.f32 %v4193, 0.0
    %v4258 = vmax.f32 %v4194, 0.0
    %v4259 = vmax.f32 %v4195, 0.0
    %v4260 = vmax.f32 %v4196, 0.0
    %v4261 = vmax.f32 %v4197, 0.0
    %v4262 = vmax.f32 %v4198, 0.0
    %v4263 = vmax.f32 %v4199, 0.0
    %v4264 = vmax.f32 %v4200, 0.0
    %v4265 = vmax.f32 %v4201, 0.0
    %v4266 = vmax.f32 %v4202, 0.0
    %v4267 = vmax.f32 %v4203, 0.0
    %v4268 = vmax.f32 %v4204, 0.0
    %v4269 = vmax.f32 %v4205, 0.0
    %v4270 = vmax.f32 %v4206, 0.0
    %v4271 = vmax.f32 %v4207, 0.0
    %v4272 = vmax.f32 %v4208, 0.0
    %v4273 = vmax.f32 %v4209, 0.0
    %v4274 = vmax.f32 %v4210, 0.0
    %v4275 = vmax.f32 %v4211, 0.0
    %v4276 = vmax.f32 %v4212, 0.0
    %v4277 = vmax.f32 %v4213, 0.0
    %v4278 = vmax.f32 %v4214, 0.0
    %v4279 = vmax.f32 %v4215, 0.0
    %v4280 = vmax.f32 %v4216, 0.0
    %v4281 = vmax.f32 %v4217, 0.0
    %v4282 = vmax.f32 %v4218, 0.0
    %v4283 = vmax.f32 %v4219, 0.0
    %v4284 = vmax.f32 %v4220, 0.0
    %v4285 = vmax.f32 %v4221, 0.0
    %v4286 = vmax.f32 %v4222, 0.0
    %v4287 = vmax.f32 %v4223, 0.0
    %v4288 = vmax.f32 %v4224, 0.0
    %v4289 = vmax.f32 %v4225, 0.0
    %v4290 = vmax.f32 %v4226, 0.0
    %v4291 = vmax.f32 %v4227, 0.0
    %v4292 = vmax.f32 %v4228, 0.0
    %v4293 = vmax.f32 %v4229, 0.0
    %v4294 = vmax.f32 %v4230, 0.0
    %v4295 = vmax.f32 %v4231, 0.0
    %v4296 = vmax.f32 %v4232, 0.0
    %v4297 = vmax.f32 %v4233, 0.0
    %v4298 = vmax.f32 %v4234, 0.0
    %v4299 = vmax.f32 %v4235, 0.0
    %v4300 = vmax.f32 %v4236, 0.0
    %v4301 = vmax.f32 %v4237, 0.0
    %v4302 = vmax.f32 %v4238, 0.0
    %v4303 = vmax.f32 %v4239, 0.0
    %v4304 = vmax.f32 %v4240, 0.0
    %v4305 = vmax.f32 %v4241, 0.0
    %v4306 = vmax.f32 %v4242, 0.0
    %v4307 = vmax.f32 %v4243, 0.0
    %v4308 = vmax.f32 %v4244, 0.0
    %v4309 = vmax.f32 %v4245, 0.0
    %v4310 = vmax.f32 %v4246, 0.0
    %v4311 = vmax.f32 %v4247, 0.0
    %v4312 = vmax.f32 %v4248, 0.0
    %v4313 = vmax.f32 %v4249, 0.0
    %v4314 = vmax.f32 %v4250, 0.0
    %v4315 = vmax.f32 %v4251, 0.0
    %v4316 = vmax.f32 %v4252, 0.0
    %v4317 = vmax.f32 %v4253, 0.0
    %v4318 = vmax.f32 %v4254, 0.0
    %v4319 = vmax.f32 %v4255, 0.0
    %4320 = vst [vmem:[#allocation3] sm:$0xff] 0.0
    %4321 = vst [vmem:[#allocation3 + $0x8] sm:$0xff] 0.0
    %4322 = vst [vmem:[#allocation3 + $0x10] sm:$0x3] 0.0
    %4323 = vst [vmem:[#allocation3 + $0x1b0] sm:$0xff] 0.0
    %4324 = vst [vmem:[#allocation3 + $0x1b8] sm:$0xff] 0.0
    %4325 = vst [vmem:[#allocation3 + $0x1c0] sm:$0x3] 0.0
    %s4326 = scalar_lea.vmem [#allocation3], 408
    %4327 = vst [vmem:[%s4326] sm:$0xff] 0.0
    %4328 = vst [vmem:[%s4326 + $0x8] sm:$0xff] 0.0
    %4329 = vst [vmem:[%s4326 + $0x10] sm:$0x3] 0.0
    %4330 = vst [vmem:[%s4326 + $0x1b0] sm:$0xff] 0.0
    %4331 = vst [vmem:[%s4326 + $0x1b8] sm:$0xff] 0.0
    %4332 = vst [vmem:[%s4326 + $0x1c0] sm:$0x3] 0.0
    %s4333 = scalar_lea.vmem [#allocation3], 24
    %4334 = vst [vmem:[%s4333] sm:$0x1] 0.0
    %4335 = vst [vmem:[%s4333 + $0x18] sm:$0x1] 0.0
    %4336 = vst [vmem:[%s4333 + $0x30] sm:$0x1] 0.0
    %4337 = vst [vmem:[%s4333 + $0x48] sm:$0x1] 0.0
    %4338 = vst [vmem:[%s4333 + $0x60] sm:$0x1] 0.0
    %4339 = vst [vmem:[%s4333 + $0x78] sm:$0x1] 0.0
    %4340 = vst [vmem:[%s4333 + $0x90] sm:$0x1] 0.0
    %4341 = vst [vmem:[%s4333 + $0xa8] sm:$0x1] 0.0
    %4342 = vst [vmem:[%s4333 + $0xc0] sm:$0x1] 0.0
    %4343 = vst [vmem:[%s4333 + $0xd8] sm:$0x1] 0.0
    %4344 = vst [vmem:[%s4333 + $0xf0] sm:$0x1] 0.0
    %4345 = vst [vmem:[%s4333 + $0x108] sm:$0x1] 0.0
    %4346 = vst [vmem:[%s4333 + $0x120] sm:$0x1] 0.0
    %4347 = vst [vmem:[%s4333 + $0x138] sm:$0x1] 0.0
    %4348 = vst [vmem:[%s4333 + $0x150] sm:$0x1] 0.0
    %4349 = vst [vmem:[%s4333 + $0x168] sm:$0x1] 0.0
    %4350 = vst [vmem:[%s4333 + $0x1b0] sm:$0x1] 0.0
    %4351 = vst [vmem:[%s4333 + $0x1c8] sm:$0x1] 0.0
    %4352 = vst [vmem:[%s4333 + $0x1e0] sm:$0x1] 0.0
    %4353 = vst [vmem:[%s4333 + $0x1f8] sm:$0x1] 0.0
    %4354 = vst [vmem:[%s4333 + $0x210] sm:$0x1] 0.0
    %4355 = vst [vmem:[%s4333 + $0x228] sm:$0x1] 0.0
    %4356 = vst [vmem:[%s4333 + $0x240] sm:$0x1] 0.0
    %4357 = vst [vmem:[%s4333 + $0x258] sm:$0x1] 0.0
    %4358 = vst [vmem:[%s4333 + $0x270] sm:$0x1] 0.0
    %4359 = vst [vmem:[%s4333 + $0x288] sm:$0x1] 0.0
    %4360 = vst [vmem:[%s4333 + $0x2a0] sm:$0x1] 0.0
    %4361 = vst [vmem:[%s4333 + $0x2b8] sm:$0x1] 0.0
    %4362 = vst [vmem:[%s4333 + $0x2d0] sm:$0x1] 0.0
    %4363 = vst [vmem:[%s4333 + $0x2e8] sm:$0x1] 0.0
    %4364 = vst [vmem:[%s4333 + $0x300] sm:$0x1] 0.0
    %4365 = vst [vmem:[%s4333 + $0x318] sm:$0x1] 0.0
    %4366 = vst [vmem:[%s4333 + $0x11] sm:$0x1] 0.0
    %4367 = vst [vmem:[%s4333 + $0x29] sm:$0x1] 0.0
    %4368 = vst [vmem:[%s4333 + $0x41] sm:$0x1] 0.0
    %4369 = vst [vmem:[%s4333 + $0x59] sm:$0x1] 0.0
    %4370 = vst [vmem:[%s4333 + $0x71] sm:$0x1] 0.0
    %4371 = vst [vmem:[%s4333 + $0x89] sm:$0x1] 0.0
    %4372 = vst [vmem:[%s4333 + $0xa1] sm:$0x1] 0.0
    %4373 = vst [vmem:[%s4333 + $0xb9] sm:$0x1] 0.0
    %4374 = vst [vmem:[%s4333 + $0xd1] sm:$0x1] 0.0
    %4375 = vst [vmem:[%s4333 + $0xe9] sm:$0x1] 0.0
    %4376 = vst [vmem:[%s4333 + $0x101] sm:$0x1] 0.0
    %4377 = vst [vmem:[%s4333 + $0x119] sm:$0x1] 0.0
    %4378 = vst [vmem:[%s4333 + $0x131] sm:$0x1] 0.0
    %4379 = vst [vmem:[%s4333 + $0x149] sm:$0x1] 0.0
    %4380 = vst [vmem:[%s4333 + $0x161] sm:$0x1] 0.0
    %4381 = vst [vmem:[%s4333 + $0x179] sm:$0x1] 0.0
    %4382 = vst [vmem:[%s4333 + $0x1c1] sm:$0x1] 0.0
    %4383 = vst [vmem:[%s4333 + $0x1d9] sm:$0x1] 0.0
    %4384 = vst [vmem:[%s4333 + $0x1f1] sm:$0x1] 0.0
    %4385 = vst [vmem:[%s4333 + $0x209] sm:$0x1] 0.0
    %4386 = vst [vmem:[%s4333 + $0x221] sm:$0x1] 0.0
    %4387 = vst [vmem:[%s4333 + $0x239] sm:$0x1] 0.0
    %4388 = vst [vmem:[%s4333 + $0x251] sm:$0x1] 0.0
    %4389 = vst [vmem:[%s4333 + $0x269] sm:$0x1] 0.0
    %4390 = vst [vmem:[%s4333 + $0x281] sm:$0x1] 0.0
    %4391 = vst [vmem:[%s4333 + $0x299] sm:$0x1] 0.0
    %4392 = vst [vmem:[%s4333 + $0x2b1] sm:$0x1] 0.0
    %4393 = vst [vmem:[%s4333 + $0x2c9] sm:$0x1] 0.0
    %4394 = vst [vmem:[%s4333 + $0x2e1] sm:$0x1] 0.0
    %4395 = vst [vmem:[%s4333 + $0x2f9] sm:$0x1] 0.0
    %4396 = vst [vmem:[%s4333 + $0x311] sm:$0x1] 0.0
    %4397 = vst [vmem:[%s4333 + $0x329] sm:$0x1] 0.0
    %4398 = vst [vmem:[%s4333 + $0x1] sm:$0xff] %v4256
    %4399 = vst [vmem:[%s4333 + $0x9] sm:$0xff] %v4257
    %4400 = vst [vmem:[%s4333 + $0x19] sm:$0xff] %v4258
    %4401 = vst [vmem:[%s4333 + $0x21] sm:$0xff] %v4259
    %4402 = vst [vmem:[%s4333 + $0x31] sm:$0xff] %v4260
    %4403 = vst [vmem:[%s4333 + $0x39] sm:$0xff] %v4261
    %4404 = vst [vmem:[%s4333 + $0x49] sm:$0xff] %v4262
    %4405 = vst [vmem:[%s4333 + $0x51] sm:$0xff] %v4263
    %4406 = vst [vmem:[%s4333 + $0x61] sm:$0xff] %v4264
    %4407 = vst [vmem:[%s4333 + $0x69] sm:$0xff] %v4265
    %4408 = vst [vmem:[%s4333 + $0x79] sm:$0xff] %v4266
    %4409 = vst [vmem:[%s4333 + $0x81] sm:$0xff] %v4267
    %4410 = vst [vmem:[%s4333 + $0x91] sm:$0xff] %v4268
    %4411 = vst [vmem:[%s4333 + $0x99] sm:$0xff] %v4269
    %4412 = vst [vmem:[%s4333 + $0xa9] sm:$0xff] %v4270
    %4413 = vst [vmem:[%s4333 + $0xb1] sm:$0xff] %v4271
    %4414 = vst [vmem:[%s4333 + $0xc1] sm:$0xff] %v4272
    %4415 = vst [vmem:[%s4333 + $0xc9] sm:$0xff] %v4273
    %4416 = vst [vmem:[%s4333 + $0xd9] sm:$0xff] %v4274
    %4417 = vst [vmem:[%s4333 + $0xe1] sm:$0xff] %v4275
    %4418 = vst [vmem:[%s4333 + $0xf1] sm:$0xff] %v4276
    %4419 = vst [vmem:[%s4333 + $0xf9] sm:$0xff] %v4277
    %4420 = vst [vmem:[%s4333 + $0x109] sm:$0xff] %v4278
    %4421 = vst [vmem:[%s4333 + $0x111] sm:$0xff] %v4279
    %4422 = vst [vmem:[%s4333 + $0x121] sm:$0xff] %v4280
    %4423 = vst [vmem:[%s4333 + $0x129] sm:$0xff] %v4281
    %4424 = vst [vmem:[%s4333 + $0x139] sm:$0xff] %v4282
    %4425 = vst [vmem:[%s4333 + $0x141] sm:$0xff] %v4283
    %4426 = vst [vmem:[%s4333 + $0x151] sm:$0xff] %v4284
    %4427 = vst [vmem:[%s4333 + $0x159] sm:$0xff] %v4285
    %4428 = vst [vmem:[%s4333 + $0x169] sm:$0xff] %v4286
    %4429 = vst [vmem:[%s4333 + $0x171] sm:$0xff] %v4287
    %4430 = vst [vmem:[%s4333 + $0x1b1] sm:$0xff] %v4288
    %4431 = vst [vmem:[%s4333 + $0x1b9] sm:$0xff] %v4289
    %4432 = vst [vmem:[%s4333 + $0x1c9] sm:$0xff] %v4290
    %4433 = vst [vmem:[%s4333 + $0x1d1] sm:$0xff] %v4291
    %4434 = vst [vmem:[%s4333 + $0x1e1] sm:$0xff] %v4292
    %4435 = vst [vmem:[%s4333 + $0x1e9] sm:$0xff] %v4293
    %4436 = vst [vmem:[%s4333 + $0x1f9] sm:$0xff] %v4294
    %4437 = vst [vmem:[%s4333 + $0x201] sm:$0xff] %v4295
    %4438 = vst [vmem:[%s4333 + $0x211] sm:$0xff] %v4296
    %4439 = vst [vmem:[%s4333 + $0x219] sm:$0xff] %v4297
    %4440 = vst [vmem:[%s4333 + $0x229] sm:$0xff] %v4298
    %4441 = vst [vmem:[%s4333 + $0x231] sm:$0xff] %v4299
    %4442 = vst [vmem:[%s4333 + $0x241] sm:$0xff] %v4300
    %4443 = vst [vmem:[%s4333 + $0x249] sm:$0xff] %v4301
    %4444 = vst [vmem:[%s4333 + $0x259] sm:$0xff] %v4302
    %4445 = vst [vmem:[%s4333 + $0x261] sm:$0xff] %v4303
    %4446 = vst [vmem:[%s4333 + $0x271] sm:$0xff] %v4304
    %4447 = vst [vmem:[%s4333 + $0x279] sm:$0xff] %v4305
    %4448 = vst [vmem:[%s4333 + $0x289] sm:$0xff] %v4306
    %4449 = vst [vmem:[%s4333 + $0x291] sm:$0xff] %v4307
    %4450 = vst [vmem:[%s4333 + $0x2a1] sm:$0xff] %v4308
    %4451 = vst [vmem:[%s4333 + $0x2a9] sm:$0xff] %v4309
    %4452 = vst [vmem:[%s4333 + $0x2b9] sm:$0xff] %v4310
    %4453 = vst [vmem:[%s4333 + $0x2c1] sm:$0xff] %v4311
    %4454 = vst [vmem:[%s4333 + $0x2d1] sm:$0xff] %v4312
    %4455 = vst [vmem:[%s4333 + $0x2d9] sm:$0xff] %v4313
    %4456 = vst [vmem:[%s4333 + $0x2e9] sm:$0xff] %v4314
    %4457 = vst [vmem:[%s4333 + $0x2f1] sm:$0xff] %v4315
    %4458 = vst [vmem:[%s4333 + $0x301] sm:$0xff] %v4316
    %4459 = vst [vmem:[%s4333 + $0x309] sm:$0xff] %v4317
    %4460 = vst [vmem:[%s4333 + $0x319] sm:$0xff] %v4318
    %4461 = vst [vmem:[%s4333 + $0x321] sm:$0xff] %v4319
    %v4462 = vld [vmem:[#allocation3] sm:$0xff]
    %v4463 = vld [vmem:[#allocation3 + $0x8] sm:$0xff]
    %v4464 = vld [vmem:[#allocation3 + $0x18] sm:$0xff]
    %v4465 = vld [vmem:[#allocation3 + $0x20] sm:$0xff]
    %v4466 = vld [vmem:[#allocation3 + $0x30] sm:$0xff]
    %v4467 = vld [vmem:[#allocation3 + $0x38] sm:$0xff]
    %v4468 = vld [vmem:[#allocation3 + $0x48] sm:$0xff]
    %v4469 = vld [vmem:[#allocation3 + $0x50] sm:$0xff]
    %v4470 = vld [vmem:[#allocation3 + $0x60] sm:$0xff]
    %v4471 = vld [vmem:[#allocation3 + $0x68] sm:$0xff]
    %v4472 = vld [vmem:[#allocation3 + $0x78] sm:$0xff]
    %v4473 = vld [vmem:[#allocation3 + $0x80] sm:$0xff]
    %v4474 = vld [vmem:[#allocation3 + $0x90] sm:$0xff]
    %v4475 = vld [vmem:[#allocation3 + $0x98] sm:$0xff]
    %v4476 = vld [vmem:[#allocation3 + $0xa8] sm:$0xff]
    %v4477 = vld [vmem:[#allocation3 + $0xb0] sm:$0xff]
    %v4478 = vld [vmem:[#allocation3 + $0xc0] sm:$0xff]
    %v4479 = vld [vmem:[#allocation3 + $0xc8] sm:$0xff]
    %v4480 = vld [vmem:[#allocation3 + $0xd8] sm:$0xff]
    %v4481 = vld [vmem:[#allocation3 + $0xe0] sm:$0xff]
    %v4482 = vld [vmem:[#allocation3 + $0xf0] sm:$0xff]
    %v4483 = vld [vmem:[#allocation3 + $0xf8] sm:$0xff]
    %v4484 = vld [vmem:[#allocation3 + $0x108] sm:$0xff]
    %v4485 = vld [vmem:[#allocation3 + $0x110] sm:$0xff]
    %v4486 = vld [vmem:[#allocation3 + $0x120] sm:$0xff]
    %v4487 = vld [vmem:[#allocation3 + $0x128] sm:$0xff]
    %v4488 = vld [vmem:[#allocation3 + $0x138] sm:$0xff]
    %v4489 = vld [vmem:[#allocation3 + $0x140] sm:$0xff]
    %v4490 = vld [vmem:[#allocation3 + $0x150] sm:$0xff]
    %v4491 = vld [vmem:[#allocation3 + $0x158] sm:$0xff]
    %v4492 = vld [vmem:[#allocation3 + $0x168] sm:$0xff]
    %v4493 = vld [vmem:[#allocation3 + $0x170] sm:$0xff]
    %v4494 = vld [vmem:[#allocation3 + $0x1b0] sm:$0xff]
    %v4495 = vld [vmem:[#allocation3 + $0x1b8] sm:$0xff]
    %v4496 = vld [vmem:[#allocation3 + $0x1c8] sm:$0xff]
    %v4497 = vld [vmem:[#allocation3 + $0x1d0] sm:$0xff]
    %v4498 = vld [vmem:[#allocation3 + $0x1e0] sm:$0xff]
    %v4499 = vld [vmem:[#allocation3 + $0x1e8] sm:$0xff]
    %v4500 = vld [vmem:[#allocation3 + $0x1f8] sm:$0xff]
    %v4501 = vld [vmem:[#allocation3 + $0x200] sm:$0xff]
    %v4502 = vld [vmem:[#allocation3 + $0x210] sm:$0xff]
    %v4503 = vld [vmem:[#allocation3 + $0x218] sm:$0xff]
    %v4504 = vld [vmem:[#allocation3 + $0x228] sm:$0xff]
    %v4505 = vld [vmem:[#allocation3 + $0x230] sm:$0xff]
    %v4506 = vld [vmem:[#allocation3 + $0x240] sm:$0xff]
    %v4507 = vld [vmem:[#allocation3 + $0x248] sm:$0xff]
    %v4508 = vld [vmem:[#allocation3 + $0x258] sm:$0xff]
    %v4509 = vld [vmem:[#allocation3 + $0x260] sm:$0xff]
    %v4510 = vld [vmem:[#allocation3 + $0x270] sm:$0xff]
    %v4511 = vld [vmem:[#allocation3 + $0x278] sm:$0xff]
    %v4512 = vld [vmem:[#allocation3 + $0x288] sm:$0xff]
    %v4513 = vld [vmem:[#allocation3 + $0x290] sm:$0xff]
    %v4514 = vld [vmem:[#allocation3 + $0x2a0] sm:$0xff]
    %v4515 = vld [vmem:[#allocation3 + $0x2a8] sm:$0xff]
    %v4516 = vld [vmem:[#allocation3 + $0x2b8] sm:$0xff]
    %v4517 = vld [vmem:[#allocation3 + $0x2c0] sm:$0xff]
    %v4518 = vld [vmem:[#allocation3 + $0x2d0] sm:$0xff]
    %v4519 = vld [vmem:[#allocation3 + $0x2d8] sm:$0xff]
    %v4520 = vld [vmem:[#allocation3 + $0x2e8] sm:$0xff]
    %v4521 = vld [vmem:[#allocation3 + $0x2f0] sm:$0xff]
    %v4522 = vld [vmem:[#allocation3 + $0x300] sm:$0xff]
    %v4523 = vld [vmem:[#allocation3 + $0x308] sm:$0xff]
    %v4524 = vld [vmem:[#allocation3 + $0x318] sm:$0xff]
    %v4525 = vld [vmem:[#allocation3 + $0x320] sm:$0xff]
    %4526 = vst [vmem:[#allocation4] sm:$0xff] %v4462
    %4527 = vst [vmem:[#allocation4 + $0x48] sm:$0xff] %v4463
    %4528 = vst [vmem:[#allocation4 + $0x90] sm:$0xff] %v4464
    %4529 = vst [vmem:[#allocation4 + $0xd8] sm:$0xff] %v4465
    %4530 = vst [vmem:[#allocation4 + $0x120] sm:$0xff] %v4466
    %4531 = vst [vmem:[#allocation4 + $0x168] sm:$0xff] %v4467
    %4532 = vst [vmem:[#allocation4 + $0x1b0] sm:$0xff] %v4468
    %4533 = vst [vmem:[#allocation4 + $0x1f8] sm:$0xff] %v4469
    %4534 = vst [vmem:[#allocation4 + $0x240] sm:$0xff] %v4470
    %4535 = vst [vmem:[#allocation4 + $0x288] sm:$0xff] %v4471
    %4536 = vst [vmem:[#allocation4 + $0x2d0] sm:$0xff] %v4472
    %4537 = vst [vmem:[#allocation4 + $0x318] sm:$0xff] %v4473
    %4538 = vst [vmem:[#allocation4 + $0x360] sm:$0xff] %v4474
    %4539 = vst [vmem:[#allocation4 + $0x3a8] sm:$0xff] %v4475
    %4540 = vst [vmem:[#allocation4 + $0x3f0] sm:$0xff] %v4476
    %4541 = vst [vmem:[#allocation4 + $0x438] sm:$0xff] %v4477
    %4542 = vst [vmem:[#allocation4 + $0x480] sm:$0xff] %v4478
    %4543 = vst [vmem:[#allocation4 + $0x4c8] sm:$0xff] %v4479
    %4544 = vst [vmem:[#allocation4 + $0x510] sm:$0xff] %v4480
    %4545 = vst [vmem:[#allocation4 + $0x558] sm:$0xff] %v4481
    %4546 = vst [vmem:[#allocation4 + $0x5a0] sm:$0xff] %v4482
    %4547 = vst [vmem:[#allocation4 + $0x5e8] sm:$0xff] %v4483
    %4548 = vst [vmem:[#allocation4 + $0x630] sm:$0xff] %v4484
    %4549 = vst [vmem:[#allocation4 + $0x678] sm:$0xff] %v4485
    %4550 = vst [vmem:[#allocation4 + $0x6c0] sm:$0xff] %v4486
    %4551 = vst [vmem:[#allocation4 + $0x708] sm:$0xff] %v4487
    %4552 = vst [vmem:[#allocation4 + $0x750] sm:$0xff] %v4488
    %4553 = vst [vmem:[#allocation4 + $0x798] sm:$0xff] %v4489
    %4554 = vst [vmem:[#allocation4 + $0x7e0] sm:$0xff] %v4490
    %4555 = vst [vmem:[#allocation4 + $0x828] sm:$0xff] %v4491
    %4556 = vst [vmem:[#allocation4 + $0x870] sm:$0xff] %v4492
    %4557 = vst [vmem:[#allocation4 + $0x8b8] sm:$0xff] %v4493
    %4558 = vst [vmem:[#allocation4 + $0x900] sm:$0xff] %v4494
    %4559 = vst [vmem:[#allocation4 + $0x948] sm:$0xff] %v4495
    %4560 = vst [vmem:[#allocation4 + $0x990] sm:$0xff] %v4496
    %4561 = vst [vmem:[#allocation4 + $0x9d8] sm:$0xff] %v4497
    %4562 = vst [vmem:[#allocation4 + $0xa20] sm:$0xff] %v4498
    %4563 = vst [vmem:[#allocation4 + $0xa68] sm:$0xff] %v4499
    %4564 = vst [vmem:[#allocation4 + $0xab0] sm:$0xff] %v4500
    %4565 = vst [vmem:[#allocation4 + $0xaf8] sm:$0xff] %v4501
    %4566 = vst [vmem:[#allocation4 + $0xb40] sm:$0xff] %v4502
    %4567 = vst [vmem:[#allocation4 + $0xb88] sm:$0xff] %v4503
    %4568 = vst [vmem:[#allocation4 + $0xbd0] sm:$0xff] %v4504
    %4569 = vst [vmem:[#allocation4 + $0xc18] sm:$0xff] %v4505
    %4570 = vst [vmem:[#allocation4 + $0xc60] sm:$0xff] %v4506
    %4571 = vst [vmem:[#allocation4 + $0xca8] sm:$0xff] %v4507
    %4572 = vst [vmem:[#allocation4 + $0xcf0] sm:$0xff] %v4508
    %4573 = vst [vmem:[#allocation4 + $0xd38] sm:$0xff] %v4509
    %4574 = vst [vmem:[#allocation4 + $0xd80] sm:$0xff] %v4510
    %4575 = vst [vmem:[#allocation4 + $0xdc8] sm:$0xff] %v4511
    %4576 = vst [vmem:[#allocation4 + $0xe10] sm:$0xff] %v4512
    %4577 = vst [vmem:[#allocation4 + $0xe58] sm:$0xff] %v4513
    %4578 = vst [vmem:[#allocation4 + $0xea0] sm:$0xff] %v4514
    %4579 = vst [vmem:[#allocation4 + $0xee8] sm:$0xff] %v4515
    %4580 = vst [vmem:[#allocation4 + $0xf30] sm:$0xff] %v4516
    %4581 = vst [vmem:[#allocation4 + $0xf78] sm:$0xff] %v4517
    %4582 = vst [vmem:[#allocation4 + $0xfc0] sm:$0xff] %v4518
    %4583 = vst [vmem:[#allocation4 + $0x1008] sm:$0xff] %v4519
    %4584 = vst [vmem:[#allocation4 + $0x1050] sm:$0xff] %v4520
    %4585 = vst [vmem:[#allocation4 + $0x1098] sm:$0xff] %v4521
    %4586 = vst [vmem:[#allocation4 + $0x10e0] sm:$0xff] %v4522
    %4587 = vst [vmem:[#allocation4 + $0x1128] sm:$0xff] %v4523
    %4588 = vst [vmem:[#allocation4 + $0x1170] sm:$0xff] %v4524
    %4589 = vst [vmem:[#allocation4 + $0x11b8] sm:$0xff] %v4525
    %v4590 = vld [vmem:[#allocation3 + $0x1] sm:$0xff]
    %v4591 = vld [vmem:[#allocation3 + $0x9] sm:$0xff]
    %v4592 = vld [vmem:[#allocation3 + $0x19] sm:$0xff]
    %v4593 = vld [vmem:[#allocation3 + $0x21] sm:$0xff]
    %v4594 = vld [vmem:[#allocation3 + $0x31] sm:$0xff]
    %v4595 = vld [vmem:[#allocation3 + $0x39] sm:$0xff]
    %v4596 = vld [vmem:[#allocation3 + $0x49] sm:$0xff]
    %v4597 = vld [vmem:[#allocation3 + $0x51] sm:$0xff]
    %v4598 = vld [vmem:[#allocation3 + $0x61] sm:$0xff]
    %v4599 = vld [vmem:[#allocation3 + $0x69] sm:$0xff]
    %v4600 = vld [vmem:[#allocation3 + $0x79] sm:$0xff]
    %v4601 = vld [vmem:[#allocation3 + $0x81] sm:$0xff]
    %v4602 = vld [vmem:[#allocation3 + $0x91] sm:$0xff]
    %v4603 = vld [vmem:[#allocation3 + $0x99] sm:$0xff]
    %v4604 = vld [vmem:[#allocation3 + $0xa9] sm:$0xff]
    %v4605 = vld [vmem:[#allocation3 + $0xb1] sm:$0xff]
    %v4606 = vld [vmem:[#allocation3 + $0xc1] sm:$0xff]
    %v4607 = vld [vmem:[#allocation3 + $0xc9] sm:$0xff]
    %v4608 = vld [vmem:[#allocation3 + $0xd9] sm:$0xff]
    %v4609 = vld [vmem:[#allocation3 + $0xe1] sm:$0xff]
    %v4610 = vld [vmem:[#allocation3 + $0xf1] sm:$0xff]
    %v4611 = vld [vmem:[#allocation3 + $0xf9] sm:$0xff]
    %v4612 = vld [vmem:[#allocation3 + $0x109] sm:$0xff]
    %v4613 = vld [vmem:[#allocation3 + $0x111] sm:$0xff]
    %v4614 = vld [vmem:[#allocation3 + $0x121] sm:$0xff]
    %v4615 = vld [vmem:[#allocation3 + $0x129] sm:$0xff]
    %v4616 = vld [vmem:[#allocation3 + $0x139] sm:$0xff]
    %v4617 = vld [vmem:[#allocation3 + $0x141] sm:$0xff]
    %v4618 = vld [vmem:[#allocation3 + $0x151] sm:$0xff]
    %v4619 = vld [vmem:[#allocation3 + $0x159] sm:$0xff]
    %v4620 = vld [vmem:[#allocation3 + $0x169] sm:$0xff]
    %v4621 = vld [vmem:[#allocation3 + $0x171] sm:$0xff]
    %v4622 = vld [vmem:[#allocation3 + $0x1b1] sm:$0xff]
    %v4623 = vld [vmem:[#allocation3 + $0x1b9] sm:$0xff]
    %v4624 = vld [vmem:[#allocation3 + $0x1c9] sm:$0xff]
    %v4625 = vld [vmem:[#allocation3 + $0x1d1] sm:$0xff]
    %v4626 = vld [vmem:[#allocation3 + $0x1e1] sm:$0xff]
    %v4627 = vld [vmem:[#allocation3 + $0x1e9] sm:$0xff]
    %v4628 = vld [vmem:[#allocation3 + $0x1f9] sm:$0xff]
    %v4629 = vld [vmem:[#allocation3 + $0x201] sm:$0xff]
    %v4630 = vld [vmem:[#allocation3 + $0x211] sm:$0xff]
    %v4631 = vld [vmem:[#allocation3 + $0x219] sm:$0xff]
    %v4632 = vld [vmem:[#allocation3 + $0x229] sm:$0xff]
    %v4633 = vld [vmem:[#allocation3 + $0x231] sm:$0xff]
    %v4634 = vld [vmem:[#allocation3 + $0x241] sm:$0xff]
    %v4635 = vld [vmem:[#allocation3 + $0x249] sm:$0xff]
    %v4636 = vld [vmem:[#allocation3 + $0x259] sm:$0xff]
    %v4637 = vld [vmem:[#allocation3 + $0x261] sm:$0xff]
    %v4638 = vld [vmem:[#allocation3 + $0x271] sm:$0xff]
    %v4639 = vld [vmem:[#allocation3 + $0x279] sm:$0xff]
    %v4640 = vld [vmem:[#allocation3 + $0x289] sm:$0xff]
    %v4641 = vld [vmem:[#allocation3 + $0x291] sm:$0xff]
    %v4642 = vld [vmem:[#allocation3 + $0x2a1] sm:$0xff]
    %v4643 = vld [vmem:[#allocation3 + $0x2a9] sm:$0xff]
    %v4644 = vld [vmem:[#allocation3 + $0x2b9] sm:$0xff]
    %v4645 = vld [vmem:[#allocation3 + $0x2c1] sm:$0xff]
    %v4646 = vld [vmem:[#allocation3 + $0x2d1] sm:$0xff]
    %v4647 = vld [vmem:[#allocation3 + $0x2d9] sm:$0xff]
    %v4648 = vld [vmem:[#allocation3 + $0x2e9] sm:$0xff]
    %v4649 = vld [vmem:[#allocation3 + $0x2f1] sm:$0xff]
    %v4650 = vld [vmem:[#allocation3 + $0x301] sm:$0xff]
    %v4651 = vld [vmem:[#allocation3 + $0x309] sm:$0xff]
    %v4652 = vld [vmem:[#allocation3 + $0x319] sm:$0xff]
    %v4653 = vld [vmem:[#allocation3 + $0x321] sm:$0xff]
    %4654 = vst [vmem:[#allocation4 + $0x8] sm:$0xff] %v4590
    %4655 = vst [vmem:[#allocation4 + $0x50] sm:$0xff] %v4591
    %4656 = vst [vmem:[#allocation4 + $0x98] sm:$0xff] %v4592
    %4657 = vst [vmem:[#allocation4 + $0xe0] sm:$0xff] %v4593
    %4658 = vst [vmem:[#allocation4 + $0x128] sm:$0xff] %v4594
    %4659 = vst [vmem:[#allocation4 + $0x170] sm:$0xff] %v4595
    %4660 = vst [vmem:[#allocation4 + $0x1b8] sm:$0xff] %v4596
    %4661 = vst [vmem:[#allocation4 + $0x200] sm:$0xff] %v4597
    %4662 = vst [vmem:[#allocation4 + $0x248] sm:$0xff] %v4598
    %4663 = vst [vmem:[#allocation4 + $0x290] sm:$0xff] %v4599
    %4664 = vst [vmem:[#allocation4 + $0x2d8] sm:$0xff] %v4600
    %4665 = vst [vmem:[#allocation4 + $0x320] sm:$0xff] %v4601
    %4666 = vst [vmem:[#allocation4 + $0x368] sm:$0xff] %v4602
    %4667 = vst [vmem:[#allocation4 + $0x3b0] sm:$0xff] %v4603
    %4668 = vst [vmem:[#allocation4 + $0x3f8] sm:$0xff] %v4604
    %4669 = vst [vmem:[#allocation4 + $0x440] sm:$0xff] %v4605
    %4670 = vst [vmem:[#allocation4 + $0x488] sm:$0xff] %v4606
    %4671 = vst [vmem:[#allocation4 + $0x4d0] sm:$0xff] %v4607
    %4672 = vst [vmem:[#allocation4 + $0x518] sm:$0xff] %v4608
    %4673 = vst [vmem:[#allocation4 + $0x560] sm:$0xff] %v4609
    %4674 = vst [vmem:[#allocation4 + $0x5a8] sm:$0xff] %v4610
    %4675 = vst [vmem:[#allocation4 + $0x5f0] sm:$0xff] %v4611
    %4676 = vst [vmem:[#allocation4 + $0x638] sm:$0xff] %v4612
    %4677 = vst [vmem:[#allocation4 + $0x680] sm:$0xff] %v4613
    %4678 = vst [vmem:[#allocation4 + $0x6c8] sm:$0xff] %v4614
    %4679 = vst [vmem:[#allocation4 + $0x710] sm:$0xff] %v4615
    %4680 = vst [vmem:[#allocation4 + $0x758] sm:$0xff] %v4616
    %4681 = vst [vmem:[#allocation4 + $0x7a0] sm:$0xff] %v4617
    %4682 = vst [vmem:[#allocation4 + $0x7e8] sm:$0xff] %v4618
    %4683 = vst [vmem:[#allocation4 + $0x830] sm:$0xff] %v4619
    %4684 = vst [vmem:[#allocation4 + $0x878] sm:$0xff] %v4620
    %4685 = vst [vmem:[#allocation4 + $0x8c0] sm:$0xff] %v4621
    %4686 = vst [vmem:[#allocation4 + $0x908] sm:$0xff] %v4622
    %4687 = vst [vmem:[#allocation4 + $0x950] sm:$0xff] %v4623
    %4688 = vst [vmem:[#allocation4 + $0x998] sm:$0xff] %v4624
    %4689 = vst [vmem:[#allocation4 + $0x9e0] sm:$0xff] %v4625
    %4690 = vst [vmem:[#allocation4 + $0xa28] sm:$0xff] %v4626
    %4691 = vst [vmem:[#allocation4 + $0xa70] sm:$0xff] %v4627
    %4692 = vst [vmem:[#allocation4 + $0xab8] sm:$0xff] %v4628
    %4693 = vst [vmem:[#allocation4 + $0xb00] sm:$0xff] %v4629
    %4694 = vst [vmem:[#allocation4 + $0xb48] sm:$0xff] %v4630
    %4695 = vst [vmem:[#allocation4 + $0xb90] sm:$0xff] %v4631
    %4696 = vst [vmem:[#allocation4 + $0xbd8] sm:$0xff] %v4632
    %4697 = vst [vmem:[#allocation4 + $0xc20] sm:$0xff] %v4633
    %4698 = vst [vmem:[#allocation4 + $0xc68] sm:$0xff] %v4634
    %4699 = vst [vmem:[#allocation4 + $0xcb0] sm:$0xff] %v4635
    %4700 = vst [vmem:[#allocation4 + $0xcf8] sm:$0xff] %v4636
    %4701 = vst [vmem:[#allocation4 + $0xd40] sm:$0xff] %v4637
    %4702 = vst [vmem:[#allocation4 + $0xd88] sm:$0xff] %v4638
    %4703 = vst [vmem:[#allocation4 + $0xdd0] sm:$0xff] %v4639
    %4704 = vst [vmem:[#allocation4 + $0xe18] sm:$0xff] %v4640
    %4705 = vst [vmem:[#allocation4 + $0xe60] sm:$0xff] %v4641
    %4706 = vst [vmem:[#allocation4 + $0xea8] sm:$0xff] %v4642
    %4707 = vst [vmem:[#allocation4 + $0xef0] sm:$0xff] %v4643
    %4708 = vst [vmem:[#allocation4 + $0xf38] sm:$0xff] %v4644
    %4709 = vst [vmem:[#allocation4 + $0xf80] sm:$0xff] %v4645
    %4710 = vst [vmem:[#allocation4 + $0xfc8] sm:$0xff] %v4646
    %4711 = vst [vmem:[#allocation4 + $0x1010] sm:$0xff] %v4647
    %4712 = vst [vmem:[#allocation4 + $0x1058] sm:$0xff] %v4648
    %4713 = vst [vmem:[#allocation4 + $0x10a0] sm:$0xff] %v4649
    %4714 = vst [vmem:[#allocation4 + $0x10e8] sm:$0xff] %v4650
    %4715 = vst [vmem:[#allocation4 + $0x1130] sm:$0xff] %v4651
    %4716 = vst [vmem:[#allocation4 + $0x1178] sm:$0xff] %v4652
    %4717 = vst [vmem:[#allocation4 + $0x11c0] sm:$0xff] %v4653
    %v4718 = vld [vmem:[#allocation3 + $0x2] sm:$0xff]
    %v4719 = vld [vmem:[#allocation3 + $0xa] sm:$0xff]
    %v4720 = vld [vmem:[#allocation3 + $0x1a] sm:$0xff]
    %v4721 = vld [vmem:[#allocation3 + $0x22] sm:$0xff]
    %v4722 = vld [vmem:[#allocation3 + $0x32] sm:$0xff]
    %v4723 = vld [vmem:[#allocation3 + $0x3a] sm:$0xff]
    %v4724 = vld [vmem:[#allocation3 + $0x4a] sm:$0xff]
    %v4725 = vld [vmem:[#allocation3 + $0x52] sm:$0xff]
    %v4726 = vld [vmem:[#allocation3 + $0x62] sm:$0xff]
    %v4727 = vld [vmem:[#allocation3 + $0x6a] sm:$0xff]
    %v4728 = vld [vmem:[#allocation3 + $0x7a] sm:$0xff]
    %v4729 = vld [vmem:[#allocation3 + $0x82] sm:$0xff]
    %v4730 = vld [vmem:[#allocation3 + $0x92] sm:$0xff]
    %v4731 = vld [vmem:[#allocation3 + $0x9a] sm:$0xff]
    %v4732 = vld [vmem:[#allocation3 + $0xaa] sm:$0xff]
    %v4733 = vld [vmem:[#allocation3 + $0xb2] sm:$0xff]
    %v4734 = vld [vmem:[#allocation3 + $0xc2] sm:$0xff]
    %v4735 = vld [vmem:[#allocation3 + $0xca] sm:$0xff]
    %v4736 = vld [vmem:[#allocation3 + $0xda] sm:$0xff]
    %v4737 = vld [vmem:[#allocation3 + $0xe2] sm:$0xff]
    %v4738 = vld [vmem:[#allocation3 + $0xf2] sm:$0xff]
    %v4739 = vld [vmem:[#allocation3 + $0xfa] sm:$0xff]
    %v4740 = vld [vmem:[#allocation3 + $0x10a] sm:$0xff]
    %v4741 = vld [vmem:[#allocation3 + $0x112] sm:$0xff]
    %v4742 = vld [vmem:[#allocation3 + $0x122] sm:$0xff]
    %v4743 = vld [vmem:[#allocation3 + $0x12a] sm:$0xff]
    %v4744 = vld [vmem:[#allocation3 + $0x13a] sm:$0xff]
    %v4745 = vld [vmem:[#allocation3 + $0x142] sm:$0xff]
    %v4746 = vld [vmem:[#allocation3 + $0x152] sm:$0xff]
    %v4747 = vld [vmem:[#allocation3 + $0x15a] sm:$0xff]
    %v4748 = vld [vmem:[#allocation3 + $0x16a] sm:$0xff]
    %v4749 = vld [vmem:[#allocation3 + $0x172] sm:$0xff]
    %v4750 = vld [vmem:[#allocation3 + $0x1b2] sm:$0xff]
    %v4751 = vld [vmem:[#allocation3 + $0x1ba] sm:$0xff]
    %v4752 = vld [vmem:[#allocation3 + $0x1ca] sm:$0xff]
    %v4753 = vld [vmem:[#allocation3 + $0x1d2] sm:$0xff]
    %v4754 = vld [vmem:[#allocation3 + $0x1e2] sm:$0xff]
    %v4755 = vld [vmem:[#allocation3 + $0x1ea] sm:$0xff]
    %v4756 = vld [vmem:[#allocation3 + $0x1fa] sm:$0xff]
    %v4757 = vld [vmem:[#allocation3 + $0x202] sm:$0xff]
    %v4758 = vld [vmem:[#allocation3 + $0x212] sm:$0xff]
    %v4759 = vld [vmem:[#allocation3 + $0x21a] sm:$0xff]
    %v4760 = vld [vmem:[#allocation3 + $0x22a] sm:$0xff]
    %v4761 = vld [vmem:[#allocation3 + $0x232] sm:$0xff]
    %v4762 = vld [vmem:[#allocation3 + $0x242] sm:$0xff]
    %v4763 = vld [vmem:[#allocation3 + $0x24a] sm:$0xff]
    %v4764 = vld [vmem:[#allocation3 + $0x25a] sm:$0xff]
    %v4765 = vld [vmem:[#allocation3 + $0x262] sm:$0xff]
    %v4766 = vld [vmem:[#allocation3 + $0x272] sm:$0xff]
    %v4767 = vld [vmem:[#allocation3 + $0x27a] sm:$0xff]
    %v4768 = vld [vmem:[#allocation3 + $0x28a] sm:$0xff]
    %v4769 = vld [vmem:[#allocation3 + $0x292] sm:$0xff]
    %v4770 = vld [vmem:[#allocation3 + $0x2a2] sm:$0xff]
    %v4771 = vld [vmem:[#allocation3 + $0x2aa] sm:$0xff]
    %v4772 = vld [vmem:[#allocation3 + $0x2ba] sm:$0xff]
    %v4773 = vld [vmem:[#allocation3 + $0x2c2] sm:$0xff]
    %v4774 = vld [vmem:[#allocation3 + $0x2d2] sm:$0xff]
    %v4775 = vld [vmem:[#allocation3 + $0x2da] sm:$0xff]
    %v4776 = vld [vmem:[#allocation3 + $0x2ea] sm:$0xff]
    %v4777 = vld [vmem:[#allocation3 + $0x2f2] sm:$0xff]
    %v4778 = vld [vmem:[#allocation3 + $0x302] sm:$0xff]
    %v4779 = vld [vmem:[#allocation3 + $0x30a] sm:$0xff]
    %v4780 = vld [vmem:[#allocation3 + $0x31a] sm:$0xff]
    %v4781 = vld [vmem:[#allocation3 + $0x322] sm:$0xff]
    %4782 = vst [vmem:[#allocation4 + $0x10] sm:$0xff] %v4718
    %4783 = vst [vmem:[#allocation4 + $0x58] sm:$0xff] %v4719
    %4784 = vst [vmem:[#allocation4 + $0xa0] sm:$0xff] %v4720
    %4785 = vst [vmem:[#allocation4 + $0xe8] sm:$0xff] %v4721
    %4786 = vst [vmem:[#allocation4 + $0x130] sm:$0xff] %v4722
    %4787 = vst [vmem:[#allocation4 + $0x178] sm:$0xff] %v4723
    %4788 = vst [vmem:[#allocation4 + $0x1c0] sm:$0xff] %v4724
    %4789 = vst [vmem:[#allocation4 + $0x208] sm:$0xff] %v4725
    %4790 = vst [vmem:[#allocation4 + $0x250] sm:$0xff] %v4726
    %4791 = vst [vmem:[#allocation4 + $0x298] sm:$0xff] %v4727
    %4792 = vst [vmem:[#allocation4 + $0x2e0] sm:$0xff] %v4728
    %4793 = vst [vmem:[#allocation4 + $0x328] sm:$0xff] %v4729
    %4794 = vst [vmem:[#allocation4 + $0x370] sm:$0xff] %v4730
    %4795 = vst [vmem:[#allocation4 + $0x3b8] sm:$0xff] %v4731
    %4796 = vst [vmem:[#allocation4 + $0x400] sm:$0xff] %v4732
    %4797 = vst [vmem:[#allocation4 + $0x448] sm:$0xff] %v4733
    %4798 = vst [vmem:[#allocation4 + $0x490] sm:$0xff] %v4734
    %4799 = vst [vmem:[#allocation4 + $0x4d8] sm:$0xff] %v4735
    %4800 = vst [vmem:[#allocation4 + $0x520] sm:$0xff] %v4736
    %4801 = vst [vmem:[#allocation4 + $0x568] sm:$0xff] %v4737
    %4802 = vst [vmem:[#allocation4 + $0x5b0] sm:$0xff] %v4738
    %4803 = vst [vmem:[#allocation4 + $0x5f8] sm:$0xff] %v4739
    %4804 = vst [vmem:[#allocation4 + $0x640] sm:$0xff] %v4740
    %4805 = vst [vmem:[#allocation4 + $0x688] sm:$0xff] %v4741
    %4806 = vst [vmem:[#allocation4 + $0x6d0] sm:$0xff] %v4742
    %4807 = vst [vmem:[#allocation4 + $0x718] sm:$0xff] %v4743
    %4808 = vst [vmem:[#allocation4 + $0x760] sm:$0xff] %v4744
    %4809 = vst [vmem:[#allocation4 + $0x7a8] sm:$0xff] %v4745
    %4810 = vst [vmem:[#allocation4 + $0x7f0] sm:$0xff] %v4746
    %4811 = vst [vmem:[#allocation4 + $0x838] sm:$0xff] %v4747
    %4812 = vst [vmem:[#allocation4 + $0x880] sm:$0xff] %v4748
    %4813 = vst [vmem:[#allocation4 + $0x8c8] sm:$0xff] %v4749
    %4814 = vst [vmem:[#allocation4 + $0x910] sm:$0xff] %v4750
    %4815 = vst [vmem:[#allocation4 + $0x958] sm:$0xff] %v4751
    %4816 = vst [vmem:[#allocation4 + $0x9a0] sm:$0xff] %v4752
    %4817 = vst [vmem:[#allocation4 + $0x9e8] sm:$0xff] %v4753
    %4818 = vst [vmem:[#allocation4 + $0xa30] sm:$0xff] %v4754
    %4819 = vst [vmem:[#allocation4 + $0xa78] sm:$0xff] %v4755
    %4820 = vst [vmem:[#allocation4 + $0xac0] sm:$0xff] %v4756
    %4821 = vst [vmem:[#allocation4 + $0xb08] sm:$0xff] %v4757
    %4822 = vst [vmem:[#allocation4 + $0xb50] sm:$0xff] %v4758
    %4823 = vst [vmem:[#allocation4 + $0xb98] sm:$0xff] %v4759
    %4824 = vst [vmem:[#allocation4 + $0xbe0] sm:$0xff] %v4760
    %4825 = vst [vmem:[#allocation4 + $0xc28] sm:$0xff] %v4761
    %4826 = vst [vmem:[#allocation4 + $0xc70] sm:$0xff] %v4762
    %4827 = vst [vmem:[#allocation4 + $0xcb8] sm:$0xff] %v4763
    %4828 = vst [vmem:[#allocation4 + $0xd00] sm:$0xff] %v4764
    %4829 = vst [vmem:[#allocation4 + $0xd48] sm:$0xff] %v4765
    %4830 = vst [vmem:[#allocation4 + $0xd90] sm:$0xff] %v4766
    %4831 = vst [vmem:[#allocation4 + $0xdd8] sm:$0xff] %v4767
    %4832 = vst [vmem:[#allocation4 + $0xe20] sm:$0xff] %v4768
    %4833 = vst [vmem:[#allocation4 + $0xe68] sm:$0xff] %v4769
    %4834 = vst [vmem:[#allocation4 + $0xeb0] sm:$0xff] %v4770
    %4835 = vst [vmem:[#allocation4 + $0xef8] sm:$0xff] %v4771
    %4836 = vst [vmem:[#allocation4 + $0xf40] sm:$0xff] %v4772
    %4837 = vst [vmem:[#allocation4 + $0xf88] sm:$0xff] %v4773
    %4838 = vst [vmem:[#allocation4 + $0xfd0] sm:$0xff] %v4774
    %4839 = vst [vmem:[#allocation4 + $0x1018] sm:$0xff] %v4775
    %4840 = vst [vmem:[#allocation4 + $0x1060] sm:$0xff] %v4776
    %4841 = vst [vmem:[#allocation4 + $0x10a8] sm:$0xff] %v4777
    %4842 = vst [vmem:[#allocation4 + $0x10f0] sm:$0xff] %v4778
    %4843 = vst [vmem:[#allocation4 + $0x1138] sm:$0xff] %v4779
    %4844 = vst [vmem:[#allocation4 + $0x1180] sm:$0xff] %v4780
    %4845 = vst [vmem:[#allocation4 + $0x11c8] sm:$0xff] %v4781
    %v4846 = vld [vmem:[%s4333] sm:$0xff]
    %v4847 = vld [vmem:[%s4333 + $0x8] sm:$0xff]
    %v4848 = vld [vmem:[%s4333 + $0x18] sm:$0xff]
    %v4849 = vld [vmem:[%s4333 + $0x20] sm:$0xff]
    %v4850 = vld [vmem:[%s4333 + $0x30] sm:$0xff]
    %v4851 = vld [vmem:[%s4333 + $0x38] sm:$0xff]
    %v4852 = vld [vmem:[%s4333 + $0x48] sm:$0xff]
    %v4853 = vld [vmem:[%s4333 + $0x50] sm:$0xff]
    %v4854 = vld [vmem:[%s4333 + $0x60] sm:$0xff]
    %v4855 = vld [vmem:[%s4333 + $0x68] sm:$0xff]
    %v4856 = vld [vmem:[%s4333 + $0x78] sm:$0xff]
    %v4857 = vld [vmem:[%s4333 + $0x80] sm:$0xff]
    %v4858 = vld [vmem:[%s4333 + $0x90] sm:$0xff]
    %v4859 = vld [vmem:[%s4333 + $0x98] sm:$0xff]
    %v4860 = vld [vmem:[%s4333 + $0xa8] sm:$0xff]
    %v4861 = vld [vmem:[%s4333 + $0xb0] sm:$0xff]
    %v4862 = vld [vmem:[%s4333 + $0xc0] sm:$0xff]
    %v4863 = vld [vmem:[%s4333 + $0xc8] sm:$0xff]
    %v4864 = vld [vmem:[%s4333 + $0xd8] sm:$0xff]
    %v4865 = vld [vmem:[%s4333 + $0xe0] sm:$0xff]
    %v4866 = vld [vmem:[%s4333 + $0xf0] sm:$0xff]
    %v4867 = vld [vmem:[%s4333 + $0xf8] sm:$0xff]
    %v4868 = vld [vmem:[%s4333 + $0x108] sm:$0xff]
    %v4869 = vld [vmem:[%s4333 + $0x110] sm:$0xff]
    %v4870 = vld [vmem:[%s4333 + $0x120] sm:$0xff]
    %v4871 = vld [vmem:[%s4333 + $0x128] sm:$0xff]
    %v4872 = vld [vmem:[%s4333 + $0x138] sm:$0xff]
    %v4873 = vld [vmem:[%s4333 + $0x140] sm:$0xff]
    %v4874 = vld [vmem:[%s4333 + $0x150] sm:$0xff]
    %v4875 = vld [vmem:[%s4333 + $0x158] sm:$0xff]
    %v4876 = vld [vmem:[%s4333 + $0x168] sm:$0xff]
    %v4877 = vld [vmem:[%s4333 + $0x170] sm:$0xff]
    %v4878 = vld [vmem:[%s4333 + $0x1b0] sm:$0xff]
    %v4879 = vld [vmem:[%s4333 + $0x1b8] sm:$0xff]
    %v4880 = vld [vmem:[%s4333 + $0x1c8] sm:$0xff]
    %v4881 = vld [vmem:[%s4333 + $0x1d0] sm:$0xff]
    %v4882 = vld [vmem:[%s4333 + $0x1e0] sm:$0xff]
    %v4883 = vld [vmem:[%s4333 + $0x1e8] sm:$0xff]
    %v4884 = vld [vmem:[%s4333 + $0x1f8] sm:$0xff]
    %v4885 = vld [vmem:[%s4333 + $0x200] sm:$0xff]
    %v4886 = vld [vmem:[%s4333 + $0x210] sm:$0xff]
    %v4887 = vld [vmem:[%s4333 + $0x218] sm:$0xff]
    %v4888 = vld [vmem:[%s4333 + $0x228] sm:$0xff]
    %v4889 = vld [vmem:[%s4333 + $0x230] sm:$0xff]
    %v4890 = vld [vmem:[%s4333 + $0x240] sm:$0xff]
    %v4891 = vld [vmem:[%s4333 + $0x248] sm:$0xff]
    %v4892 = vld [vmem:[%s4333 + $0x258] sm:$0xff]
    %v4893 = vld [vmem:[%s4333 + $0x260] sm:$0xff]
    %v4894 = vld [vmem:[%s4333 + $0x270] sm:$0xff]
    %v4895 = vld [vmem:[%s4333 + $0x278] sm:$0xff]
    %v4896 = vld [vmem:[%s4333 + $0x288] sm:$0xff]
    %v4897 = vld [vmem:[%s4333 + $0x290] sm:$0xff]
    %v4898 = vld [vmem:[%s4333 + $0x2a0] sm:$0xff]
    %v4899 = vld [vmem:[%s4333 + $0x2a8] sm:$0xff]
    %v4900 = vld [vmem:[%s4333 + $0x2b8] sm:$0xff]
    %v4901 = vld [vmem:[%s4333 + $0x2c0] sm:$0xff]
    %v4902 = vld [vmem:[%s4333 + $0x2d0] sm:$0xff]
    %v4903 = vld [vmem:[%s4333 + $0x2d8] sm:$0xff]
    %v4904 = vld [vmem:[%s4333 + $0x2e8] sm:$0xff]
    %v4905 = vld [vmem:[%s4333 + $0x2f0] sm:$0xff]
    %v4906 = vld [vmem:[%s4333 + $0x300] sm:$0xff]
    %v4907 = vld [vmem:[%s4333 + $0x308] sm:$0xff]
    %v4908 = vld [vmem:[%s4333 + $0x318] sm:$0xff]
    %v4909 = vld [vmem:[%s4333 + $0x320] sm:$0xff]
    %4910 = vst [vmem:[#allocation4 + $0x18] sm:$0xff] %v4846
    %4911 = vst [vmem:[#allocation4 + $0x60] sm:$0xff] %v4847
    %4912 = vst [vmem:[#allocation4 + $0xa8] sm:$0xff] %v4848
    %4913 = vst [vmem:[#allocation4 + $0xf0] sm:$0xff] %v4849
    %4914 = vst [vmem:[#allocation4 + $0x138] sm:$0xff] %v4850
    %4915 = vst [vmem:[#allocation4 + $0x180] sm:$0xff] %v4851
    %4916 = vst [vmem:[#allocation4 + $0x1c8] sm:$0xff] %v4852
    %4917 = vst [vmem:[#allocation4 + $0x210] sm:$0xff] %v4853
    %4918 = vst [vmem:[#allocation4 + $0x258] sm:$0xff] %v4854
    %4919 = vst [vmem:[#allocation4 + $0x2a0] sm:$0xff] %v4855
    %4920 = vst [vmem:[#allocation4 + $0x2e8] sm:$0xff] %v4856
    %4921 = vst [vmem:[#allocation4 + $0x330] sm:$0xff] %v4857
    %4922 = vst [vmem:[#allocation4 + $0x378] sm:$0xff] %v4858
    %4923 = vst [vmem:[#allocation4 + $0x3c0] sm:$0xff] %v4859
    %4924 = vst [vmem:[#allocation4 + $0x408] sm:$0xff] %v4860
    %4925 = vst [vmem:[#allocation4 + $0x450] sm:$0xff] %v4861
    %4926 = vst [vmem:[#allocation4 + $0x498] sm:$0xff] %v4862
    %4927 = vst [vmem:[#allocation4 + $0x4e0] sm:$0xff] %v4863
    %4928 = vst [vmem:[#allocation4 + $0x528] sm:$0xff] %v4864
    %4929 = vst [vmem:[#allocation4 + $0x570] sm:$0xff] %v4865
    %4930 = vst [vmem:[#allocation4 + $0x5b8] sm:$0xff] %v4866
    %4931 = vst [vmem:[#allocation4 + $0x600] sm:$0xff] %v4867
    %4932 = vst [vmem:[#allocation4 + $0x648] sm:$0xff] %v4868
    %4933 = vst [vmem:[#allocation4 + $0x690] sm:$0xff] %v4869
    %4934 = vst [vmem:[#allocation4 + $0x6d8] sm:$0xff] %v4870
    %4935 = vst [vmem:[#allocation4 + $0x720] sm:$0xff] %v4871
    %4936 = vst [vmem:[#allocation4 + $0x768] sm:$0xff] %v4872
    %4937 = vst [vmem:[#allocation4 + $0x7b0] sm:$0xff] %v4873
    %4938 = vst [vmem:[#allocation4 + $0x7f8] sm:$0xff] %v4874
    %4939 = vst [vmem:[#allocation4 + $0x840] sm:$0xff] %v4875
    %4940 = vst [vmem:[#allocation4 + $0x888] sm:$0xff] %v4876
    %4941 = vst [vmem:[#allocation4 + $0x8d0] sm:$0xff] %v4877
    %4942 = vst [vmem:[#allocation4 + $0x918] sm:$0xff] %v4878
    %4943 = vst [vmem:[#allocation4 + $0x960] sm:$0xff] %v4879
    %4944 = vst [vmem:[#allocation4 + $0x9a8] sm:$0xff] %v4880
    %4945 = vst [vmem:[#allocation4 + $0x9f0] sm:$0xff] %v4881
    %4946 = vst [vmem:[#allocation4 + $0xa38] sm:$0xff] %v4882
    %4947 = vst [vmem:[#allocation4 + $0xa80] sm:$0xff] %v4883
    %4948 = vst [vmem:[#allocation4 + $0xac8] sm:$0xff] %v4884
    %4949 = vst [vmem:[#allocation4 + $0xb10] sm:$0xff] %v4885
    %4950 = vst [vmem:[#allocation4 + $0xb58] sm:$0xff] %v4886
    %4951 = vst [vmem:[#allocation4 + $0xba0] sm:$0xff] %v4887
    %4952 = vst [vmem:[#allocation4 + $0xbe8] sm:$0xff] %v4888
    %4953 = vst [vmem:[#allocation4 + $0xc30] sm:$0xff] %v4889
    %4954 = vst [vmem:[#allocation4 + $0xc78] sm:$0xff] %v4890
    %4955 = vst [vmem:[#allocation4 + $0xcc0] sm:$0xff] %v4891
    %4956 = vst [vmem:[#allocation4 + $0xd08] sm:$0xff] %v4892
    %4957 = vst [vmem:[#allocation4 + $0xd50] sm:$0xff] %v4893
    %4958 = vst [vmem:[#allocation4 + $0xd98] sm:$0xff] %v4894
    %4959 = vst [vmem:[#allocation4 + $0xde0] sm:$0xff] %v4895
    %4960 = vst [vmem:[#allocation4 + $0xe28] sm:$0xff] %v4896
    %4961 = vst [vmem:[#allocation4 + $0xe70] sm:$0xff] %v4897
    %4962 = vst [vmem:[#allocation4 + $0xeb8] sm:$0xff] %v4898
    %4963 = vst [vmem:[#allocation4 + $0xf00] sm:$0xff] %v4899
    %4964 = vst [vmem:[#allocation4 + $0xf48] sm:$0xff] %v4900
    %4965 = vst [vmem:[#allocation4 + $0xf90] sm:$0xff] %v4901
    %4966 = vst [vmem:[#allocation4 + $0xfd8] sm:$0xff] %v4902
    %4967 = vst [vmem:[#allocation4 + $0x1020] sm:$0xff] %v4903
    %4968 = vst [vmem:[#allocation4 + $0x1068] sm:$0xff] %v4904
    %4969 = vst [vmem:[#allocation4 + $0x10b0] sm:$0xff] %v4905
    %4970 = vst [vmem:[#allocation4 + $0x10f8] sm:$0xff] %v4906
    %4971 = vst [vmem:[#allocation4 + $0x1140] sm:$0xff] %v4907
    %4972 = vst [vmem:[#allocation4 + $0x1188] sm:$0xff] %v4908
    %4973 = vst [vmem:[#allocation4 + $0x11d0] sm:$0xff] %v4909
    %v4974 = vld [vmem:[%s4333 + $0x1] sm:$0xff]
    %v4975 = vld [vmem:[%s4333 + $0x9] sm:$0xff]
    %v4976 = vld [vmem:[%s4333 + $0x19] sm:$0xff]
    %v4977 = vld [vmem:[%s4333 + $0x21] sm:$0xff]
    %v4978 = vld [vmem:[%s4333 + $0x31] sm:$0xff]
    %v4979 = vld [vmem:[%s4333 + $0x39] sm:$0xff]
    %v4980 = vld [vmem:[%s4333 + $0x49] sm:$0xff]
    %v4981 = vld [vmem:[%s4333 + $0x51] sm:$0xff]
    %v4982 = vld [vmem:[%s4333 + $0x61] sm:$0xff]
    %v4983 = vld [vmem:[%s4333 + $0x69] sm:$0xff]
    %v4984 = vld [vmem:[%s4333 + $0x79] sm:$0xff]
    %v4985 = vld [vmem:[%s4333 + $0x81] sm:$0xff]
    %v4986 = vld [vmem:[%s4333 + $0x91] sm:$0xff]
    %v4987 = vld [vmem:[%s4333 + $0x99] sm:$0xff]
    %v4988 = vld [vmem:[%s4333 + $0xa9] sm:$0xff]
    %v4989 = vld [vmem:[%s4333 + $0xb1] sm:$0xff]
    %v4990 = vld [vmem:[%s4333 + $0xc1] sm:$0xff]
    %v4991 = vld [vmem:[%s4333 + $0xc9] sm:$0xff]
    %v4992 = vld [vmem:[%s4333 + $0xd9] sm:$0xff]
    %v4993 = vld [vmem:[%s4333 + $0xe1] sm:$0xff]
    %v4994 = vld [vmem:[%s4333 + $0xf1] sm:$0xff]
    %v4995 = vld [vmem:[%s4333 + $0xf9] sm:$0xff]
    %v4996 = vld [vmem:[%s4333 + $0x109] sm:$0xff]
    %v4997 = vld [vmem:[%s4333 + $0x111] sm:$0xff]
    %v4998 = vld [vmem:[%s4333 + $0x121] sm:$0xff]
    %v4999 = vld [vmem:[%s4333 + $0x129] sm:$0xff]
    %v5000 = vld [vmem:[%s4333 + $0x139] sm:$0xff]
    %v5001 = vld [vmem:[%s4333 + $0x141] sm:$0xff]
    %v5002 = vld [vmem:[%s4333 + $0x151] sm:$0xff]
    %v5003 = vld [vmem:[%s4333 + $0x159] sm:$0xff]
    %v5004 = vld [vmem:[%s4333 + $0x169] sm:$0xff]
    %v5005 = vld [vmem:[%s4333 + $0x171] sm:$0xff]
    %v5006 = vld [vmem:[%s4333 + $0x1b1] sm:$0xff]
    %v5007 = vld [vmem:[%s4333 + $0x1b9] sm:$0xff]
    %v5008 = vld [vmem:[%s4333 + $0x1c9] sm:$0xff]
    %v5009 = vld [vmem:[%s4333 + $0x1d1] sm:$0xff]
    %v5010 = vld [vmem:[%s4333 + $0x1e1] sm:$0xff]
    %v5011 = vld [vmem:[%s4333 + $0x1e9] sm:$0xff]
    %v5012 = vld [vmem:[%s4333 + $0x1f9] sm:$0xff]
    %v5013 = vld [vmem:[%s4333 + $0x201] sm:$0xff]
    %v5014 = vld [vmem:[%s4333 + $0x211] sm:$0xff]
    %v5015 = vld [vmem:[%s4333 + $0x219] sm:$0xff]
    %v5016 = vld [vmem:[%s4333 + $0x229] sm:$0xff]
    %v5017 = vld [vmem:[%s4333 + $0x231] sm:$0xff]
    %v5018 = vld [vmem:[%s4333 + $0x241] sm:$0xff]
    %v5019 = vld [vmem:[%s4333 + $0x249] sm:$0xff]
    %v5020 = vld [vmem:[%s4333 + $0x259] sm:$0xff]
    %v5021 = vld [vmem:[%s4333 + $0x261] sm:$0xff]
    %v5022 = vld [vmem:[%s4333 + $0x271] sm:$0xff]
    %v5023 = vld [vmem:[%s4333 + $0x279] sm:$0xff]
    %v5024 = vld [vmem:[%s4333 + $0x289] sm:$0xff]
    %v5025 = vld [vmem:[%s4333 + $0x291] sm:$0xff]
    %v5026 = vld [vmem:[%s4333 + $0x2a1] sm:$0xff]
    %v5027 = vld [vmem:[%s4333 + $0x2a9] sm:$0xff]
    %v5028 = vld [vmem:[%s4333 + $0x2b9] sm:$0xff]
    %v5029 = vld [vmem:[%s4333 + $0x2c1] sm:$0xff]
    %v5030 = vld [vmem:[%s4333 + $0x2d1] sm:$0xff]
    %v5031 = vld [vmem:[%s4333 + $0x2d9] sm:$0xff]
    %v5032 = vld [vmem:[%s4333 + $0x2e9] sm:$0xff]
    %v5033 = vld [vmem:[%s4333 + $0x2f1] sm:$0xff]
    %v5034 = vld [vmem:[%s4333 + $0x301] sm:$0xff]
    %v5035 = vld [vmem:[%s4333 + $0x309] sm:$0xff]
    %v5036 = vld [vmem:[%s4333 + $0x319] sm:$0xff]
    %v5037 = vld [vmem:[%s4333 + $0x321] sm:$0xff]
    %5038 = vst [vmem:[#allocation4 + $0x20] sm:$0xff] %v4974
    %5039 = vst [vmem:[#allocation4 + $0x68] sm:$0xff] %v4975
    %5040 = vst [vmem:[#allocation4 + $0xb0] sm:$0xff] %v4976
    %5041 = vst [vmem:[#allocation4 + $0xf8] sm:$0xff] %v4977
    %5042 = vst [vmem:[#allocation4 + $0x140] sm:$0xff] %v4978
    %5043 = vst [vmem:[#allocation4 + $0x188] sm:$0xff] %v4979
    %5044 = vst [vmem:[#allocation4 + $0x1d0] sm:$0xff] %v4980
    %5045 = vst [vmem:[#allocation4 + $0x218] sm:$0xff] %v4981
    %5046 = vst [vmem:[#allocation4 + $0x260] sm:$0xff] %v4982
    %5047 = vst [vmem:[#allocation4 + $0x2a8] sm:$0xff] %v4983
    %5048 = vst [vmem:[#allocation4 + $0x2f0] sm:$0xff] %v4984
    %5049 = vst [vmem:[#allocation4 + $0x338] sm:$0xff] %v4985
    %5050 = vst [vmem:[#allocation4 + $0x380] sm:$0xff] %v4986
    %5051 = vst [vmem:[#allocation4 + $0x3c8] sm:$0xff] %v4987
    %5052 = vst [vmem:[#allocation4 + $0x410] sm:$0xff] %v4988
    %5053 = vst [vmem:[#allocation4 + $0x458] sm:$0xff] %v4989
    %5054 = vst [vmem:[#allocation4 + $0x4a0] sm:$0xff] %v4990
    %5055 = vst [vmem:[#allocation4 + $0x4e8] sm:$0xff] %v4991
    %5056 = vst [vmem:[#allocation4 + $0x530] sm:$0xff] %v4992
    %5057 = vst [vmem:[#allocation4 + $0x578] sm:$0xff] %v4993
    %5058 = vst [vmem:[#allocation4 + $0x5c0] sm:$0xff] %v4994
    %5059 = vst [vmem:[#allocation4 + $0x608] sm:$0xff] %v4995
    %5060 = vst [vmem:[#allocation4 + $0x650] sm:$0xff] %v4996
    %5061 = vst [vmem:[#allocation4 + $0x698] sm:$0xff] %v4997
    %5062 = vst [vmem:[#allocation4 + $0x6e0] sm:$0xff] %v4998
    %5063 = vst [vmem:[#allocation4 + $0x728] sm:$0xff] %v4999
    %5064 = vst [vmem:[#allocation4 + $0x770] sm:$0xff] %v5000
    %5065 = vst [vmem:[#allocation4 + $0x7b8] sm:$0xff] %v5001
    %5066 = vst [vmem:[#allocation4 + $0x800] sm:$0xff] %v5002
    %5067 = vst [vmem:[#allocation4 + $0x848] sm:$0xff] %v5003
    %5068 = vst [vmem:[#allocation4 + $0x890] sm:$0xff] %v5004
    %5069 = vst [vmem:[#allocation4 + $0x8d8] sm:$0xff] %v5005
    %5070 = vst [vmem:[#allocation4 + $0x920] sm:$0xff] %v5006
    %5071 = vst [vmem:[#allocation4 + $0x968] sm:$0xff] %v5007
    %5072 = vst [vmem:[#allocation4 + $0x9b0] sm:$0xff] %v5008
    %5073 = vst [vmem:[#allocation4 + $0x9f8] sm:$0xff] %v5009
    %5074 = vst [vmem:[#allocation4 + $0xa40] sm:$0xff] %v5010
    %5075 = vst [vmem:[#allocation4 + $0xa88] sm:$0xff] %v5011
    %5076 = vst [vmem:[#allocation4 + $0xad0] sm:$0xff] %v5012
    %5077 = vst [vmem:[#allocation4 + $0xb18] sm:$0xff] %v5013
    %5078 = vst [vmem:[#allocation4 + $0xb60] sm:$0xff] %v5014
    %5079 = vst [vmem:[#allocation4 + $0xba8] sm:$0xff] %v5015
    %5080 = vst [vmem:[#allocation4 + $0xbf0] sm:$0xff] %v5016
    %5081 = vst [vmem:[#allocation4 + $0xc38] sm:$0xff] %v5017
    %5082 = vst [vmem:[#allocation4 + $0xc80] sm:$0xff] %v5018
    %5083 = vst [vmem:[#allocation4 + $0xcc8] sm:$0xff] %v5019
    %5084 = vst [vmem:[#allocation4 + $0xd10] sm:$0xff] %v5020
    %5085 = vst [vmem:[#allocation4 + $0xd58] sm:$0xff] %v5021
    %5086 = vst [vmem:[#allocation4 + $0xda0] sm:$0xff] %v5022
    %5087 = vst [vmem:[#allocation4 + $0xde8] sm:$0xff] %v5023
    %5088 = vst [vmem:[#allocation4 + $0xe30] sm:$0xff] %v5024
    %5089 = vst [vmem:[#allocation4 + $0xe78] sm:$0xff] %v5025
    %5090 = vst [vmem:[#allocation4 + $0xec0] sm:$0xff] %v5026
    %5091 = vst [vmem:[#allocation4 + $0xf08] sm:$0xff] %v5027
    %5092 = vst [vmem:[#allocation4 + $0xf50] sm:$0xff] %v5028
    %5093 = vst [vmem:[#allocation4 + $0xf98] sm:$0xff] %v5029
    %5094 = vst [vmem:[#allocation4 + $0xfe0] sm:$0xff] %v5030
    %5095 = vst [vmem:[#allocation4 + $0x1028] sm:$0xff] %v5031
    %5096 = vst [vmem:[#allocation4 + $0x1070] sm:$0xff] %v5032
    %5097 = vst [vmem:[#allocation4 + $0x10b8] sm:$0xff] %v5033
    %5098 = vst [vmem:[#allocation4 + $0x1100] sm:$0xff] %v5034
    %5099 = vst [vmem:[#allocation4 + $0x1148] sm:$0xff] %v5035
    %5100 = vst [vmem:[#allocation4 + $0x1190] sm:$0xff] %v5036
    %5101 = vst [vmem:[#allocation4 + $0x11d8] sm:$0xff] %v5037
    %v5102 = vld [vmem:[%s4333 + $0x2] sm:$0xff]
    %v5103 = vld [vmem:[%s4333 + $0xa] sm:$0xff]
    %v5104 = vld [vmem:[%s4333 + $0x1a] sm:$0xff]
    %v5105 = vld [vmem:[%s4333 + $0x22] sm:$0xff]
    %v5106 = vld [vmem:[%s4333 + $0x32] sm:$0xff]
    %v5107 = vld [vmem:[%s4333 + $0x3a] sm:$0xff]
    %v5108 = vld [vmem:[%s4333 + $0x4a] sm:$0xff]
    %v5109 = vld [vmem:[%s4333 + $0x52] sm:$0xff]
    %v5110 = vld [vmem:[%s4333 + $0x62] sm:$0xff]
    %v5111 = vld [vmem:[%s4333 + $0x6a] sm:$0xff]
    %v5112 = vld [vmem:[%s4333 + $0x7a] sm:$0xff]
    %v5113 = vld [vmem:[%s4333 + $0x82] sm:$0xff]
    %v5114 = vld [vmem:[%s4333 + $0x92] sm:$0xff]
    %v5115 = vld [vmem:[%s4333 + $0x9a] sm:$0xff]
    %v5116 = vld [vmem:[%s4333 + $0xaa] sm:$0xff]
    %v5117 = vld [vmem:[%s4333 + $0xb2] sm:$0xff]
    %v5118 = vld [vmem:[%s4333 + $0xc2] sm:$0xff]
    %v5119 = vld [vmem:[%s4333 + $0xca] sm:$0xff]
    %v5120 = vld [vmem:[%s4333 + $0xda] sm:$0xff]
    %v5121 = vld [vmem:[%s4333 + $0xe2] sm:$0xff]
    %v5122 = vld [vmem:[%s4333 + $0xf2] sm:$0xff]
    %v5123 = vld [vmem:[%s4333 + $0xfa] sm:$0xff]
    %v5124 = vld [vmem:[%s4333 + $0x10a] sm:$0xff]
    %v5125 = vld [vmem:[%s4333 + $0x112] sm:$0xff]
    %v5126 = vld [vmem:[%s4333 + $0x122] sm:$0xff]
    %v5127 = vld [vmem:[%s4333 + $0x12a] sm:$0xff]
    %v5128 = vld [vmem:[%s4333 + $0x13a] sm:$0xff]
    %v5129 = vld [vmem:[%s4333 + $0x142] sm:$0xff]
    %v5130 = vld [vmem:[%s4333 + $0x152] sm:$0xff]
    %v5131 = vld [vmem:[%s4333 + $0x15a] sm:$0xff]
    %v5132 = vld [vmem:[%s4333 + $0x16a] sm:$0xff]
    %v5133 = vld [vmem:[%s4333 + $0x172] sm:$0xff]
    %v5134 = vld [vmem:[%s4333 + $0x1b2] sm:$0xff]
    %v5135 = vld [vmem:[%s4333 + $0x1ba] sm:$0xff]
    %v5136 = vld [vmem:[%s4333 + $0x1ca] sm:$0xff]
    %v5137 = vld [vmem:[%s4333 + $0x1d2] sm:$0xff]
    %v5138 = vld [vmem:[%s4333 + $0x1e2] sm:$0xff]
    %v5139 = vld [vmem:[%s4333 + $0x1ea] sm:$0xff]
    %v5140 = vld [vmem:[%s4333 + $0x1fa] sm:$0xff]
    %v5141 = vld [vmem:[%s4333 + $0x202] sm:$0xff]
    %v5142 = vld [vmem:[%s4333 + $0x212] sm:$0xff]
    %v5143 = vld [vmem:[%s4333 + $0x21a] sm:$0xff]
    %v5144 = vld [vmem:[%s4333 + $0x22a] sm:$0xff]
    %v5145 = vld [vmem:[%s4333 + $0x232] sm:$0xff]
    %v5146 = vld [vmem:[%s4333 + $0x242] sm:$0xff]
    %v5147 = vld [vmem:[%s4333 + $0x24a] sm:$0xff]
    %v5148 = vld [vmem:[%s4333 + $0x25a] sm:$0xff]
    %v5149 = vld [vmem:[%s4333 + $0x262] sm:$0xff]
    %v5150 = vld [vmem:[%s4333 + $0x272] sm:$0xff]
    %v5151 = vld [vmem:[%s4333 + $0x27a] sm:$0xff]
    %v5152 = vld [vmem:[%s4333 + $0x28a] sm:$0xff]
    %v5153 = vld [vmem:[%s4333 + $0x292] sm:$0xff]
    %v5154 = vld [vmem:[%s4333 + $0x2a2] sm:$0xff]
    %v5155 = vld [vmem:[%s4333 + $0x2aa] sm:$0xff]
    %v5156 = vld [vmem:[%s4333 + $0x2ba] sm:$0xff]
    %v5157 = vld [vmem:[%s4333 + $0x2c2] sm:$0xff]
    %v5158 = vld [vmem:[%s4333 + $0x2d2] sm:$0xff]
    %v5159 = vld [vmem:[%s4333 + $0x2da] sm:$0xff]
    %v5160 = vld [vmem:[%s4333 + $0x2ea] sm:$0xff]
    %v5161 = vld [vmem:[%s4333 + $0x2f2] sm:$0xff]
    %v5162 = vld [vmem:[%s4333 + $0x302] sm:$0xff]
    %v5163 = vld [vmem:[%s4333 + $0x30a] sm:$0xff]
    %v5164 = vld [vmem:[%s4333 + $0x31a] sm:$0xff]
    %v5165 = vld [vmem:[%s4333 + $0x322] sm:$0xff]
    %5166 = vst [vmem:[#allocation4 + $0x28] sm:$0xff] %v5102
    %5167 = vst [vmem:[#allocation4 + $0x70] sm:$0xff] %v5103
    %5168 = vst [vmem:[#allocation4 + $0xb8] sm:$0xff] %v5104
    %5169 = vst [vmem:[#allocation4 + $0x100] sm:$0xff] %v5105
    %5170 = vst [vmem:[#allocation4 + $0x148] sm:$0xff] %v5106
    %5171 = vst [vmem:[#allocation4 + $0x190] sm:$0xff] %v5107
    %5172 = vst [vmem:[#allocation4 + $0x1d8] sm:$0xff] %v5108
    %5173 = vst [vmem:[#allocation4 + $0x220] sm:$0xff] %v5109
    %5174 = vst [vmem:[#allocation4 + $0x268] sm:$0xff] %v5110
    %5175 = vst [vmem:[#allocation4 + $0x2b0] sm:$0xff] %v5111
    %5176 = vst [vmem:[#allocation4 + $0x2f8] sm:$0xff] %v5112
    %5177 = vst [vmem:[#allocation4 + $0x340] sm:$0xff] %v5113
    %5178 = vst [vmem:[#allocation4 + $0x388] sm:$0xff] %v5114
    %5179 = vst [vmem:[#allocation4 + $0x3d0] sm:$0xff] %v5115
    %5180 = vst [vmem:[#allocation4 + $0x418] sm:$0xff] %v5116
    %5181 = vst [vmem:[#allocation4 + $0x460] sm:$0xff] %v5117
    %5182 = vst [vmem:[#allocation4 + $0x4a8] sm:$0xff] %v5118
    %5183 = vst [vmem:[#allocation4 + $0x4f0] sm:$0xff] %v5119
    %5184 = vst [vmem:[#allocation4 + $0x538] sm:$0xff] %v5120
    %5185 = vst [vmem:[#allocation4 + $0x580] sm:$0xff] %v5121
    %5186 = vst [vmem:[#allocation4 + $0x5c8] sm:$0xff] %v5122
    %5187 = vst [vmem:[#allocation4 + $0x610] sm:$0xff] %v5123
    %5188 = vst [vmem:[#allocation4 + $0x658] sm:$0xff] %v5124
    %5189 = vst [vmem:[#allocation4 + $0x6a0] sm:$0xff] %v5125
    %5190 = vst [vmem:[#allocation4 + $0x6e8] sm:$0xff] %v5126
    %5191 = vst [vmem:[#allocation4 + $0x730] sm:$0xff] %v5127
    %5192 = vst [vmem:[#allocation4 + $0x778] sm:$0xff] %v5128
    %5193 = vst [vmem:[#allocation4 + $0x7c0] sm:$0xff] %v5129
    %5194 = vst [vmem:[#allocation4 + $0x808] sm:$0xff] %v5130
    %5195 = vst [vmem:[#allocation4 + $0x850] sm:$0xff] %v5131
    %5196 = vst [vmem:[#allocation4 + $0x898] sm:$0xff] %v5132
    %5197 = vst [vmem:[#allocation4 + $0x8e0] sm:$0xff] %v5133
    %5198 = vst [vmem:[#allocation4 + $0x928] sm:$0xff] %v5134
    %5199 = vst [vmem:[#allocation4 + $0x970] sm:$0xff] %v5135
    %5200 = vst [vmem:[#allocation4 + $0x9b8] sm:$0xff] %v5136
    %5201 = vst [vmem:[#allocation4 + $0xa00] sm:$0xff] %v5137
    %5202 = vst [vmem:[#allocation4 + $0xa48] sm:$0xff] %v5138
    %5203 = vst [vmem:[#allocation4 + $0xa90] sm:$0xff] %v5139
    %5204 = vst [vmem:[#allocation4 + $0xad8] sm:$0xff] %v5140
    %5205 = vst [vmem:[#allocation4 + $0xb20] sm:$0xff] %v5141
    %5206 = vst [vmem:[#allocation4 + $0xb68] sm:$0xff] %v5142
    %5207 = vst [vmem:[#allocation4 + $0xbb0] sm:$0xff] %v5143
    %5208 = vst [vmem:[#allocation4 + $0xbf8] sm:$0xff] %v5144
    %5209 = vst [vmem:[#allocation4 + $0xc40] sm:$0xff] %v5145
    %5210 = vst [vmem:[#allocation4 + $0xc88] sm:$0xff] %v5146
    %5211 = vst [vmem:[#allocation4 + $0xcd0] sm:$0xff] %v5147
    %5212 = vst [vmem:[#allocation4 + $0xd18] sm:$0xff] %v5148
    %5213 = vst [vmem:[#allocation4 + $0xd60] sm:$0xff] %v5149
    %5214 = vst [vmem:[#allocation4 + $0xda8] sm:$0xff] %v5150
    %5215 = vst [vmem:[#allocation4 + $0xdf0] sm:$0xff] %v5151
    %5216 = vst [vmem:[#allocation4 + $0xe38] sm:$0xff] %v5152
    %5217 = vst [vmem:[#allocation4 + $0xe80] sm:$0xff] %v5153
    %5218 = vst [vmem:[#allocation4 + $0xec8] sm:$0xff] %v5154
    %5219 = vst [vmem:[#allocation4 + $0xf10] sm:$0xff] %v5155
    %5220 = vst [vmem:[#allocation4 + $0xf58] sm:$0xff] %v5156
    %5221 = vst [vmem:[#allocation4 + $0xfa0] sm:$0xff] %v5157
    %5222 = vst [vmem:[#allocation4 + $0xfe8] sm:$0xff] %v5158
    %5223 = vst [vmem:[#allocation4 + $0x1030] sm:$0xff] %v5159
    %5224 = vst [vmem:[#allocation4 + $0x1078] sm:$0xff] %v5160
    %5225 = vst [vmem:[#allocation4 + $0x10c0] sm:$0xff] %v5161
    %5226 = vst [vmem:[#allocation4 + $0x1108] sm:$0xff] %v5162
    %5227 = vst [vmem:[#allocation4 + $0x1150] sm:$0xff] %v5163
    %5228 = vst [vmem:[#allocation4 + $0x1198] sm:$0xff] %v5164
    %5229 = vst [vmem:[#allocation4 + $0x11e0] sm:$0xff] %v5165
    %s5230 = scalar_lea.vmem [#allocation3], 48
    %v5231 = vld [vmem:[%s5230] sm:$0xff]
    %v5232 = vld [vmem:[%s5230 + $0x8] sm:$0xff]
    %v5233 = vld [vmem:[%s5230 + $0x18] sm:$0xff]
    %v5234 = vld [vmem:[%s5230 + $0x20] sm:$0xff]
    %v5235 = vld [vmem:[%s5230 + $0x30] sm:$0xff]
    %v5236 = vld [vmem:[%s5230 + $0x38] sm:$0xff]
    %v5237 = vld [vmem:[%s5230 + $0x48] sm:$0xff]
    %v5238 = vld [vmem:[%s5230 + $0x50] sm:$0xff]
    %v5239 = vld [vmem:[%s5230 + $0x60] sm:$0xff]
    %v5240 = vld [vmem:[%s5230 + $0x68] sm:$0xff]
    %v5241 = vld [vmem:[%s5230 + $0x78] sm:$0xff]
    %v5242 = vld [vmem:[%s5230 + $0x80] sm:$0xff]
    %v5243 = vld [vmem:[%s5230 + $0x90] sm:$0xff]
    %v5244 = vld [vmem:[%s5230 + $0x98] sm:$0xff]
    %v5245 = vld [vmem:[%s5230 + $0xa8] sm:$0xff]
    %v5246 = vld [vmem:[%s5230 + $0xb0] sm:$0xff]
    %v5247 = vld [vmem:[%s5230 + $0xc0] sm:$0xff]
    %v5248 = vld [vmem:[%s5230 + $0xc8] sm:$0xff]
    %v5249 = vld [vmem:[%s5230 + $0xd8] sm:$0xff]
    %v5250 = vld [vmem:[%s5230 + $0xe0] sm:$0xff]
    %v5251 = vld [vmem:[%s5230 + $0xf0] sm:$0xff]
    %v5252 = vld [vmem:[%s5230 + $0xf8] sm:$0xff]
    %v5253 = vld [vmem:[%s5230 + $0x108] sm:$0xff]
    %v5254 = vld [vmem:[%s5230 + $0x110] sm:$0xff]
    %v5255 = vld [vmem:[%s5230 + $0x120] sm:$0xff]
    %v5256 = vld [vmem:[%s5230 + $0x128] sm:$0xff]
    %v5257 = vld [vmem:[%s5230 + $0x138] sm:$0xff]
    %v5258 = vld [vmem:[%s5230 + $0x140] sm:$0xff]
    %v5259 = vld [vmem:[%s5230 + $0x150] sm:$0xff]
    %v5260 = vld [vmem:[%s5230 + $0x158] sm:$0xff]
    %v5261 = vld [vmem:[%s5230 + $0x168] sm:$0xff]
    %v5262 = vld [vmem:[%s5230 + $0x170] sm:$0xff]
    %v5263 = vld [vmem:[%s5230 + $0x1b0] sm:$0xff]
    %v5264 = vld [vmem:[%s5230 + $0x1b8] sm:$0xff]
    %v5265 = vld [vmem:[%s5230 + $0x1c8] sm:$0xff]
    %v5266 = vld [vmem:[%s5230 + $0x1d0] sm:$0xff]
    %v5267 = vld [vmem:[%s5230 + $0x1e0] sm:$0xff]
    %v5268 = vld [vmem:[%s5230 + $0x1e8] sm:$0xff]
    %v5269 = vld [vmem:[%s5230 + $0x1f8] sm:$0xff]
    %v5270 = vld [vmem:[%s5230 + $0x200] sm:$0xff]
    %v5271 = vld [vmem:[%s5230 + $0x210] sm:$0xff]
    %v5272 = vld [vmem:[%s5230 + $0x218] sm:$0xff]
    %v5273 = vld [vmem:[%s5230 + $0x228] sm:$0xff]
    %v5274 = vld [vmem:[%s5230 + $0x230] sm:$0xff]
    %v5275 = vld [vmem:[%s5230 + $0x240] sm:$0xff]
    %v5276 = vld [vmem:[%s5230 + $0x248] sm:$0xff]
    %v5277 = vld [vmem:[%s5230 + $0x258] sm:$0xff]
    %v5278 = vld [vmem:[%s5230 + $0x260] sm:$0xff]
    %v5279 = vld [vmem:[%s5230 + $0x270] sm:$0xff]
    %v5280 = vld [vmem:[%s5230 + $0x278] sm:$0xff]
    %v5281 = vld [vmem:[%s5230 + $0x288] sm:$0xff]
    %v5282 = vld [vmem:[%s5230 + $0x290] sm:$0xff]
    %v5283 = vld [vmem:[%s5230 + $0x2a0] sm:$0xff]
    %v5284 = vld [vmem:[%s5230 + $0x2a8] sm:$0xff]
    %v5285 = vld [vmem:[%s5230 + $0x2b8] sm:$0xff]
    %v5286 = vld [vmem:[%s5230 + $0x2c0] sm:$0xff]
    %v5287 = vld [vmem:[%s5230 + $0x2d0] sm:$0xff]
    %v5288 = vld [vmem:[%s5230 + $0x2d8] sm:$0xff]
    %v5289 = vld [vmem:[%s5230 + $0x2e8] sm:$0xff]
    %v5290 = vld [vmem:[%s5230 + $0x2f0] sm:$0xff]
    %v5291 = vld [vmem:[%s5230 + $0x300] sm:$0xff]
    %v5292 = vld [vmem:[%s5230 + $0x308] sm:$0xff]
    %v5293 = vld [vmem:[%s5230 + $0x318] sm:$0xff]
    %v5294 = vld [vmem:[%s5230 + $0x320] sm:$0xff]
    %5295 = vst [vmem:[#allocation4 + $0x30] sm:$0xff] %v5231
    %5296 = vst [vmem:[#allocation4 + $0x78] sm:$0xff] %v5232
    %5297 = vst [vmem:[#allocation4 + $0xc0] sm:$0xff] %v5233
    %5298 = vst [vmem:[#allocation4 + $0x108] sm:$0xff] %v5234
    %5299 = vst [vmem:[#allocation4 + $0x150] sm:$0xff] %v5235
    %5300 = vst [vmem:[#allocation4 + $0x198] sm:$0xff] %v5236
    %5301 = vst [vmem:[#allocation4 + $0x1e0] sm:$0xff] %v5237
    %5302 = vst [vmem:[#allocation4 + $0x228] sm:$0xff] %v5238
    %5303 = vst [vmem:[#allocation4 + $0x270] sm:$0xff] %v5239
    %5304 = vst [vmem:[#allocation4 + $0x2b8] sm:$0xff] %v5240
    %5305 = vst [vmem:[#allocation4 + $0x300] sm:$0xff] %v5241
    %5306 = vst [vmem:[#allocation4 + $0x348] sm:$0xff] %v5242
    %5307 = vst [vmem:[#allocation4 + $0x390] sm:$0xff] %v5243
    %5308 = vst [vmem:[#allocation4 + $0x3d8] sm:$0xff] %v5244
    %5309 = vst [vmem:[#allocation4 + $0x420] sm:$0xff] %v5245
    %5310 = vst [vmem:[#allocation4 + $0x468] sm:$0xff] %v5246
    %5311 = vst [vmem:[#allocation4 + $0x4b0] sm:$0xff] %v5247
    %5312 = vst [vmem:[#allocation4 + $0x4f8] sm:$0xff] %v5248
    %5313 = vst [vmem:[#allocation4 + $0x540] sm:$0xff] %v5249
    %5314 = vst [vmem:[#allocation4 + $0x588] sm:$0xff] %v5250
    %5315 = vst [vmem:[#allocation4 + $0x5d0] sm:$0xff] %v5251
    %5316 = vst [vmem:[#allocation4 + $0x618] sm:$0xff] %v5252
    %5317 = vst [vmem:[#allocation4 + $0x660] sm:$0xff] %v5253
    %5318 = vst [vmem:[#allocation4 + $0x6a8] sm:$0xff] %v5254
    %5319 = vst [vmem:[#allocation4 + $0x6f0] sm:$0xff] %v5255
    %5320 = vst [vmem:[#allocation4 + $0x738] sm:$0xff] %v5256
    %5321 = vst [vmem:[#allocation4 + $0x780] sm:$0xff] %v5257
    %5322 = vst [vmem:[#allocation4 + $0x7c8] sm:$0xff] %v5258
    %5323 = vst [vmem:[#allocation4 + $0x810] sm:$0xff] %v5259
    %5324 = vst [vmem:[#allocation4 + $0x858] sm:$0xff] %v5260
    %5325 = vst [vmem:[#allocation4 + $0x8a0] sm:$0xff] %v5261
    %5326 = vst [vmem:[#allocation4 + $0x8e8] sm:$0xff] %v5262
    %5327 = vst [vmem:[#allocation4 + $0x930] sm:$0xff] %v5263
    %5328 = vst [vmem:[#allocation4 + $0x978] sm:$0xff] %v5264
    %5329 = vst [vmem:[#allocation4 + $0x9c0] sm:$0xff] %v5265
    %5330 = vst [vmem:[#allocation4 + $0xa08] sm:$0xff] %v5266
    %5331 = vst [vmem:[#allocation4 + $0xa50] sm:$0xff] %v5267
    %5332 = vst [vmem:[#allocation4 + $0xa98] sm:$0xff] %v5268
    %5333 = vst [vmem:[#allocation4 + $0xae0] sm:$0xff] %v5269
    %5334 = vst [vmem:[#allocation4 + $0xb28] sm:$0xff] %v5270
    %5335 = vst [vmem:[#allocation4 + $0xb70] sm:$0xff] %v5271
    %5336 = vst [vmem:[#allocation4 + $0xbb8] sm:$0xff] %v5272
    %5337 = vst [vmem:[#allocation4 + $0xc00] sm:$0xff] %v5273
    %5338 = vst [vmem:[#allocation4 + $0xc48] sm:$0xff] %v5274
    %5339 = vst [vmem:[#allocation4 + $0xc90] sm:$0xff] %v5275
    %5340 = vst [vmem:[#allocation4 + $0xcd8] sm:$0xff] %v5276
    %5341 = vst [vmem:[#allocation4 + $0xd20] sm:$0xff] %v5277
    %5342 = vst [vmem:[#allocation4 + $0xd68] sm:$0xff] %v5278
    %5343 = vst [vmem:[#allocation4 + $0xdb0] sm:$0xff] %v5279
    %5344 = vst [vmem:[#allocation4 + $0xdf8] sm:$0xff] %v5280
    %5345 = vst [vmem:[#allocation4 + $0xe40] sm:$0xff] %v5281
    %5346 = vst [vmem:[#allocation4 + $0xe88] sm:$0xff] %v5282
    %5347 = vst [vmem:[#allocation4 + $0xed0] sm:$0xff] %v5283
    %5348 = vst [vmem:[#allocation4 + $0xf18] sm:$0xff] %v5284
    %5349 = vst [vmem:[#allocation4 + $0xf60] sm:$0xff] %v5285
    %5350 = vst [vmem:[#allocation4 + $0xfa8] sm:$0xff] %v5286
    %5351 = vst [vmem:[#allocation4 + $0xff0] sm:$0xff] %v5287
    %5352 = vst [vmem:[#allocation4 + $0x1038] sm:$0xff] %v5288
    %5353 = vst [vmem:[#allocation4 + $0x1080] sm:$0xff] %v5289
    %5354 = vst [vmem:[#allocation4 + $0x10c8] sm:$0xff] %v5290
    %5355 = vst [vmem:[#allocation4 + $0x1110] sm:$0xff] %v5291
    %5356 = vst [vmem:[#allocation4 + $0x1158] sm:$0xff] %v5292
    %5357 = vst [vmem:[#allocation4 + $0x11a0] sm:$0xff] %v5293
    %5358 = vst [vmem:[#allocation4 + $0x11e8] sm:$0xff] %v5294
    %v5359 = vld [vmem:[%s5230 + $0x1] sm:$0xff]
    %v5360 = vld [vmem:[%s5230 + $0x9] sm:$0xff]
    %v5361 = vld [vmem:[%s5230 + $0x19] sm:$0xff]
    %v5362 = vld [vmem:[%s5230 + $0x21] sm:$0xff]
    %v5363 = vld [vmem:[%s5230 + $0x31] sm:$0xff]
    %v5364 = vld [vmem:[%s5230 + $0x39] sm:$0xff]
    %v5365 = vld [vmem:[%s5230 + $0x49] sm:$0xff]
    %v5366 = vld [vmem:[%s5230 + $0x51] sm:$0xff]
    %v5367 = vld [vmem:[%s5230 + $0x61] sm:$0xff]
    %v5368 = vld [vmem:[%s5230 + $0x69] sm:$0xff]
    %v5369 = vld [vmem:[%s5230 + $0x79] sm:$0xff]
    %v5370 = vld [vmem:[%s5230 + $0x81] sm:$0xff]
    %v5371 = vld [vmem:[%s5230 + $0x91] sm:$0xff]
    %v5372 = vld [vmem:[%s5230 + $0x99] sm:$0xff]
    %v5373 = vld [vmem:[%s5230 + $0xa9] sm:$0xff]
    %v5374 = vld [vmem:[%s5230 + $0xb1] sm:$0xff]
    %v5375 = vld [vmem:[%s5230 + $0xc1] sm:$0xff]
    %v5376 = vld [vmem:[%s5230 + $0xc9] sm:$0xff]
    %v5377 = vld [vmem:[%s5230 + $0xd9] sm:$0xff]
    %v5378 = vld [vmem:[%s5230 + $0xe1] sm:$0xff]
    %v5379 = vld [vmem:[%s5230 + $0xf1] sm:$0xff]
    %v5380 = vld [vmem:[%s5230 + $0xf9] sm:$0xff]
    %v5381 = vld [vmem:[%s5230 + $0x109] sm:$0xff]
    %v5382 = vld [vmem:[%s5230 + $0x111] sm:$0xff]
    %v5383 = vld [vmem:[%s5230 + $0x121] sm:$0xff]
    %v5384 = vld [vmem:[%s5230 + $0x129] sm:$0xff]
    %v5385 = vld [vmem:[%s5230 + $0x139] sm:$0xff]
    %v5386 = vld [vmem:[%s5230 + $0x141] sm:$0xff]
    %v5387 = vld [vmem:[%s5230 + $0x151] sm:$0xff]
    %v5388 = vld [vmem:[%s5230 + $0x159] sm:$0xff]
    %v5389 = vld [vmem:[%s5230 + $0x169] sm:$0xff]
    %v5390 = vld [vmem:[%s5230 + $0x171] sm:$0xff]
    %v5391 = vld [vmem:[%s5230 + $0x1b1] sm:$0xff]
    %v5392 = vld [vmem:[%s5230 + $0x1b9] sm:$0xff]
    %v5393 = vld [vmem:[%s5230 + $0x1c9] sm:$0xff]
    %v5394 = vld [vmem:[%s5230 + $0x1d1] sm:$0xff]
    %v5395 = vld [vmem:[%s5230 + $0x1e1] sm:$0xff]
    %v5396 = vld [vmem:[%s5230 + $0x1e9] sm:$0xff]
    %v5397 = vld [vmem:[%s5230 + $0x1f9] sm:$0xff]
    %v5398 = vld [vmem:[%s5230 + $0x201] sm:$0xff]
    %v5399 = vld [vmem:[%s5230 + $0x211] sm:$0xff]
    %v5400 = vld [vmem:[%s5230 + $0x219] sm:$0xff]
    %v5401 = vld [vmem:[%s5230 + $0x229] sm:$0xff]
    %v5402 = vld [vmem:[%s5230 + $0x231] sm:$0xff]
    %v5403 = vld [vmem:[%s5230 + $0x241] sm:$0xff]
    %v5404 = vld [vmem:[%s5230 + $0x249] sm:$0xff]
    %v5405 = vld [vmem:[%s5230 + $0x259] sm:$0xff]
    %v5406 = vld [vmem:[%s5230 + $0x261] sm:$0xff]
    %v5407 = vld [vmem:[%s5230 + $0x271] sm:$0xff]
    %v5408 = vld [vmem:[%s5230 + $0x279] sm:$0xff]
    %v5409 = vld [vmem:[%s5230 + $0x289] sm:$0xff]
    %v5410 = vld [vmem:[%s5230 + $0x291] sm:$0xff]
    %v5411 = vld [vmem:[%s5230 + $0x2a1] sm:$0xff]
    %v5412 = vld [vmem:[%s5230 + $0x2a9] sm:$0xff]
    %v5413 = vld [vmem:[%s5230 + $0x2b9] sm:$0xff]
    %v5414 = vld [vmem:[%s5230 + $0x2c1] sm:$0xff]
    %v5415 = vld [vmem:[%s5230 + $0x2d1] sm:$0xff]
    %v5416 = vld [vmem:[%s5230 + $0x2d9] sm:$0xff]
    %v5417 = vld [vmem:[%s5230 + $0x2e9] sm:$0xff]
    %v5418 = vld [vmem:[%s5230 + $0x2f1] sm:$0xff]
    %v5419 = vld [vmem:[%s5230 + $0x301] sm:$0xff]
    %v5420 = vld [vmem:[%s5230 + $0x309] sm:$0xff]
    %v5421 = vld [vmem:[%s5230 + $0x319] sm:$0xff]
    %v5422 = vld [vmem:[%s5230 + $0x321] sm:$0xff]
    %5423 = vst [vmem:[#allocation4 + $0x38] sm:$0xff] %v5359
    %5424 = vst [vmem:[#allocation4 + $0x80] sm:$0xff] %v5360
    %5425 = vst [vmem:[#allocation4 + $0xc8] sm:$0xff] %v5361
    %5426 = vst [vmem:[#allocation4 + $0x110] sm:$0xff] %v5362
    %5427 = vst [vmem:[#allocation4 + $0x158] sm:$0xff] %v5363
    %5428 = vst [vmem:[#allocation4 + $0x1a0] sm:$0xff] %v5364
    %5429 = vst [vmem:[#allocation4 + $0x1e8] sm:$0xff] %v5365
    %5430 = vst [vmem:[#allocation4 + $0x230] sm:$0xff] %v5366
    %5431 = vst [vmem:[#allocation4 + $0x278] sm:$0xff] %v5367
    %5432 = vst [vmem:[#allocation4 + $0x2c0] sm:$0xff] %v5368
    %5433 = vst [vmem:[#allocation4 + $0x308] sm:$0xff] %v5369
    %5434 = vst [vmem:[#allocation4 + $0x350] sm:$0xff] %v5370
    %5435 = vst [vmem:[#allocation4 + $0x398] sm:$0xff] %v5371
    %5436 = vst [vmem:[#allocation4 + $0x3e0] sm:$0xff] %v5372
    %5437 = vst [vmem:[#allocation4 + $0x428] sm:$0xff] %v5373
    %5438 = vst [vmem:[#allocation4 + $0x470] sm:$0xff] %v5374
    %5439 = vst [vmem:[#allocation4 + $0x4b8] sm:$0xff] %v5375
    %5440 = vst [vmem:[#allocation4 + $0x500] sm:$0xff] %v5376
    %5441 = vst [vmem:[#allocation4 + $0x548] sm:$0xff] %v5377
    %5442 = vst [vmem:[#allocation4 + $0x590] sm:$0xff] %v5378
    %5443 = vst [vmem:[#allocation4 + $0x5d8] sm:$0xff] %v5379
    %5444 = vst [vmem:[#allocation4 + $0x620] sm:$0xff] %v5380
    %5445 = vst [vmem:[#allocation4 + $0x668] sm:$0xff] %v5381
    %5446 = vst [vmem:[#allocation4 + $0x6b0] sm:$0xff] %v5382
    %5447 = vst [vmem:[#allocation4 + $0x6f8] sm:$0xff] %v5383
    %5448 = vst [vmem:[#allocation4 + $0x740] sm:$0xff] %v5384
    %5449 = vst [vmem:[#allocation4 + $0x788] sm:$0xff] %v5385
    %5450 = vst [vmem:[#allocation4 + $0x7d0] sm:$0xff] %v5386
    %5451 = vst [vmem:[#allocation4 + $0x818] sm:$0xff] %v5387
    %5452 = vst [vmem:[#allocation4 + $0x860] sm:$0xff] %v5388
    %5453 = vst [vmem:[#allocation4 + $0x8a8] sm:$0xff] %v5389
    %5454 = vst [vmem:[#allocation4 + $0x8f0] sm:$0xff] %v5390
    %5455 = vst [vmem:[#allocation4 + $0x938] sm:$0xff] %v5391
    %5456 = vst [vmem:[#allocation4 + $0x980] sm:$0xff] %v5392
    %5457 = vst [vmem:[#allocation4 + $0x9c8] sm:$0xff] %v5393
    %5458 = vst [vmem:[#allocation4 + $0xa10] sm:$0xff] %v5394
    %5459 = vst [vmem:[#allocation4 + $0xa58] sm:$0xff] %v5395
    %5460 = vst [vmem:[#allocation4 + $0xaa0] sm:$0xff] %v5396
    %5461 = vst [vmem:[#allocation4 + $0xae8] sm:$0xff] %v5397
    %5462 = vst [vmem:[#allocation4 + $0xb30] sm:$0xff] %v5398
    %5463 = vst [vmem:[#allocation4 + $0xb78] sm:$0xff] %v5399
    %5464 = vst [vmem:[#allocation4 + $0xbc0] sm:$0xff] %v5400
    %5465 = vst [vmem:[#allocation4 + $0xc08] sm:$0xff] %v5401
    %5466 = vst [vmem:[#allocation4 + $0xc50] sm:$0xff] %v5402
    %5467 = vst [vmem:[#allocation4 + $0xc98] sm:$0xff] %v5403
    %5468 = vst [vmem:[#allocation4 + $0xce0] sm:$0xff] %v5404
    %5469 = vst [vmem:[#allocation4 + $0xd28] sm:$0xff] %v5405
    %5470 = vst [vmem:[#allocation4 + $0xd70] sm:$0xff] %v5406
    %5471 = vst [vmem:[#allocation4 + $0xdb8] sm:$0xff] %v5407
    %5472 = vst [vmem:[#allocation4 + $0xe00] sm:$0xff] %v5408
    %5473 = vst [vmem:[#allocation4 + $0xe48] sm:$0xff] %v5409
    %5474 = vst [vmem:[#allocation4 + $0xe90] sm:$0xff] %v5410
    %5475 = vst [vmem:[#allocation4 + $0xed8] sm:$0xff] %v5411
    %5476 = vst [vmem:[#allocation4 + $0xf20] sm:$0xff] %v5412
    %5477 = vst [vmem:[#allocation4 + $0xf68] sm:$0xff] %v5413
    %5478 = vst [vmem:[#allocation4 + $0xfb0] sm:$0xff] %v5414
    %5479 = vst [vmem:[#allocation4 + $0xff8] sm:$0xff] %v5415
    %5480 = vst [vmem:[#allocation4 + $0x1040] sm:$0xff] %v5416
    %5481 = vst [vmem:[#allocation4 + $0x1088] sm:$0xff] %v5417
    %5482 = vst [vmem:[#allocation4 + $0x10d0] sm:$0xff] %v5418
    %5483 = vst [vmem:[#allocation4 + $0x1118] sm:$0xff] %v5419
    %5484 = vst [vmem:[#allocation4 + $0x1160] sm:$0xff] %v5420
    %5485 = vst [vmem:[#allocation4 + $0x11a8] sm:$0xff] %v5421
    %5486 = vst [vmem:[#allocation4 + $0x11f0] sm:$0xff] %v5422
    %v5487 = vld [vmem:[%s5230 + $0x2] sm:$0xff]
    %v5488 = vld [vmem:[%s5230 + $0xa] sm:$0xff]
    %v5489 = vld [vmem:[%s5230 + $0x1a] sm:$0xff]
    %v5490 = vld [vmem:[%s5230 + $0x22] sm:$0xff]
    %v5491 = vld [vmem:[%s5230 + $0x32] sm:$0xff]
    %v5492 = vld [vmem:[%s5230 + $0x3a] sm:$0xff]
    %v5493 = vld [vmem:[%s5230 + $0x4a] sm:$0xff]
    %v5494 = vld [vmem:[%s5230 + $0x52] sm:$0xff]
    %v5495 = vld [vmem:[%s5230 + $0x62] sm:$0xff]
    %v5496 = vld [vmem:[%s5230 + $0x6a] sm:$0xff]
    %v5497 = vld [vmem:[%s5230 + $0x7a] sm:$0xff]
    %v5498 = vld [vmem:[%s5230 + $0x82] sm:$0xff]
    %v5499 = vld [vmem:[%s5230 + $0x92] sm:$0xff]
    %v5500 = vld [vmem:[%s5230 + $0x9a] sm:$0xff]
    %v5501 = vld [vmem:[%s5230 + $0xaa] sm:$0xff]
    %v5502 = vld [vmem:[%s5230 + $0xb2] sm:$0xff]
    %v5503 = vld [vmem:[%s5230 + $0xc2] sm:$0xff]
    %v5504 = vld [vmem:[%s5230 + $0xca] sm:$0xff]
    %v5505 = vld [vmem:[%s5230 + $0xda] sm:$0xff]
    %v5506 = vld [vmem:[%s5230 + $0xe2] sm:$0xff]
    %v5507 = vld [vmem:[%s5230 + $0xf2] sm:$0xff]
    %v5508 = vld [vmem:[%s5230 + $0xfa] sm:$0xff]
    %v5509 = vld [vmem:[%s5230 + $0x10a] sm:$0xff]
    %v5510 = vld [vmem:[%s5230 + $0x112] sm:$0xff]
    %v5511 = vld [vmem:[%s5230 + $0x122] sm:$0xff]
    %v5512 = vld [vmem:[%s5230 + $0x12a] sm:$0xff]
    %v5513 = vld [vmem:[%s5230 + $0x13a] sm:$0xff]
    %v5514 = vld [vmem:[%s5230 + $0x142] sm:$0xff]
    %v5515 = vld [vmem:[%s5230 + $0x152] sm:$0xff]
    %v5516 = vld [vmem:[%s5230 + $0x15a] sm:$0xff]
    %v5517 = vld [vmem:[%s5230 + $0x16a] sm:$0xff]
    %v5518 = vld [vmem:[%s5230 + $0x172] sm:$0xff]
    %v5519 = vld [vmem:[%s5230 + $0x1b2] sm:$0xff]
    %v5520 = vld [vmem:[%s5230 + $0x1ba] sm:$0xff]
    %v5521 = vld [vmem:[%s5230 + $0x1ca] sm:$0xff]
    %v5522 = vld [vmem:[%s5230 + $0x1d2] sm:$0xff]
    %v5523 = vld [vmem:[%s5230 + $0x1e2] sm:$0xff]
    %v5524 = vld [vmem:[%s5230 + $0x1ea] sm:$0xff]
    %v5525 = vld [vmem:[%s5230 + $0x1fa] sm:$0xff]
    %v5526 = vld [vmem:[%s5230 + $0x202] sm:$0xff]
    %v5527 = vld [vmem:[%s5230 + $0x212] sm:$0xff]
    %v5528 = vld [vmem:[%s5230 + $0x21a] sm:$0xff]
    %v5529 = vld [vmem:[%s5230 + $0x22a] sm:$0xff]
    %v5530 = vld [vmem:[%s5230 + $0x232] sm:$0xff]
    %v5531 = vld [vmem:[%s5230 + $0x242] sm:$0xff]
    %v5532 = vld [vmem:[%s5230 + $0x24a] sm:$0xff]
    %v5533 = vld [vmem:[%s5230 + $0x25a] sm:$0xff]
    %v5534 = vld [vmem:[%s5230 + $0x262] sm:$0xff]
    %v5535 = vld [vmem:[%s5230 + $0x272] sm:$0xff]
    %v5536 = vld [vmem:[%s5230 + $0x27a] sm:$0xff]
    %v5537 = vld [vmem:[%s5230 + $0x28a] sm:$0xff]
    %v5538 = vld [vmem:[%s5230 + $0x292] sm:$0xff]
    %v5539 = vld [vmem:[%s5230 + $0x2a2] sm:$0xff]
    %v5540 = vld [vmem:[%s5230 + $0x2aa] sm:$0xff]
    %v5541 = vld [vmem:[%s5230 + $0x2ba] sm:$0xff]
    %v5542 = vld [vmem:[%s5230 + $0x2c2] sm:$0xff]
    %v5543 = vld [vmem:[%s5230 + $0x2d2] sm:$0xff]
    %v5544 = vld [vmem:[%s5230 + $0x2da] sm:$0xff]
    %v5545 = vld [vmem:[%s5230 + $0x2ea] sm:$0xff]
    %v5546 = vld [vmem:[%s5230 + $0x2f2] sm:$0xff]
    %v5547 = vld [vmem:[%s5230 + $0x302] sm:$0xff]
    %v5548 = vld [vmem:[%s5230 + $0x30a] sm:$0xff]
    %v5549 = vld [vmem:[%s5230 + $0x31a] sm:$0xff]
    %v5550 = vld [vmem:[%s5230 + $0x322] sm:$0xff]
    %5551 = vst [vmem:[#allocation4 + $0x40] sm:$0xff] %v5487
    %5552 = vst [vmem:[#allocation4 + $0x88] sm:$0xff] %v5488
    %5553 = vst [vmem:[#allocation4 + $0xd0] sm:$0xff] %v5489
    %5554 = vst [vmem:[#allocation4 + $0x118] sm:$0xff] %v5490
    %5555 = vst [vmem:[#allocation4 + $0x160] sm:$0xff] %v5491
    %5556 = vst [vmem:[#allocation4 + $0x1a8] sm:$0xff] %v5492
    %5557 = vst [vmem:[#allocation4 + $0x1f0] sm:$0xff] %v5493
    %5558 = vst [vmem:[#allocation4 + $0x238] sm:$0xff] %v5494
    %5559 = vst [vmem:[#allocation4 + $0x280] sm:$0xff] %v5495
    %5560 = vst [vmem:[#allocation4 + $0x2c8] sm:$0xff] %v5496
    %5561 = vst [vmem:[#allocation4 + $0x310] sm:$0xff] %v5497
    %5562 = vst [vmem:[#allocation4 + $0x358] sm:$0xff] %v5498
    %5563 = vst [vmem:[#allocation4 + $0x3a0] sm:$0xff] %v5499
    %5564 = vst [vmem:[#allocation4 + $0x3e8] sm:$0xff] %v5500
    %5565 = vst [vmem:[#allocation4 + $0x430] sm:$0xff] %v5501
    %5566 = vst [vmem:[#allocation4 + $0x478] sm:$0xff] %v5502
    %5567 = vst [vmem:[#allocation4 + $0x4c0] sm:$0xff] %v5503
    %5568 = vst [vmem:[#allocation4 + $0x508] sm:$0xff] %v5504
    %5569 = vst [vmem:[#allocation4 + $0x550] sm:$0xff] %v5505
    %5570 = vst [vmem:[#allocation4 + $0x598] sm:$0xff] %v5506
    %5571 = vst [vmem:[#allocation4 + $0x5e0] sm:$0xff] %v5507
    %5572 = vst [vmem:[#allocation4 + $0x628] sm:$0xff] %v5508
    %5573 = vst [vmem:[#allocation4 + $0x670] sm:$0xff] %v5509
    %5574 = vst [vmem:[#allocation4 + $0x6b8] sm:$0xff] %v5510
    %5575 = vst [vmem:[#allocation4 + $0x700] sm:$0xff] %v5511
    %5576 = vst [vmem:[#allocation4 + $0x748] sm:$0xff] %v5512
    %5577 = vst [vmem:[#allocation4 + $0x790] sm:$0xff] %v5513
    %5578 = vst [vmem:[#allocation4 + $0x7d8] sm:$0xff] %v5514
    %5579 = vst [vmem:[#allocation4 + $0x820] sm:$0xff] %v5515
    %5580 = vst [vmem:[#allocation4 + $0x868] sm:$0xff] %v5516
    %5581 = vst [vmem:[#allocation4 + $0x8b0] sm:$0xff] %v5517
    %5582 = vst [vmem:[#allocation4 + $0x8f8] sm:$0xff] %v5518
    %5583 = vst [vmem:[#allocation4 + $0x940] sm:$0xff] %v5519
    %5584 = vst [vmem:[#allocation4 + $0x988] sm:$0xff] %v5520
    %5585 = vst [vmem:[#allocation4 + $0x9d0] sm:$0xff] %v5521
    %5586 = vst [vmem:[#allocation4 + $0xa18] sm:$0xff] %v5522
    %5587 = vst [vmem:[#allocation4 + $0xa60] sm:$0xff] %v5523
    %5588 = vst [vmem:[#allocation4 + $0xaa8] sm:$0xff] %v5524
    %5589 = vst [vmem:[#allocation4 + $0xaf0] sm:$0xff] %v5525
    %5590 = vst [vmem:[#allocation4 + $0xb38] sm:$0xff] %v5526
    %5591 = vst [vmem:[#allocation4 + $0xb80] sm:$0xff] %v5527
    %5592 = vst [vmem:[#allocation4 + $0xbc8] sm:$0xff] %v5528
    %5593 = vst [vmem:[#allocation4 + $0xc10] sm:$0xff] %v5529
    %5594 = vst [vmem:[#allocation4 + $0xc58] sm:$0xff] %v5530
    %5595 = vst [vmem:[#allocation4 + $0xca0] sm:$0xff] %v5531
    %5596 = vst [vmem:[#allocation4 + $0xce8] sm:$0xff] %v5532
    %5597 = vst [vmem:[#allocation4 + $0xd30] sm:$0xff] %v5533
    %5598 = vst [vmem:[#allocation4 + $0xd78] sm:$0xff] %v5534
    %5599 = vst [vmem:[#allocation4 + $0xdc0] sm:$0xff] %v5535
    %5600 = vst [vmem:[#allocation4 + $0xe08] sm:$0xff] %v5536
    %5601 = vst [vmem:[#allocation4 + $0xe50] sm:$0xff] %v5537
    %5602 = vst [vmem:[#allocation4 + $0xe98] sm:$0xff] %v5538
    %5603 = vst [vmem:[#allocation4 + $0xee0] sm:$0xff] %v5539
    %5604 = vst [vmem:[#allocation4 + $0xf28] sm:$0xff] %v5540
    %5605 = vst [vmem:[#allocation4 + $0xf70] sm:$0xff] %v5541
    %5606 = vst [vmem:[#allocation4 + $0xfb8] sm:$0xff] %v5542
    %5607 = vst [vmem:[#allocation4 + $0x1000] sm:$0xff] %v5543
    %5608 = vst [vmem:[#allocation4 + $0x1048] sm:$0xff] %v5544
    %5609 = vst [vmem:[#allocation4 + $0x1090] sm:$0xff] %v5545
    %5610 = vst [vmem:[#allocation4 + $0x10d8] sm:$0xff] %v5546
    %5611 = vst [vmem:[#allocation4 + $0x1120] sm:$0xff] %v5547
    %5612 = vst [vmem:[#allocation4 + $0x1168] sm:$0xff] %v5548
    %5613 = vst [vmem:[#allocation4 + $0x11b0] sm:$0xff] %v5549
    %5614 = vst [vmem:[#allocation4 + $0x11f8] sm:$0xff] %v5550
    %v5615 = vld [vmem:[#allocation4] sm:$0xff]
    %v5616 = vld [vmem:[#allocation4 + $0x8] sm:$0xff]
    %v5617 = vld [vmem:[#allocation4 + $0x10] sm:$0xff]
    %v5618 = vld [vmem:[#allocation4 + $0x18] sm:$0xff]
    %v5619 = vld [vmem:[#allocation4 + $0x20] sm:$0xff]
    %v5620 = vld [vmem:[#allocation4 + $0x28] sm:$0xff]
    %v5621 = vld [vmem:[#allocation4 + $0x30] sm:$0xff]
    %v5622 = vld [vmem:[#allocation4 + $0x38] sm:$0xff]
    %v5623 = vld [vmem:[#allocation4 + $0x40] sm:$0xff]
    %v5624 = vld [vmem:[#allocation4 + $0x48] sm:$0xff]
    %v5625 = vld [vmem:[#allocation4 + $0x50] sm:$0xff]
    %v5626 = vld [vmem:[#allocation4 + $0x58] sm:$0xff]
    %v5627 = vld [vmem:[#allocation4 + $0x60] sm:$0xff]
    %v5628 = vld [vmem:[#allocation4 + $0x68] sm:$0xff]
    %v5629 = vld [vmem:[#allocation4 + $0x70] sm:$0xff]
    %v5630 = vld [vmem:[#allocation4 + $0x78] sm:$0xff]
    %v5631 = vld [vmem:[#allocation4 + $0x80] sm:$0xff]
    %v5632 = vld [vmem:[#allocation4 + $0x88] sm:$0xff]
    %v5633 = vld [vmem:[#allocation4 + $0x90] sm:$0xff]
    %v5634 = vld [vmem:[#allocation4 + $0x98] sm:$0xff]
    %v5635 = vld [vmem:[#allocation4 + $0xa0] sm:$0xff]
    %v5636 = vld [vmem:[#allocation4 + $0xa8] sm:$0xff]
    %v5637 = vld [vmem:[#allocation4 + $0xb0] sm:$0xff]
    %v5638 = vld [vmem:[#allocation4 + $0xb8] sm:$0xff]
    %v5639 = vld [vmem:[#allocation4 + $0xc0] sm:$0xff]
    %v5640 = vld [vmem:[#allocation4 + $0xc8] sm:$0xff]
    %v5641 = vld [vmem:[#allocation4 + $0xd0] sm:$0xff]
    %v5642 = vld [vmem:[#allocation4 + $0xd8] sm:$0xff]
    %v5643 = vld [vmem:[#allocation4 + $0xe0] sm:$0xff]
    %v5644 = vld [vmem:[#allocation4 + $0xe8] sm:$0xff]
    %v5645 = vld [vmem:[#allocation4 + $0xf0] sm:$0xff]
    %v5646 = vld [vmem:[#allocation4 + $0xf8] sm:$0xff]
    %v5647 = vld [vmem:[#allocation4 + $0x100] sm:$0xff]
    %v5648 = vld [vmem:[#allocation4 + $0x108] sm:$0xff]
    %v5649 = vld [vmem:[#allocation4 + $0x110] sm:$0xff]
    %v5650 = vld [vmem:[#allocation4 + $0x118] sm:$0xff]
    %v5651 = vld [vmem:[#allocation4 + $0x120] sm:$0xff]
    %v5652 = vld [vmem:[#allocation4 + $0x128] sm:$0xff]
    %v5653 = vld [vmem:[#allocation4 + $0x130] sm:$0xff]
    %v5654 = vld [vmem:[#allocation4 + $0x138] sm:$0xff]
    %v5655 = vld [vmem:[#allocation4 + $0x140] sm:$0xff]
    %v5656 = vld [vmem:[#allocation4 + $0x148] sm:$0xff]
    %v5657 = vld [vmem:[#allocation4 + $0x150] sm:$0xff]
    %v5658 = vld [vmem:[#allocation4 + $0x158] sm:$0xff]
    %v5659 = vld [vmem:[#allocation4 + $0x160] sm:$0xff]
    %v5660 = vld [vmem:[#allocation4 + $0x168] sm:$0xff]
    %v5661 = vld [vmem:[#allocation4 + $0x170] sm:$0xff]
    %v5662 = vld [vmem:[#allocation4 + $0x178] sm:$0xff]
    %v5663 = vld [vmem:[#allocation4 + $0x180] sm:$0xff]
    %v5664 = vld [vmem:[#allocation4 + $0x188] sm:$0xff]
    %v5665 = vld [vmem:[#allocation4 + $0x190] sm:$0xff]
    %v5666 = vld [vmem:[#allocation4 + $0x198] sm:$0xff]
    %v5667 = vld [vmem:[#allocation4 + $0x1a0] sm:$0xff]
    %v5668 = vld [vmem:[#allocation4 + $0x1a8] sm:$0xff]
    %v5669 = vld [vmem:[#allocation4 + $0x1b0] sm:$0xff]
    %v5670 = vld [vmem:[#allocation4 + $0x1b8] sm:$0xff]
    %v5671 = vld [vmem:[#allocation4 + $0x1c0] sm:$0xff]
    %v5672 = vld [vmem:[#allocation4 + $0x1c8] sm:$0xff]
    %v5673 = vld [vmem:[#allocation4 + $0x1d0] sm:$0xff]
    %v5674 = vld [vmem:[#allocation4 + $0x1d8] sm:$0xff]
    %v5675 = vld [vmem:[#allocation4 + $0x1e0] sm:$0xff]
    %v5676 = vld [vmem:[#allocation4 + $0x1e8] sm:$0xff]
    %v5677 = vld [vmem:[#allocation4 + $0x1f0] sm:$0xff]
    %v5678 = vld [vmem:[#allocation4 + $0x1f8] sm:$0xff]
    %v5679 = vld [vmem:[#allocation4 + $0x200] sm:$0xff]
    %v5680 = vld [vmem:[#allocation4 + $0x208] sm:$0xff]
    %v5681 = vld [vmem:[#allocation4 + $0x210] sm:$0xff]
    %v5682 = vld [vmem:[#allocation4 + $0x218] sm:$0xff]
    %v5683 = vld [vmem:[#allocation4 + $0x220] sm:$0xff]
    %v5684 = vld [vmem:[#allocation4 + $0x228] sm:$0xff]
    %v5685 = vld [vmem:[#allocation4 + $0x230] sm:$0xff]
    %v5686 = vld [vmem:[#allocation4 + $0x238] sm:$0xff]
    %v5687 = vld [vmem:[#allocation4 + $0x240] sm:$0xff]
    %v5688 = vld [vmem:[#allocation4 + $0x248] sm:$0xff]
    %v5689 = vld [vmem:[#allocation4 + $0x250] sm:$0xff]
    %v5690 = vld [vmem:[#allocation4 + $0x258] sm:$0xff]
    %v5691 = vld [vmem:[#allocation4 + $0x260] sm:$0xff]
    %v5692 = vld [vmem:[#allocation4 + $0x268] sm:$0xff]
    %v5693 = vld [vmem:[#allocation4 + $0x270] sm:$0xff]
    %v5694 = vld [vmem:[#allocation4 + $0x278] sm:$0xff]
    %v5695 = vld [vmem:[#allocation4 + $0x280] sm:$0xff]
    %v5696 = vld [vmem:[#allocation4 + $0x288] sm:$0xff]
    %v5697 = vld [vmem:[#allocation4 + $0x290] sm:$0xff]
    %v5698 = vld [vmem:[#allocation4 + $0x298] sm:$0xff]
    %v5699 = vld [vmem:[#allocation4 + $0x2a0] sm:$0xff]
    %v5700 = vld [vmem:[#allocation4 + $0x2a8] sm:$0xff]
    %v5701 = vld [vmem:[#allocation4 + $0x2b0] sm:$0xff]
    %v5702 = vld [vmem:[#allocation4 + $0x2b8] sm:$0xff]
    %v5703 = vld [vmem:[#allocation4 + $0x2c0] sm:$0xff]
    %v5704 = vld [vmem:[#allocation4 + $0x2c8] sm:$0xff]
    %v5705 = vld [vmem:[#allocation4 + $0x2d0] sm:$0xff]
    %v5706 = vld [vmem:[#allocation4 + $0x2d8] sm:$0xff]
    %v5707 = vld [vmem:[#allocation4 + $0x2e0] sm:$0xff]
    %v5708 = vld [vmem:[#allocation4 + $0x2e8] sm:$0xff]
    %v5709 = vld [vmem:[#allocation4 + $0x2f0] sm:$0xff]
    %v5710 = vld [vmem:[#allocation4 + $0x2f8] sm:$0xff]
    %v5711 = vld [vmem:[#allocation4 + $0x300] sm:$0xff]
    %v5712 = vld [vmem:[#allocation4 + $0x308] sm:$0xff]
    %v5713 = vld [vmem:[#allocation4 + $0x310] sm:$0xff]
    %v5714 = vld [vmem:[#allocation4 + $0x318] sm:$0xff]
    %v5715 = vld [vmem:[#allocation4 + $0x320] sm:$0xff]
    %v5716 = vld [vmem:[#allocation4 + $0x328] sm:$0xff]
    %v5717 = vld [vmem:[#allocation4 + $0x330] sm:$0xff]
    %v5718 = vld [vmem:[#allocation4 + $0x338] sm:$0xff]
    %v5719 = vld [vmem:[#allocation4 + $0x340] sm:$0xff]
    %v5720 = vld [vmem:[#allocation4 + $0x348] sm:$0xff]
    %v5721 = vld [vmem:[#allocation4 + $0x350] sm:$0xff]
    %v5722 = vld [vmem:[#allocation4 + $0x358] sm:$0xff]
    %v5723 = vld [vmem:[#allocation4 + $0x360] sm:$0xff]
    %v5724 = vld [vmem:[#allocation4 + $0x368] sm:$0xff]
    %v5725 = vld [vmem:[#allocation4 + $0x370] sm:$0xff]
    %v5726 = vld [vmem:[#allocation4 + $0x378] sm:$0xff]
    %v5727 = vld [vmem:[#allocation4 + $0x380] sm:$0xff]
    %v5728 = vld [vmem:[#allocation4 + $0x388] sm:$0xff]
    %v5729 = vld [vmem:[#allocation4 + $0x390] sm:$0xff]
    %v5730 = vld [vmem:[#allocation4 + $0x398] sm:$0xff]
    %v5731 = vld [vmem:[#allocation4 + $0x3a0] sm:$0xff]
    %v5732 = vld [vmem:[#allocation4 + $0x3a8] sm:$0xff]
    %v5733 = vld [vmem:[#allocation4 + $0x3b0] sm:$0xff]
    %v5734 = vld [vmem:[#allocation4 + $0x3b8] sm:$0xff]
    %v5735 = vld [vmem:[#allocation4 + $0x3c0] sm:$0xff]
    %v5736 = vld [vmem:[#allocation4 + $0x3c8] sm:$0xff]
    %v5737 = vld [vmem:[#allocation4 + $0x3d0] sm:$0xff]
    %v5738 = vld [vmem:[#allocation4 + $0x3d8] sm:$0xff]
    %v5739 = vld [vmem:[#allocation4 + $0x3e0] sm:$0xff]
    %v5740 = vld [vmem:[#allocation4 + $0x3e8] sm:$0xff]
    %v5741 = vld [vmem:[#allocation4 + $0x3f0] sm:$0xff]
    %v5742 = vld [vmem:[#allocation4 + $0x3f8] sm:$0xff]
    %v5743 = vld [vmem:[#allocation4 + $0x400] sm:$0xff]
    %v5744 = vld [vmem:[#allocation4 + $0x408] sm:$0xff]
    %v5745 = vld [vmem:[#allocation4 + $0x410] sm:$0xff]
    %v5746 = vld [vmem:[#allocation4 + $0x418] sm:$0xff]
    %v5747 = vld [vmem:[#allocation4 + $0x420] sm:$0xff]
    %v5748 = vld [vmem:[#allocation4 + $0x428] sm:$0xff]
    %v5749 = vld [vmem:[#allocation4 + $0x430] sm:$0xff]
    %v5750 = vld [vmem:[#allocation4 + $0x438] sm:$0xff]
    %v5751 = vld [vmem:[#allocation4 + $0x440] sm:$0xff]
    %v5752 = vld [vmem:[#allocation4 + $0x448] sm:$0xff]
    %v5753 = vld [vmem:[#allocation4 + $0x450] sm:$0xff]
    %v5754 = vld [vmem:[#allocation4 + $0x458] sm:$0xff]
    %v5755 = vld [vmem:[#allocation4 + $0x460] sm:$0xff]
    %v5756 = vld [vmem:[#allocation4 + $0x468] sm:$0xff]
    %v5757 = vld [vmem:[#allocation4 + $0x470] sm:$0xff]
    %v5758 = vld [vmem:[#allocation4 + $0x478] sm:$0xff]
    %v5759 = vld [vmem:[#allocation4 + $0x480] sm:$0xff]
    %v5760 = vld [vmem:[#allocation4 + $0x488] sm:$0xff]
    %v5761 = vld [vmem:[#allocation4 + $0x490] sm:$0xff]
    %v5762 = vld [vmem:[#allocation4 + $0x498] sm:$0xff]
    %v5763 = vld [vmem:[#allocation4 + $0x4a0] sm:$0xff]
    %v5764 = vld [vmem:[#allocation4 + $0x4a8] sm:$0xff]
    %v5765 = vld [vmem:[#allocation4 + $0x4b0] sm:$0xff]
    %v5766 = vld [vmem:[#allocation4 + $0x4b8] sm:$0xff]
    %v5767 = vld [vmem:[#allocation4 + $0x4c0] sm:$0xff]
    %v5768 = vld [vmem:[#allocation4 + $0x4c8] sm:$0xff]
    %v5769 = vld [vmem:[#allocation4 + $0x4d0] sm:$0xff]
    %v5770 = vld [vmem:[#allocation4 + $0x4d8] sm:$0xff]
    %v5771 = vld [vmem:[#allocation4 + $0x4e0] sm:$0xff]
    %v5772 = vld [vmem:[#allocation4 + $0x4e8] sm:$0xff]
    %v5773 = vld [vmem:[#allocation4 + $0x4f0] sm:$0xff]
    %v5774 = vld [vmem:[#allocation4 + $0x4f8] sm:$0xff]
    %v5775 = vld [vmem:[#allocation4 + $0x500] sm:$0xff]
    %v5776 = vld [vmem:[#allocation4 + $0x508] sm:$0xff]
    %v5777 = vld [vmem:[#allocation4 + $0x510] sm:$0xff]
    %v5778 = vld [vmem:[#allocation4 + $0x518] sm:$0xff]
    %v5779 = vld [vmem:[#allocation4 + $0x520] sm:$0xff]
    %v5780 = vld [vmem:[#allocation4 + $0x528] sm:$0xff]
    %v5781 = vld [vmem:[#allocation4 + $0x530] sm:$0xff]
    %v5782 = vld [vmem:[#allocation4 + $0x538] sm:$0xff]
    %v5783 = vld [vmem:[#allocation4 + $0x540] sm:$0xff]
    %v5784 = vld [vmem:[#allocation4 + $0x548] sm:$0xff]
    %v5785 = vld [vmem:[#allocation4 + $0x550] sm:$0xff]
    %v5786 = vld [vmem:[#allocation4 + $0x558] sm:$0xff]
    %v5787 = vld [vmem:[#allocation4 + $0x560] sm:$0xff]
    %v5788 = vld [vmem:[#allocation4 + $0x568] sm:$0xff]
    %v5789 = vld [vmem:[#allocation4 + $0x570] sm:$0xff]
    %v5790 = vld [vmem:[#allocation4 + $0x578] sm:$0xff]
    %v5791 = vld [vmem:[#allocation4 + $0x580] sm:$0xff]
    %v5792 = vld [vmem:[#allocation4 + $0x588] sm:$0xff]
    %v5793 = vld [vmem:[#allocation4 + $0x590] sm:$0xff]
    %v5794 = vld [vmem:[#allocation4 + $0x598] sm:$0xff]
    %v5795 = vld [vmem:[#allocation4 + $0x5a0] sm:$0xff]
    %v5796 = vld [vmem:[#allocation4 + $0x5a8] sm:$0xff]
    %v5797 = vld [vmem:[#allocation4 + $0x5b0] sm:$0xff]
    %v5798 = vld [vmem:[#allocation4 + $0x5b8] sm:$0xff]
    %v5799 = vld [vmem:[#allocation4 + $0x5c0] sm:$0xff]
    %v5800 = vld [vmem:[#allocation4 + $0x5c8] sm:$0xff]
    %v5801 = vld [vmem:[#allocation4 + $0x5d0] sm:$0xff]
    %v5802 = vld [vmem:[#allocation4 + $0x5d8] sm:$0xff]
    %v5803 = vld [vmem:[#allocation4 + $0x5e0] sm:$0xff]
    %v5804 = vld [vmem:[#allocation4 + $0x5e8] sm:$0xff]
    %v5805 = vld [vmem:[#allocation4 + $0x5f0] sm:$0xff]
    %v5806 = vld [vmem:[#allocation4 + $0x5f8] sm:$0xff]
    %v5807 = vld [vmem:[#allocation4 + $0x600] sm:$0xff]
    %v5808 = vld [vmem:[#allocation4 + $0x608] sm:$0xff]
    %v5809 = vld [vmem:[#allocation4 + $0x610] sm:$0xff]
    %v5810 = vld [vmem:[#allocation4 + $0x618] sm:$0xff]
    %v5811 = vld [vmem:[#allocation4 + $0x620] sm:$0xff]
    %v5812 = vld [vmem:[#allocation4 + $0x628] sm:$0xff]
    %v5813 = vld [vmem:[#allocation4 + $0x630] sm:$0xff]
    %v5814 = vld [vmem:[#allocation4 + $0x638] sm:$0xff]
    %v5815 = vld [vmem:[#allocation4 + $0x640] sm:$0xff]
    %v5816 = vld [vmem:[#allocation4 + $0x648] sm:$0xff]
    %v5817 = vld [vmem:[#allocation4 + $0x650] sm:$0xff]
    %v5818 = vld [vmem:[#allocation4 + $0x658] sm:$0xff]
    %v5819 = vld [vmem:[#allocation4 + $0x660] sm:$0xff]
    %v5820 = vld [vmem:[#allocation4 + $0x668] sm:$0xff]
    %v5821 = vld [vmem:[#allocation4 + $0x670] sm:$0xff]
    %v5822 = vld [vmem:[#allocation4 + $0x678] sm:$0xff]
    %v5823 = vld [vmem:[#allocation4 + $0x680] sm:$0xff]
    %v5824 = vld [vmem:[#allocation4 + $0x688] sm:$0xff]
    %v5825 = vld [vmem:[#allocation4 + $0x690] sm:$0xff]
    %v5826 = vld [vmem:[#allocation4 + $0x698] sm:$0xff]
    %v5827 = vld [vmem:[#allocation4 + $0x6a0] sm:$0xff]
    %v5828 = vld [vmem:[#allocation4 + $0x6a8] sm:$0xff]
    %v5829 = vld [vmem:[#allocation4 + $0x6b0] sm:$0xff]
    %v5830 = vld [vmem:[#allocation4 + $0x6b8] sm:$0xff]
    %v5831 = vld [vmem:[#allocation4 + $0x6c0] sm:$0xff]
    %v5832 = vld [vmem:[#allocation4 + $0x6c8] sm:$0xff]
    %v5833 = vld [vmem:[#allocation4 + $0x6d0] sm:$0xff]
    %v5834 = vld [vmem:[#allocation4 + $0x6d8] sm:$0xff]
    %v5835 = vld [vmem:[#allocation4 + $0x6e0] sm:$0xff]
    %v5836 = vld [vmem:[#allocation4 + $0x6e8] sm:$0xff]
    %v5837 = vld [vmem:[#allocation4 + $0x6f0] sm:$0xff]
    %v5838 = vld [vmem:[#allocation4 + $0x6f8] sm:$0xff]
    %v5839 = vld [vmem:[#allocation4 + $0x700] sm:$0xff]
    %v5840 = vld [vmem:[#allocation4 + $0x708] sm:$0xff]
    %v5841 = vld [vmem:[#allocation4 + $0x710] sm:$0xff]
    %v5842 = vld [vmem:[#allocation4 + $0x718] sm:$0xff]
    %v5843 = vld [vmem:[#allocation4 + $0x720] sm:$0xff]
    %v5844 = vld [vmem:[#allocation4 + $0x728] sm:$0xff]
    %v5845 = vld [vmem:[#allocation4 + $0x730] sm:$0xff]
    %v5846 = vld [vmem:[#allocation4 + $0x738] sm:$0xff]
    %v5847 = vld [vmem:[#allocation4 + $0x740] sm:$0xff]
    %v5848 = vld [vmem:[#allocation4 + $0x748] sm:$0xff]
    %v5849 = vld [vmem:[#allocation4 + $0x750] sm:$0xff]
    %v5850 = vld [vmem:[#allocation4 + $0x758] sm:$0xff]
    %v5851 = vld [vmem:[#allocation4 + $0x760] sm:$0xff]
    %v5852 = vld [vmem:[#allocation4 + $0x768] sm:$0xff]
    %v5853 = vld [vmem:[#allocation4 + $0x770] sm:$0xff]
    %v5854 = vld [vmem:[#allocation4 + $0x778] sm:$0xff]
    %v5855 = vld [vmem:[#allocation4 + $0x780] sm:$0xff]
    %v5856 = vld [vmem:[#allocation4 + $0x788] sm:$0xff]
    %v5857 = vld [vmem:[#allocation4 + $0x790] sm:$0xff]
    %v5858 = vld [vmem:[#allocation4 + $0x798] sm:$0xff]
    %v5859 = vld [vmem:[#allocation4 + $0x7a0] sm:$0xff]
    %v5860 = vld [vmem:[#allocation4 + $0x7a8] sm:$0xff]
    %v5861 = vld [vmem:[#allocation4 + $0x7b0] sm:$0xff]
    %v5862 = vld [vmem:[#allocation4 + $0x7b8] sm:$0xff]
    %v5863 = vld [vmem:[#allocation4 + $0x7c0] sm:$0xff]
    %v5864 = vld [vmem:[#allocation4 + $0x7c8] sm:$0xff]
    %v5865 = vld [vmem:[#allocation4 + $0x7d0] sm:$0xff]
    %v5866 = vld [vmem:[#allocation4 + $0x7d8] sm:$0xff]
    %v5867 = vld [vmem:[#allocation4 + $0x7e0] sm:$0xff]
    %v5868 = vld [vmem:[#allocation4 + $0x7e8] sm:$0xff]
    %v5869 = vld [vmem:[#allocation4 + $0x7f0] sm:$0xff]
    %v5870 = vld [vmem:[#allocation4 + $0x7f8] sm:$0xff]
    %v5871 = vld [vmem:[#allocation4 + $0x800] sm:$0xff]
    %v5872 = vld [vmem:[#allocation4 + $0x808] sm:$0xff]
    %v5873 = vld [vmem:[#allocation4 + $0x810] sm:$0xff]
    %v5874 = vld [vmem:[#allocation4 + $0x818] sm:$0xff]
    %v5875 = vld [vmem:[#allocation4 + $0x820] sm:$0xff]
    %v5876 = vld [vmem:[#allocation4 + $0x828] sm:$0xff]
    %v5877 = vld [vmem:[#allocation4 + $0x830] sm:$0xff]
    %v5878 = vld [vmem:[#allocation4 + $0x838] sm:$0xff]
    %v5879 = vld [vmem:[#allocation4 + $0x840] sm:$0xff]
    %v5880 = vld [vmem:[#allocation4 + $0x848] sm:$0xff]
    %v5881 = vld [vmem:[#allocation4 + $0x850] sm:$0xff]
    %v5882 = vld [vmem:[#allocation4 + $0x858] sm:$0xff]
    %v5883 = vld [vmem:[#allocation4 + $0x860] sm:$0xff]
    %v5884 = vld [vmem:[#allocation4 + $0x868] sm:$0xff]
    %v5885 = vld [vmem:[#allocation4 + $0x870] sm:$0xff]
    %v5886 = vld [vmem:[#allocation4 + $0x878] sm:$0xff]
    %v5887 = vld [vmem:[#allocation4 + $0x880] sm:$0xff]
    %v5888 = vld [vmem:[#allocation4 + $0x888] sm:$0xff]
    %v5889 = vld [vmem:[#allocation4 + $0x890] sm:$0xff]
    %v5890 = vld [vmem:[#allocation4 + $0x898] sm:$0xff]
    %v5891 = vld [vmem:[#allocation4 + $0x8a0] sm:$0xff]
    %v5892 = vld [vmem:[#allocation4 + $0x8a8] sm:$0xff]
    %v5893 = vld [vmem:[#allocation4 + $0x8b0] sm:$0xff]
    %v5894 = vld [vmem:[#allocation4 + $0x8b8] sm:$0xff]
    %v5895 = vld [vmem:[#allocation4 + $0x8c0] sm:$0xff]
    %v5896 = vld [vmem:[#allocation4 + $0x8c8] sm:$0xff]
    %v5897 = vld [vmem:[#allocation4 + $0x8d0] sm:$0xff]
    %v5898 = vld [vmem:[#allocation4 + $0x8d8] sm:$0xff]
    %v5899 = vld [vmem:[#allocation4 + $0x8e0] sm:$0xff]
    %v5900 = vld [vmem:[#allocation4 + $0x8e8] sm:$0xff]
    %v5901 = vld [vmem:[#allocation4 + $0x8f0] sm:$0xff]
    %v5902 = vld [vmem:[#allocation4 + $0x8f8] sm:$0xff]
    %v5903 = vld [vmem:[#allocation4 + $0x900] sm:$0xff]
    %v5904 = vld [vmem:[#allocation4 + $0x908] sm:$0xff]
    %v5905 = vld [vmem:[#allocation4 + $0x910] sm:$0xff]
    %v5906 = vld [vmem:[#allocation4 + $0x918] sm:$0xff]
    %v5907 = vld [vmem:[#allocation4 + $0x920] sm:$0xff]
    %v5908 = vld [vmem:[#allocation4 + $0x928] sm:$0xff]
    %v5909 = vld [vmem:[#allocation4 + $0x930] sm:$0xff]
    %v5910 = vld [vmem:[#allocation4 + $0x938] sm:$0xff]
    %v5911 = vld [vmem:[#allocation4 + $0x940] sm:$0xff]
    %v5912 = vld [vmem:[#allocation4 + $0x948] sm:$0xff]
    %v5913 = vld [vmem:[#allocation4 + $0x950] sm:$0xff]
    %v5914 = vld [vmem:[#allocation4 + $0x958] sm:$0xff]
    %v5915 = vld [vmem:[#allocation4 + $0x960] sm:$0xff]
    %v5916 = vld [vmem:[#allocation4 + $0x968] sm:$0xff]
    %v5917 = vld [vmem:[#allocation4 + $0x970] sm:$0xff]
    %v5918 = vld [vmem:[#allocation4 + $0x978] sm:$0xff]
    %v5919 = vld [vmem:[#allocation4 + $0x980] sm:$0xff]
    %v5920 = vld [vmem:[#allocation4 + $0x988] sm:$0xff]
    %v5921 = vld [vmem:[#allocation4 + $0x990] sm:$0xff]
    %v5922 = vld [vmem:[#allocation4 + $0x998] sm:$0xff]
    %v5923 = vld [vmem:[#allocation4 + $0x9a0] sm:$0xff]
    %v5924 = vld [vmem:[#allocation4 + $0x9a8] sm:$0xff]
    %v5925 = vld [vmem:[#allocation4 + $0x9b0] sm:$0xff]
    %v5926 = vld [vmem:[#allocation4 + $0x9b8] sm:$0xff]
    %v5927 = vld [vmem:[#allocation4 + $0x9c0] sm:$0xff]
    %v5928 = vld [vmem:[#allocation4 + $0x9c8] sm:$0xff]
    %v5929 = vld [vmem:[#allocation4 + $0x9d0] sm:$0xff]
    %v5930 = vld [vmem:[#allocation4 + $0x9d8] sm:$0xff]
    %v5931 = vld [vmem:[#allocation4 + $0x9e0] sm:$0xff]
    %v5932 = vld [vmem:[#allocation4 + $0x9e8] sm:$0xff]
    %v5933 = vld [vmem:[#allocation4 + $0x9f0] sm:$0xff]
    %v5934 = vld [vmem:[#allocation4 + $0x9f8] sm:$0xff]
    %v5935 = vld [vmem:[#allocation4 + $0xa00] sm:$0xff]
    %v5936 = vld [vmem:[#allocation4 + $0xa08] sm:$0xff]
    %v5937 = vld [vmem:[#allocation4 + $0xa10] sm:$0xff]
    %v5938 = vld [vmem:[#allocation4 + $0xa18] sm:$0xff]
    %v5939 = vld [vmem:[#allocation4 + $0xa20] sm:$0xff]
    %v5940 = vld [vmem:[#allocation4 + $0xa28] sm:$0xff]
    %v5941 = vld [vmem:[#allocation4 + $0xa30] sm:$0xff]
    %v5942 = vld [vmem:[#allocation4 + $0xa38] sm:$0xff]
    %v5943 = vld [vmem:[#allocation4 + $0xa40] sm:$0xff]
    %v5944 = vld [vmem:[#allocation4 + $0xa48] sm:$0xff]
    %v5945 = vld [vmem:[#allocation4 + $0xa50] sm:$0xff]
    %v5946 = vld [vmem:[#allocation4 + $0xa58] sm:$0xff]
    %v5947 = vld [vmem:[#allocation4 + $0xa60] sm:$0xff]
    %v5948 = vld [vmem:[#allocation4 + $0xa68] sm:$0xff]
    %v5949 = vld [vmem:[#allocation4 + $0xa70] sm:$0xff]
    %v5950 = vld [vmem:[#allocation4 + $0xa78] sm:$0xff]
    %v5951 = vld [vmem:[#allocation4 + $0xa80] sm:$0xff]
    %v5952 = vld [vmem:[#allocation4 + $0xa88] sm:$0xff]
    %v5953 = vld [vmem:[#allocation4 + $0xa90] sm:$0xff]
    %v5954 = vld [vmem:[#allocation4 + $0xa98] sm:$0xff]
    %v5955 = vld [vmem:[#allocation4 + $0xaa0] sm:$0xff]
    %v5956 = vld [vmem:[#allocation4 + $0xaa8] sm:$0xff]
    %v5957 = vld [vmem:[#allocation4 + $0xab0] sm:$0xff]
    %v5958 = vld [vmem:[#allocation4 + $0xab8] sm:$0xff]
    %v5959 = vld [vmem:[#allocation4 + $0xac0] sm:$0xff]
    %v5960 = vld [vmem:[#allocation4 + $0xac8] sm:$0xff]
    %v5961 = vld [vmem:[#allocation4 + $0xad0] sm:$0xff]
    %v5962 = vld [vmem:[#allocation4 + $0xad8] sm:$0xff]
    %v5963 = vld [vmem:[#allocation4 + $0xae0] sm:$0xff]
    %v5964 = vld [vmem:[#allocation4 + $0xae8] sm:$0xff]
    %v5965 = vld [vmem:[#allocation4 + $0xaf0] sm:$0xff]
    %v5966 = vld [vmem:[#allocation4 + $0xaf8] sm:$0xff]
    %v5967 = vld [vmem:[#allocation4 + $0xb00] sm:$0xff]
    %v5968 = vld [vmem:[#allocation4 + $0xb08] sm:$0xff]
    %v5969 = vld [vmem:[#allocation4 + $0xb10] sm:$0xff]
    %v5970 = vld [vmem:[#allocation4 + $0xb18] sm:$0xff]
    %v5971 = vld [vmem:[#allocation4 + $0xb20] sm:$0xff]
    %v5972 = vld [vmem:[#allocation4 + $0xb28] sm:$0xff]
    %v5973 = vld [vmem:[#allocation4 + $0xb30] sm:$0xff]
    %v5974 = vld [vmem:[#allocation4 + $0xb38] sm:$0xff]
    %v5975 = vld [vmem:[#allocation4 + $0xb40] sm:$0xff]
    %v5976 = vld [vmem:[#allocation4 + $0xb48] sm:$0xff]
    %v5977 = vld [vmem:[#allocation4 + $0xb50] sm:$0xff]
    %v5978 = vld [vmem:[#allocation4 + $0xb58] sm:$0xff]
    %v5979 = vld [vmem:[#allocation4 + $0xb60] sm:$0xff]
    %v5980 = vld [vmem:[#allocation4 + $0xb68] sm:$0xff]
    %v5981 = vld [vmem:[#allocation4 + $0xb70] sm:$0xff]
    %v5982 = vld [vmem:[#allocation4 + $0xb78] sm:$0xff]
    %v5983 = vld [vmem:[#allocation4 + $0xb80] sm:$0xff]
    %v5984 = vld [vmem:[#allocation4 + $0xb88] sm:$0xff]
    %v5985 = vld [vmem:[#allocation4 + $0xb90] sm:$0xff]
    %v5986 = vld [vmem:[#allocation4 + $0xb98] sm:$0xff]
    %v5987 = vld [vmem:[#allocation4 + $0xba0] sm:$0xff]
    %v5988 = vld [vmem:[#allocation4 + $0xba8] sm:$0xff]
    %v5989 = vld [vmem:[#allocation4 + $0xbb0] sm:$0xff]
    %v5990 = vld [vmem:[#allocation4 + $0xbb8] sm:$0xff]
    %v5991 = vld [vmem:[#allocation4 + $0xbc0] sm:$0xff]
    %v5992 = vld [vmem:[#allocation4 + $0xbc8] sm:$0xff]
    %v5993 = vld [vmem:[#allocation4 + $0xbd0] sm:$0xff]
    %v5994 = vld [vmem:[#allocation4 + $0xbd8] sm:$0xff]
    %v5995 = vld [vmem:[#allocation4 + $0xbe0] sm:$0xff]
    %v5996 = vld [vmem:[#allocation4 + $0xbe8] sm:$0xff]
    %v5997 = vld [vmem:[#allocation4 + $0xbf0] sm:$0xff]
    %v5998 = vld [vmem:[#allocation4 + $0xbf8] sm:$0xff]
    %v5999 = vld [vmem:[#allocation4 + $0xc00] sm:$0xff]
    %v6000 = vld [vmem:[#allocation4 + $0xc08] sm:$0xff]
    %v6001 = vld [vmem:[#allocation4 + $0xc10] sm:$0xff]
    %v6002 = vld [vmem:[#allocation4 + $0xc18] sm:$0xff]
    %v6003 = vld [vmem:[#allocation4 + $0xc20] sm:$0xff]
    %v6004 = vld [vmem:[#allocation4 + $0xc28] sm:$0xff]
    %v6005 = vld [vmem:[#allocation4 + $0xc30] sm:$0xff]
    %v6006 = vld [vmem:[#allocation4 + $0xc38] sm:$0xff]
    %v6007 = vld [vmem:[#allocation4 + $0xc40] sm:$0xff]
    %v6008 = vld [vmem:[#allocation4 + $0xc48] sm:$0xff]
    %v6009 = vld [vmem:[#allocation4 + $0xc50] sm:$0xff]
    %v6010 = vld [vmem:[#allocation4 + $0xc58] sm:$0xff]
    %v6011 = vld [vmem:[#allocation4 + $0xc60] sm:$0xff]
    %v6012 = vld [vmem:[#allocation4 + $0xc68] sm:$0xff]
    %v6013 = vld [vmem:[#allocation4 + $0xc70] sm:$0xff]
    %v6014 = vld [vmem:[#allocation4 + $0xc78] sm:$0xff]
    %v6015 = vld [vmem:[#allocation4 + $0xc80] sm:$0xff]
    %v6016 = vld [vmem:[#allocation4 + $0xc88] sm:$0xff]
    %v6017 = vld [vmem:[#allocation4 + $0xc90] sm:$0xff]
    %v6018 = vld [vmem:[#allocation4 + $0xc98] sm:$0xff]
    %v6019 = vld [vmem:[#allocation4 + $0xca0] sm:$0xff]
    %v6020 = vld [vmem:[#allocation4 + $0xca8] sm:$0xff]
    %v6021 = vld [vmem:[#allocation4 + $0xcb0] sm:$0xff]
    %v6022 = vld [vmem:[#allocation4 + $0xcb8] sm:$0xff]
    %v6023 = vld [vmem:[#allocation4 + $0xcc0] sm:$0xff]
    %v6024 = vld [vmem:[#allocation4 + $0xcc8] sm:$0xff]
    %v6025 = vld [vmem:[#allocation4 + $0xcd0] sm:$0xff]
    %v6026 = vld [vmem:[#allocation4 + $0xcd8] sm:$0xff]
    %v6027 = vld [vmem:[#allocation4 + $0xce0] sm:$0xff]
    %v6028 = vld [vmem:[#allocation4 + $0xce8] sm:$0xff]
    %v6029 = vld [vmem:[#allocation4 + $0xcf0] sm:$0xff]
    %v6030 = vld [vmem:[#allocation4 + $0xcf8] sm:$0xff]
    %v6031 = vld [vmem:[#allocation4 + $0xd00] sm:$0xff]
    %v6032 = vld [vmem:[#allocation4 + $0xd08] sm:$0xff]
    %v6033 = vld [vmem:[#allocation4 + $0xd10] sm:$0xff]
    %v6034 = vld [vmem:[#allocation4 + $0xd18] sm:$0xff]
    %v6035 = vld [vmem:[#allocation4 + $0xd20] sm:$0xff]
    %v6036 = vld [vmem:[#allocation4 + $0xd28] sm:$0xff]
    %v6037 = vld [vmem:[#allocation4 + $0xd30] sm:$0xff]
    %v6038 = vld [vmem:[#allocation4 + $0xd38] sm:$0xff]
    %v6039 = vld [vmem:[#allocation4 + $0xd40] sm:$0xff]
    %v6040 = vld [vmem:[#allocation4 + $0xd48] sm:$0xff]
    %v6041 = vld [vmem:[#allocation4 + $0xd50] sm:$0xff]
    %v6042 = vld [vmem:[#allocation4 + $0xd58] sm:$0xff]
    %v6043 = vld [vmem:[#allocation4 + $0xd60] sm:$0xff]
    %v6044 = vld [vmem:[#allocation4 + $0xd68] sm:$0xff]
    %v6045 = vld [vmem:[#allocation4 + $0xd70] sm:$0xff]
    %v6046 = vld [vmem:[#allocation4 + $0xd78] sm:$0xff]
    %v6047 = vld [vmem:[#allocation4 + $0xd80] sm:$0xff]
    %v6048 = vld [vmem:[#allocation4 + $0xd88] sm:$0xff]
    %v6049 = vld [vmem:[#allocation4 + $0xd90] sm:$0xff]
    %v6050 = vld [vmem:[#allocation4 + $0xd98] sm:$0xff]
    %v6051 = vld [vmem:[#allocation4 + $0xda0] sm:$0xff]
    %v6052 = vld [vmem:[#allocation4 + $0xda8] sm:$0xff]
    %v6053 = vld [vmem:[#allocation4 + $0xdb0] sm:$0xff]
    %v6054 = vld [vmem:[#allocation4 + $0xdb8] sm:$0xff]
    %v6055 = vld [vmem:[#allocation4 + $0xdc0] sm:$0xff]
    %v6056 = vld [vmem:[#allocation4 + $0xdc8] sm:$0xff]
    %v6057 = vld [vmem:[#allocation4 + $0xdd0] sm:$0xff]
    %v6058 = vld [vmem:[#allocation4 + $0xdd8] sm:$0xff]
    %v6059 = vld [vmem:[#allocation4 + $0xde0] sm:$0xff]
    %v6060 = vld [vmem:[#allocation4 + $0xde8] sm:$0xff]
    %v6061 = vld [vmem:[#allocation4 + $0xdf0] sm:$0xff]
    %v6062 = vld [vmem:[#allocation4 + $0xdf8] sm:$0xff]
    %v6063 = vld [vmem:[#allocation4 + $0xe00] sm:$0xff]
    %v6064 = vld [vmem:[#allocation4 + $0xe08] sm:$0xff]
    %v6065 = vld [vmem:[#allocation4 + $0xe10] sm:$0xff]
    %v6066 = vld [vmem:[#allocation4 + $0xe18] sm:$0xff]
    %v6067 = vld [vmem:[#allocation4 + $0xe20] sm:$0xff]
    %v6068 = vld [vmem:[#allocation4 + $0xe28] sm:$0xff]
    %v6069 = vld [vmem:[#allocation4 + $0xe30] sm:$0xff]
    %v6070 = vld [vmem:[#allocation4 + $0xe38] sm:$0xff]
    %v6071 = vld [vmem:[#allocation4 + $0xe40] sm:$0xff]
    %v6072 = vld [vmem:[#allocation4 + $0xe48] sm:$0xff]
    %v6073 = vld [vmem:[#allocation4 + $0xe50] sm:$0xff]
    %v6074 = vld [vmem:[#allocation4 + $0xe58] sm:$0xff]
    %v6075 = vld [vmem:[#allocation4 + $0xe60] sm:$0xff]
    %v6076 = vld [vmem:[#allocation4 + $0xe68] sm:$0xff]
    %v6077 = vld [vmem:[#allocation4 + $0xe70] sm:$0xff]
    %v6078 = vld [vmem:[#allocation4 + $0xe78] sm:$0xff]
    %v6079 = vld [vmem:[#allocation4 + $0xe80] sm:$0xff]
    %v6080 = vld [vmem:[#allocation4 + $0xe88] sm:$0xff]
    %v6081 = vld [vmem:[#allocation4 + $0xe90] sm:$0xff]
    %v6082 = vld [vmem:[#allocation4 + $0xe98] sm:$0xff]
    %v6083 = vld [vmem:[#allocation4 + $0xea0] sm:$0xff]
    %v6084 = vld [vmem:[#allocation4 + $0xea8] sm:$0xff]
    %v6085 = vld [vmem:[#allocation4 + $0xeb0] sm:$0xff]
    %v6086 = vld [vmem:[#allocation4 + $0xeb8] sm:$0xff]
    %v6087 = vld [vmem:[#allocation4 + $0xec0] sm:$0xff]
    %v6088 = vld [vmem:[#allocation4 + $0xec8] sm:$0xff]
    %v6089 = vld [vmem:[#allocation4 + $0xed0] sm:$0xff]
    %v6090 = vld [vmem:[#allocation4 + $0xed8] sm:$0xff]
    %v6091 = vld [vmem:[#allocation4 + $0xee0] sm:$0xff]
    %v6092 = vld [vmem:[#allocation4 + $0xee8] sm:$0xff]
    %v6093 = vld [vmem:[#allocation4 + $0xef0] sm:$0xff]
    %v6094 = vld [vmem:[#allocation4 + $0xef8] sm:$0xff]
    %v6095 = vld [vmem:[#allocation4 + $0xf00] sm:$0xff]
    %v6096 = vld [vmem:[#allocation4 + $0xf08] sm:$0xff]
    %v6097 = vld [vmem:[#allocation4 + $0xf10] sm:$0xff]
    %v6098 = vld [vmem:[#allocation4 + $0xf18] sm:$0xff]
    %v6099 = vld [vmem:[#allocation4 + $0xf20] sm:$0xff]
    %v6100 = vld [vmem:[#allocation4 + $0xf28] sm:$0xff]
    %v6101 = vld [vmem:[#allocation4 + $0xf30] sm:$0xff]
    %v6102 = vld [vmem:[#allocation4 + $0xf38] sm:$0xff]
    %v6103 = vld [vmem:[#allocation4 + $0xf40] sm:$0xff]
    %v6104 = vld [vmem:[#allocation4 + $0xf48] sm:$0xff]
    %v6105 = vld [vmem:[#allocation4 + $0xf50] sm:$0xff]
    %v6106 = vld [vmem:[#allocation4 + $0xf58] sm:$0xff]
    %v6107 = vld [vmem:[#allocation4 + $0xf60] sm:$0xff]
    %v6108 = vld [vmem:[#allocation4 + $0xf68] sm:$0xff]
    %v6109 = vld [vmem:[#allocation4 + $0xf70] sm:$0xff]
    %v6110 = vld [vmem:[#allocation4 + $0xf78] sm:$0xff]
    %v6111 = vld [vmem:[#allocation4 + $0xf80] sm:$0xff]
    %v6112 = vld [vmem:[#allocation4 + $0xf88] sm:$0xff]
    %v6113 = vld [vmem:[#allocation4 + $0xf90] sm:$0xff]
    %v6114 = vld [vmem:[#allocation4 + $0xf98] sm:$0xff]
    %v6115 = vld [vmem:[#allocation4 + $0xfa0] sm:$0xff]
    %v6116 = vld [vmem:[#allocation4 + $0xfa8] sm:$0xff]
    %v6117 = vld [vmem:[#allocation4 + $0xfb0] sm:$0xff]
    %v6118 = vld [vmem:[#allocation4 + $0xfb8] sm:$0xff]
    %v6119 = vld [vmem:[#allocation4 + $0xfc0] sm:$0xff]
    %v6120 = vld [vmem:[#allocation4 + $0xfc8] sm:$0xff]
    %v6121 = vld [vmem:[#allocation4 + $0xfd0] sm:$0xff]
    %v6122 = vld [vmem:[#allocation4 + $0xfd8] sm:$0xff]
    %v6123 = vld [vmem:[#allocation4 + $0xfe0] sm:$0xff]
    %v6124 = vld [vmem:[#allocation4 + $0xfe8] sm:$0xff]
    %v6125 = vld [vmem:[#allocation4 + $0xff0] sm:$0xff]
    %v6126 = vld [vmem:[#allocation4 + $0xff8] sm:$0xff]
    %v6127 = vld [vmem:[#allocation4 + $0x1000] sm:$0xff]
    %v6128 = vld [vmem:[#allocation4 + $0x1008] sm:$0xff]
    %v6129 = vld [vmem:[#allocation4 + $0x1010] sm:$0xff]
    %v6130 = vld [vmem:[#allocation4 + $0x1018] sm:$0xff]
    %v6131 = vld [vmem:[#allocation4 + $0x1020] sm:$0xff]
    %v6132 = vld [vmem:[#allocation4 + $0x1028] sm:$0xff]
    %v6133 = vld [vmem:[#allocation4 + $0x1030] sm:$0xff]
    %v6134 = vld [vmem:[#allocation4 + $0x1038] sm:$0xff]
    %v6135 = vld [vmem:[#allocation4 + $0x1040] sm:$0xff]
    %v6136 = vld [vmem:[#allocation4 + $0x1048] sm:$0xff]
    %v6137 = vld [vmem:[#allocation4 + $0x1050] sm:$0xff]
    %v6138 = vld [vmem:[#allocation4 + $0x1058] sm:$0xff]
    %v6139 = vld [vmem:[#allocation4 + $0x1060] sm:$0xff]
    %v6140 = vld [vmem:[#allocation4 + $0x1068] sm:$0xff]
    %v6141 = vld [vmem:[#allocation4 + $0x1070] sm:$0xff]
    %v6142 = vld [vmem:[#allocation4 + $0x1078] sm:$0xff]
    %v6143 = vld [vmem:[#allocation4 + $0x1080] sm:$0xff]
    %v6144 = vld [vmem:[#allocation4 + $0x1088] sm:$0xff]
    %v6145 = vld [vmem:[#allocation4 + $0x1090] sm:$0xff]
    %v6146 = vld [vmem:[#allocation4 + $0x1098] sm:$0xff]
    %v6147 = vld [vmem:[#allocation4 + $0x10a0] sm:$0xff]
    %v6148 = vld [vmem:[#allocation4 + $0x10a8] sm:$0xff]
    %v6149 = vld [vmem:[#allocation4 + $0x10b0] sm:$0xff]
    %v6150 = vld [vmem:[#allocation4 + $0x10b8] sm:$0xff]
    %v6151 = vld [vmem:[#allocation4 + $0x10c0] sm:$0xff]
    %v6152 = vld [vmem:[#allocation4 + $0x10c8] sm:$0xff]
    %v6153 = vld [vmem:[#allocation4 + $0x10d0] sm:$0xff]
    %v6154 = vld [vmem:[#allocation4 + $0x10d8] sm:$0xff]
    %v6155 = vld [vmem:[#allocation4 + $0x10e0] sm:$0xff]
    %v6156 = vld [vmem:[#allocation4 + $0x10e8] sm:$0xff]
    %v6157 = vld [vmem:[#allocation4 + $0x10f0] sm:$0xff]
    %v6158 = vld [vmem:[#allocation4 + $0x10f8] sm:$0xff]
    %v6159 = vld [vmem:[#allocation4 + $0x1100] sm:$0xff]
    %v6160 = vld [vmem:[#allocation4 + $0x1108] sm:$0xff]
    %v6161 = vld [vmem:[#allocation4 + $0x1110] sm:$0xff]
    %v6162 = vld [vmem:[#allocation4 + $0x1118] sm:$0xff]
    %v6163 = vld [vmem:[#allocation4 + $0x1120] sm:$0xff]
    %v6164 = vld [vmem:[#allocation4 + $0x1128] sm:$0xff]
    %v6165 = vld [vmem:[#allocation4 + $0x1130] sm:$0xff]
    %v6166 = vld [vmem:[#allocation4 + $0x1138] sm:$0xff]
    %v6167 = vld [vmem:[#allocation4 + $0x1140] sm:$0xff]
    %v6168 = vld [vmem:[#allocation4 + $0x1148] sm:$0xff]
    %v6169 = vld [vmem:[#allocation4 + $0x1150] sm:$0xff]
    %v6170 = vld [vmem:[#allocation4 + $0x1158] sm:$0xff]
    %v6171 = vld [vmem:[#allocation4 + $0x1160] sm:$0xff]
    %v6172 = vld [vmem:[#allocation4 + $0x1168] sm:$0xff]
    %v6173 = vld [vmem:[#allocation4 + $0x1170] sm:$0xff]
    %v6174 = vld [vmem:[#allocation4 + $0x1178] sm:$0xff]
    %v6175 = vld [vmem:[#allocation4 + $0x1180] sm:$0xff]
    %v6176 = vld [vmem:[#allocation4 + $0x1188] sm:$0xff]
    %v6177 = vld [vmem:[#allocation4 + $0x1190] sm:$0xff]
    %v6178 = vld [vmem:[#allocation4 + $0x1198] sm:$0xff]
    %v6179 = vld [vmem:[#allocation4 + $0x11a0] sm:$0xff]
    %v6180 = vld [vmem:[#allocation4 + $0x11a8] sm:$0xff]
    %v6181 = vld [vmem:[#allocation4 + $0x11b0] sm:$0xff]
    %v6182 = vld [vmem:[#allocation4 + $0x11b8] sm:$0xff]
    %v6183 = vld [vmem:[#allocation4 + $0x11c0] sm:$0xff]
    %v6184 = vld [vmem:[#allocation4 + $0x11c8] sm:$0xff]
    %v6185 = vld [vmem:[#allocation4 + $0x11d0] sm:$0xff]
    %v6186 = vld [vmem:[#allocation4 + $0x11d8] sm:$0xff]
    %v6187 = vld [vmem:[#allocation4 + $0x11e0] sm:$0xff]
    %v6188 = vld [vmem:[#allocation4 + $0x11e8] sm:$0xff]
    %v6189 = vld [vmem:[#allocation4 + $0x11f0] sm:$0xff]
    %v6190 = vld [vmem:[#allocation4 + $0x11f8] sm:$0xff]
    %v6191 = vld [vmem:[#allocation5] sm:$0xff]
    %v6192 = vld [vmem:[#allocation5 + $0x8] sm:$0xff]
    %v6193 = vld [vmem:[#allocation5 + $0x10] sm:$0xff]
    %v6194 = vld [vmem:[#allocation5 + $0x18] sm:$0xff]
    %v6195 = vld [vmem:[#allocation5 + $0x20] sm:$0xff]
    %v6196 = vld [vmem:[#allocation5 + $0x28] sm:$0xff]
    %v6197 = vld [vmem:[#allocation5 + $0x30] sm:$0xff]
    %v6198 = vld [vmem:[#allocation5 + $0x38] sm:$0xff]
    %v6199 = vld [vmem:[#allocation5 + $0x40] sm:$0xff]
    %v6200 = vld [vmem:[#allocation5 + $0x48] sm:$0xff]
    %v6201 = vld [vmem:[#allocation5 + $0x50] sm:$0xff]
    %v6202 = vld [vmem:[#allocation5 + $0x58] sm:$0xff]
    %v6203 = vld [vmem:[#allocation5 + $0x60] sm:$0xff]
    %v6204 = vld [vmem:[#allocation5 + $0x68] sm:$0xff]
    %v6205 = vld [vmem:[#allocation5 + $0x70] sm:$0xff]
    %v6206 = vld [vmem:[#allocation5 + $0x78] sm:$0xff]
    %v6207 = vld [vmem:[#allocation5 + $0x80] sm:$0xff]
    %v6208 = vld [vmem:[#allocation5 + $0x88] sm:$0xff]
    %v6209 = vld [vmem:[#allocation5 + $0x90] sm:$0xff]
    %v6210 = vld [vmem:[#allocation5 + $0x98] sm:$0xff]
    %v6211 = vld [vmem:[#allocation5 + $0xa0] sm:$0xff]
    %v6212 = vld [vmem:[#allocation5 + $0xa8] sm:$0xff]
    %v6213 = vld [vmem:[#allocation5 + $0xb0] sm:$0xff]
    %v6214 = vld [vmem:[#allocation5 + $0xb8] sm:$0xff]
    %v6215 = vld [vmem:[#allocation5 + $0xc0] sm:$0xff]
    %v6216 = vld [vmem:[#allocation5 + $0xc8] sm:$0xff]
    %v6217 = vld [vmem:[#allocation5 + $0xd0] sm:$0xff]
    %v6218 = vld [vmem:[#allocation5 + $0xd8] sm:$0xff]
    %v6219 = vld [vmem:[#allocation5 + $0xe0] sm:$0xff]
    %v6220 = vld [vmem:[#allocation5 + $0xe8] sm:$0xff]
    %v6221 = vld [vmem:[#allocation5 + $0xf0] sm:$0xff]
    %v6222 = vld [vmem:[#allocation5 + $0xf8] sm:$0xff]
    %v6223 = vld [vmem:[#allocation5 + $0x100] sm:$0xff]
    %v6224 = vld [vmem:[#allocation5 + $0x108] sm:$0xff]
    %v6225 = vld [vmem:[#allocation5 + $0x110] sm:$0xff]
    %v6226 = vld [vmem:[#allocation5 + $0x118] sm:$0xff]
    %v6227 = vld [vmem:[#allocation5 + $0x120] sm:$0xff]
    %v6228 = vld [vmem:[#allocation5 + $0x128] sm:$0xff]
    %v6229 = vld [vmem:[#allocation5 + $0x130] sm:$0xff]
    %v6230 = vld [vmem:[#allocation5 + $0x138] sm:$0xff]
    %v6231 = vld [vmem:[#allocation5 + $0x140] sm:$0xff]
    %v6232 = vld [vmem:[#allocation5 + $0x148] sm:$0xff]
    %v6233 = vld [vmem:[#allocation5 + $0x150] sm:$0xff]
    %v6234 = vld [vmem:[#allocation5 + $0x158] sm:$0xff]
    %v6235 = vld [vmem:[#allocation5 + $0x160] sm:$0xff]
    %v6236 = vld [vmem:[#allocation5 + $0x168] sm:$0xff]
    %v6237 = vld [vmem:[#allocation5 + $0x170] sm:$0xff]
    %v6238 = vld [vmem:[#allocation5 + $0x178] sm:$0xff]
    %v6239 = vld [vmem:[#allocation5 + $0x180] sm:$0xff]
    %v6240 = vld [vmem:[#allocation5 + $0x188] sm:$0xff]
    %v6241 = vld [vmem:[#allocation5 + $0x190] sm:$0xff]
    %v6242 = vld [vmem:[#allocation5 + $0x198] sm:$0xff]
    %v6243 = vld [vmem:[#allocation5 + $0x1a0] sm:$0xff]
    %v6244 = vld [vmem:[#allocation5 + $0x1a8] sm:$0xff]
    %v6245 = vld [vmem:[#allocation5 + $0x1b0] sm:$0xff]
    %v6246 = vld [vmem:[#allocation5 + $0x1b8] sm:$0xff]
    %v6247 = vld [vmem:[#allocation5 + $0x1c0] sm:$0xff]
    %v6248 = vld [vmem:[#allocation5 + $0x1c8] sm:$0xff]
    %v6249 = vld [vmem:[#allocation5 + $0x1d0] sm:$0xff]
    %v6250 = vld [vmem:[#allocation5 + $0x1d8] sm:$0xff]
    %v6251 = vld [vmem:[#allocation5 + $0x1e0] sm:$0xff]
    %v6252 = vld [vmem:[#allocation5 + $0x1e8] sm:$0xff]
    %v6253 = vld [vmem:[#allocation5 + $0x1f0] sm:$0xff]
    %v6254 = vld [vmem:[#allocation5 + $0x1f8] sm:$0xff]
    %v6255 = vld [vmem:[#allocation5 + $0x200] sm:$0xff]
    %v6256 = vld [vmem:[#allocation5 + $0x208] sm:$0xff]
    %v6257 = vld [vmem:[#allocation5 + $0x210] sm:$0xff]
    %v6258 = vld [vmem:[#allocation5 + $0x218] sm:$0xff]
    %v6259 = vld [vmem:[#allocation5 + $0x220] sm:$0xff]
    %v6260 = vld [vmem:[#allocation5 + $0x228] sm:$0xff]
    %v6261 = vld [vmem:[#allocation5 + $0x230] sm:$0xff]
    %v6262 = vld [vmem:[#allocation5 + $0x238] sm:$0xff]
    %v6263 = vld [vmem:[#allocation5 + $0x240] sm:$0xff]
    %v6264 = vld [vmem:[#allocation5 + $0x248] sm:$0xff]
    %v6265 = vld [vmem:[#allocation5 + $0x250] sm:$0xff]
    %v6266 = vld [vmem:[#allocation5 + $0x258] sm:$0xff]
    %v6267 = vld [vmem:[#allocation5 + $0x260] sm:$0xff]
    %v6268 = vld [vmem:[#allocation5 + $0x268] sm:$0xff]
    %v6269 = vld [vmem:[#allocation5 + $0x270] sm:$0xff]
    %v6270 = vld [vmem:[#allocation5 + $0x278] sm:$0xff]
    %v6271 = vld [vmem:[#allocation5 + $0x280] sm:$0xff]
    %v6272 = vld [vmem:[#allocation5 + $0x288] sm:$0xff]
    %v6273 = vld [vmem:[#allocation5 + $0x290] sm:$0xff]
    %v6274 = vld [vmem:[#allocation5 + $0x298] sm:$0xff]
    %v6275 = vld [vmem:[#allocation5 + $0x2a0] sm:$0xff]
    %v6276 = vld [vmem:[#allocation5 + $0x2a8] sm:$0xff]
    %v6277 = vld [vmem:[#allocation5 + $0x2b0] sm:$0xff]
    %v6278 = vld [vmem:[#allocation5 + $0x2b8] sm:$0xff]
    %v6279 = vld [vmem:[#allocation5 + $0x2c0] sm:$0xff]
    %v6280 = vld [vmem:[#allocation5 + $0x2c8] sm:$0xff]
    %v6281 = vld [vmem:[#allocation5 + $0x2d0] sm:$0xff]
    %v6282 = vld [vmem:[#allocation5 + $0x2d8] sm:$0xff]
    %v6283 = vld [vmem:[#allocation5 + $0x2e0] sm:$0xff]
    %v6284 = vld [vmem:[#allocation5 + $0x2e8] sm:$0xff]
    %v6285 = vld [vmem:[#allocation5 + $0x2f0] sm:$0xff]
    %v6286 = vld [vmem:[#allocation5 + $0x2f8] sm:$0xff]
    %v6287 = vld [vmem:[#allocation5 + $0x300] sm:$0xff]
    %v6288 = vld [vmem:[#allocation5 + $0x308] sm:$0xff]
    %v6289 = vld [vmem:[#allocation5 + $0x310] sm:$0xff]
    %v6290 = vld [vmem:[#allocation5 + $0x318] sm:$0xff]
    %v6291 = vld [vmem:[#allocation5 + $0x320] sm:$0xff]
    %v6292 = vld [vmem:[#allocation5 + $0x328] sm:$0xff]
    %v6293 = vld [vmem:[#allocation5 + $0x330] sm:$0xff]
    %v6294 = vld [vmem:[#allocation5 + $0x338] sm:$0xff]
    %v6295 = vld [vmem:[#allocation5 + $0x340] sm:$0xff]
    %v6296 = vld [vmem:[#allocation5 + $0x348] sm:$0xff]
    %v6297 = vld [vmem:[#allocation5 + $0x350] sm:$0xff]
    %v6298 = vld [vmem:[#allocation5 + $0x358] sm:$0xff]
    %v6299 = vld [vmem:[#allocation5 + $0x360] sm:$0xff]
    %v6300 = vld [vmem:[#allocation5 + $0x368] sm:$0xff]
    %v6301 = vld [vmem:[#allocation5 + $0x370] sm:$0xff]
    %v6302 = vld [vmem:[#allocation5 + $0x378] sm:$0xff]
    %v6303 = vld [vmem:[#allocation5 + $0x380] sm:$0xff]
    %v6304 = vld [vmem:[#allocation5 + $0x388] sm:$0xff]
    %v6305 = vld [vmem:[#allocation5 + $0x390] sm:$0xff]
    %v6306 = vld [vmem:[#allocation5 + $0x398] sm:$0xff]
    %v6307 = vld [vmem:[#allocation5 + $0x3a0] sm:$0xff]
    %v6308 = vld [vmem:[#allocation5 + $0x3a8] sm:$0xff]
    %v6309 = vld [vmem:[#allocation5 + $0x3b0] sm:$0xff]
    %v6310 = vld [vmem:[#allocation5 + $0x3b8] sm:$0xff]
    %v6311 = vld [vmem:[#allocation5 + $0x3c0] sm:$0xff]
    %v6312 = vld [vmem:[#allocation5 + $0x3c8] sm:$0xff]
    %v6313 = vld [vmem:[#allocation5 + $0x3d0] sm:$0xff]
    %v6314 = vld [vmem:[#allocation5 + $0x3d8] sm:$0xff]
    %v6315 = vld [vmem:[#allocation5 + $0x3e0] sm:$0xff]
    %v6316 = vld [vmem:[#allocation5 + $0x3e8] sm:$0xff]
    %v6317 = vld [vmem:[#allocation5 + $0x3f0] sm:$0xff]
    %v6318 = vld [vmem:[#allocation5 + $0x3f8] sm:$0xff]
    %v6319 = vld [vmem:[#allocation5 + $0x400] sm:$0xff]
    %v6320 = vld [vmem:[#allocation5 + $0x408] sm:$0xff]
    %v6321 = vld [vmem:[#allocation5 + $0x410] sm:$0xff]
    %v6322 = vld [vmem:[#allocation5 + $0x418] sm:$0xff]
    %v6323 = vld [vmem:[#allocation5 + $0x420] sm:$0xff]
    %v6324 = vld [vmem:[#allocation5 + $0x428] sm:$0xff]
    %v6325 = vld [vmem:[#allocation5 + $0x430] sm:$0xff]
    %v6326 = vld [vmem:[#allocation5 + $0x438] sm:$0xff]
    %v6327 = vld [vmem:[#allocation5 + $0x440] sm:$0xff]
    %v6328 = vld [vmem:[#allocation5 + $0x448] sm:$0xff]
    %v6329 = vld [vmem:[#allocation5 + $0x450] sm:$0xff]
    %v6330 = vld [vmem:[#allocation5 + $0x458] sm:$0xff]
    %v6331 = vld [vmem:[#allocation5 + $0x460] sm:$0xff]
    %v6332 = vld [vmem:[#allocation5 + $0x468] sm:$0xff]
    %v6333 = vld [vmem:[#allocation5 + $0x470] sm:$0xff]
    %v6334 = vld [vmem:[#allocation5 + $0x478] sm:$0xff]
    %6335 = vmatprep.subr.mxu0 0.0
    %6336 = vmatpush1.msra.mxu0 %v6206
    %6337 = vmatprep.subr.mxu0 0.0
    %6338 = vmatpush1.msra.mxu0 %v6205
    %6339 = vmatprep.subr.mxu0 0.0
    %6340 = vmatpush1.msra.mxu0 %v6204
    %6341 = vmatprep.subr.mxu0 0.0
    %6342 = vmatpush1.msra.mxu0 %v6203
    %6343 = vmatprep.subr.mxu0 0.0
    %6344 = vmatpush1.msra.mxu0 %v6202
    %6345 = vmatprep.subr.mxu0 0.0
    %6346 = vmatpush1.msra.mxu0 %v6201
    %6347 = vmatprep.subr.mxu0 0.0
    %6348 = vmatpush1.msra.mxu0 %v6200
    %6349 = vmatprep.subr.mxu0 0.0
    %6350 = vmatpush1.msra.mxu0 %v6199
    %6351 = vmatprep.subr.mxu0 0.0
    %6352 = vmatpush1.msra.mxu0 %v6198
    %6353 = vmatprep.subr.mxu0 0.0
    %6354 = vmatpush1.msra.mxu0 %v6197
    %6355 = vmatprep.subr.mxu0 0.0
    %6356 = vmatpush1.msra.mxu0 %v6196
    %6357 = vmatprep.subr.mxu0 0.0
    %6358 = vmatpush1.msra.mxu0 %v6195
    %6359 = vmatprep.subr.mxu0 0.0
    %6360 = vmatpush1.msra.mxu0 %v6194
    %6361 = vmatprep.subr.mxu0 0.0
    %6362 = vmatpush1.msra.mxu0 %v6193
    %6363 = vmatprep.subr.mxu0 0.0
    %6364 = vmatpush1.msra.mxu0 %v6192
    %6365 = vmatprep.subr.mxu0 0.0
    %6366 = vmatpush1.msra.mxu0 %v6191
    %6367 = vmatprep.subr.mxu0 0.0
    %6368 = vmatpush2.msra.mxu0 %v6222
    %6369 = vmatprep.subr.mxu0 0.0
    %6370 = vmatpush2.msra.mxu0 %v6221
    %6371 = vmatprep.subr.mxu0 0.0
    %6372 = vmatpush2.msra.mxu0 %v6220
    %6373 = vmatprep.subr.mxu0 0.0
    %6374 = vmatpush2.msra.mxu0 %v6219
    %6375 = vmatprep.subr.mxu0 0.0
    %6376 = vmatpush2.msra.mxu0 %v6218
    %6377 = vmatprep.subr.mxu0 0.0
    %6378 = vmatpush2.msra.mxu0 %v6217
    %6379 = vmatprep.subr.mxu0 0.0
    %6380 = vmatpush2.msra.mxu0 %v6216
    %6381 = vmatprep.subr.mxu0 0.0
    %6382 = vmatpush2.msra.mxu0 %v6215
    %6383 = vmatprep.subr.mxu0 0.0
    %6384 = vmatpush2.msra.mxu0 %v6214
    %6385 = vmatprep.subr.mxu0 0.0
    %6386 = vmatpush2.msra.mxu0 %v6213
    %6387 = vmatprep.subr.mxu0 0.0
    %6388 = vmatpush2.msra.mxu0 %v6212
    %6389 = vmatprep.subr.mxu0 0.0
    %6390 = vmatpush2.msra.mxu0 %v6211
    %6391 = vmatprep.subr.mxu0 0.0
    %6392 = vmatpush2.msra.mxu0 %v6210
    %6393 = vmatprep.subr.mxu0 0.0
    %6394 = vmatpush2.msra.mxu0 %v6209
    %6395 = vmatprep.subr.mxu0 0.0
    %6396 = vmatpush2.msra.mxu0 %v6208
    %6397 = vmatprep.subr.mxu0 0.0
    %6398 = vmatpush2.msra.mxu0 %v6207
    %6399 = vmatprep.mubr.f32.mxu0 %v5616
    %6400 = vmatmul.mubr.f32.gmra.mxu0 %v5615
    %v6401 = vpop.f32.mrf.mxu0
    %v6402 = vadd.f32 0.0, %v6401
    %v6403 = vpop.f32.mrf.mxu0
    %6404 = vmatprep.mubr.f32.mxu0 %v5625
    %6405 = vmatmul.mubr.f32.gmra.mxu0 %v5624
    %v6406 = vpop.f32.mrf.mxu0
    %v6407 = vadd.f32 0.0, %v6406
    %v6408 = vpop.f32.mrf.mxu0
    %6409 = vmatprep.mubr.f32.mxu0 %v5634
    %6410 = vmatmul.mubr.f32.gmra.mxu0 %v5633
    %v6411 = vpop.f32.mrf.mxu0
    %v6412 = vadd.f32 0.0, %v6411
    %v6413 = vpop.f32.mrf.mxu0
    %6414 = vmatprep.mubr.f32.mxu0 %v5643
    %6415 = vmatmul.mubr.f32.gmra.mxu0 %v5642
    %v6416 = vpop.f32.mrf.mxu0
    %v6417 = vadd.f32 0.0, %v6416
    %v6418 = vpop.f32.mrf.mxu0
    %6419 = vmatprep.mubr.f32.mxu0 %v5652
    %6420 = vmatmul.mubr.f32.gmra.mxu0 %v5651
    %v6421 = vpop.f32.mrf.mxu0
    %v6422 = vadd.f32 0.0, %v6421
    %v6423 = vpop.f32.mrf.mxu0
    %6424 = vmatprep.mubr.f32.mxu0 %v5661
    %6425 = vmatmul.mubr.f32.gmra.mxu0 %v5660
    %v6426 = vpop.f32.mrf.mxu0
    %v6427 = vadd.f32 0.0, %v6426
    %v6428 = vpop.f32.mrf.mxu0
    %6429 = vmatprep.mubr.f32.mxu0 %v5670
    %6430 = vmatmul.mubr.f32.gmra.mxu0 %v5669
    %v6431 = vpop.f32.mrf.mxu0
    %v6432 = vadd.f32 0.0, %v6431
    %v6433 = vpop.f32.mrf.mxu0
    %6434 = vmatprep.mubr.f32.mxu0 %v5679
    %6435 = vmatmul.mubr.f32.gmra.mxu0 %v5678
    %v6436 = vpop.f32.mrf.mxu0
    %v6437 = vadd.f32 0.0, %v6436
    %v6438 = vpop.f32.mrf.mxu0
    %6439 = vmatprep.mubr.f32.mxu0 %v5688
    %6440 = vmatmul.mubr.f32.gmra.mxu0 %v5687
    %v6441 = vpop.f32.mrf.mxu0
    %v6442 = vadd.f32 0.0, %v6441
    %v6443 = vpop.f32.mrf.mxu0
    %6444 = vmatprep.mubr.f32.mxu0 %v5697
    %6445 = vmatmul.mubr.f32.gmra.mxu0 %v5696
    %v6446 = vpop.f32.mrf.mxu0
    %v6447 = vadd.f32 0.0, %v6446
    %v6448 = vpop.f32.mrf.mxu0
    %6449 = vmatprep.mubr.f32.mxu0 %v5706
    %6450 = vmatmul.mubr.f32.gmra.mxu0 %v5705
    %v6451 = vpop.f32.mrf.mxu0
    %v6452 = vadd.f32 0.0, %v6451
    %v6453 = vpop.f32.mrf.mxu0
    %6454 = vmatprep.mubr.f32.mxu0 %v5715
    %6455 = vmatmul.mubr.f32.gmra.mxu0 %v5714
    %v6456 = vpop.f32.mrf.mxu0
    %v6457 = vadd.f32 0.0, %v6456
    %v6458 = vpop.f32.mrf.mxu0
    %6459 = vmatprep.mubr.f32.mxu0 %v5724
    %6460 = vmatmul.mubr.f32.gmra.mxu0 %v5723
    %v6461 = vpop.f32.mrf.mxu0
    %v6462 = vadd.f32 0.0, %v6461
    %v6463 = vpop.f32.mrf.mxu0
    %6464 = vmatprep.mubr.f32.mxu0 %v5733
    %6465 = vmatmul.mubr.f32.gmra.mxu0 %v5732
    %v6466 = vpop.f32.mrf.mxu0
    %v6467 = vadd.f32 0.0, %v6466
    %v6468 = vpop.f32.mrf.mxu0
    %6469 = vmatprep.mubr.f32.mxu0 %v5742
    %6470 = vmatmul.mubr.f32.gmra.mxu0 %v5741
    %v6471 = vpop.f32.mrf.mxu0
    %v6472 = vadd.f32 0.0, %v6471
    %v6473 = vpop.f32.mrf.mxu0
    %6474 = vmatprep.mubr.f32.mxu0 %v5751
    %6475 = vmatmul.mubr.f32.gmra.mxu0 %v5750
    %v6476 = vpop.f32.mrf.mxu0
    %v6477 = vadd.f32 0.0, %v6476
    %v6478 = vpop.f32.mrf.mxu0
    %6479 = vmatprep.mubr.f32.mxu0 %v5760
    %6480 = vmatmul.mubr.f32.gmra.mxu0 %v5759
    %v6481 = vpop.f32.mrf.mxu0
    %v6482 = vadd.f32 0.0, %v6481
    %v6483 = vpop.f32.mrf.mxu0
    %6484 = vmatprep.mubr.f32.mxu0 %v5769
    %6485 = vmatmul.mubr.f32.gmra.mxu0 %v5768
    %v6486 = vpop.f32.mrf.mxu0
    %v6487 = vadd.f32 0.0, %v6486
    %v6488 = vpop.f32.mrf.mxu0
    %6489 = vmatprep.mubr.f32.mxu0 %v5778
    %6490 = vmatmul.mubr.f32.gmra.mxu0 %v5777
    %v6491 = vpop.f32.mrf.mxu0
    %v6492 = vadd.f32 0.0, %v6491
    %v6493 = vpop.f32.mrf.mxu0
    %6494 = vmatprep.mubr.f32.mxu0 %v5787
    %6495 = vmatmul.mubr.f32.gmra.mxu0 %v5786
    %v6496 = vpop.f32.mrf.mxu0
    %v6497 = vadd.f32 0.0, %v6496
    %v6498 = vpop.f32.mrf.mxu0
    %6499 = vmatprep.mubr.f32.mxu0 %v5796
    %6500 = vmatmul.mubr.f32.gmra.mxu0 %v5795
    %v6501 = vpop.f32.mrf.mxu0
    %v6502 = vadd.f32 0.0, %v6501
    %v6503 = vpop.f32.mrf.mxu0
    %6504 = vmatprep.mubr.f32.mxu0 %v5805
    %6505 = vmatmul.mubr.f32.gmra.mxu0 %v5804
    %v6506 = vpop.f32.mrf.mxu0
    %v6507 = vadd.f32 0.0, %v6506
    %v6508 = vpop.f32.mrf.mxu0
    %6509 = vmatprep.mubr.f32.mxu0 %v5814
    %6510 = vmatmul.mubr.f32.gmra.mxu0 %v5813
    %v6511 = vpop.f32.mrf.mxu0
    %v6512 = vadd.f32 0.0, %v6511
    %v6513 = vpop.f32.mrf.mxu0
    %6514 = vmatprep.mubr.f32.mxu0 %v5823
    %6515 = vmatmul.mubr.f32.gmra.mxu0 %v5822
    %v6516 = vpop.f32.mrf.mxu0
    %v6517 = vadd.f32 0.0, %v6516
    %v6518 = vpop.f32.mrf.mxu0
    %6519 = vmatprep.mubr.f32.mxu0 %v5832
    %6520 = vmatmul.mubr.f32.gmra.mxu0 %v5831
    %v6521 = vpop.f32.mrf.mxu0
    %v6522 = vadd.f32 0.0, %v6521
    %v6523 = vpop.f32.mrf.mxu0
    %6524 = vmatprep.mubr.f32.mxu0 %v5841
    %6525 = vmatmul.mubr.f32.gmra.mxu0 %v5840
    %v6526 = vpop.f32.mrf.mxu0
    %v6527 = vadd.f32 0.0, %v6526
    %v6528 = vpop.f32.mrf.mxu0
    %6529 = vmatprep.mubr.f32.mxu0 %v5850
    %6530 = vmatmul.mubr.f32.gmra.mxu0 %v5849
    %v6531 = vpop.f32.mrf.mxu0
    %v6532 = vadd.f32 0.0, %v6531
    %v6533 = vpop.f32.mrf.mxu0
    %6534 = vmatprep.mubr.f32.mxu0 %v5859
    %6535 = vmatmul.mubr.f32.gmra.mxu0 %v5858
    %v6536 = vpop.f32.mrf.mxu0
    %v6537 = vadd.f32 0.0, %v6536
    %v6538 = vpop.f32.mrf.mxu0
    %6539 = vmatprep.mubr.f32.mxu0 %v5868
    %6540 = vmatmul.mubr.f32.gmra.mxu0 %v5867
    %v6541 = vpop.f32.mrf.mxu0
    %v6542 = vadd.f32 0.0, %v6541
    %v6543 = vpop.f32.mrf.mxu0
    %6544 = vmatprep.mubr.f32.mxu0 %v5877
    %6545 = vmatmul.mubr.f32.gmra.mxu0 %v5876
    %v6546 = vpop.f32.mrf.mxu0
    %v6547 = vadd.f32 0.0, %v6546
    %v6548 = vpop.f32.mrf.mxu0
    %6549 = vmatprep.mubr.f32.mxu0 %v5886
    %6550 = vmatmul.mubr.f32.gmra.mxu0 %v5885
    %v6551 = vpop.f32.mrf.mxu0
    %v6552 = vadd.f32 0.0, %v6551
    %v6553 = vpop.f32.mrf.mxu0
    %6554 = vmatprep.mubr.f32.mxu0 %v5895
    %6555 = vmatmul.mubr.f32.gmra.mxu0 %v5894
    %v6556 = vpop.f32.mrf.mxu0
    %v6557 = vadd.f32 0.0, %v6556
    %v6558 = vpop.f32.mrf.mxu0
    %6559 = vmatprep.mubr.f32.mxu0 %v5904
    %6560 = vmatmul.mubr.f32.gmra.mxu0 %v5903
    %v6561 = vpop.f32.mrf.mxu0
    %v6562 = vadd.f32 0.0, %v6561
    %v6563 = vpop.f32.mrf.mxu0
    %6564 = vmatprep.mubr.f32.mxu0 %v5913
    %6565 = vmatmul.mubr.f32.gmra.mxu0 %v5912
    %v6566 = vpop.f32.mrf.mxu0
    %v6567 = vadd.f32 0.0, %v6566
    %v6568 = vpop.f32.mrf.mxu0
    %6569 = vmatprep.mubr.f32.mxu0 %v5922
    %6570 = vmatmul.mubr.f32.gmra.mxu0 %v5921
    %v6571 = vpop.f32.mrf.mxu0
    %v6572 = vadd.f32 0.0, %v6571
    %v6573 = vpop.f32.mrf.mxu0
    %6574 = vmatprep.mubr.f32.mxu0 %v5931
    %6575 = vmatmul.mubr.f32.gmra.mxu0 %v5930
    %v6576 = vpop.f32.mrf.mxu0
    %v6577 = vadd.f32 0.0, %v6576
    %v6578 = vpop.f32.mrf.mxu0
    %6579 = vmatprep.mubr.f32.mxu0 %v5940
    %6580 = vmatmul.mubr.f32.gmra.mxu0 %v5939
    %v6581 = vpop.f32.mrf.mxu0
    %v6582 = vadd.f32 0.0, %v6581
    %v6583 = vpop.f32.mrf.mxu0
    %6584 = vmatprep.mubr.f32.mxu0 %v5949
    %6585 = vmatmul.mubr.f32.gmra.mxu0 %v5948
    %v6586 = vpop.f32.mrf.mxu0
    %v6587 = vadd.f32 0.0, %v6586
    %v6588 = vpop.f32.mrf.mxu0
    %6589 = vmatprep.mubr.f32.mxu0 %v5958
    %6590 = vmatmul.mubr.f32.gmra.mxu0 %v5957
    %v6591 = vpop.f32.mrf.mxu0
    %v6592 = vadd.f32 0.0, %v6591
    %v6593 = vpop.f32.mrf.mxu0
    %6594 = vmatprep.mubr.f32.mxu0 %v5967
    %6595 = vmatmul.mubr.f32.gmra.mxu0 %v5966
    %v6596 = vpop.f32.mrf.mxu0
    %v6597 = vadd.f32 0.0, %v6596
    %v6598 = vpop.f32.mrf.mxu0
    %6599 = vmatprep.mubr.f32.mxu0 %v5976
    %6600 = vmatmul.mubr.f32.gmra.mxu0 %v5975
    %v6601 = vpop.f32.mrf.mxu0
    %v6602 = vadd.f32 0.0, %v6601
    %v6603 = vpop.f32.mrf.mxu0
    %6604 = vmatprep.mubr.f32.mxu0 %v5985
    %6605 = vmatmul.mubr.f32.gmra.mxu0 %v5984
    %v6606 = vpop.f32.mrf.mxu0
    %v6607 = vadd.f32 0.0, %v6606
    %v6608 = vpop.f32.mrf.mxu0
    %6609 = vmatprep.mubr.f32.mxu0 %v5994
    %6610 = vmatmul.mubr.f32.gmra.mxu0 %v5993
    %v6611 = vpop.f32.mrf.mxu0
    %v6612 = vadd.f32 0.0, %v6611
    %v6613 = vpop.f32.mrf.mxu0
    %6614 = vmatprep.mubr.f32.mxu0 %v6003
    %6615 = vmatmul.mubr.f32.gmra.mxu0 %v6002
    %v6616 = vpop.f32.mrf.mxu0
    %v6617 = vadd.f32 0.0, %v6616
    %v6618 = vpop.f32.mrf.mxu0
    %6619 = vmatprep.mubr.f32.mxu0 %v6012
    %6620 = vmatmul.mubr.f32.gmra.mxu0 %v6011
    %v6621 = vpop.f32.mrf.mxu0
    %v6622 = vadd.f32 0.0, %v6621
    %v6623 = vpop.f32.mrf.mxu0
    %6624 = vmatprep.mubr.f32.mxu0 %v6021
    %6625 = vmatmul.mubr.f32.gmra.mxu0 %v6020
    %v6626 = vpop.f32.mrf.mxu0
    %v6627 = vadd.f32 0.0, %v6626
    %v6628 = vpop.f32.mrf.mxu0
    %6629 = vmatprep.mubr.f32.mxu0 %v6030
    %6630 = vmatmul.mubr.f32.gmra.mxu0 %v6029
    %v6631 = vpop.f32.mrf.mxu0
    %v6632 = vadd.f32 0.0, %v6631
    %v6633 = vpop.f32.mrf.mxu0
    %6634 = vmatprep.mubr.f32.mxu0 %v6039
    %6635 = vmatmul.mubr.f32.gmra.mxu0 %v6038
    %v6636 = vpop.f32.mrf.mxu0
    %v6637 = vadd.f32 0.0, %v6636
    %v6638 = vpop.f32.mrf.mxu0
    %6639 = vmatprep.mubr.f32.mxu0 %v6048
    %6640 = vmatmul.mubr.f32.gmra.mxu0 %v6047
    %v6641 = vpop.f32.mrf.mxu0
    %v6642 = vadd.f32 0.0, %v6641
    %v6643 = vpop.f32.mrf.mxu0
    %6644 = vmatprep.mubr.f32.mxu0 %v6057
    %6645 = vmatmul.mubr.f32.gmra.mxu0 %v6056
    %v6646 = vpop.f32.mrf.mxu0
    %v6647 = vadd.f32 0.0, %v6646
    %v6648 = vpop.f32.mrf.mxu0
    %6649 = vmatprep.mubr.f32.mxu0 %v6066
    %6650 = vmatmul.mubr.f32.gmra.mxu0 %v6065
    %v6651 = vpop.f32.mrf.mxu0
    %v6652 = vadd.f32 0.0, %v6651
    %v6653 = vpop.f32.mrf.mxu0
    %6654 = vmatprep.mubr.f32.mxu0 %v6075
    %6655 = vmatmul.mubr.f32.gmra.mxu0 %v6074
    %v6656 = vpop.f32.mrf.mxu0
    %v6657 = vadd.f32 0.0, %v6656
    %v6658 = vpop.f32.mrf.mxu0
    %6659 = vmatprep.mubr.f32.mxu0 %v6084
    %6660 = vmatmul.mubr.f32.gmra.mxu0 %v6083
    %v6661 = vpop.f32.mrf.mxu0
    %v6662 = vadd.f32 0.0, %v6661
    %v6663 = vpop.f32.mrf.mxu0
    %6664 = vmatprep.mubr.f32.mxu0 %v6093
    %6665 = vmatmul.mubr.f32.gmra.mxu0 %v6092
    %v6666 = vpop.f32.mrf.mxu0
    %v6667 = vadd.f32 0.0, %v6666
    %v6668 = vpop.f32.mrf.mxu0
    %6669 = vmatprep.mubr.f32.mxu0 %v6102
    %6670 = vmatmul.mubr.f32.gmra.mxu0 %v6101
    %v6671 = vpop.f32.mrf.mxu0
    %v6672 = vadd.f32 0.0, %v6671
    %v6673 = vpop.f32.mrf.mxu0
    %6674 = vmatprep.mubr.f32.mxu0 %v6111
    %6675 = vmatmul.mubr.f32.gmra.mxu0 %v6110
    %v6676 = vpop.f32.mrf.mxu0
    %v6677 = vadd.f32 0.0, %v6676
    %v6678 = vpop.f32.mrf.mxu0
    %6679 = vmatprep.mubr.f32.mxu0 %v6120
    %6680 = vmatmul.mubr.f32.gmra.mxu0 %v6119
    %v6681 = vpop.f32.mrf.mxu0
    %v6682 = vadd.f32 0.0, %v6681
    %v6683 = vpop.f32.mrf.mxu0
    %6684 = vmatprep.mubr.f32.mxu0 %v6129
    %6685 = vmatmul.mubr.f32.gmra.mxu0 %v6128
    %v6686 = vpop.f32.mrf.mxu0
    %v6687 = vadd.f32 0.0, %v6686
    %v6688 = vpop.f32.mrf.mxu0
    %6689 = vmatprep.mubr.f32.mxu0 %v6138
    %6690 = vmatmul.mubr.f32.gmra.mxu0 %v6137
    %v6691 = vpop.f32.mrf.mxu0
    %v6692 = vadd.f32 0.0, %v6691
    %v6693 = vpop.f32.mrf.mxu0
    %6694 = vmatprep.mubr.f32.mxu0 %v6147
    %6695 = vmatmul.mubr.f32.gmra.mxu0 %v6146
    %v6696 = vpop.f32.mrf.mxu0
    %v6697 = vadd.f32 0.0, %v6696
    %v6698 = vpop.f32.mrf.mxu0
    %6699 = vmatprep.mubr.f32.mxu0 %v6156
    %6700 = vmatmul.mubr.f32.gmra.mxu0 %v6155
    %v6701 = vpop.f32.mrf.mxu0
    %v6702 = vadd.f32 0.0, %v6701
    %v6703 = vpop.f32.mrf.mxu0
    %6704 = vmatprep.mubr.f32.mxu0 %v6165
    %6705 = vmatmul.mubr.f32.gmra.mxu0 %v6164
    %v6706 = vpop.f32.mrf.mxu0
    %v6707 = vadd.f32 0.0, %v6706
    %v6708 = vpop.f32.mrf.mxu0
    %6709 = vmatprep.mubr.f32.mxu0 %v6174
    %6710 = vmatmul.mubr.f32.gmra.mxu0 %v6173
    %v6711 = vpop.f32.mrf.mxu0
    %v6712 = vadd.f32 0.0, %v6711
    %v6713 = vpop.f32.mrf.mxu0
    %6714 = vmatprep.mubr.f32.mxu0 %v6183
    %6715 = vmatmul.mubr.f32.gmra.mxu0 %v6182
    %v6716 = vpop.f32.mrf.mxu0
    %v6717 = vadd.f32 0.0, %v6716
    %v6718 = vpop.f32.mrf.mxu0
    %6719 = vdwg.mxu0
    %6720 = vmatprep.subr.mxu0 0.0
    %6721 = vmatpush1.msra.mxu0 %v6238
    %6722 = vmatprep.subr.mxu0 0.0
    %6723 = vmatpush1.msra.mxu0 %v6237
    %6724 = vmatprep.subr.mxu0 0.0
    %6725 = vmatpush1.msra.mxu0 %v6236
    %6726 = vmatprep.subr.mxu0 0.0
    %6727 = vmatpush1.msra.mxu0 %v6235
    %6728 = vmatprep.subr.mxu0 0.0
    %6729 = vmatpush1.msra.mxu0 %v6234
    %6730 = vmatprep.subr.mxu0 0.0
    %6731 = vmatpush1.msra.mxu0 %v6233
    %6732 = vmatprep.subr.mxu0 0.0
    %6733 = vmatpush1.msra.mxu0 %v6232
    %6734 = vmatprep.subr.mxu0 0.0
    %6735 = vmatpush1.msra.mxu0 %v6231
    %6736 = vmatprep.subr.mxu0 0.0
    %6737 = vmatpush1.msra.mxu0 %v6230
    %6738 = vmatprep.subr.mxu0 0.0
    %6739 = vmatpush1.msra.mxu0 %v6229
    %6740 = vmatprep.subr.mxu0 0.0
    %6741 = vmatpush1.msra.mxu0 %v6228
    %6742 = vmatprep.subr.mxu0 0.0
    %6743 = vmatpush1.msra.mxu0 %v6227
    %6744 = vmatprep.subr.mxu0 0.0
    %6745 = vmatpush1.msra.mxu0 %v6226
    %6746 = vmatprep.subr.mxu0 0.0
    %6747 = vmatpush1.msra.mxu0 %v6225
    %6748 = vmatprep.subr.mxu0 0.0
    %6749 = vmatpush1.msra.mxu0 %v6224
    %6750 = vmatprep.subr.mxu0 0.0
    %6751 = vmatpush1.msra.mxu0 %v6223
    %6752 = vmatprep.subr.mxu0 0.0
    %6753 = vmatpush2.msra.mxu0 %v6254
    %6754 = vmatprep.subr.mxu0 0.0
    %6755 = vmatpush2.msra.mxu0 %v6253
    %6756 = vmatprep.subr.mxu0 0.0
    %6757 = vmatpush2.msra.mxu0 %v6252
    %6758 = vmatprep.subr.mxu0 0.0
    %6759 = vmatpush2.msra.mxu0 %v6251
    %6760 = vmatprep.subr.mxu0 0.0
    %6761 = vmatpush2.msra.mxu0 %v6250
    %6762 = vmatprep.subr.mxu0 0.0
    %6763 = vmatpush2.msra.mxu0 %v6249
    %6764 = vmatprep.subr.mxu0 0.0
    %6765 = vmatpush2.msra.mxu0 %v6248
    %6766 = vmatprep.subr.mxu0 0.0
    %6767 = vmatpush2.msra.mxu0 %v6247
    %6768 = vmatprep.subr.mxu0 0.0
    %6769 = vmatpush2.msra.mxu0 %v6246
    %6770 = vmatprep.subr.mxu0 0.0
    %6771 = vmatpush2.msra.mxu0 %v6245
    %6772 = vmatprep.subr.mxu0 0.0
    %6773 = vmatpush2.msra.mxu0 %v6244
    %6774 = vmatprep.subr.mxu0 0.0
    %6775 = vmatpush2.msra.mxu0 %v6243
    %6776 = vmatprep.subr.mxu0 0.0
    %6777 = vmatpush2.msra.mxu0 %v6242
    %6778 = vmatprep.subr.mxu0 0.0
    %6779 = vmatpush2.msra.mxu0 %v6241
    %6780 = vmatprep.subr.mxu0 0.0
    %6781 = vmatpush2.msra.mxu0 %v6240
    %6782 = vmatprep.subr.mxu0 0.0
    %6783 = vmatpush2.msra.mxu0 %v6239
    %6784 = vmatprep.mubr.f32.mxu0 %v5618
    %6785 = vmatmul.mubr.f32.gmra.mxu0 %v5617
    %v6786 = vpop.f32.mrf.mxu0
    %v6787 = vadd.f32 %v6402, %v6786
    %v6788 = vpop.f32.mrf.mxu0
    %6789 = vmatprep.mubr.f32.mxu0 %v5627
    %6790 = vmatmul.mubr.f32.gmra.mxu0 %v5626
    %v6791 = vpop.f32.mrf.mxu0
    %v6792 = vadd.f32 %v6407, %v6791
    %v6793 = vpop.f32.mrf.mxu0
    %6794 = vmatprep.mubr.f32.mxu0 %v5636
    %6795 = vmatmul.mubr.f32.gmra.mxu0 %v5635
    %v6796 = vpop.f32.mrf.mxu0
    %v6797 = vadd.f32 %v6412, %v6796
    %v6798 = vpop.f32.mrf.mxu0
    %6799 = vmatprep.mubr.f32.mxu0 %v5645
    %6800 = vmatmul.mubr.f32.gmra.mxu0 %v5644
    %v6801 = vpop.f32.mrf.mxu0
    %v6802 = vadd.f32 %v6417, %v6801
    %v6803 = vpop.f32.mrf.mxu0
    %6804 = vmatprep.mubr.f32.mxu0 %v5654
    %6805 = vmatmul.mubr.f32.gmra.mxu0 %v5653
    %v6806 = vpop.f32.mrf.mxu0
    %v6807 = vadd.f32 %v6422, %v6806
    %v6808 = vpop.f32.mrf.mxu0
    %6809 = vmatprep.mubr.f32.mxu0 %v5663
    %6810 = vmatmul.mubr.f32.gmra.mxu0 %v5662
    %v6811 = vpop.f32.mrf.mxu0
    %v6812 = vadd.f32 %v6427, %v6811
    %v6813 = vpop.f32.mrf.mxu0
    %6814 = vmatprep.mubr.f32.mxu0 %v5672
    %6815 = vmatmul.mubr.f32.gmra.mxu0 %v5671
    %v6816 = vpop.f32.mrf.mxu0
    %v6817 = vadd.f32 %v6432, %v6816
    %v6818 = vpop.f32.mrf.mxu0
    %6819 = vmatprep.mubr.f32.mxu0 %v5681
    %6820 = vmatmul.mubr.f32.gmra.mxu0 %v5680
    %v6821 = vpop.f32.mrf.mxu0
    %v6822 = vadd.f32 %v6437, %v6821
    %v6823 = vpop.f32.mrf.mxu0
    %6824 = vmatprep.mubr.f32.mxu0 %v5690
    %6825 = vmatmul.mubr.f32.gmra.mxu0 %v5689
    %v6826 = vpop.f32.mrf.mxu0
    %v6827 = vadd.f32 %v6442, %v6826
    %v6828 = vpop.f32.mrf.mxu0
    %6829 = vmatprep.mubr.f32.mxu0 %v5699
    %6830 = vmatmul.mubr.f32.gmra.mxu0 %v5698
    %v6831 = vpop.f32.mrf.mxu0
    %v6832 = vadd.f32 %v6447, %v6831
    %v6833 = vpop.f32.mrf.mxu0
    %6834 = vmatprep.mubr.f32.mxu0 %v5708
    %6835 = vmatmul.mubr.f32.gmra.mxu0 %v5707
    %v6836 = vpop.f32.mrf.mxu0
    %v6837 = vadd.f32 %v6452, %v6836
    %v6838 = vpop.f32.mrf.mxu0
    %6839 = vmatprep.mubr.f32.mxu0 %v5717
    %6840 = vmatmul.mubr.f32.gmra.mxu0 %v5716
    %v6841 = vpop.f32.mrf.mxu0
    %v6842 = vadd.f32 %v6457, %v6841
    %v6843 = vpop.f32.mrf.mxu0
    %6844 = vmatprep.mubr.f32.mxu0 %v5726
    %6845 = vmatmul.mubr.f32.gmra.mxu0 %v5725
    %v6846 = vpop.f32.mrf.mxu0
    %v6847 = vadd.f32 %v6462, %v6846
    %v6848 = vpop.f32.mrf.mxu0
    %6849 = vmatprep.mubr.f32.mxu0 %v5735
    %6850 = vmatmul.mubr.f32.gmra.mxu0 %v5734
    %v6851 = vpop.f32.mrf.mxu0
    %v6852 = vadd.f32 %v6467, %v6851
    %v6853 = vpop.f32.mrf.mxu0
    %6854 = vmatprep.mubr.f32.mxu0 %v5744
    %6855 = vmatmul.mubr.f32.gmra.mxu0 %v5743
    %v6856 = vpop.f32.mrf.mxu0
    %v6857 = vadd.f32 %v6472, %v6856
    %v6858 = vpop.f32.mrf.mxu0
    %6859 = vmatprep.mubr.f32.mxu0 %v5753
    %6860 = vmatmul.mubr.f32.gmra.mxu0 %v5752
    %v6861 = vpop.f32.mrf.mxu0
    %v6862 = vadd.f32 %v6477, %v6861
    %v6863 = vpop.f32.mrf.mxu0
    %6864 = vmatprep.mubr.f32.mxu0 %v5762
    %6865 = vmatmul.mubr.f32.gmra.mxu0 %v5761
    %v6866 = vpop.f32.mrf.mxu0
    %v6867 = vadd.f32 %v6482, %v6866
    %v6868 = vpop.f32.mrf.mxu0
    %6869 = vmatprep.mubr.f32.mxu0 %v5771
    %6870 = vmatmul.mubr.f32.gmra.mxu0 %v5770
    %v6871 = vpop.f32.mrf.mxu0
    %v6872 = vadd.f32 %v6487, %v6871
    %v6873 = vpop.f32.mrf.mxu0
    %6874 = vmatprep.mubr.f32.mxu0 %v5780
    %6875 = vmatmul.mubr.f32.gmra.mxu0 %v5779
    %v6876 = vpop.f32.mrf.mxu0
    %v6877 = vadd.f32 %v6492, %v6876
    %v6878 = vpop.f32.mrf.mxu0
    %6879 = vmatprep.mubr.f32.mxu0 %v5789
    %6880 = vmatmul.mubr.f32.gmra.mxu0 %v5788
    %v6881 = vpop.f32.mrf.mxu0
    %v6882 = vadd.f32 %v6497, %v6881
    %v6883 = vpop.f32.mrf.mxu0
    %6884 = vmatprep.mubr.f32.mxu0 %v5798
    %6885 = vmatmul.mubr.f32.gmra.mxu0 %v5797
    %v6886 = vpop.f32.mrf.mxu0
    %v6887 = vadd.f32 %v6502, %v6886
    %v6888 = vpop.f32.mrf.mxu0
    %6889 = vmatprep.mubr.f32.mxu0 %v5807
    %6890 = vmatmul.mubr.f32.gmra.mxu0 %v5806
    %v6891 = vpop.f32.mrf.mxu0
    %v6892 = vadd.f32 %v6507, %v6891
    %v6893 = vpop.f32.mrf.mxu0
    %6894 = vmatprep.mubr.f32.mxu0 %v5816
    %6895 = vmatmul.mubr.f32.gmra.mxu0 %v5815
    %v6896 = vpop.f32.mrf.mxu0
    %v6897 = vadd.f32 %v6512, %v6896
    %v6898 = vpop.f32.mrf.mxu0
    %6899 = vmatprep.mubr.f32.mxu0 %v5825
    %6900 = vmatmul.mubr.f32.gmra.mxu0 %v5824
    %v6901 = vpop.f32.mrf.mxu0
    %v6902 = vadd.f32 %v6517, %v6901
    %v6903 = vpop.f32.mrf.mxu0
    %6904 = vmatprep.mubr.f32.mxu0 %v5834
    %6905 = vmatmul.mubr.f32.gmra.mxu0 %v5833
    %v6906 = vpop.f32.mrf.mxu0
    %v6907 = vadd.f32 %v6522, %v6906
    %v6908 = vpop.f32.mrf.mxu0
    %6909 = vmatprep.mubr.f32.mxu0 %v5843
    %6910 = vmatmul.mubr.f32.gmra.mxu0 %v5842
    %v6911 = vpop.f32.mrf.mxu0
    %v6912 = vadd.f32 %v6527, %v6911
    %v6913 = vpop.f32.mrf.mxu0
    %6914 = vmatprep.mubr.f32.mxu0 %v5852
    %6915 = vmatmul.mubr.f32.gmra.mxu0 %v5851
    %v6916 = vpop.f32.mrf.mxu0
    %v6917 = vadd.f32 %v6532, %v6916
    %v6918 = vpop.f32.mrf.mxu0
    %6919 = vmatprep.mubr.f32.mxu0 %v5861
    %6920 = vmatmul.mubr.f32.gmra.mxu0 %v5860
    %v6921 = vpop.f32.mrf.mxu0
    %v6922 = vadd.f32 %v6537, %v6921
    %v6923 = vpop.f32.mrf.mxu0
    %6924 = vmatprep.mubr.f32.mxu0 %v5870
    %6925 = vmatmul.mubr.f32.gmra.mxu0 %v5869
    %v6926 = vpop.f32.mrf.mxu0
    %v6927 = vadd.f32 %v6542, %v6926
    %v6928 = vpop.f32.mrf.mxu0
    %6929 = vmatprep.mubr.f32.mxu0 %v5879
    %6930 = vmatmul.mubr.f32.gmra.mxu0 %v5878
    %v6931 = vpop.f32.mrf.mxu0
    %v6932 = vadd.f32 %v6547, %v6931
    %v6933 = vpop.f32.mrf.mxu0
    %6934 = vmatprep.mubr.f32.mxu0 %v5888
    %6935 = vmatmul.mubr.f32.gmra.mxu0 %v5887
    %v6936 = vpop.f32.mrf.mxu0
    %v6937 = vadd.f32 %v6552, %v6936
    %v6938 = vpop.f32.mrf.mxu0
    %6939 = vmatprep.mubr.f32.mxu0 %v5897
    %6940 = vmatmul.mubr.f32.gmra.mxu0 %v5896
    %v6941 = vpop.f32.mrf.mxu0
    %v6942 = vadd.f32 %v6557, %v6941
    %v6943 = vpop.f32.mrf.mxu0
    %6944 = vmatprep.mubr.f32.mxu0 %v5906
    %6945 = vmatmul.mubr.f32.gmra.mxu0 %v5905
    %v6946 = vpop.f32.mrf.mxu0
    %v6947 = vadd.f32 %v6562, %v6946
    %v6948 = vpop.f32.mrf.mxu0
    %6949 = vmatprep.mubr.f32.mxu0 %v5915
    %6950 = vmatmul.mubr.f32.gmra.mxu0 %v5914
    %v6951 = vpop.f32.mrf.mxu0
    %v6952 = vadd.f32 %v6567, %v6951
    %v6953 = vpop.f32.mrf.mxu0
    %6954 = vmatprep.mubr.f32.mxu0 %v5924
    %6955 = vmatmul.mubr.f32.gmra.mxu0 %v5923
    %v6956 = vpop.f32.mrf.mxu0
    %v6957 = vadd.f32 %v6572, %v6956
    %v6958 = vpop.f32.mrf.mxu0
    %6959 = vmatprep.mubr.f32.mxu0 %v5933
    %6960 = vmatmul.mubr.f32.gmra.mxu0 %v5932
    %v6961 = vpop.f32.mrf.mxu0
    %v6962 = vadd.f32 %v6577, %v6961
    %v6963 = vpop.f32.mrf.mxu0
    %6964 = vmatprep.mubr.f32.mxu0 %v5942
    %6965 = vmatmul.mubr.f32.gmra.mxu0 %v5941
    %v6966 = vpop.f32.mrf.mxu0
    %v6967 = vadd.f32 %v6582, %v6966
    %v6968 = vpop.f32.mrf.mxu0
    %6969 = vmatprep.mubr.f32.mxu0 %v5951
    %6970 = vmatmul.mubr.f32.gmra.mxu0 %v5950
    %v6971 = vpop.f32.mrf.mxu0
    %v6972 = vadd.f32 %v6587, %v6971
    %v6973 = vpop.f32.mrf.mxu0
    %6974 = vmatprep.mubr.f32.mxu0 %v5960
    %6975 = vmatmul.mubr.f32.gmra.mxu0 %v5959
    %v6976 = vpop.f32.mrf.mxu0
    %v6977 = vadd.f32 %v6592, %v6976
    %v6978 = vpop.f32.mrf.mxu0
    %6979 = vmatprep.mubr.f32.mxu0 %v5969
    %6980 = vmatmul.mubr.f32.gmra.mxu0 %v5968
    %v6981 = vpop.f32.mrf.mxu0
    %v6982 = vadd.f32 %v6597, %v6981
    %v6983 = vpop.f32.mrf.mxu0
    %6984 = vmatprep.mubr.f32.mxu0 %v5978
    %6985 = vmatmul.mubr.f32.gmra.mxu0 %v5977
    %v6986 = vpop.f32.mrf.mxu0
    %v6987 = vadd.f32 %v6602, %v6986
    %v6988 = vpop.f32.mrf.mxu0
    %6989 = vmatprep.mubr.f32.mxu0 %v5987
    %6990 = vmatmul.mubr.f32.gmra.mxu0 %v5986
    %v6991 = vpop.f32.mrf.mxu0
    %v6992 = vadd.f32 %v6607, %v6991
    %v6993 = vpop.f32.mrf.mxu0
    %6994 = vmatprep.mubr.f32.mxu0 %v5996
    %6995 = vmatmul.mubr.f32.gmra.mxu0 %v5995
    %v6996 = vpop.f32.mrf.mxu0
    %v6997 = vadd.f32 %v6612, %v6996
    %v6998 = vpop.f32.mrf.mxu0
    %6999 = vmatprep.mubr.f32.mxu0 %v6005
    %7000 = vmatmul.mubr.f32.gmra.mxu0 %v6004
    %v7001 = vpop.f32.mrf.mxu0
    %v7002 = vadd.f32 %v6617, %v7001
    %v7003 = vpop.f32.mrf.mxu0
    %7004 = vmatprep.mubr.f32.mxu0 %v6014
    %7005 = vmatmul.mubr.f32.gmra.mxu0 %v6013
    %v7006 = vpop.f32.mrf.mxu0
    %v7007 = vadd.f32 %v6622, %v7006
    %v7008 = vpop.f32.mrf.mxu0
    %7009 = vmatprep.mubr.f32.mxu0 %v6023
    %7010 = vmatmul.mubr.f32.gmra.mxu0 %v6022
    %v7011 = vpop.f32.mrf.mxu0
    %v7012 = vadd.f32 %v6627, %v7011
    %v7013 = vpop.f32.mrf.mxu0
    %7014 = vmatprep.mubr.f32.mxu0 %v6032
    %7015 = vmatmul.mubr.f32.gmra.mxu0 %v6031
    %v7016 = vpop.f32.mrf.mxu0
    %v7017 = vadd.f32 %v6632, %v7016
    %v7018 = vpop.f32.mrf.mxu0
    %7019 = vmatprep.mubr.f32.mxu0 %v6041
    %7020 = vmatmul.mubr.f32.gmra.mxu0 %v6040
    %v7021 = vpop.f32.mrf.mxu0
    %v7022 = vadd.f32 %v6637, %v7021
    %v7023 = vpop.f32.mrf.mxu0
    %7024 = vmatprep.mubr.f32.mxu0 %v6050
    %7025 = vmatmul.mubr.f32.gmra.mxu0 %v6049
    %v7026 = vpop.f32.mrf.mxu0
    %v7027 = vadd.f32 %v6642, %v7026
    %v7028 = vpop.f32.mrf.mxu0
    %7029 = vmatprep.mubr.f32.mxu0 %v6059
    %7030 = vmatmul.mubr.f32.gmra.mxu0 %v6058
    %v7031 = vpop.f32.mrf.mxu0
    %v7032 = vadd.f32 %v6647, %v7031
    %v7033 = vpop.f32.mrf.mxu0
    %7034 = vmatprep.mubr.f32.mxu0 %v6068
    %7035 = vmatmul.mubr.f32.gmra.mxu0 %v6067
    %v7036 = vpop.f32.mrf.mxu0
    %v7037 = vadd.f32 %v6652, %v7036
    %v7038 = vpop.f32.mrf.mxu0
    %7039 = vmatprep.mubr.f32.mxu0 %v6077
    %7040 = vmatmul.mubr.f32.gmra.mxu0 %v6076
    %v7041 = vpop.f32.mrf.mxu0
    %v7042 = vadd.f32 %v6657, %v7041
    %v7043 = vpop.f32.mrf.mxu0
    %7044 = vmatprep.mubr.f32.mxu0 %v6086
    %7045 = vmatmul.mubr.f32.gmra.mxu0 %v6085
    %v7046 = vpop.f32.mrf.mxu0
    %v7047 = vadd.f32 %v6662, %v7046
    %v7048 = vpop.f32.mrf.mxu0
    %7049 = vmatprep.mubr.f32.mxu0 %v6095
    %7050 = vmatmul.mubr.f32.gmra.mxu0 %v6094
    %v7051 = vpop.f32.mrf.mxu0
    %v7052 = vadd.f32 %v6667, %v7051
    %v7053 = vpop.f32.mrf.mxu0
    %7054 = vmatprep.mubr.f32.mxu0 %v6104
    %7055 = vmatmul.mubr.f32.gmra.mxu0 %v6103
    %v7056 = vpop.f32.mrf.mxu0
    %v7057 = vadd.f32 %v6672, %v7056
    %v7058 = vpop.f32.mrf.mxu0
    %7059 = vmatprep.mubr.f32.mxu0 %v6113
    %7060 = vmatmul.mubr.f32.gmra.mxu0 %v6112
    %v7061 = vpop.f32.mrf.mxu0
    %v7062 = vadd.f32 %v6677, %v7061
    %v7063 = vpop.f32.mrf.mxu0
    %7064 = vmatprep.mubr.f32.mxu0 %v6122
    %7065 = vmatmul.mubr.f32.gmra.mxu0 %v6121
    %v7066 = vpop.f32.mrf.mxu0
    %v7067 = vadd.f32 %v6682, %v7066
    %v7068 = vpop.f32.mrf.mxu0
    %7069 = vmatprep.mubr.f32.mxu0 %v6131
    %7070 = vmatmul.mubr.f32.gmra.mxu0 %v6130
    %v7071 = vpop.f32.mrf.mxu0
    %v7072 = vadd.f32 %v6687, %v7071
    %v7073 = vpop.f32.mrf.mxu0
    %7074 = vmatprep.mubr.f32.mxu0 %v6140
    %7075 = vmatmul.mubr.f32.gmra.mxu0 %v6139
    %v7076 = vpop.f32.mrf.mxu0
    %v7077 = vadd.f32 %v6692, %v7076
    %v7078 = vpop.f32.mrf.mxu0
    %7079 = vmatprep.mubr.f32.mxu0 %v6149
    %7080 = vmatmul.mubr.f32.gmra.mxu0 %v6148
    %v7081 = vpop.f32.mrf.mxu0
    %v7082 = vadd.f32 %v6697, %v7081
    %v7083 = vpop.f32.mrf.mxu0
    %7084 = vmatprep.mubr.f32.mxu0 %v6158
    %7085 = vmatmul.mubr.f32.gmra.mxu0 %v6157
    %v7086 = vpop.f32.mrf.mxu0
    %v7087 = vadd.f32 %v6702, %v7086
    %v7088 = vpop.f32.mrf.mxu0
    %7089 = vmatprep.mubr.f32.mxu0 %v6167
    %7090 = vmatmul.mubr.f32.gmra.mxu0 %v6166
    %v7091 = vpop.f32.mrf.mxu0
    %v7092 = vadd.f32 %v6707, %v7091
    %v7093 = vpop.f32.mrf.mxu0
    %7094 = vmatprep.mubr.f32.mxu0 %v6176
    %7095 = vmatmul.mubr.f32.gmra.mxu0 %v6175
    %v7096 = vpop.f32.mrf.mxu0
    %v7097 = vadd.f32 %v6712, %v7096
    %v7098 = vpop.f32.mrf.mxu0
    %7099 = vmatprep.mubr.f32.mxu0 %v6185
    %7100 = vmatmul.mubr.f32.gmra.mxu0 %v6184
    %v7101 = vpop.f32.mrf.mxu0
    %v7102 = vadd.f32 %v6717, %v7101
    %v7103 = vpop.f32.mrf.mxu0
    %7104 = vdwg.mxu0
    %7105 = vmatprep.subr.mxu0 0.0
    %7106 = vmatpush1.msra.mxu0 %v6270
    %7107 = vmatprep.subr.mxu0 0.0
    %7108 = vmatpush1.msra.mxu0 %v6269
    %7109 = vmatprep.subr.mxu0 0.0
    %7110 = vmatpush1.msra.mxu0 %v6268
    %7111 = vmatprep.subr.mxu0 0.0
    %7112 = vmatpush1.msra.mxu0 %v6267
    %7113 = vmatprep.subr.mxu0 0.0
    %7114 = vmatpush1.msra.mxu0 %v6266
    %7115 = vmatprep.subr.mxu0 0.0
    %7116 = vmatpush1.msra.mxu0 %v6265
    %7117 = vmatprep.subr.mxu0 0.0
    %7118 = vmatpush1.msra.mxu0 %v6264
    %7119 = vmatprep.subr.mxu0 0.0
    %7120 = vmatpush1.msra.mxu0 %v6263
    %7121 = vmatprep.subr.mxu0 0.0
    %7122 = vmatpush1.msra.mxu0 %v6262
    %7123 = vmatprep.subr.mxu0 0.0
    %7124 = vmatpush1.msra.mxu0 %v6261
    %7125 = vmatprep.subr.mxu0 0.0
    %7126 = vmatpush1.msra.mxu0 %v6260
    %7127 = vmatprep.subr.mxu0 0.0
    %7128 = vmatpush1.msra.mxu0 %v6259
    %7129 = vmatprep.subr.mxu0 0.0
    %7130 = vmatpush1.msra.mxu0 %v6258
    %7131 = vmatprep.subr.mxu0 0.0
    %7132 = vmatpush1.msra.mxu0 %v6257
    %7133 = vmatprep.subr.mxu0 0.0
    %7134 = vmatpush1.msra.mxu0 %v6256
    %7135 = vmatprep.subr.mxu0 0.0
    %7136 = vmatpush1.msra.mxu0 %v6255
    %7137 = vmatprep.subr.mxu0 0.0
    %7138 = vmatpush2.msra.mxu0 %v6286
    %7139 = vmatprep.subr.mxu0 0.0
    %7140 = vmatpush2.msra.mxu0 %v6285
    %7141 = vmatprep.subr.mxu0 0.0
    %7142 = vmatpush2.msra.mxu0 %v6284
    %7143 = vmatprep.subr.mxu0 0.0
    %7144 = vmatpush2.msra.mxu0 %v6283
    %7145 = vmatprep.subr.mxu0 0.0
    %7146 = vmatpush2.msra.mxu0 %v6282
    %7147 = vmatprep.subr.mxu0 0.0
    %7148 = vmatpush2.msra.mxu0 %v6281
    %7149 = vmatprep.subr.mxu0 0.0
    %7150 = vmatpush2.msra.mxu0 %v6280
    %7151 = vmatprep.subr.mxu0 0.0
    %7152 = vmatpush2.msra.mxu0 %v6279
    %7153 = vmatprep.subr.mxu0 0.0
    %7154 = vmatpush2.msra.mxu0 %v6278
    %7155 = vmatprep.subr.mxu0 0.0
    %7156 = vmatpush2.msra.mxu0 %v6277
    %7157 = vmatprep.subr.mxu0 0.0
    %7158 = vmatpush2.msra.mxu0 %v6276
    %7159 = vmatprep.subr.mxu0 0.0
    %7160 = vmatpush2.msra.mxu0 %v6275
    %7161 = vmatprep.subr.mxu0 0.0
    %7162 = vmatpush2.msra.mxu0 %v6274
    %7163 = vmatprep.subr.mxu0 0.0
    %7164 = vmatpush2.msra.mxu0 %v6273
    %7165 = vmatprep.subr.mxu0 0.0
    %7166 = vmatpush2.msra.mxu0 %v6272
    %7167 = vmatprep.subr.mxu0 0.0
    %7168 = vmatpush2.msra.mxu0 %v6271
    %7169 = vmatprep.mubr.f32.mxu0 %v5620
    %7170 = vmatmul.mubr.f32.gmra.mxu0 %v5619
    %v7171 = vpop.f32.mrf.mxu0
    %v7172 = vadd.f32 %v6787, %v7171
    %v7173 = vpop.f32.mrf.mxu0
    %7174 = vmatprep.mubr.f32.mxu0 %v5629
    %7175 = vmatmul.mubr.f32.gmra.mxu0 %v5628
    %v7176 = vpop.f32.mrf.mxu0
    %v7177 = vadd.f32 %v6792, %v7176
    %v7178 = vpop.f32.mrf.mxu0
    %7179 = vmatprep.mubr.f32.mxu0 %v5638
    %7180 = vmatmul.mubr.f32.gmra.mxu0 %v5637
    %v7181 = vpop.f32.mrf.mxu0
    %v7182 = vadd.f32 %v6797, %v7181
    %v7183 = vpop.f32.mrf.mxu0
    %7184 = vmatprep.mubr.f32.mxu0 %v5647
    %7185 = vmatmul.mubr.f32.gmra.mxu0 %v5646
    %v7186 = vpop.f32.mrf.mxu0
    %v7187 = vadd.f32 %v6802, %v7186
    %v7188 = vpop.f32.mrf.mxu0
    %7189 = vmatprep.mubr.f32.mxu0 %v5656
    %7190 = vmatmul.mubr.f32.gmra.mxu0 %v5655
    %v7191 = vpop.f32.mrf.mxu0
    %v7192 = vadd.f32 %v6807, %v7191
    %v7193 = vpop.f32.mrf.mxu0
    %7194 = vmatprep.mubr.f32.mxu0 %v5665
    %7195 = vmatmul.mubr.f32.gmra.mxu0 %v5664
    %v7196 = vpop.f32.mrf.mxu0
    %v7197 = vadd.f32 %v6812, %v7196
    %v7198 = vpop.f32.mrf.mxu0
    %7199 = vmatprep.mubr.f32.mxu0 %v5674
    %7200 = vmatmul.mubr.f32.gmra.mxu0 %v5673
    %v7201 = vpop.f32.mrf.mxu0
    %v7202 = vadd.f32 %v6817, %v7201
    %v7203 = vpop.f32.mrf.mxu0
    %7204 = vmatprep.mubr.f32.mxu0 %v5683
    %7205 = vmatmul.mubr.f32.gmra.mxu0 %v5682
    %v7206 = vpop.f32.mrf.mxu0
    %v7207 = vadd.f32 %v6822, %v7206
    %v7208 = vpop.f32.mrf.mxu0
    %7209 = vmatprep.mubr.f32.mxu0 %v5692
    %7210 = vmatmul.mubr.f32.gmra.mxu0 %v5691
    %v7211 = vpop.f32.mrf.mxu0
    %v7212 = vadd.f32 %v6827, %v7211
    %v7213 = vpop.f32.mrf.mxu0
    %7214 = vmatprep.mubr.f32.mxu0 %v5701
    %7215 = vmatmul.mubr.f32.gmra.mxu0 %v5700
    %v7216 = vpop.f32.mrf.mxu0
    %v7217 = vadd.f32 %v6832, %v7216
    %v7218 = vpop.f32.mrf.mxu0
    %7219 = vmatprep.mubr.f32.mxu0 %v5710
    %7220 = vmatmul.mubr.f32.gmra.mxu0 %v5709
    %v7221 = vpop.f32.mrf.mxu0
    %v7222 = vadd.f32 %v6837, %v7221
    %v7223 = vpop.f32.mrf.mxu0
    %7224 = vmatprep.mubr.f32.mxu0 %v5719
    %7225 = vmatmul.mubr.f32.gmra.mxu0 %v5718
    %v7226 = vpop.f32.mrf.mxu0
    %v7227 = vadd.f32 %v6842, %v7226
    %v7228 = vpop.f32.mrf.mxu0
    %7229 = vmatprep.mubr.f32.mxu0 %v5728
    %7230 = vmatmul.mubr.f32.gmra.mxu0 %v5727
    %v7231 = vpop.f32.mrf.mxu0
    %v7232 = vadd.f32 %v6847, %v7231
    %v7233 = vpop.f32.mrf.mxu0
    %7234 = vmatprep.mubr.f32.mxu0 %v5737
    %7235 = vmatmul.mubr.f32.gmra.mxu0 %v5736
    %v7236 = vpop.f32.mrf.mxu0
    %v7237 = vadd.f32 %v6852, %v7236
    %v7238 = vpop.f32.mrf.mxu0
    %7239 = vmatprep.mubr.f32.mxu0 %v5746
    %7240 = vmatmul.mubr.f32.gmra.mxu0 %v5745
    %v7241 = vpop.f32.mrf.mxu0
    %v7242 = vadd.f32 %v6857, %v7241
    %v7243 = vpop.f32.mrf.mxu0
    %7244 = vmatprep.mubr.f32.mxu0 %v5755
    %7245 = vmatmul.mubr.f32.gmra.mxu0 %v5754
    %v7246 = vpop.f32.mrf.mxu0
    %v7247 = vadd.f32 %v6862, %v7246
    %v7248 = vpop.f32.mrf.mxu0
    %7249 = vmatprep.mubr.f32.mxu0 %v5764
    %7250 = vmatmul.mubr.f32.gmra.mxu0 %v5763
    %v7251 = vpop.f32.mrf.mxu0
    %v7252 = vadd.f32 %v6867, %v7251
    %v7253 = vpop.f32.mrf.mxu0
    %7254 = vmatprep.mubr.f32.mxu0 %v5773
    %7255 = vmatmul.mubr.f32.gmra.mxu0 %v5772
    %v7256 = vpop.f32.mrf.mxu0
    %v7257 = vadd.f32 %v6872, %v7256
    %v7258 = vpop.f32.mrf.mxu0
    %7259 = vmatprep.mubr.f32.mxu0 %v5782
    %7260 = vmatmul.mubr.f32.gmra.mxu0 %v5781
    %v7261 = vpop.f32.mrf.mxu0
    %v7262 = vadd.f32 %v6877, %v7261
    %v7263 = vpop.f32.mrf.mxu0
    %7264 = vmatprep.mubr.f32.mxu0 %v5791
    %7265 = vmatmul.mubr.f32.gmra.mxu0 %v5790
    %v7266 = vpop.f32.mrf.mxu0
    %v7267 = vadd.f32 %v6882, %v7266
    %v7268 = vpop.f32.mrf.mxu0
    %7269 = vmatprep.mubr.f32.mxu0 %v5800
    %7270 = vmatmul.mubr.f32.gmra.mxu0 %v5799
    %v7271 = vpop.f32.mrf.mxu0
    %v7272 = vadd.f32 %v6887, %v7271
    %v7273 = vpop.f32.mrf.mxu0
    %7274 = vmatprep.mubr.f32.mxu0 %v5809
    %7275 = vmatmul.mubr.f32.gmra.mxu0 %v5808
    %v7276 = vpop.f32.mrf.mxu0
    %v7277 = vadd.f32 %v6892, %v7276
    %v7278 = vpop.f32.mrf.mxu0
    %7279 = vmatprep.mubr.f32.mxu0 %v5818
    %7280 = vmatmul.mubr.f32.gmra.mxu0 %v5817
    %v7281 = vpop.f32.mrf.mxu0
    %v7282 = vadd.f32 %v6897, %v7281
    %v7283 = vpop.f32.mrf.mxu0
    %7284 = vmatprep.mubr.f32.mxu0 %v5827
    %7285 = vmatmul.mubr.f32.gmra.mxu0 %v5826
    %v7286 = vpop.f32.mrf.mxu0
    %v7287 = vadd.f32 %v6902, %v7286
    %v7288 = vpop.f32.mrf.mxu0
    %7289 = vmatprep.mubr.f32.mxu0 %v5836
    %7290 = vmatmul.mubr.f32.gmra.mxu0 %v5835
    %v7291 = vpop.f32.mrf.mxu0
    %v7292 = vadd.f32 %v6907, %v7291
    %v7293 = vpop.f32.mrf.mxu0
    %7294 = vmatprep.mubr.f32.mxu0 %v5845
    %7295 = vmatmul.mubr.f32.gmra.mxu0 %v5844
    %v7296 = vpop.f32.mrf.mxu0
    %v7297 = vadd.f32 %v6912, %v7296
    %v7298 = vpop.f32.mrf.mxu0
    %7299 = vmatprep.mubr.f32.mxu0 %v5854
    %7300 = vmatmul.mubr.f32.gmra.mxu0 %v5853
    %v7301 = vpop.f32.mrf.mxu0
    %v7302 = vadd.f32 %v6917, %v7301
    %v7303 = vpop.f32.mrf.mxu0
    %7304 = vmatprep.mubr.f32.mxu0 %v5863
    %7305 = vmatmul.mubr.f32.gmra.mxu0 %v5862
    %v7306 = vpop.f32.mrf.mxu0
    %v7307 = vadd.f32 %v6922, %v7306
    %v7308 = vpop.f32.mrf.mxu0
    %7309 = vmatprep.mubr.f32.mxu0 %v5872
    %7310 = vmatmul.mubr.f32.gmra.mxu0 %v5871
    %v7311 = vpop.f32.mrf.mxu0
    %v7312 = vadd.f32 %v6927, %v7311
    %v7313 = vpop.f32.mrf.mxu0
    %7314 = vmatprep.mubr.f32.mxu0 %v5881
    %7315 = vmatmul.mubr.f32.gmra.mxu0 %v5880
    %v7316 = vpop.f32.mrf.mxu0
    %v7317 = vadd.f32 %v6932, %v7316
    %v7318 = vpop.f32.mrf.mxu0
    %7319 = vmatprep.mubr.f32.mxu0 %v5890
    %7320 = vmatmul.mubr.f32.gmra.mxu0 %v5889
    %v7321 = vpop.f32.mrf.mxu0
    %v7322 = vadd.f32 %v6937, %v7321
    %v7323 = vpop.f32.mrf.mxu0
    %7324 = vmatprep.mubr.f32.mxu0 %v5899
    %7325 = vmatmul.mubr.f32.gmra.mxu0 %v5898
    %v7326 = vpop.f32.mrf.mxu0
    %v7327 = vadd.f32 %v6942, %v7326
    %v7328 = vpop.f32.mrf.mxu0
    %7329 = vmatprep.mubr.f32.mxu0 %v5908
    %7330 = vmatmul.mubr.f32.gmra.mxu0 %v5907
    %v7331 = vpop.f32.mrf.mxu0
    %v7332 = vadd.f32 %v6947, %v7331
    %v7333 = vpop.f32.mrf.mxu0
    %7334 = vmatprep.mubr.f32.mxu0 %v5917
    %7335 = vmatmul.mubr.f32.gmra.mxu0 %v5916
    %v7336 = vpop.f32.mrf.mxu0
    %v7337 = vadd.f32 %v6952, %v7336
    %v7338 = vpop.f32.mrf.mxu0
    %7339 = vmatprep.mubr.f32.mxu0 %v5926
    %7340 = vmatmul.mubr.f32.gmra.mxu0 %v5925
    %v7341 = vpop.f32.mrf.mxu0
    %v7342 = vadd.f32 %v6957, %v7341
    %v7343 = vpop.f32.mrf.mxu0
    %7344 = vmatprep.mubr.f32.mxu0 %v5935
    %7345 = vmatmul.mubr.f32.gmra.mxu0 %v5934
    %v7346 = vpop.f32.mrf.mxu0
    %v7347 = vadd.f32 %v6962, %v7346
    %v7348 = vpop.f32.mrf.mxu0
    %7349 = vmatprep.mubr.f32.mxu0 %v5944
    %7350 = vmatmul.mubr.f32.gmra.mxu0 %v5943
    %v7351 = vpop.f32.mrf.mxu0
    %v7352 = vadd.f32 %v6967, %v7351
    %v7353 = vpop.f32.mrf.mxu0
    %7354 = vmatprep.mubr.f32.mxu0 %v5953
    %7355 = vmatmul.mubr.f32.gmra.mxu0 %v5952
    %v7356 = vpop.f32.mrf.mxu0
    %v7357 = vadd.f32 %v6972, %v7356
    %v7358 = vpop.f32.mrf.mxu0
    %7359 = vmatprep.mubr.f32.mxu0 %v5962
    %7360 = vmatmul.mubr.f32.gmra.mxu0 %v5961
    %v7361 = vpop.f32.mrf.mxu0
    %v7362 = vadd.f32 %v6977, %v7361
    %v7363 = vpop.f32.mrf.mxu0
    %7364 = vmatprep.mubr.f32.mxu0 %v5971
    %7365 = vmatmul.mubr.f32.gmra.mxu0 %v5970
    %v7366 = vpop.f32.mrf.mxu0
    %v7367 = vadd.f32 %v6982, %v7366
    %v7368 = vpop.f32.mrf.mxu0
    %7369 = vmatprep.mubr.f32.mxu0 %v5980
    %7370 = vmatmul.mubr.f32.gmra.mxu0 %v5979
    %v7371 = vpop.f32.mrf.mxu0
    %v7372 = vadd.f32 %v6987, %v7371
    %v7373 = vpop.f32.mrf.mxu0
    %7374 = vmatprep.mubr.f32.mxu0 %v5989
    %7375 = vmatmul.mubr.f32.gmra.mxu0 %v5988
    %v7376 = vpop.f32.mrf.mxu0
    %v7377 = vadd.f32 %v6992, %v7376
    %v7378 = vpop.f32.mrf.mxu0
    %7379 = vmatprep.mubr.f32.mxu0 %v5998
    %7380 = vmatmul.mubr.f32.gmra.mxu0 %v5997
    %v7381 = vpop.f32.mrf.mxu0
    %v7382 = vadd.f32 %v6997, %v7381
    %v7383 = vpop.f32.mrf.mxu0
    %7384 = vmatprep.mubr.f32.mxu0 %v6007
    %7385 = vmatmul.mubr.f32.gmra.mxu0 %v6006
    %v7386 = vpop.f32.mrf.mxu0
    %v7387 = vadd.f32 %v7002, %v7386
    %v7388 = vpop.f32.mrf.mxu0
    %7389 = vmatprep.mubr.f32.mxu0 %v6016
    %7390 = vmatmul.mubr.f32.gmra.mxu0 %v6015
    %v7391 = vpop.f32.mrf.mxu0
    %v7392 = vadd.f32 %v7007, %v7391
    %v7393 = vpop.f32.mrf.mxu0
    %7394 = vmatprep.mubr.f32.mxu0 %v6025
    %7395 = vmatmul.mubr.f32.gmra.mxu0 %v6024
    %v7396 = vpop.f32.mrf.mxu0
    %v7397 = vadd.f32 %v7012, %v7396
    %v7398 = vpop.f32.mrf.mxu0
    %7399 = vmatprep.mubr.f32.mxu0 %v6034
    %7400 = vmatmul.mubr.f32.gmra.mxu0 %v6033
    %v7401 = vpop.f32.mrf.mxu0
    %v7402 = vadd.f32 %v7017, %v7401
    %v7403 = vpop.f32.mrf.mxu0
    %7404 = vmatprep.mubr.f32.mxu0 %v6043
    %7405 = vmatmul.mubr.f32.gmra.mxu0 %v6042
    %v7406 = vpop.f32.mrf.mxu0
    %v7407 = vadd.f32 %v7022, %v7406
    %v7408 = vpop.f32.mrf.mxu0
    %7409 = vmatprep.mubr.f32.mxu0 %v6052
    %7410 = vmatmul.mubr.f32.gmra.mxu0 %v6051
    %v7411 = vpop.f32.mrf.mxu0
    %v7412 = vadd.f32 %v7027, %v7411
    %v7413 = vpop.f32.mrf.mxu0
    %7414 = vmatprep.mubr.f32.mxu0 %v6061
    %7415 = vmatmul.mubr.f32.gmra.mxu0 %v6060
    %v7416 = vpop.f32.mrf.mxu0
    %v7417 = vadd.f32 %v7032, %v7416
    %v7418 = vpop.f32.mrf.mxu0
    %7419 = vmatprep.mubr.f32.mxu0 %v6070
    %7420 = vmatmul.mubr.f32.gmra.mxu0 %v6069
    %v7421 = vpop.f32.mrf.mxu0
    %v7422 = vadd.f32 %v7037, %v7421
    %v7423 = vpop.f32.mrf.mxu0
    %7424 = vmatprep.mubr.f32.mxu0 %v6079
    %7425 = vmatmul.mubr.f32.gmra.mxu0 %v6078
    %v7426 = vpop.f32.mrf.mxu0
    %v7427 = vadd.f32 %v7042, %v7426
    %v7428 = vpop.f32.mrf.mxu0
    %7429 = vmatprep.mubr.f32.mxu0 %v6088
    %7430 = vmatmul.mubr.f32.gmra.mxu0 %v6087
    %v7431 = vpop.f32.mrf.mxu0
    %v7432 = vadd.f32 %v7047, %v7431
    %v7433 = vpop.f32.mrf.mxu0
    %7434 = vmatprep.mubr.f32.mxu0 %v6097
    %7435 = vmatmul.mubr.f32.gmra.mxu0 %v6096
    %v7436 = vpop.f32.mrf.mxu0
    %v7437 = vadd.f32 %v7052, %v7436
    %v7438 = vpop.f32.mrf.mxu0
    %7439 = vmatprep.mubr.f32.mxu0 %v6106
    %7440 = vmatmul.mubr.f32.gmra.mxu0 %v6105
    %v7441 = vpop.f32.mrf.mxu0
    %v7442 = vadd.f32 %v7057, %v7441
    %v7443 = vpop.f32.mrf.mxu0
    %7444 = vmatprep.mubr.f32.mxu0 %v6115
    %7445 = vmatmul.mubr.f32.gmra.mxu0 %v6114
    %v7446 = vpop.f32.mrf.mxu0
    %v7447 = vadd.f32 %v7062, %v7446
    %v7448 = vpop.f32.mrf.mxu0
    %7449 = vmatprep.mubr.f32.mxu0 %v6124
    %7450 = vmatmul.mubr.f32.gmra.mxu0 %v6123
    %v7451 = vpop.f32.mrf.mxu0
    %v7452 = vadd.f32 %v7067, %v7451
    %v7453 = vpop.f32.mrf.mxu0
    %7454 = vmatprep.mubr.f32.mxu0 %v6133
    %7455 = vmatmul.mubr.f32.gmra.mxu0 %v6132
    %v7456 = vpop.f32.mrf.mxu0
    %v7457 = vadd.f32 %v7072, %v7456
    %v7458 = vpop.f32.mrf.mxu0
    %7459 = vmatprep.mubr.f32.mxu0 %v6142
    %7460 = vmatmul.mubr.f32.gmra.mxu0 %v6141
    %v7461 = vpop.f32.mrf.mxu0
    %v7462 = vadd.f32 %v7077, %v7461
    %v7463 = vpop.f32.mrf.mxu0
    %7464 = vmatprep.mubr.f32.mxu0 %v6151
    %7465 = vmatmul.mubr.f32.gmra.mxu0 %v6150
    %v7466 = vpop.f32.mrf.mxu0
    %v7467 = vadd.f32 %v7082, %v7466
    %v7468 = vpop.f32.mrf.mxu0
    %7469 = vmatprep.mubr.f32.mxu0 %v6160
    %7470 = vmatmul.mubr.f32.gmra.mxu0 %v6159
    %v7471 = vpop.f32.mrf.mxu0
    %v7472 = vadd.f32 %v7087, %v7471
    %v7473 = vpop.f32.mrf.mxu0
    %7474 = vmatprep.mubr.f32.mxu0 %v6169
    %7475 = vmatmul.mubr.f32.gmra.mxu0 %v6168
    %v7476 = vpop.f32.mrf.mxu0
    %v7477 = vadd.f32 %v7092, %v7476
    %v7478 = vpop.f32.mrf.mxu0
    %7479 = vmatprep.mubr.f32.mxu0 %v6178
    %7480 = vmatmul.mubr.f32.gmra.mxu0 %v6177
    %v7481 = vpop.f32.mrf.mxu0
    %v7482 = vadd.f32 %v7097, %v7481
    %v7483 = vpop.f32.mrf.mxu0
    %7484 = vmatprep.mubr.f32.mxu0 %v6187
    %7485 = vmatmul.mubr.f32.gmra.mxu0 %v6186
    %v7486 = vpop.f32.mrf.mxu0
    %v7487 = vadd.f32 %v7102, %v7486
    %v7488 = vpop.f32.mrf.mxu0
    %7489 = vdwg.mxu0
    %7490 = vmatprep.subr.mxu0 0.0
    %7491 = vmatpush1.msra.mxu0 %v6302
    %7492 = vmatprep.subr.mxu0 0.0
    %7493 = vmatpush1.msra.mxu0 %v6301
    %7494 = vmatprep.subr.mxu0 0.0
    %7495 = vmatpush1.msra.mxu0 %v6300
    %7496 = vmatprep.subr.mxu0 0.0
    %7497 = vmatpush1.msra.mxu0 %v6299
    %7498 = vmatprep.subr.mxu0 0.0
    %7499 = vmatpush1.msra.mxu0 %v6298
    %7500 = vmatprep.subr.mxu0 0.0
    %7501 = vmatpush1.msra.mxu0 %v6297
    %7502 = vmatprep.subr.mxu0 0.0
    %7503 = vmatpush1.msra.mxu0 %v6296
    %7504 = vmatprep.subr.mxu0 0.0
    %7505 = vmatpush1.msra.mxu0 %v6295
    %7506 = vmatprep.subr.mxu0 0.0
    %7507 = vmatpush1.msra.mxu0 %v6294
    %7508 = vmatprep.subr.mxu0 0.0
    %7509 = vmatpush1.msra.mxu0 %v6293
    %7510 = vmatprep.subr.mxu0 0.0
    %7511 = vmatpush1.msra.mxu0 %v6292
    %7512 = vmatprep.subr.mxu0 0.0
    %7513 = vmatpush1.msra.mxu0 %v6291
    %7514 = vmatprep.subr.mxu0 0.0
    %7515 = vmatpush1.msra.mxu0 %v6290
    %7516 = vmatprep.subr.mxu0 0.0
    %7517 = vmatpush1.msra.mxu0 %v6289
    %7518 = vmatprep.subr.mxu0 0.0
    %7519 = vmatpush1.msra.mxu0 %v6288
    %7520 = vmatprep.subr.mxu0 0.0
    %7521 = vmatpush1.msra.mxu0 %v6287
    %7522 = vmatprep.subr.mxu0 0.0
    %7523 = vmatpush2.msra.mxu0 %v6318
    %7524 = vmatprep.subr.mxu0 0.0
    %7525 = vmatpush2.msra.mxu0 %v6317
    %7526 = vmatprep.subr.mxu0 0.0
    %7527 = vmatpush2.msra.mxu0 %v6316
    %7528 = vmatprep.subr.mxu0 0.0
    %7529 = vmatpush2.msra.mxu0 %v6315
    %7530 = vmatprep.subr.mxu0 0.0
    %7531 = vmatpush2.msra.mxu0 %v6314
    %7532 = vmatprep.subr.mxu0 0.0
    %7533 = vmatpush2.msra.mxu0 %v6313
    %7534 = vmatprep.subr.mxu0 0.0
    %7535 = vmatpush2.msra.mxu0 %v6312
    %7536 = vmatprep.subr.mxu0 0.0
    %7537 = vmatpush2.msra.mxu0 %v6311
    %7538 = vmatprep.subr.mxu0 0.0
    %7539 = vmatpush2.msra.mxu0 %v6310
    %7540 = vmatprep.subr.mxu0 0.0
    %7541 = vmatpush2.msra.mxu0 %v6309
    %7542 = vmatprep.subr.mxu0 0.0
    %7543 = vmatpush2.msra.mxu0 %v6308
    %7544 = vmatprep.subr.mxu0 0.0
    %7545 = vmatpush2.msra.mxu0 %v6307
    %7546 = vmatprep.subr.mxu0 0.0
    %7547 = vmatpush2.msra.mxu0 %v6306
    %7548 = vmatprep.subr.mxu0 0.0
    %7549 = vmatpush2.msra.mxu0 %v6305
    %7550 = vmatprep.subr.mxu0 0.0
    %7551 = vmatpush2.msra.mxu0 %v6304
    %7552 = vmatprep.subr.mxu0 0.0
    %7553 = vmatpush2.msra.mxu0 %v6303
    %7554 = vmatprep.mubr.f32.mxu0 %v5622
    %7555 = vmatmul.mubr.f32.gmra.mxu0 %v5621
    %v7556 = vpop.f32.mrf.mxu0
    %v7557 = vadd.f32 %v7172, %v7556
    %v7558 = vpop.f32.mrf.mxu0
    %7559 = vmatprep.mubr.f32.mxu0 %v5631
    %7560 = vmatmul.mubr.f32.gmra.mxu0 %v5630
    %v7561 = vpop.f32.mrf.mxu0
    %v7562 = vadd.f32 %v7177, %v7561
    %v7563 = vpop.f32.mrf.mxu0
    %7564 = vmatprep.mubr.f32.mxu0 %v5640
    %7565 = vmatmul.mubr.f32.gmra.mxu0 %v5639
    %v7566 = vpop.f32.mrf.mxu0
    %v7567 = vadd.f32 %v7182, %v7566
    %v7568 = vpop.f32.mrf.mxu0
    %7569 = vmatprep.mubr.f32.mxu0 %v5649
    %7570 = vmatmul.mubr.f32.gmra.mxu0 %v5648
    %v7571 = vpop.f32.mrf.mxu0
    %v7572 = vadd.f32 %v7187, %v7571
    %v7573 = vpop.f32.mrf.mxu0
    %7574 = vmatprep.mubr.f32.mxu0 %v5658
    %7575 = vmatmul.mubr.f32.gmra.mxu0 %v5657
    %v7576 = vpop.f32.mrf.mxu0
    %v7577 = vadd.f32 %v7192, %v7576
    %v7578 = vpop.f32.mrf.mxu0
    %7579 = vmatprep.mubr.f32.mxu0 %v5667
    %7580 = vmatmul.mubr.f32.gmra.mxu0 %v5666
    %v7581 = vpop.f32.mrf.mxu0
    %v7582 = vadd.f32 %v7197, %v7581
    %v7583 = vpop.f32.mrf.mxu0
    %7584 = vmatprep.mubr.f32.mxu0 %v5676
    %7585 = vmatmul.mubr.f32.gmra.mxu0 %v5675
    %v7586 = vpop.f32.mrf.mxu0
    %v7587 = vadd.f32 %v7202, %v7586
    %v7588 = vpop.f32.mrf.mxu0
    %7589 = vmatprep.mubr.f32.mxu0 %v5685
    %7590 = vmatmul.mubr.f32.gmra.mxu0 %v5684
    %v7591 = vpop.f32.mrf.mxu0
    %v7592 = vadd.f32 %v7207, %v7591
    %v7593 = vpop.f32.mrf.mxu0
    %7594 = vmatprep.mubr.f32.mxu0 %v5694
    %7595 = vmatmul.mubr.f32.gmra.mxu0 %v5693
    %v7596 = vpop.f32.mrf.mxu0
    %v7597 = vadd.f32 %v7212, %v7596
    %v7598 = vpop.f32.mrf.mxu0
    %7599 = vmatprep.mubr.f32.mxu0 %v5703
    %7600 = vmatmul.mubr.f32.gmra.mxu0 %v5702
    %v7601 = vpop.f32.mrf.mxu0
    %v7602 = vadd.f32 %v7217, %v7601
    %v7603 = vpop.f32.mrf.mxu0
    %7604 = vmatprep.mubr.f32.mxu0 %v5712
    %7605 = vmatmul.mubr.f32.gmra.mxu0 %v5711
    %v7606 = vpop.f32.mrf.mxu0
    %v7607 = vadd.f32 %v7222, %v7606
    %v7608 = vpop.f32.mrf.mxu0
    %7609 = vmatprep.mubr.f32.mxu0 %v5721
    %7610 = vmatmul.mubr.f32.gmra.mxu0 %v5720
    %v7611 = vpop.f32.mrf.mxu0
    %v7612 = vadd.f32 %v7227, %v7611
    %v7613 = vpop.f32.mrf.mxu0
    %7614 = vmatprep.mubr.f32.mxu0 %v5730
    %7615 = vmatmul.mubr.f32.gmra.mxu0 %v5729
    %v7616 = vpop.f32.mrf.mxu0
    %v7617 = vadd.f32 %v7232, %v7616
    %v7618 = vpop.f32.mrf.mxu0
    %7619 = vmatprep.mubr.f32.mxu0 %v5739
    %7620 = vmatmul.mubr.f32.gmra.mxu0 %v5738
    %v7621 = vpop.f32.mrf.mxu0
    %v7622 = vadd.f32 %v7237, %v7621
    %v7623 = vpop.f32.mrf.mxu0
    %7624 = vmatprep.mubr.f32.mxu0 %v5748
    %7625 = vmatmul.mubr.f32.gmra.mxu0 %v5747
    %v7626 = vpop.f32.mrf.mxu0
    %v7627 = vadd.f32 %v7242, %v7626
    %v7628 = vpop.f32.mrf.mxu0
    %7629 = vmatprep.mubr.f32.mxu0 %v5757
    %7630 = vmatmul.mubr.f32.gmra.mxu0 %v5756
    %v7631 = vpop.f32.mrf.mxu0
    %v7632 = vadd.f32 %v7247, %v7631
    %v7633 = vpop.f32.mrf.mxu0
    %7634 = vmatprep.mubr.f32.mxu0 %v5766
    %7635 = vmatmul.mubr.f32.gmra.mxu0 %v5765
    %v7636 = vpop.f32.mrf.mxu0
    %v7637 = vadd.f32 %v7252, %v7636
    %v7638 = vpop.f32.mrf.mxu0
    %7639 = vmatprep.mubr.f32.mxu0 %v5775
    %7640 = vmatmul.mubr.f32.gmra.mxu0 %v5774
    %v7641 = vpop.f32.mrf.mxu0
    %v7642 = vadd.f32 %v7257, %v7641
    %v7643 = vpop.f32.mrf.mxu0
    %7644 = vmatprep.mubr.f32.mxu0 %v5784
    %7645 = vmatmul.mubr.f32.gmra.mxu0 %v5783
    %v7646 = vpop.f32.mrf.mxu0
    %v7647 = vadd.f32 %v7262, %v7646
    %v7648 = vpop.f32.mrf.mxu0
    %7649 = vmatprep.mubr.f32.mxu0 %v5793
    %7650 = vmatmul.mubr.f32.gmra.mxu0 %v5792
    %v7651 = vpop.f32.mrf.mxu0
    %v7652 = vadd.f32 %v7267, %v7651
    %v7653 = vpop.f32.mrf.mxu0
    %7654 = vmatprep.mubr.f32.mxu0 %v5802
    %7655 = vmatmul.mubr.f32.gmra.mxu0 %v5801
    %v7656 = vpop.f32.mrf.mxu0
    %v7657 = vadd.f32 %v7272, %v7656
    %v7658 = vpop.f32.mrf.mxu0
    %7659 = vmatprep.mubr.f32.mxu0 %v5811
    %7660 = vmatmul.mubr.f32.gmra.mxu0 %v5810
    %v7661 = vpop.f32.mrf.mxu0
    %v7662 = vadd.f32 %v7277, %v7661
    %v7663 = vpop.f32.mrf.mxu0
    %7664 = vmatprep.mubr.f32.mxu0 %v5820
    %7665 = vmatmul.mubr.f32.gmra.mxu0 %v5819
    %v7666 = vpop.f32.mrf.mxu0
    %v7667 = vadd.f32 %v7282, %v7666
    %v7668 = vpop.f32.mrf.mxu0
    %7669 = vmatprep.mubr.f32.mxu0 %v5829
    %7670 = vmatmul.mubr.f32.gmra.mxu0 %v5828
    %v7671 = vpop.f32.mrf.mxu0
    %v7672 = vadd.f32 %v7287, %v7671
    %v7673 = vpop.f32.mrf.mxu0
    %7674 = vmatprep.mubr.f32.mxu0 %v5838
    %7675 = vmatmul.mubr.f32.gmra.mxu0 %v5837
    %v7676 = vpop.f32.mrf.mxu0
    %v7677 = vadd.f32 %v7292, %v7676
    %v7678 = vpop.f32.mrf.mxu0
    %7679 = vmatprep.mubr.f32.mxu0 %v5847
    %7680 = vmatmul.mubr.f32.gmra.mxu0 %v5846
    %v7681 = vpop.f32.mrf.mxu0
    %v7682 = vadd.f32 %v7297, %v7681
    %v7683 = vpop.f32.mrf.mxu0
    %7684 = vmatprep.mubr.f32.mxu0 %v5856
    %7685 = vmatmul.mubr.f32.gmra.mxu0 %v5855
    %v7686 = vpop.f32.mrf.mxu0
    %v7687 = vadd.f32 %v7302, %v7686
    %v7688 = vpop.f32.mrf.mxu0
    %7689 = vmatprep.mubr.f32.mxu0 %v5865
    %7690 = vmatmul.mubr.f32.gmra.mxu0 %v5864
    %v7691 = vpop.f32.mrf.mxu0
    %v7692 = vadd.f32 %v7307, %v7691
    %v7693 = vpop.f32.mrf.mxu0
    %7694 = vmatprep.mubr.f32.mxu0 %v5874
    %7695 = vmatmul.mubr.f32.gmra.mxu0 %v5873
    %v7696 = vpop.f32.mrf.mxu0
    %v7697 = vadd.f32 %v7312, %v7696
    %v7698 = vpop.f32.mrf.mxu0
    %7699 = vmatprep.mubr.f32.mxu0 %v5883
    %7700 = vmatmul.mubr.f32.gmra.mxu0 %v5882
    %v7701 = vpop.f32.mrf.mxu0
    %v7702 = vadd.f32 %v7317, %v7701
    %v7703 = vpop.f32.mrf.mxu0
    %7704 = vmatprep.mubr.f32.mxu0 %v5892
    %7705 = vmatmul.mubr.f32.gmra.mxu0 %v5891
    %v7706 = vpop.f32.mrf.mxu0
    %v7707 = vadd.f32 %v7322, %v7706
    %v7708 = vpop.f32.mrf.mxu0
    %7709 = vmatprep.mubr.f32.mxu0 %v5901
    %7710 = vmatmul.mubr.f32.gmra.mxu0 %v5900
    %v7711 = vpop.f32.mrf.mxu0
    %v7712 = vadd.f32 %v7327, %v7711
    %v7713 = vpop.f32.mrf.mxu0
    %7714 = vmatprep.mubr.f32.mxu0 %v5910
    %7715 = vmatmul.mubr.f32.gmra.mxu0 %v5909
    %v7716 = vpop.f32.mrf.mxu0
    %v7717 = vadd.f32 %v7332, %v7716
    %v7718 = vpop.f32.mrf.mxu0
    %7719 = vmatprep.mubr.f32.mxu0 %v5919
    %7720 = vmatmul.mubr.f32.gmra.mxu0 %v5918
    %v7721 = vpop.f32.mrf.mxu0
    %v7722 = vadd.f32 %v7337, %v7721
    %v7723 = vpop.f32.mrf.mxu0
    %7724 = vmatprep.mubr.f32.mxu0 %v5928
    %7725 = vmatmul.mubr.f32.gmra.mxu0 %v5927
    %v7726 = vpop.f32.mrf.mxu0
    %v7727 = vadd.f32 %v7342, %v7726
    %v7728 = vpop.f32.mrf.mxu0
    %7729 = vmatprep.mubr.f32.mxu0 %v5937
    %7730 = vmatmul.mubr.f32.gmra.mxu0 %v5936
    %v7731 = vpop.f32.mrf.mxu0
    %v7732 = vadd.f32 %v7347, %v7731
    %v7733 = vpop.f32.mrf.mxu0
    %7734 = vmatprep.mubr.f32.mxu0 %v5946
    %7735 = vmatmul.mubr.f32.gmra.mxu0 %v5945
    %v7736 = vpop.f32.mrf.mxu0
    %v7737 = vadd.f32 %v7352, %v7736
    %v7738 = vpop.f32.mrf.mxu0
    %7739 = vmatprep.mubr.f32.mxu0 %v5955
    %7740 = vmatmul.mubr.f32.gmra.mxu0 %v5954
    %v7741 = vpop.f32.mrf.mxu0
    %v7742 = vadd.f32 %v7357, %v7741
    %v7743 = vpop.f32.mrf.mxu0
    %7744 = vmatprep.mubr.f32.mxu0 %v5964
    %7745 = vmatmul.mubr.f32.gmra.mxu0 %v5963
    %v7746 = vpop.f32.mrf.mxu0
    %v7747 = vadd.f32 %v7362, %v7746
    %v7748 = vpop.f32.mrf.mxu0
    %7749 = vmatprep.mubr.f32.mxu0 %v5973
    %7750 = vmatmul.mubr.f32.gmra.mxu0 %v5972
    %v7751 = vpop.f32.mrf.mxu0
    %v7752 = vadd.f32 %v7367, %v7751
    %v7753 = vpop.f32.mrf.mxu0
    %7754 = vmatprep.mubr.f32.mxu0 %v5982
    %7755 = vmatmul.mubr.f32.gmra.mxu0 %v5981
    %v7756 = vpop.f32.mrf.mxu0
    %v7757 = vadd.f32 %v7372, %v7756
    %v7758 = vpop.f32.mrf.mxu0
    %7759 = vmatprep.mubr.f32.mxu0 %v5991
    %7760 = vmatmul.mubr.f32.gmra.mxu0 %v5990
    %v7761 = vpop.f32.mrf.mxu0
    %v7762 = vadd.f32 %v7377, %v7761
    %v7763 = vpop.f32.mrf.mxu0
    %7764 = vmatprep.mubr.f32.mxu0 %v6000
    %7765 = vmatmul.mubr.f32.gmra.mxu0 %v5999
    %v7766 = vpop.f32.mrf.mxu0
    %v7767 = vadd.f32 %v7382, %v7766
    %v7768 = vpop.f32.mrf.mxu0
    %7769 = vmatprep.mubr.f32.mxu0 %v6009
    %7770 = vmatmul.mubr.f32.gmra.mxu0 %v6008
    %v7771 = vpop.f32.mrf.mxu0
    %v7772 = vadd.f32 %v7387, %v7771
    %v7773 = vpop.f32.mrf.mxu0
    %7774 = vmatprep.mubr.f32.mxu0 %v6018
    %7775 = vmatmul.mubr.f32.gmra.mxu0 %v6017
    %v7776 = vpop.f32.mrf.mxu0
    %v7777 = vadd.f32 %v7392, %v7776
    %v7778 = vpop.f32.mrf.mxu0
    %7779 = vmatprep.mubr.f32.mxu0 %v6027
    %7780 = vmatmul.mubr.f32.gmra.mxu0 %v6026
    %v7781 = vpop.f32.mrf.mxu0
    %v7782 = vadd.f32 %v7397, %v7781
    %v7783 = vpop.f32.mrf.mxu0
    %7784 = vmatprep.mubr.f32.mxu0 %v6036
    %7785 = vmatmul.mubr.f32.gmra.mxu0 %v6035
    %v7786 = vpop.f32.mrf.mxu0
    %v7787 = vadd.f32 %v7402, %v7786
    %v7788 = vpop.f32.mrf.mxu0
    %7789 = vmatprep.mubr.f32.mxu0 %v6045
    %7790 = vmatmul.mubr.f32.gmra.mxu0 %v6044
    %v7791 = vpop.f32.mrf.mxu0
    %v7792 = vadd.f32 %v7407, %v7791
    %v7793 = vpop.f32.mrf.mxu0
    %7794 = vmatprep.mubr.f32.mxu0 %v6054
    %7795 = vmatmul.mubr.f32.gmra.mxu0 %v6053
    %v7796 = vpop.f32.mrf.mxu0
    %v7797 = vadd.f32 %v7412, %v7796
    %v7798 = vpop.f32.mrf.mxu0
    %7799 = vmatprep.mubr.f32.mxu0 %v6063
    %7800 = vmatmul.mubr.f32.gmra.mxu0 %v6062
    %v7801 = vpop.f32.mrf.mxu0
    %v7802 = vadd.f32 %v7417, %v7801
    %v7803 = vpop.f32.mrf.mxu0
    %7804 = vmatprep.mubr.f32.mxu0 %v6072
    %7805 = vmatmul.mubr.f32.gmra.mxu0 %v6071
    %v7806 = vpop.f32.mrf.mxu0
    %v7807 = vadd.f32 %v7422, %v7806
    %v7808 = vpop.f32.mrf.mxu0
    %7809 = vmatprep.mubr.f32.mxu0 %v6081
    %7810 = vmatmul.mubr.f32.gmra.mxu0 %v6080
    %v7811 = vpop.f32.mrf.mxu0
    %v7812 = vadd.f32 %v7427, %v7811
    %v7813 = vpop.f32.mrf.mxu0
    %7814 = vmatprep.mubr.f32.mxu0 %v6090
    %7815 = vmatmul.mubr.f32.gmra.mxu0 %v6089
    %v7816 = vpop.f32.mrf.mxu0
    %v7817 = vadd.f32 %v7432, %v7816
    %v7818 = vpop.f32.mrf.mxu0
    %7819 = vmatprep.mubr.f32.mxu0 %v6099
    %7820 = vmatmul.mubr.f32.gmra.mxu0 %v6098
    %v7821 = vpop.f32.mrf.mxu0
    %v7822 = vadd.f32 %v7437, %v7821
    %v7823 = vpop.f32.mrf.mxu0
    %7824 = vmatprep.mubr.f32.mxu0 %v6108
    %7825 = vmatmul.mubr.f32.gmra.mxu0 %v6107
    %v7826 = vpop.f32.mrf.mxu0
    %v7827 = vadd.f32 %v7442, %v7826
    %v7828 = vpop.f32.mrf.mxu0
    %7829 = vmatprep.mubr.f32.mxu0 %v6117
    %7830 = vmatmul.mubr.f32.gmra.mxu0 %v6116
    %v7831 = vpop.f32.mrf.mxu0
    %v7832 = vadd.f32 %v7447, %v7831
    %v7833 = vpop.f32.mrf.mxu0
    %7834 = vmatprep.mubr.f32.mxu0 %v6126
    %7835 = vmatmul.mubr.f32.gmra.mxu0 %v6125
    %v7836 = vpop.f32.mrf.mxu0
    %v7837 = vadd.f32 %v7452, %v7836
    %v7838 = vpop.f32.mrf.mxu0
    %7839 = vmatprep.mubr.f32.mxu0 %v6135
    %7840 = vmatmul.mubr.f32.gmra.mxu0 %v6134
    %v7841 = vpop.f32.mrf.mxu0
    %v7842 = vadd.f32 %v7457, %v7841
    %v7843 = vpop.f32.mrf.mxu0
    %7844 = vmatprep.mubr.f32.mxu0 %v6144
    %7845 = vmatmul.mubr.f32.gmra.mxu0 %v6143
    %v7846 = vpop.f32.mrf.mxu0
    %v7847 = vadd.f32 %v7462, %v7846
    %v7848 = vpop.f32.mrf.mxu0
    %7849 = vmatprep.mubr.f32.mxu0 %v6153
    %7850 = vmatmul.mubr.f32.gmra.mxu0 %v6152
    %v7851 = vpop.f32.mrf.mxu0
    %v7852 = vadd.f32 %v7467, %v7851
    %v7853 = vpop.f32.mrf.mxu0
    %7854 = vmatprep.mubr.f32.mxu0 %v6162
    %7855 = vmatmul.mubr.f32.gmra.mxu0 %v6161
    %v7856 = vpop.f32.mrf.mxu0
    %v7857 = vadd.f32 %v7472, %v7856
    %v7858 = vpop.f32.mrf.mxu0
    %7859 = vmatprep.mubr.f32.mxu0 %v6171
    %7860 = vmatmul.mubr.f32.gmra.mxu0 %v6170
    %v7861 = vpop.f32.mrf.mxu0
    %v7862 = vadd.f32 %v7477, %v7861
    %v7863 = vpop.f32.mrf.mxu0
    %7864 = vmatprep.mubr.f32.mxu0 %v6180
    %7865 = vmatmul.mubr.f32.gmra.mxu0 %v6179
    %v7866 = vpop.f32.mrf.mxu0
    %v7867 = vadd.f32 %v7482, %v7866
    %v7868 = vpop.f32.mrf.mxu0
    %7869 = vmatprep.mubr.f32.mxu0 %v6189
    %7870 = vmatmul.mubr.f32.gmra.mxu0 %v6188
    %v7871 = vpop.f32.mrf.mxu0
    %v7872 = vadd.f32 %v7487, %v7871
    %v7873 = vpop.f32.mrf.mxu0
    %7874 = vdwg.mxu0
    %7875 = vmatprep.subr.mxu0 0.0
    %7876 = vmatpush1.msra.mxu0 %v6334
    %7877 = vmatprep.subr.mxu0 0.0
    %7878 = vmatpush1.msra.mxu0 %v6333
    %7879 = vmatprep.subr.mxu0 0.0
    %7880 = vmatpush1.msra.mxu0 %v6332
    %7881 = vmatprep.subr.mxu0 0.0
    %7882 = vmatpush1.msra.mxu0 %v6331
    %7883 = vmatprep.subr.mxu0 0.0
    %7884 = vmatpush1.msra.mxu0 %v6330
    %7885 = vmatprep.subr.mxu0 0.0
    %7886 = vmatpush1.msra.mxu0 %v6329
    %7887 = vmatprep.subr.mxu0 0.0
    %7888 = vmatpush1.msra.mxu0 %v6328
    %7889 = vmatprep.subr.mxu0 0.0
    %7890 = vmatpush1.msra.mxu0 %v6327
    %7891 = vmatprep.subr.mxu0 0.0
    %7892 = vmatpush1.msra.mxu0 %v6326
    %7893 = vmatprep.subr.mxu0 0.0
    %7894 = vmatpush1.msra.mxu0 %v6325
    %7895 = vmatprep.subr.mxu0 0.0
    %7896 = vmatpush1.msra.mxu0 %v6324
    %7897 = vmatprep.subr.mxu0 0.0
    %7898 = vmatpush1.msra.mxu0 %v6323
    %7899 = vmatprep.subr.mxu0 0.0
    %7900 = vmatpush1.msra.mxu0 %v6322
    %7901 = vmatprep.subr.mxu0 0.0
    %7902 = vmatpush1.msra.mxu0 %v6321
    %7903 = vmatprep.subr.mxu0 0.0
    %7904 = vmatpush1.msra.mxu0 %v6320
    %7905 = vmatprep.subr.mxu0 0.0
    %7906 = vmatpush1.msra.mxu0 %v6319
    %7907 = vmatprep.subr.mxu0 0.0
    %7908 = vmatpush2.msra.mxu0 0.0
    %7909 = vmatprep.subr.mxu0 0.0
    %7910 = vmatpush2.msra.mxu0 0.0
    %7911 = vmatprep.subr.mxu0 0.0
    %7912 = vmatpush2.msra.mxu0 0.0
    %7913 = vmatprep.subr.mxu0 0.0
    %7914 = vmatpush2.msra.mxu0 0.0
    %7915 = vmatprep.subr.mxu0 0.0
    %7916 = vmatpush2.msra.mxu0 0.0
    %7917 = vmatprep.subr.mxu0 0.0
    %7918 = vmatpush2.msra.mxu0 0.0
    %7919 = vmatprep.subr.mxu0 0.0
    %7920 = vmatpush2.msra.mxu0 0.0
    %7921 = vmatprep.subr.mxu0 0.0
    %7922 = vmatpush2.msra.mxu0 0.0
    %7923 = vmatprep.subr.mxu0 0.0
    %7924 = vmatpush2.msra.mxu0 0.0
    %7925 = vmatprep.subr.mxu0 0.0
    %7926 = vmatpush2.msra.mxu0 0.0
    %7927 = vmatprep.subr.mxu0 0.0
    %7928 = vmatpush2.msra.mxu0 0.0
    %7929 = vmatprep.subr.mxu0 0.0
    %7930 = vmatpush2.msra.mxu0 0.0
    %7931 = vmatprep.subr.mxu0 0.0
    %7932 = vmatpush2.msra.mxu0 0.0
    %7933 = vmatprep.subr.mxu0 0.0
    %7934 = vmatpush2.msra.mxu0 0.0
    %7935 = vmatprep.subr.mxu0 0.0
    %7936 = vmatpush2.msra.mxu0 0.0
    %7937 = vmatprep.subr.mxu0 0.0
    %7938 = vmatpush2.msra.mxu0 0.0
    %7939 = vmatprep.mubr.f32.mxu0 0.0
    %7940 = vmatmul.mubr.f32.gmra.mxu0 %v5623
    %v7941 = vpop.f32.mrf.mxu0
    %v7942 = vadd.f32 %v7557, %v7941
    %v7943 = vpop.f32.mrf.mxu0
    %7944 = vmatprep.mubr.f32.mxu0 0.0
    %7945 = vmatmul.mubr.f32.gmra.mxu0 %v5632
    %v7946 = vpop.f32.mrf.mxu0
    %v7947 = vadd.f32 %v7562, %v7946
    %v7948 = vpop.f32.mrf.mxu0
    %7949 = vmatprep.mubr.f32.mxu0 0.0
    %7950 = vmatmul.mubr.f32.gmra.mxu0 %v5641
    %v7951 = vpop.f32.mrf.mxu0
    %v7952 = vadd.f32 %v7567, %v7951
    %v7953 = vpop.f32.mrf.mxu0
    %7954 = vmatprep.mubr.f32.mxu0 0.0
    %7955 = vmatmul.mubr.f32.gmra.mxu0 %v5650
    %v7956 = vpop.f32.mrf.mxu0
    %v7957 = vadd.f32 %v7572, %v7956
    %v7958 = vpop.f32.mrf.mxu0
    %7959 = vmatprep.mubr.f32.mxu0 0.0
    %7960 = vmatmul.mubr.f32.gmra.mxu0 %v5659
    %v7961 = vpop.f32.mrf.mxu0
    %v7962 = vadd.f32 %v7577, %v7961
    %v7963 = vpop.f32.mrf.mxu0
    %7964 = vmatprep.mubr.f32.mxu0 0.0
    %7965 = vmatmul.mubr.f32.gmra.mxu0 %v5668
    %v7966 = vpop.f32.mrf.mxu0
    %v7967 = vadd.f32 %v7582, %v7966
    %v7968 = vpop.f32.mrf.mxu0
    %7969 = vmatprep.mubr.f32.mxu0 0.0
    %7970 = vmatmul.mubr.f32.gmra.mxu0 %v5677
    %v7971 = vpop.f32.mrf.mxu0
    %v7972 = vadd.f32 %v7587, %v7971
    %v7973 = vpop.f32.mrf.mxu0
    %7974 = vmatprep.mubr.f32.mxu0 0.0
    %7975 = vmatmul.mubr.f32.gmra.mxu0 %v5686
    %v7976 = vpop.f32.mrf.mxu0
    %v7977 = vadd.f32 %v7592, %v7976
    %v7978 = vpop.f32.mrf.mxu0
    %7979 = vmatprep.mubr.f32.mxu0 0.0
    %7980 = vmatmul.mubr.f32.gmra.mxu0 %v5695
    %v7981 = vpop.f32.mrf.mxu0
    %v7982 = vadd.f32 %v7597, %v7981
    %v7983 = vpop.f32.mrf.mxu0
    %7984 = vmatprep.mubr.f32.mxu0 0.0
    %7985 = vmatmul.mubr.f32.gmra.mxu0 %v5704
    %v7986 = vpop.f32.mrf.mxu0
    %v7987 = vadd.f32 %v7602, %v7986
    %v7988 = vpop.f32.mrf.mxu0
    %7989 = vmatprep.mubr.f32.mxu0 0.0
    %7990 = vmatmul.mubr.f32.gmra.mxu0 %v5713
    %v7991 = vpop.f32.mrf.mxu0
    %v7992 = vadd.f32 %v7607, %v7991
    %v7993 = vpop.f32.mrf.mxu0
    %7994 = vmatprep.mubr.f32.mxu0 0.0
    %7995 = vmatmul.mubr.f32.gmra.mxu0 %v5722
    %v7996 = vpop.f32.mrf.mxu0
    %v7997 = vadd.f32 %v7612, %v7996
    %v7998 = vpop.f32.mrf.mxu0
    %7999 = vmatprep.mubr.f32.mxu0 0.0
    %8000 = vmatmul.mubr.f32.gmra.mxu0 %v5731
    %v8001 = vpop.f32.mrf.mxu0
    %v8002 = vadd.f32 %v7617, %v8001
    %v8003 = vpop.f32.mrf.mxu0
    %8004 = vmatprep.mubr.f32.mxu0 0.0
    %8005 = vmatmul.mubr.f32.gmra.mxu0 %v5740
    %v8006 = vpop.f32.mrf.mxu0
    %v8007 = vadd.f32 %v7622, %v8006
    %v8008 = vpop.f32.mrf.mxu0
    %8009 = vmatprep.mubr.f32.mxu0 0.0
    %8010 = vmatmul.mubr.f32.gmra.mxu0 %v5749
    %v8011 = vpop.f32.mrf.mxu0
    %v8012 = vadd.f32 %v7627, %v8011
    %v8013 = vpop.f32.mrf.mxu0
    %8014 = vmatprep.mubr.f32.mxu0 0.0
    %8015 = vmatmul.mubr.f32.gmra.mxu0 %v5758
    %v8016 = vpop.f32.mrf.mxu0
    %v8017 = vadd.f32 %v7632, %v8016
    %v8018 = vpop.f32.mrf.mxu0
    %8019 = vmatprep.mubr.f32.mxu0 0.0
    %8020 = vmatmul.mubr.f32.gmra.mxu0 %v5767
    %v8021 = vpop.f32.mrf.mxu0
    %v8022 = vadd.f32 %v7637, %v8021
    %v8023 = vpop.f32.mrf.mxu0
    %8024 = vmatprep.mubr.f32.mxu0 0.0
    %8025 = vmatmul.mubr.f32.gmra.mxu0 %v5776
    %v8026 = vpop.f32.mrf.mxu0
    %v8027 = vadd.f32 %v7642, %v8026
    %v8028 = vpop.f32.mrf.mxu0
    %8029 = vmatprep.mubr.f32.mxu0 0.0
    %8030 = vmatmul.mubr.f32.gmra.mxu0 %v5785
    %v8031 = vpop.f32.mrf.mxu0
    %v8032 = vadd.f32 %v7647, %v8031
    %v8033 = vpop.f32.mrf.mxu0
    %8034 = vmatprep.mubr.f32.mxu0 0.0
    %8035 = vmatmul.mubr.f32.gmra.mxu0 %v5794
    %v8036 = vpop.f32.mrf.mxu0
    %v8037 = vadd.f32 %v7652, %v8036
    %v8038 = vpop.f32.mrf.mxu0
    %8039 = vmatprep.mubr.f32.mxu0 0.0
    %8040 = vmatmul.mubr.f32.gmra.mxu0 %v5803
    %v8041 = vpop.f32.mrf.mxu0
    %v8042 = vadd.f32 %v7657, %v8041
    %v8043 = vpop.f32.mrf.mxu0
    %8044 = vmatprep.mubr.f32.mxu0 0.0
    %8045 = vmatmul.mubr.f32.gmra.mxu0 %v5812
    %v8046 = vpop.f32.mrf.mxu0
    %v8047 = vadd.f32 %v7662, %v8046
    %v8048 = vpop.f32.mrf.mxu0
    %8049 = vmatprep.mubr.f32.mxu0 0.0
    %8050 = vmatmul.mubr.f32.gmra.mxu0 %v5821
    %v8051 = vpop.f32.mrf.mxu0
    %v8052 = vadd.f32 %v7667, %v8051
    %v8053 = vpop.f32.mrf.mxu0
    %8054 = vmatprep.mubr.f32.mxu0 0.0
    %8055 = vmatmul.mubr.f32.gmra.mxu0 %v5830
    %v8056 = vpop.f32.mrf.mxu0
    %v8057 = vadd.f32 %v7672, %v8056
    %v8058 = vpop.f32.mrf.mxu0
    %8059 = vmatprep.mubr.f32.mxu0 0.0
    %8060 = vmatmul.mubr.f32.gmra.mxu0 %v5839
    %v8061 = vpop.f32.mrf.mxu0
    %v8062 = vadd.f32 %v7677, %v8061
    %v8063 = vpop.f32.mrf.mxu0
    %8064 = vmatprep.mubr.f32.mxu0 0.0
    %8065 = vmatmul.mubr.f32.gmra.mxu0 %v5848
    %v8066 = vpop.f32.mrf.mxu0
    %v8067 = vadd.f32 %v7682, %v8066
    %v8068 = vpop.f32.mrf.mxu0
    %8069 = vmatprep.mubr.f32.mxu0 0.0
    %8070 = vmatmul.mubr.f32.gmra.mxu0 %v5857
    %v8071 = vpop.f32.mrf.mxu0
    %v8072 = vadd.f32 %v7687, %v8071
    %v8073 = vpop.f32.mrf.mxu0
    %8074 = vmatprep.mubr.f32.mxu0 0.0
    %8075 = vmatmul.mubr.f32.gmra.mxu0 %v5866
    %v8076 = vpop.f32.mrf.mxu0
    %v8077 = vadd.f32 %v7692, %v8076
    %v8078 = vpop.f32.mrf.mxu0
    %8079 = vmatprep.mubr.f32.mxu0 0.0
    %8080 = vmatmul.mubr.f32.gmra.mxu0 %v5875
    %v8081 = vpop.f32.mrf.mxu0
    %v8082 = vadd.f32 %v7697, %v8081
    %v8083 = vpop.f32.mrf.mxu0
    %8084 = vmatprep.mubr.f32.mxu0 0.0
    %8085 = vmatmul.mubr.f32.gmra.mxu0 %v5884
    %v8086 = vpop.f32.mrf.mxu0
    %v8087 = vadd.f32 %v7702, %v8086
    %v8088 = vpop.f32.mrf.mxu0
    %8089 = vmatprep.mubr.f32.mxu0 0.0
    %8090 = vmatmul.mubr.f32.gmra.mxu0 %v5893
    %v8091 = vpop.f32.mrf.mxu0
    %v8092 = vadd.f32 %v7707, %v8091
    %v8093 = vpop.f32.mrf.mxu0
    %8094 = vmatprep.mubr.f32.mxu0 0.0
    %8095 = vmatmul.mubr.f32.gmra.mxu0 %v5902
    %v8096 = vpop.f32.mrf.mxu0
    %v8097 = vadd.f32 %v7712, %v8096
    %v8098 = vpop.f32.mrf.mxu0
    %8099 = vmatprep.mubr.f32.mxu0 0.0
    %8100 = vmatmul.mubr.f32.gmra.mxu0 %v5911
    %v8101 = vpop.f32.mrf.mxu0
    %v8102 = vadd.f32 %v7717, %v8101
    %v8103 = vpop.f32.mrf.mxu0
    %8104 = vmatprep.mubr.f32.mxu0 0.0
    %8105 = vmatmul.mubr.f32.gmra.mxu0 %v5920
    %v8106 = vpop.f32.mrf.mxu0
    %v8107 = vadd.f32 %v7722, %v8106
    %v8108 = vpop.f32.mrf.mxu0
    %8109 = vmatprep.mubr.f32.mxu0 0.0
    %8110 = vmatmul.mubr.f32.gmra.mxu0 %v5929
    %v8111 = vpop.f32.mrf.mxu0
    %v8112 = vadd.f32 %v7727, %v8111
    %v8113 = vpop.f32.mrf.mxu0
    %8114 = vmatprep.mubr.f32.mxu0 0.0
    %8115 = vmatmul.mubr.f32.gmra.mxu0 %v5938
    %v8116 = vpop.f32.mrf.mxu0
    %v8117 = vadd.f32 %v7732, %v8116
    %v8118 = vpop.f32.mrf.mxu0
    %8119 = vmatprep.mubr.f32.mxu0 0.0
    %8120 = vmatmul.mubr.f32.gmra.mxu0 %v5947
    %v8121 = vpop.f32.mrf.mxu0
    %v8122 = vadd.f32 %v7737, %v8121
    %v8123 = vpop.f32.mrf.mxu0
    %8124 = vmatprep.mubr.f32.mxu0 0.0
    %8125 = vmatmul.mubr.f32.gmra.mxu0 %v5956
    %v8126 = vpop.f32.mrf.mxu0
    %v8127 = vadd.f32 %v7742, %v8126
    %v8128 = vpop.f32.mrf.mxu0
    %8129 = vmatprep.mubr.f32.mxu0 0.0
    %8130 = vmatmul.mubr.f32.gmra.mxu0 %v5965
    %v8131 = vpop.f32.mrf.mxu0
    %v8132 = vadd.f32 %v7747, %v8131
    %v8133 = vpop.f32.mrf.mxu0
    %8134 = vmatprep.mubr.f32.mxu0 0.0
    %8135 = vmatmul.mubr.f32.gmra.mxu0 %v5974
    %v8136 = vpop.f32.mrf.mxu0
    %v8137 = vadd.f32 %v7752, %v8136
    %v8138 = vpop.f32.mrf.mxu0
    %8139 = vmatprep.mubr.f32.mxu0 0.0
    %8140 = vmatmul.mubr.f32.gmra.mxu0 %v5983
    %v8141 = vpop.f32.mrf.mxu0
    %v8142 = vadd.f32 %v7757, %v8141
    %v8143 = vpop.f32.mrf.mxu0
    %8144 = vmatprep.mubr.f32.mxu0 0.0
    %8145 = vmatmul.mubr.f32.gmra.mxu0 %v5992
    %v8146 = vpop.f32.mrf.mxu0
    %v8147 = vadd.f32 %v7762, %v8146
    %v8148 = vpop.f32.mrf.mxu0
    %8149 = vmatprep.mubr.f32.mxu0 0.0
    %8150 = vmatmul.mubr.f32.gmra.mxu0 %v6001
    %v8151 = vpop.f32.mrf.mxu0
    %v8152 = vadd.f32 %v7767, %v8151
    %v8153 = vpop.f32.mrf.mxu0
    %8154 = vmatprep.mubr.f32.mxu0 0.0
    %8155 = vmatmul.mubr.f32.gmra.mxu0 %v6010
    %v8156 = vpop.f32.mrf.mxu0
    %v8157 = vadd.f32 %v7772, %v8156
    %v8158 = vpop.f32.mrf.mxu0
    %8159 = vmatprep.mubr.f32.mxu0 0.0
    %8160 = vmatmul.mubr.f32.gmra.mxu0 %v6019
    %v8161 = vpop.f32.mrf.mxu0
    %v8162 = vadd.f32 %v7777, %v8161
    %v8163 = vpop.f32.mrf.mxu0
    %8164 = vmatprep.mubr.f32.mxu0 0.0
    %8165 = vmatmul.mubr.f32.gmra.mxu0 %v6028
    %v8166 = vpop.f32.mrf.mxu0
    %v8167 = vadd.f32 %v7782, %v8166
    %v8168 = vpop.f32.mrf.mxu0
    %8169 = vmatprep.mubr.f32.mxu0 0.0
    %8170 = vmatmul.mubr.f32.gmra.mxu0 %v6037
    %v8171 = vpop.f32.mrf.mxu0
    %v8172 = vadd.f32 %v7787, %v8171
    %v8173 = vpop.f32.mrf.mxu0
    %8174 = vmatprep.mubr.f32.mxu0 0.0
    %8175 = vmatmul.mubr.f32.gmra.mxu0 %v6046
    %v8176 = vpop.f32.mrf.mxu0
    %v8177 = vadd.f32 %v7792, %v8176
    %v8178 = vpop.f32.mrf.mxu0
    %8179 = vmatprep.mubr.f32.mxu0 0.0
    %8180 = vmatmul.mubr.f32.gmra.mxu0 %v6055
    %v8181 = vpop.f32.mrf.mxu0
    %v8182 = vadd.f32 %v7797, %v8181
    %v8183 = vpop.f32.mrf.mxu0
    %8184 = vmatprep.mubr.f32.mxu0 0.0
    %8185 = vmatmul.mubr.f32.gmra.mxu0 %v6064
    %v8186 = vpop.f32.mrf.mxu0
    %v8187 = vadd.f32 %v7802, %v8186
    %v8188 = vpop.f32.mrf.mxu0
    %8189 = vmatprep.mubr.f32.mxu0 0.0
    %8190 = vmatmul.mubr.f32.gmra.mxu0 %v6073
    %v8191 = vpop.f32.mrf.mxu0
    %v8192 = vadd.f32 %v7807, %v8191
    %v8193 = vpop.f32.mrf.mxu0
    %8194 = vmatprep.mubr.f32.mxu0 0.0
    %8195 = vmatmul.mubr.f32.gmra.mxu0 %v6082
    %v8196 = vpop.f32.mrf.mxu0
    %v8197 = vadd.f32 %v7812, %v8196
    %v8198 = vpop.f32.mrf.mxu0
    %8199 = vmatprep.mubr.f32.mxu0 0.0
    %8200 = vmatmul.mubr.f32.gmra.mxu0 %v6091
    %v8201 = vpop.f32.mrf.mxu0
    %v8202 = vadd.f32 %v7817, %v8201
    %v8203 = vpop.f32.mrf.mxu0
    %8204 = vmatprep.mubr.f32.mxu0 0.0
    %8205 = vmatmul.mubr.f32.gmra.mxu0 %v6100
    %v8206 = vpop.f32.mrf.mxu0
    %v8207 = vadd.f32 %v7822, %v8206
    %v8208 = vpop.f32.mrf.mxu0
    %8209 = vmatprep.mubr.f32.mxu0 0.0
    %8210 = vmatmul.mubr.f32.gmra.mxu0 %v6109
    %v8211 = vpop.f32.mrf.mxu0
    %v8212 = vadd.f32 %v7827, %v8211
    %v8213 = vpop.f32.mrf.mxu0
    %8214 = vmatprep.mubr.f32.mxu0 0.0
    %8215 = vmatmul.mubr.f32.gmra.mxu0 %v6118
    %v8216 = vpop.f32.mrf.mxu0
    %v8217 = vadd.f32 %v7832, %v8216
    %v8218 = vpop.f32.mrf.mxu0
    %8219 = vmatprep.mubr.f32.mxu0 0.0
    %8220 = vmatmul.mubr.f32.gmra.mxu0 %v6127
    %v8221 = vpop.f32.mrf.mxu0
    %v8222 = vadd.f32 %v7837, %v8221
    %v8223 = vpop.f32.mrf.mxu0
    %8224 = vmatprep.mubr.f32.mxu0 0.0
    %8225 = vmatmul.mubr.f32.gmra.mxu0 %v6136
    %v8226 = vpop.f32.mrf.mxu0
    %v8227 = vadd.f32 %v7842, %v8226
    %v8228 = vpop.f32.mrf.mxu0
    %8229 = vmatprep.mubr.f32.mxu0 0.0
    %8230 = vmatmul.mubr.f32.gmra.mxu0 %v6145
    %v8231 = vpop.f32.mrf.mxu0
    %v8232 = vadd.f32 %v7847, %v8231
    %v8233 = vpop.f32.mrf.mxu0
    %8234 = vmatprep.mubr.f32.mxu0 0.0
    %8235 = vmatmul.mubr.f32.gmra.mxu0 %v6154
    %v8236 = vpop.f32.mrf.mxu0
    %v8237 = vadd.f32 %v7852, %v8236
    %v8238 = vpop.f32.mrf.mxu0
    %8239 = vmatprep.mubr.f32.mxu0 0.0
    %8240 = vmatmul.mubr.f32.gmra.mxu0 %v6163
    %v8241 = vpop.f32.mrf.mxu0
    %v8242 = vadd.f32 %v7857, %v8241
    %v8243 = vpop.f32.mrf.mxu0
    %8244 = vmatprep.mubr.f32.mxu0 0.0
    %8245 = vmatmul.mubr.f32.gmra.mxu0 %v6172
    %v8246 = vpop.f32.mrf.mxu0
    %v8247 = vadd.f32 %v7862, %v8246
    %v8248 = vpop.f32.mrf.mxu0
    %8249 = vmatprep.mubr.f32.mxu0 0.0
    %8250 = vmatmul.mubr.f32.gmra.mxu0 %v6181
    %v8251 = vpop.f32.mrf.mxu0
    %v8252 = vadd.f32 %v7867, %v8251
    %v8253 = vpop.f32.mrf.mxu0
    %8254 = vmatprep.mubr.f32.mxu0 0.0
    %8255 = vmatmul.mubr.f32.gmra.mxu0 %v6190
    %v8256 = vpop.f32.mrf.mxu0
    %v8257 = vadd.f32 %v7872, %v8256
    %v8258 = vpop.f32.mrf.mxu0
    %8259 = vdwg.mxu0
    %v8260 = vadd.f32 %v7942, %v7947
    %v8261 = vadd.f32 %v8260, %v7952
    %v8262 = vadd.f32 %v8261, %v7957
    %v8263 = vadd.f32 %v8262, %v7962
    %v8264 = vadd.f32 %v8263, %v7967
    %v8265 = vadd.f32 %v8264, %v7972
    %v8266 = vadd.f32 %v8265, %v7977
    %v8267 = vadd.f32 %v8266, %v7982
    %v8268 = vadd.f32 %v8267, %v7987
    %v8269 = vadd.f32 %v8268, %v7992
    %v8270 = vadd.f32 %v8269, %v7997
    %v8271 = vadd.f32 %v8270, %v8002
    %v8272 = vadd.f32 %v8271, %v8007
    %v8273 = vadd.f32 %v8272, %v8012
    %v8274 = vadd.f32 %v8273, %v8017
    %v8275 = vadd.f32 %v8274, %v8022
    %v8276 = vadd.f32 %v8275, %v8027
    %v8277 = vadd.f32 %v8276, %v8032
    %v8278 = vadd.f32 %v8277, %v8037
    %v8279 = vadd.f32 %v8278, %v8042
    %v8280 = vadd.f32 %v8279, %v8047
    %v8281 = vadd.f32 %v8280, %v8052
    %v8282 = vadd.f32 %v8281, %v8057
    %v8283 = vadd.f32 %v8282, %v8062
    %v8284 = vadd.f32 %v8283, %v8067
    %v8285 = vadd.f32 %v8284, %v8072
    %v8286 = vadd.f32 %v8285, %v8077
    %v8287 = vadd.f32 %v8286, %v8082
    %v8288 = vadd.f32 %v8287, %v8087
    %v8289 = vadd.f32 %v8288, %v8092
    %v8290 = vadd.f32 %v8289, %v8097
    %v8291 = vadd.f32 %v8290, %v8102
    %v8292 = vadd.f32 %v8291, %v8107
    %v8293 = vadd.f32 %v8292, %v8112
    %v8294 = vadd.f32 %v8293, %v8117
    %v8295 = vadd.f32 %v8294, %v8122
    %v8296 = vadd.f32 %v8295, %v8127
    %v8297 = vadd.f32 %v8296, %v8132
    %v8298 = vadd.f32 %v8297, %v8137
    %v8299 = vadd.f32 %v8298, %v8142
    %v8300 = vadd.f32 %v8299, %v8147
    %v8301 = vadd.f32 %v8300, %v8152
    %v8302 = vadd.f32 %v8301, %v8157
    %v8303 = vadd.f32 %v8302, %v8162
    %v8304 = vadd.f32 %v8303, %v8167
    %v8305 = vadd.f32 %v8304, %v8172
    %v8306 = vadd.f32 %v8305, %v8177
    %v8307 = vadd.f32 %v8306, %v8182
    %v8308 = vadd.f32 %v8307, %v8187
    %v8309 = vadd.f32 %v8308, %v8192
    %v8310 = vadd.f32 %v8309, %v8197
    %v8311 = vadd.f32 %v8310, %v8202
    %v8312 = vadd.f32 %v8311, %v8207
    %v8313 = vadd.f32 %v8312, %v8212
    %v8314 = vadd.f32 %v8313, %v8217
    %v8315 = vadd.f32 %v8314, %v8222
    %v8316 = vadd.f32 %v8315, %v8227
    %v8317 = vadd.f32 %v8316, %v8232
    %v8318 = vadd.f32 %v8317, %v8237
    %v8319 = vadd.f32 %v8318, %v8242
    %v8320 = vadd.f32 %v8319, %v8247
    %v8321 = vadd.f32 %v8320, %v8252
    %v8322 = vadd.f32 %v8321, %v8257
    %v8323 = vrot.slane %v8322, 4
    %v8324 = vadd.f32 %v8322, %v8323
    %v8325 = vrot.slane %v8324, 2
    %v8326 = vadd.f32 %v8324, %v8325
    %v8327 = vrot.slane %v8326, 1
    %v8328 = vadd.f32 %v8326, %v8327
    %v8329 = vmul.f32 %v7942, %v7942
    %v8330 = vmul.f32 %v7947, %v7947
    %v8331 = vmul.f32 %v7952, %v7952
    %v8332 = vmul.f32 %v7957, %v7957
    %v8333 = vmul.f32 %v7962, %v7962
    %v8334 = vmul.f32 %v7967, %v7967
    %v8335 = vmul.f32 %v7972, %v7972
    %v8336 = vmul.f32 %v7977, %v7977
    %v8337 = vmul.f32 %v7982, %v7982
    %v8338 = vmul.f32 %v7987, %v7987
    %v8339 = vmul.f32 %v7992, %v7992
    %v8340 = vmul.f32 %v7997, %v7997
    %v8341 = vmul.f32 %v8002, %v8002
    %v8342 = vmul.f32 %v8007, %v8007
    %v8343 = vmul.f32 %v8012, %v8012
    %v8344 = vmul.f32 %v8017, %v8017
    %v8345 = vmul.f32 %v8022, %v8022
    %v8346 = vmul.f32 %v8027, %v8027
    %v8347 = vmul.f32 %v8032, %v8032
    %v8348 = vmul.f32 %v8037, %v8037
    %v8349 = vmul.f32 %v8042, %v8042
    %v8350 = vmul.f32 %v8047, %v8047
    %v8351 = vmul.f32 %v8052, %v8052
    %v8352 = vmul.f32 %v8057, %v8057
    %v8353 = vmul.f32 %v8062, %v8062
    %v8354 = vmul.f32 %v8067, %v8067
    %v8355 = vmul.f32 %v8072, %v8072
    %v8356 = vmul.f32 %v8077, %v8077
    %v8357 = vmul.f32 %v8082, %v8082
    %v8358 = vmul.f32 %v8087, %v8087
    %v8359 = vmul.f32 %v8092, %v8092
    %v8360 = vmul.f32 %v8097, %v8097
    %v8361 = vmul.f32 %v8102, %v8102
    %v8362 = vmul.f32 %v8107, %v8107
    %v8363 = vmul.f32 %v8112, %v8112
    %v8364 = vmul.f32 %v8117, %v8117
    %v8365 = vmul.f32 %v8122, %v8122
    %v8366 = vmul.f32 %v8127, %v8127
    %v8367 = vmul.f32 %v8132, %v8132
    %v8368 = vmul.f32 %v8137, %v8137
    %v8369 = vmul.f32 %v8142, %v8142
    %v8370 = vmul.f32 %v8147, %v8147
    %v8371 = vmul.f32 %v8152, %v8152
    %v8372 = vmul.f32 %v8157, %v8157
    %v8373 = vmul.f32 %v8162, %v8162
    %v8374 = vmul.f32 %v8167, %v8167
    %v8375 = vmul.f32 %v8172, %v8172
    %v8376 = vmul.f32 %v8177, %v8177
    %v8377 = vmul.f32 %v8182, %v8182
    %v8378 = vmul.f32 %v8187, %v8187
    %v8379 = vmul.f32 %v8192, %v8192
    %v8380 = vmul.f32 %v8197, %v8197
    %v8381 = vmul.f32 %v8202, %v8202
    %v8382 = vmul.f32 %v8207, %v8207
    %v8383 = vmul.f32 %v8212, %v8212
    %v8384 = vmul.f32 %v8217, %v8217
    %v8385 = vmul.f32 %v8222, %v8222
    %v8386 = vmul.f32 %v8227, %v8227
    %v8387 = vmul.f32 %v8232, %v8232
    %v8388 = vmul.f32 %v8237, %v8237
    %v8389 = vmul.f32 %v8242, %v8242
    %v8390 = vmul.f32 %v8247, %v8247
    %v8391 = vmul.f32 %v8252, %v8252
    %v8392 = vmul.f32 %v8257, %v8257
    %v8393 = vadd.f32 %v8329, %v8330
    %v8394 = vadd.f32 %v8393, %v8331
    %v8395 = vadd.f32 %v8394, %v8332
    %v8396 = vadd.f32 %v8395, %v8333
    %v8397 = vadd.f32 %v8396, %v8334
    %v8398 = vadd.f32 %v8397, %v8335
    %v8399 = vadd.f32 %v8398, %v8336
    %v8400 = vadd.f32 %v8399, %v8337
    %v8401 = vadd.f32 %v8400, %v8338
    %v8402 = vadd.f32 %v8401, %v8339
    %v8403 = vadd.f32 %v8402, %v8340
    %v8404 = vadd.f32 %v8403, %v8341
    %v8405 = vadd.f32 %v8404, %v8342
    %v8406 = vadd.f32 %v8405, %v8343
    %v8407 = vadd.f32 %v8406, %v8344
    %v8408 = vadd.f32 %v8407, %v8345
    %v8409 = vadd.f32 %v8408, %v8346
    %v8410 = vadd.f32 %v8409, %v8347
    %v8411 = vadd.f32 %v8410, %v8348
    %v8412 = vadd.f32 %v8411, %v8349
    %v8413 = vadd.f32 %v8412, %v8350
    %v8414 = vadd.f32 %v8413, %v8351
    %v8415 = vadd.f32 %v8414, %v8352
    %v8416 = vadd.f32 %v8415, %v8353
    %v8417 = vadd.f32 %v8416, %v8354
    %v8418 = vadd.f32 %v8417, %v8355
    %v8419 = vadd.f32 %v8418, %v8356
    %v8420 = vadd.f32 %v8419, %v8357
    %v8421 = vadd.f32 %v8420, %v8358
    %v8422 = vadd.f32 %v8421, %v8359
    %v8423 = vadd.f32 %v8422, %v8360
    %v8424 = vadd.f32 %v8423, %v8361
    %v8425 = vadd.f32 %v8424, %v8362
    %v8426 = vadd.f32 %v8425, %v8363
    %v8427 = vadd.f32 %v8426, %v8364
    %v8428 = vadd.f32 %v8427, %v8365
    %v8429 = vadd.f32 %v8428, %v8366
    %v8430 = vadd.f32 %v8429, %v8367
    %v8431 = vadd.f32 %v8430, %v8368
    %v8432 = vadd.f32 %v8431, %v8369
    %v8433 = vadd.f32 %v8432, %v8370
    %v8434 = vadd.f32 %v8433, %v8371
    %v8435 = vadd.f32 %v8434, %v8372
    %v8436 = vadd.f32 %v8435, %v8373
    %v8437 = vadd.f32 %v8436, %v8374
    %v8438 = vadd.f32 %v8437, %v8375
    %v8439 = vadd.f32 %v8438, %v8376
    %v8440 = vadd.f32 %v8439, %v8377
    %v8441 = vadd.f32 %v8440, %v8378
    %v8442 = vadd.f32 %v8441, %v8379
    %v8443 = vadd.f32 %v8442, %v8380
    %v8444 = vadd.f32 %v8443, %v8381
    %v8445 = vadd.f32 %v8444, %v8382
    %v8446 = vadd.f32 %v8445, %v8383
    %v8447 = vadd.f32 %v8446, %v8384
    %v8448 = vadd.f32 %v8447, %v8385
    %v8449 = vadd.f32 %v8448, %v8386
    %v8450 = vadd.f32 %v8449, %v8387
    %v8451 = vadd.f32 %v8450, %v8388
    %v8452 = vadd.f32 %v8451, %v8389
    %v8453 = vadd.f32 %v8452, %v8390
    %v8454 = vadd.f32 %v8453, %v8391
    %v8455 = vadd.f32 %v8454, %v8392
    %v8456 = vrot.slane %v8455, 4
    %v8457 = vadd.f32 %v8455, %v8456
    %v8458 = vrot.slane %v8457, 2
    %v8459 = vadd.f32 %v8457, %v8458
    %v8460 = vrot.slane %v8459, 1
    %v8461 = vadd.f32 %v8459, %v8460
    %v8462 = vmul.f32 %v8328, 0.001953125
    %v8463 = vmul.f32 %v8461, 0.001953125
    %v8464 = vmul.f32 %v8462, %v8462
    %v8465 = vsub.f32 %v8463, %v8464
    %v8466 = vld [vmem:[%s5] sm:$0x1]
    %v8467 = vadd.f32 %v8465, 1e-05
    %v8468 = vrsqrt.pop %v8467
    %v8469 = vmul.f32 %v8466, %v8468
    %v8470 = vld [vmem:[%s6] sm:$0x1]
    %v8471 = vmul.f32 %v8462, %v8469
    %v8472 = vsub.f32 %v8470, %v8471
    %v8474 = vlaneseq
    %v8475 = vshrl.u32 %v8474, 7
    %v8476 = vsub.s32 0, %v8475
    %v8477 = vrot.slane %v8469, %v8476
    %v8479 = vmul.f32 %v7942, %v8477
    %v8480 = vmul.f32 %v7947, %v8477
    %v8481 = vmul.f32 %v7952, %v8477
    %v8482 = vmul.f32 %v7957, %v8477
    %v8483 = vmul.f32 %v7962, %v8477
    %v8484 = vmul.f32 %v7967, %v8477
    %v8485 = vmul.f32 %v7972, %v8477
    %v8486 = vmul.f32 %v7977, %v8477
    %v8487 = vmul.f32 %v7982, %v8477
    %v8488 = vmul.f32 %v7987, %v8477
    %v8489 = vmul.f32 %v7992, %v8477
    %v8490 = vmul.f32 %v7997, %v8477
    %v8491 = vmul.f32 %v8002, %v8477
    %v8492 = vmul.f32 %v8007, %v8477
    %v8493 = vmul.f32 %v8012, %v8477
    %v8494 = vmul.f32 %v8017, %v8477
    %v8495 = vmul.f32 %v8022, %v8477
    %v8496 = vmul.f32 %v8027, %v8477
    %v8497 = vmul.f32 %v8032, %v8477
    %v8498 = vmul.f32 %v8037, %v8477
    %v8499 = vmul.f32 %v8042, %v8477
    %v8500 = vmul.f32 %v8047, %v8477
    %v8501 = vmul.f32 %v8052, %v8477
    %v8502 = vmul.f32 %v8057, %v8477
    %v8503 = vmul.f32 %v8062, %v8477
    %v8504 = vmul.f32 %v8067, %v8477
    %v8505 = vmul.f32 %v8072, %v8477
    %v8506 = vmul.f32 %v8077, %v8477
    %v8507 = vmul.f32 %v8082, %v8477
    %v8508 = vmul.f32 %v8087, %v8477
    %v8509 = vmul.f32 %v8092, %v8477
    %v8510 = vmul.f32 %v8097, %v8477
    %v8511 = vmul.f32 %v8102, %v8477
    %v8512 = vmul.f32 %v8107, %v8477
    %v8513 = vmul.f32 %v8112, %v8477
    %v8514 = vmul.f32 %v8117, %v8477
    %v8515 = vmul.f32 %v8122, %v8477
    %v8516 = vmul.f32 %v8127, %v8477
    %v8517 = vmul.f32 %v8132, %v8477
    %v8518 = vmul.f32 %v8137, %v8477
    %v8519 = vmul.f32 %v8142, %v8477
    %v8520 = vmul.f32 %v8147, %v8477
    %v8521 = vmul.f32 %v8152, %v8477
    %v8522 = vmul.f32 %v8157, %v8477
    %v8523 = vmul.f32 %v8162, %v8477
    %v8524 = vmul.f32 %v8167, %v8477
    %v8525 = vmul.f32 %v8172, %v8477
    %v8526 = vmul.f32 %v8177, %v8477
    %v8527 = vmul.f32 %v8182, %v8477
    %v8528 = vmul.f32 %v8187, %v8477
    %v8529 = vmul.f32 %v8192, %v8477
    %v8530 = vmul.f32 %v8197, %v8477
    %v8531 = vmul.f32 %v8202, %v8477
    %v8532 = vmul.f32 %v8207, %v8477
    %v8533 = vmul.f32 %v8212, %v8477
    %v8534 = vmul.f32 %v8217, %v8477
    %v8535 = vmul.f32 %v8222, %v8477
    %v8536 = vmul.f32 %v8227, %v8477
    %v8537 = vmul.f32 %v8232, %v8477
    %v8538 = vmul.f32 %v8237, %v8477
    %v8539 = vmul.f32 %v8242, %v8477
    %v8540 = vmul.f32 %v8247, %v8477
    %v8541 = vmul.f32 %v8252, %v8477
    %v8542 = vmul.f32 %v8257, %v8477
    %v8544 = vlaneseq
    %v8545 = vshrl.u32 %v8544, 7
    %v8546 = vsub.s32 0, %v8545
    %v8547 = vrot.slane %v8472, %v8546
    %v8549 = vadd.f32 %v8479, %v8547
    %v8550 = vadd.f32 %v8480, %v8547
    %v8551 = vadd.f32 %v8481, %v8547
    %v8552 = vadd.f32 %v8482, %v8547
    %v8553 = vadd.f32 %v8483, %v8547
    %v8554 = vadd.f32 %v8484, %v8547
    %v8555 = vadd.f32 %v8485, %v8547
    %v8556 = vadd.f32 %v8486, %v8547
    %v8557 = vadd.f32 %v8487, %v8547
    %v8558 = vadd.f32 %v8488, %v8547
    %v8559 = vadd.f32 %v8489, %v8547
    %v8560 = vadd.f32 %v8490, %v8547
    %v8561 = vadd.f32 %v8491, %v8547
    %v8562 = vadd.f32 %v8492, %v8547
    %v8563 = vadd.f32 %v8493, %v8547
    %v8564 = vadd.f32 %v8494, %v8547
    %v8565 = vadd.f32 %v8495, %v8547
    %v8566 = vadd.f32 %v8496, %v8547
    %v8567 = vadd.f32 %v8497, %v8547
    %v8568 = vadd.f32 %v8498, %v8547
    %v8569 = vadd.f32 %v8499, %v8547
    %v8570 = vadd.f32 %v8500, %v8547
    %v8571 = vadd.f32 %v8501, %v8547
    %v8572 = vadd.f32 %v8502, %v8547
    %v8573 = vadd.f32 %v8503, %v8547
    %v8574 = vadd.f32 %v8504, %v8547
    %v8575 = vadd.f32 %v8505, %v8547
    %v8576 = vadd.f32 %v8506, %v8547
    %v8577 = vadd.f32 %v8507, %v8547
    %v8578 = vadd.f32 %v8508, %v8547
    %v8579 = vadd.f32 %v8509, %v8547
    %v8580 = vadd.f32 %v8510, %v8547
    %v8581 = vadd.f32 %v8511, %v8547
    %v8582 = vadd.f32 %v8512, %v8547
    %v8583 = vadd.f32 %v8513, %v8547
    %v8584 = vadd.f32 %v8514, %v8547
    %v8585 = vadd.f32 %v8515, %v8547
    %v8586 = vadd.f32 %v8516, %v8547
    %v8587 = vadd.f32 %v8517, %v8547
    %v8588 = vadd.f32 %v8518, %v8547
    %v8589 = vadd.f32 %v8519, %v8547
    %v8590 = vadd.f32 %v8520, %v8547
    %v8591 = vadd.f32 %v8521, %v8547
    %v8592 = vadd.f32 %v8522, %v8547
    %v8593 = vadd.f32 %v8523, %v8547
    %v8594 = vadd.f32 %v8524, %v8547
    %v8595 = vadd.f32 %v8525, %v8547
    %v8596 = vadd.f32 %v8526, %v8547
    %v8597 = vadd.f32 %v8527, %v8547
    %v8598 = vadd.f32 %v8528, %v8547
    %v8599 = vadd.f32 %v8529, %v8547
    %v8600 = vadd.f32 %v8530, %v8547
    %v8601 = vadd.f32 %v8531, %v8547
    %v8602 = vadd.f32 %v8532, %v8547
    %v8603 = vadd.f32 %v8533, %v8547
    %v8604 = vadd.f32 %v8534, %v8547
    %v8605 = vadd.f32 %v8535, %v8547
    %v8606 = vadd.f32 %v8536, %v8547
    %v8607 = vadd.f32 %v8537, %v8547
    %v8608 = vadd.f32 %v8538, %v8547
    %v8609 = vadd.f32 %v8539, %v8547
    %v8610 = vadd.f32 %v8540, %v8547
    %v8611 = vadd.f32 %v8541, %v8547
    %v8612 = vadd.f32 %v8542, %v8547
    %v8613 = vmax.f32 %v8549, 0.0
    %v8614 = vmax.f32 %v8550, 0.0
    %v8615 = vmax.f32 %v8551, 0.0
    %v8616 = vmax.f32 %v8552, 0.0
    %v8617 = vmax.f32 %v8553, 0.0
    %v8618 = vmax.f32 %v8554, 0.0
    %v8619 = vmax.f32 %v8555, 0.0
    %v8620 = vmax.f32 %v8556, 0.0
    %v8621 = vmax.f32 %v8557, 0.0
    %v8622 = vmax.f32 %v8558, 0.0
    %v8623 = vmax.f32 %v8559, 0.0
    %v8624 = vmax.f32 %v8560, 0.0
    %v8625 = vmax.f32 %v8561, 0.0
    %v8626 = vmax.f32 %v8562, 0.0
    %v8627 = vmax.f32 %v8563, 0.0
    %v8628 = vmax.f32 %v8564, 0.0
    %v8629 = vmax.f32 %v8565, 0.0
    %v8630 = vmax.f32 %v8566, 0.0
    %v8631 = vmax.f32 %v8567, 0.0
    %v8632 = vmax.f32 %v8568, 0.0
    %v8633 = vmax.f32 %v8569, 0.0
    %v8634 = vmax.f32 %v8570, 0.0
    %v8635 = vmax.f32 %v8571, 0.0
    %v8636 = vmax.f32 %v8572, 0.0
    %v8637 = vmax.f32 %v8573, 0.0
    %v8638 = vmax.f32 %v8574, 0.0
    %v8639 = vmax.f32 %v8575, 0.0
    %v8640 = vmax.f32 %v8576, 0.0
    %v8641 = vmax.f32 %v8577, 0.0
    %v8642 = vmax.f32 %v8578, 0.0
    %v8643 = vmax.f32 %v8579, 0.0
    %v8644 = vmax.f32 %v8580, 0.0
    %v8645 = vmax.f32 %v8581, 0.0
    %v8646 = vmax.f32 %v8582, 0.0
    %v8647 = vmax.f32 %v8583, 0.0
    %v8648 = vmax.f32 %v8584, 0.0
    %v8649 = vmax.f32 %v8585, 0.0
    %v8650 = vmax.f32 %v8586, 0.0
    %v8651 = vmax.f32 %v8587, 0.0
    %v8652 = vmax.f32 %v8588, 0.0
    %v8653 = vmax.f32 %v8589, 0.0
    %v8654 = vmax.f32 %v8590, 0.0
    %v8655 = vmax.f32 %v8591, 0.0
    %v8656 = vmax.f32 %v8592, 0.0
    %v8657 = vmax.f32 %v8593, 0.0
    %v8658 = vmax.f32 %v8594, 0.0
    %v8659 = vmax.f32 %v8595, 0.0
    %v8660 = vmax.f32 %v8596, 0.0
    %v8661 = vmax.f32 %v8597, 0.0
    %v8662 = vmax.f32 %v8598, 0.0
    %v8663 = vmax.f32 %v8599, 0.0
    %v8664 = vmax.f32 %v8600, 0.0
    %v8665 = vmax.f32 %v8601, 0.0
    %v8666 = vmax.f32 %v8602, 0.0
    %v8667 = vmax.f32 %v8603, 0.0
    %v8668 = vmax.f32 %v8604, 0.0
    %v8669 = vmax.f32 %v8605, 0.0
    %v8670 = vmax.f32 %v8606, 0.0
    %v8671 = vmax.f32 %v8607, 0.0
    %v8672 = vmax.f32 %v8608, 0.0
    %v8673 = vmax.f32 %v8609, 0.0
    %v8674 = vmax.f32 %v8610, 0.0
    %v8675 = vmax.f32 %v8611, 0.0
    %v8676 = vmax.f32 %v8612, 0.0
    %8677 = vst [vmem:[#allocation8] sm:$0xff] %v8613
    %8678 = vst [vmem:[#allocation8 + $0x8] sm:$0xff] %v8614
    %8679 = vst [vmem:[#allocation8 + $0x10] sm:$0xff] %v8615
    %8680 = vst [vmem:[#allocation8 + $0x18] sm:$0xff] %v8616
    %8681 = vst [vmem:[#allocation8 + $0x20] sm:$0xff] %v8617
    %8682 = vst [vmem:[#allocation8 + $0x28] sm:$0xff] %v8618
    %8683 = vst [vmem:[#allocation8 + $0x30] sm:$0xff] %v8619
    %8684 = vst [vmem:[#allocation8 + $0x38] sm:$0xff] %v8620
    %8685 = vst [vmem:[#allocation8 + $0x40] sm:$0xff] %v8621
    %8686 = vst [vmem:[#allocation8 + $0x48] sm:$0xff] %v8622
    %8687 = vst [vmem:[#allocation8 + $0x50] sm:$0xff] %v8623
    %8688 = vst [vmem:[#allocation8 + $0x58] sm:$0xff] %v8624
    %8689 = vst [vmem:[#allocation8 + $0x60] sm:$0xff] %v8625
    %8690 = vst [vmem:[#allocation8 + $0x68] sm:$0xff] %v8626
    %8691 = vst [vmem:[#allocation8 + $0x70] sm:$0xff] %v8627
    %8692 = vst [vmem:[#allocation8 + $0x78] sm:$0xff] %v8628
    %8693 = vst [vmem:[#allocation8 + $0x80] sm:$0xff] %v8629
    %8694 = vst [vmem:[#allocation8 + $0x88] sm:$0xff] %v8630
    %8695 = vst [vmem:[#allocation8 + $0x90] sm:$0xff] %v8631
    %8696 = vst [vmem:[#allocation8 + $0x98] sm:$0xff] %v8632
    %8697 = vst [vmem:[#allocation8 + $0xa0] sm:$0xff] %v8633
    %8698 = vst [vmem:[#allocation8 + $0xa8] sm:$0xff] %v8634
    %8699 = vst [vmem:[#allocation8 + $0xb0] sm:$0xff] %v8635
    %8700 = vst [vmem:[#allocation8 + $0xb8] sm:$0xff] %v8636
    %8701 = vst [vmem:[#allocation8 + $0xc0] sm:$0xff] %v8637
    %8702 = vst [vmem:[#allocation8 + $0xc8] sm:$0xff] %v8638
    %8703 = vst [vmem:[#allocation8 + $0xd0] sm:$0xff] %v8639
    %8704 = vst [vmem:[#allocation8 + $0xd8] sm:$0xff] %v8640
    %8705 = vst [vmem:[#allocation8 + $0xe0] sm:$0xff] %v8641
    %8706 = vst [vmem:[#allocation8 + $0xe8] sm:$0xff] %v8642
    %8707 = vst [vmem:[#allocation8 + $0xf0] sm:$0xff] %v8643
    %8708 = vst [vmem:[#allocation8 + $0xf8] sm:$0xff] %v8644
    %8709 = vst [vmem:[#allocation8 + $0x100] sm:$0xff] %v8645
    %8710 = vst [vmem:[#allocation8 + $0x108] sm:$0xff] %v8646
    %8711 = vst [vmem:[#allocation8 + $0x110] sm:$0xff] %v8647
    %8712 = vst [vmem:[#allocation8 + $0x118] sm:$0xff] %v8648
    %8713 = vst [vmem:[#allocation8 + $0x120] sm:$0xff] %v8649
    %8714 = vst [vmem:[#allocation8 + $0x128] sm:$0xff] %v8650
    %8715 = vst [vmem:[#allocation8 + $0x130] sm:$0xff] %v8651
    %8716 = vst [vmem:[#allocation8 + $0x138] sm:$0xff] %v8652
    %8717 = vst [vmem:[#allocation8 + $0x140] sm:$0xff] %v8653
    %8718 = vst [vmem:[#allocation8 + $0x148] sm:$0xff] %v8654
    %8719 = vst [vmem:[#allocation8 + $0x150] sm:$0xff] %v8655
    %8720 = vst [vmem:[#allocation8 + $0x158] sm:$0xff] %v8656
    %8721 = vst [vmem:[#allocation8 + $0x160] sm:$0xff] %v8657
    %8722 = vst [vmem:[#allocation8 + $0x168] sm:$0xff] %v8658
    %8723 = vst [vmem:[#allocation8 + $0x170] sm:$0xff] %v8659
    %8724 = vst [vmem:[#allocation8 + $0x178] sm:$0xff] %v8660
    %8725 = vst [vmem:[#allocation8 + $0x180] sm:$0xff] %v8661
    %8726 = vst [vmem:[#allocation8 + $0x188] sm:$0xff] %v8662
    %8727 = vst [vmem:[#allocation8 + $0x190] sm:$0xff] %v8663
    %8728 = vst [vmem:[#allocation8 + $0x198] sm:$0xff] %v8664
    %8729 = vst [vmem:[#allocation8 + $0x1a0] sm:$0xff] %v8665
    %8730 = vst [vmem:[#allocation8 + $0x1a8] sm:$0xff] %v8666
    %8731 = vst [vmem:[#allocation8 + $0x1b0] sm:$0xff] %v8667
    %8732 = vst [vmem:[#allocation8 + $0x1b8] sm:$0xff] %v8668
    %8733 = vst [vmem:[#allocation8 + $0x1c0] sm:$0xff] %v8669
    %8734 = vst [vmem:[#allocation8 + $0x1c8] sm:$0xff] %v8670
    %8735 = vst [vmem:[#allocation8 + $0x1d0] sm:$0xff] %v8671
    %8736 = vst [vmem:[#allocation8 + $0x1d8] sm:$0xff] %v8672
    %8737 = vst [vmem:[#allocation8 + $0x1e0] sm:$0xff] %v8673
    %8738 = vst [vmem:[#allocation8 + $0x1e8] sm:$0xff] %v8674
    %8739 = vst [vmem:[#allocation8 + $0x1f0] sm:$0xff] %v8675
    %8740 = vst [vmem:[#allocation8 + $0x1f8] sm:$0xff] %v8676
    // Predicated region
    $region34: #{tpu_custom_call.1} parent=1 // pred_check
      _
    $region35: #{tpu_custom_call.1} parent=1 // pred_check_branch
      %8742 = sbr.rel (0) target = $region37
    $region36: #{tpu_custom_call.1} parent=1 // pred_region
      %s8744 = ssub.s32 8192, 8192
      %8745 = vsyncadd [#allocation7], %s8744
      %s8746 = sshll.u32 [#allocation8], 4
      %s8747 = int_to_ptr.vmem [resolvable:$true] %s8746
      %8752 = dma.vmem_to_hbm [thread:$0]  %s8747, 8192, %s7, [#allocation7], 128, 128, 8
    $region37: #{tpu_custom_call.1} parent=1 // pred_fallthru
      _
    // Predicated region
    $region38: #{tpu_custom_call.1} parent=1 // pred_check
      _
    $region39: #{tpu_custom_call.1} parent=1 // pred_check_branch
      %8754 = sbr.rel (0) target = $region41
    $region40: #{tpu_custom_call.1} parent=1 // pred_region
      %8755 = dma.done [#allocation7], 8192
    $region41: #{tpu_custom_call.1} parent=1 // pred_fallthru
      _
    %8756 = vsyncpa [#allocation6], 1
    %8757 = vsyncpa [#allocation7], 1

</llo_original>
